<compile_context>
chip_gen: v7x
topology: tpu7x:2x2x1
jax: 0.10.0
libtpu: 0.0.40
codegen_flags: <defaults>
</compile_context>

<pallas_src>
import functools

import jax
import jax.numpy as jnp
from jax.experimental import pallas as pl
from jax.experimental.pallas import tpu as pltpu

EPS = 1e-5
LANE = 128


def _ceil_to(x, m):
    return (x + m - 1) // m * m


def _detect_vmem_limits():
    """Generation-aware scoped-VMEM request: ~96MiB on v5e/v6e (128MiB physical),
    <=48MiB on v7x (64MiB physical)."""
    try:
        cap = int(pltpu.get_tpu_info().vmem_capacity_bytes)
    except Exception:
        cap = 64 * 1024 * 1024
    if cap <= 0:
        cap = 64 * 1024 * 1024
    limit = max(min(cap * 3 // 4, 96 * 1024 * 1024), 28 * 1024 * 1024)
    return limit, limit * 4 // 5


VMEM_LIMIT, VMEM_BUDGET = _detect_vmem_limits()
_CONSERVATIVE = False      # flipped if the tuned config fails to compile on this chip


def _set_conservative():
    """Fallback config (matches the previously-validated kernel settings)."""
    global _CONSERVATIVE, VMEM_LIMIT, VMEM_BUDGET
    _CONSERVATIVE = True
    VMEM_LIMIT = 28 * 1024 * 1024
    VMEM_BUDGET = 24 * 1024 * 1024


# ---------------------------------------------------------------------------
# Pallas kernels
# ---------------------------------------------------------------------------
def _pack_stats(acc):
    """Pack per-tile (sum_y, sum_y^2) into rows 0/1 of an (8, C) slab."""
    s1 = jnp.sum(acc, axis=0, keepdims=True)
    s2 = jnp.sum(acc * acc, axis=0, keepdims=True)
    row = jax.lax.broadcasted_iota(jnp.int32, (8, acc.shape[1]), 0)
    return jnp.where(row == 0, s1, 0.0) + jnp.where(row == 1, s2, 0.0)


def _matmul_stats_kernel(x_ref, w_ref, y_ref, st_ref):
    """y = x @ w (bf16 in, f32 accumulate, bf16 store) + per-tile BN partial sums."""
    acc = jnp.dot(x_ref[...], w_ref[...], preferred_element_type=jnp.float32)
    y_ref[...] = acc.astype(y_ref.dtype)
    st_ref[...] = _pack_stats(acc)


def _conv2_fused_s1_kernel(y1_ref, sb1_ref, w2_ref, y2_ref, st_ref, pad_ref, *, H, W):
    """stride-1 3x3 conv fused with BN1+ReLU and in-kernel halo im2col.

    y1_ref : (H*W, C) bf16 conv1 output for one image
    pad_ref: (H+2, W+2, C) f32 VMEM scratch (zero border = conv padding)
    """
    C = pad_ref.shape[-1]
    sb = sb1_ref[...]
    a = jnp.maximum(y1_ref[...].astype(jnp.float32) * sb[0:1, :] + sb[1:2, :], 0.0)
    pad_ref[...] = jnp.zeros(pad_ref.shape, pad_ref.dtype)
    pad_ref[1:H + 1, 1:W + 1, :] = a.reshape(H, W, C)
    taps = []
    for di in range(3):
        for dj in range(3):
            t = pad_ref[di:di + H, dj:dj + W, :].astype(jnp.bfloat16)
            taps.append(t.reshape(H * W, C))
    patches = jnp.concatenate(taps, axis=-1)                    # (H*W, 9C) bf16
    acc = jnp.dot(patches, w2_ref[...], preferred_element_type=jnp.float32)
    y2_ref[...] = acc.astype(y2_ref.dtype)
    st_ref[...] = _pack_stats(acc)


def _conv3_kernel(y2_ref, sb2_ref, w3_ref, y3_ref, st3_ref):
    """Fused: BN2+ReLU normalize of y2, then the 1x1 conv3 matmul (+BN3 partials)."""
    sb = sb2_ref[...]
    a = jnp.maximum(y2_ref[...].astype(jnp.float32) * sb[0:1, :] + sb[1:2, :], 0.0)
    acc = jnp.dot(a.astype(jnp.bfloat16), w3_ref[...],
                  preferred_element_type=jnp.float32)
    y3_ref[...] = acc.astype(y3_ref.dtype)
    st3_ref[...] = _pack_stats(acc)


def _conv3_sc_kernel(y2_ref, sb2_ref, w3_ref, xs_ref, wsc_ref,
                     y3_ref, st3_ref, ysc_ref, stsc_ref):
    """conv3 (with BN2+ReLU fused in) plus the shortcut 1x1 conv in one launch."""
    sb = sb2_ref[...]
    a = jnp.maximum(y2_ref[...].astype(jnp.float32) * sb[0:1, :] + sb[1:2, :], 0.0)
    acc3 = jnp.dot(a.astype(jnp.bfloat16), w3_ref[...],
                   preferred_element_type=jnp.float32)
    y3_ref[...] = acc3.astype(y3_ref.dtype)
    st3_ref[...] = _pack_stats(acc3)
    accs = jnp.dot(xs_ref[...], wsc_ref[...], preferred_element_type=jnp.float32)
    ysc_ref[...] = accs.astype(ysc_ref.dtype)
    stsc_ref[...] = _pack_stats(accs)


def _bn_act_kernel(y_ref, sb_ref, o_ref, *, relu):
    """Normalize with folded per-channel scale/bias (one FMA) + optional ReLU."""
    sb = sb_ref[...]
    r = y_ref[...].astype(jnp.float32) * sb[0:1, :] + sb[1:2, :]
    if relu:
        r = jnp.maximum(r, 0.0)
    o_ref[...] = r.astype(o_ref.dtype)


def _bn_add_relu_kernel(y_ref, sb_ref, ysc_ref, sbsc_ref, o_ref):
    """Fused final epilogue: BN3 + shortcut-BN + residual add + ReLU."""
    sb = sb_ref[...]
    r = y_ref[...].astype(jnp.float32) * sb[0:1, :] + sb[1:2, :]
    sbs = sbsc_ref[...]
    s = ysc_ref[...].astype(jnp.float32) * sbs[0:1, :] + sbs[1:2, :]
    o_ref[...] = jnp.maximum(r + s, 0.0).astype(o_ref.dtype)


# ---------------------------------------------------------------------------
# pallas_call wrappers
# ---------------------------------------------------------------------------
def _mosaic_params(grid_len=1):
    return pltpu.CompilerParams(
        dimension_semantics=("parallel",) * grid_len,
        vmem_limit_bytes=int(VMEM_LIMIT))


def _bspec(shape, index_map, *, buffers=None):
    """BlockSpec; grid-invariant operands get single buffering (saves VMEM)."""
    if buffers is not None and not _CONSERVATIVE:
        try:
            return pl.BlockSpec(shape, index_map, pipeline_mode=pl.Buffered(buffers))
        except Exception:
            pass
    return pl.BlockSpec(shape, index_map)


def matmul_with_stats(x, w, tm):
    m_pad, k_pad = x.shape
    c_pad = w.shape[1]
    n_tiles = m_pad // tm
    return pl.pallas_call(
        _matmul_stats_kernel,
        out_shape=(jax.ShapeDtypeStruct((m_pad, c_pad), jnp.bfloat16),
                   jax.ShapeDtypeStruct((n_tiles * 8, c_pad), jnp.float32)),
        grid=(n_tiles,),
        in_specs=[pl.BlockSpec((tm, k_pad), lambda i: (i, 0)),
                  _bspec((k_pad, c_pad), lambda i: (0, 0), buffers=1)],
        out_specs=(pl.BlockSpec((tm, c_pad), lambda i: (i, 0)),
                   pl.BlockSpec((8, c_pad), lambda i: (i, 0))),
        compiler_params=_mosaic_params(1),
    )(x, w)


def conv2_fused_s1(y1, sb1, w2m, N, H, W):
    hw = H * W
    c_mid = y1.shape[1]
    k_pad = w2m.shape[0]
    kern = functools.partial(_conv2_fused_s1_kernel, H=H, W=W)
    return pl.pallas_call(
        kern,
        out_shape=(jax.ShapeDtypeStruct((N * hw, c_mid), jnp.bfloat16),
                   jax.ShapeDtypeStruct((N * 8, c_mid), jnp.float32)),
        grid=(N,),
        in_specs=[pl.BlockSpec((hw, c_mid), lambda n: (n, 0)),
                  _bspec((8, c_mid), lambda n: (0, 0), buffers=1),
                  _bspec((k_pad, c_mid), lambda n: (0, 0), buffers=1)],
        out_specs=(pl.BlockSpec((hw, c_mid), lambda n: (n, 0)),
                   pl.BlockSpec((8, c_mid), lambda n: (n, 0))),
        scratch_shapes=[pltpu.VMEM((H + 2, W + 2, c_mid), jnp.float32)],
        compiler_params=_mosaic_params(1),
    )(y1, sb1, w2m)


def conv3_only(y2, sb2, w3m, tm):
    m_pad, k_pad = y2.shape
    c_out = w3m.shape[1]
    n_tiles = m_pad // tm
    return pl.pallas_call(
        _conv3_kernel,
        out_shape=(jax.ShapeDtypeStruct((m_pad, c_out), jnp.bfloat16),
                   jax.ShapeDtypeStruct((n_tiles * 8, c_out), jnp.float32)),
        grid=(n_tiles,),
        in_specs=[pl.BlockSpec((tm, k_pad), lambda i: (i, 0)),
                  _bspec((8, k_pad), lambda i: (0, 0), buffers=1),
                  _bspec((k_pad, c_out), lambda i: (0, 0), buffers=1)],
        out_specs=(pl.BlockSpec((tm, c_out), lambda i: (i, 0)),
                   pl.BlockSpec((8, c_out), lambda i: (i, 0))),
        compiler_params=_mosaic_params(1),
    )(y2, sb2, w3m)


def conv3_with_shortcut(y2, sb2, w3m, xs, wscm, tm):
    m_pad, k_pad = y2.shape
    c_out = w3m.shape[1]
    cin_p = xs.shape[1]
    n_tiles = m_pad // tm
    return pl.pallas_call(
        _conv3_sc_kernel,
        out_shape=(jax.ShapeDtypeStruct((m_pad, c_out), jnp.bfloat16),
                   jax.ShapeDtypeStruct((n_tiles * 8, c_out), jnp.float32),
                   jax.ShapeDtypeStruct((m_pad, c_out), jnp.bfloat16),
                   jax.ShapeDtypeStruct((n_tiles * 8, c_out), jnp.float32)),
        grid=(n_tiles,),
        in_specs=[pl.BlockSpec((tm, k_pad), lambda i: (i, 0)),
                  _bspec((8, k_pad), lambda i: (0, 0), buffers=1),
                  _bspec((k_pad, c_out), lambda i: (0, 0), buffers=1),
                  pl.BlockSpec((tm, cin_p), lambda i: (i, 0)),
                  _bspec((cin_p, c_out), lambda i: (0, 0), buffers=1)],
        out_specs=(pl.BlockSpec((tm, c_out), lambda i: (i, 0)),
                   pl.BlockSpec((8, c_out), lambda i: (i, 0)),
                   pl.BlockSpec((tm, c_out), lambda i: (i, 0)),
                   pl.BlockSpec((8, c_out), lambda i: (i, 0))),
        compiler_params=_mosaic_params(1),
    )(y2, sb2, w3m, xs, wscm)


def bn_act(y, sb, tm, out_dtype, relu=True):
    m_pad, c_pad = y.shape
    n_tiles = m_pad // tm
    kern = functools.partial(_bn_act_kernel, relu=relu)
    return pl.pallas_call(
        kern,
        out_shape=jax.ShapeDtypeStruct((m_pad, c_pad), out_dtype),
        grid=(n_tiles,),
        in_specs=[pl.BlockSpec((tm, c_pad), lambda i: (i, 0)),
                  _bspec((8, c_pad), lambda i: (0, 0), buffers=1)],
        out_specs=pl.BlockSpec((tm, c_pad), lambda i: (i, 0)),
        compiler_params=_mosaic_params(1),
    )(y, sb)


def bn_add_relu(y, sb, ysc, sbsc, tm):
    m_pad, c_pad = y.shape
    n_tiles = m_pad // tm
    return pl.pallas_call(
        _bn_add_relu_kernel,
        out_shape=jax.ShapeDtypeStruct((m_pad, c_pad), jnp.float32),
        grid=(n_tiles,),
        in_specs=[pl.BlockSpec((tm, c_pad), lambda i: (i, 0)),
                  _bspec((8, c_pad), lambda i: (0, 0), buffers=1),
                  pl.BlockSpec((tm, c_pad), lambda i: (i, 0)),
                  _bspec((8, c_pad), lambda i: (0, 0), buffers=1)],
        out_specs=pl.BlockSpec((tm, c_pad), lambda i: (i, 0)),
        compiler_params=_mosaic_params(1),
    )(y, sb, ysc, sbsc)


# ---------------------------------------------------------------------------
# Glue: BN folding, tile sizing, padding/packing, im2col (plain JAX)
# ---------------------------------------------------------------------------
def _fold_stats(st, count, gamma_p, beta_p, corr=None):
    """Reduce per-tile partials and fold BN into per-channel scale/bias."""
    c_pad = st.shape[-1]
    st = st.reshape(-1, 8, c_pad)
    s1 = st[:, 0, :].sum(axis=0)
    s2 = st[:, 1, :].sum(axis=0)
    if corr is not None:
        n_pad, v = corr                 # constant per-channel value of padded rows
        s1 = s1 - n_pad * v
        s2 = s2 - n_pad * v * v
    mean = s1 / count
    var = jnp.maximum(s2 / count - mean * mean, 0.0)
    scale = gamma_p * jax.lax.rsqrt(var + EPS)
    bias = beta_p - mean * scale
    return jnp.zeros((8, c_pad), jnp.float32).at[0].set(scale).at[1].set(bias)


def _tile_bytes(tm, kc_pairs):
    need = 0
    for k_pad, c_pad in kc_pairs:
        n = (2 * tm * k_pad * 2        # bf16 input tile, double-buffered
             + k_pad * c_pad * 2       # bf16 weights, single-buffered
             + 2 * 8 * k_pad * 4       # scale/bias slab
             + 2 * tm * c_pad * 2      # bf16 output tile, double-buffered
             + 2 * 8 * c_pad * 4       # stats output
             + tm * c_pad * 4)         # in-kernel f32 accumulator value
        need = max(need, n)
    return need


def _pick_tm(m, kc_pairs):
    """Largest power-of-two M tile that fits the VMEM budget, gives >=2 grid steps
    (so both v7x TensorCores get work) and preferably divides m exactly."""
    m8 = _ceil_to(max(m, 8), 8)
    tm_cap = 8
    for tm in (4096, 2048, 1024, 512, 256, 128, 64, 32, 16, 8):
        if _tile_bytes(tm, kc_pairs) <= VMEM_BUDGET:
            tm_cap = tm
            break
    while tm_cap > 8 and m8 <= tm_cap:
        tm_cap //= 2
    tm = tm_cap
    while tm > 8 and m % tm != 0:
        tm //= 2
    if m % tm == 0 and tm >= max(8, tm_cap // 4):
        return tm
    return tm_cap


def _pad2d(a, m_pad, c_pad, dtype):
    m, c = a.shape
    return jnp.pad(a, ((0, m_pad - m), (0, c_pad - c))).astype(dtype)


def _align_rows(a, valid, target):
    if a.shape[0] == target:
        return a
    a = a[:min(valid, a.shape[0])]
    if a.shape[0] < target:
        a = jnp.pad(a, ((0, target - a.shape[0]), (0, 0)))
    return a


def _pad_vec(v, c_pad):
    return jnp.pad(v, (0, c_pad - v.shape[0])).astype(jnp.float32)


def _pack_1x1(w_oihw, cin_p, cout_p):
    co, ci = w_oihw.shape[:2]
    wm = w_oihw.reshape(co, ci).T                               # (ci, co)
    return jnp.pad(wm, ((0, cin_p - ci), (0, cout_p - co))).astype(jnp.bfloat16)


def _pack_3x3(w_oihw, cin_p, cout_p):
    co, ci = w_oihw.shape[:2]
    w = jnp.transpose(w_oihw, (2, 3, 1, 0))                     # (3, 3, ci, co)
    w = jnp.pad(w, ((0, 0), (0, 0), (0, cin_p - ci), (0, cout_p - co)))
    return w.reshape(9 * cin_p, cout_p).astype(jnp.bfloat16)


def _im2col_3x3(x_nhwc, stride):
    # Only used on the stride>1 path (see TODO at top of file).
    N, H, W, C = x_nhwc.shape
    xp = jnp.pad(x_nhwc, ((0, 0), (1, 1), (1, 1), (0, 0)))
    Ho = (H - 1) // stride + 1
    Wo = (W - 1) // stride + 1
    cols = []
    for i in range(3):
        for j in range(3):
            cols.append(xp[:, i:i + Ho * stride:stride,
                           j:j + Wo * stride:stride, :])
    patches = jnp.concatenate(cols, axis=-1)                    # (N, Ho, Wo, 9C)
    return patches.reshape(N * Ho * Wo, 9 * C), (Ho, Wo)


# ---------------------------------------------------------------------------
# Parameters (raw PyTorch layout + precomputed matmul-form packed at init)
# ---------------------------------------------------------------------------
def init_bottleneck_block(key, in_channels, out_channels, stride):
    expansion = 4
    cin, cmid, cout = in_channels, out_channels, out_channels * expansion
    ks = jax.random.split(key, 12)
    p = {
        "stride": stride, "cin": cin, "cmid": cmid, "cout": cout,
        "use_conv_shortcut": (stride != 1) or (cin != cout),
        "w1": 0.1 * jax.random.normal(ks[0], (cmid, cin, 1, 1), jnp.float32),
        "g1": 1.0 + 0.1 * jax.random.normal(ks[1], (cmid,), jnp.float32),
        "b1": 0.1 * jax.random.normal(ks[2], (cmid,), jnp.float32),
        "w2": 0.1 * jax.random.normal(ks[3], (cmid, cmid, 3, 3), jnp.float32),
        "g2": 1.0 + 0.1 * jax.random.normal(ks[4], (cmid,), jnp.float32),
        "b2": 0.1 * jax.random.normal(ks[5], (cmid,), jnp.float32),
        "w3": 0.1 * jax.random.normal(ks[6], (cout, cmid, 1, 1), jnp.float32),
        "g3": 1.0 + 0.1 * jax.random.normal(ks[7], (cout,), jnp.float32),
        "b3": 0.1 * jax.random.normal(ks[8], (cout,), jnp.float32),
    }
    if p["use_conv_shortcut"]:
        p["wsc"] = 0.1 * jax.random.normal(ks[9], (cout, cin, 1, 1), jnp.float32)
        p["gsc"] = 1.0 + 0.1 * jax.random.normal(ks[10], (cout,), jnp.float32)
        p["bsc"] = 0.1 * jax.random.normal(ks[11], (cout,), jnp.float32)

    cin_p = _ceil_to(cin, LANE)
    cmid_p = _ceil_to(cmid, LANE)
    cout_p = _ceil_to(cout, LANE)
    p.update(
        cin_p=cin_p, cmid_p=cmid_p, cout_p=cout_p,
        w1m=_pack_1x1(p["w1"], cin_p, cmid_p),
        w2m=_pack_3x3(p["w2"], cmid_p, cmid_p),
        w3m=_pack_1x1(p["w3"], cmid_p, cout_p),
        g1p=_pad_vec(p["g1"], cmid_p), b1p=_pad_vec(p["b1"], cmid_p),
        g2p=_pad_vec(p["g2"], cmid_p), b2p=_pad_vec(p["b2"], cmid_p),
        g3p=_pad_vec(p["g3"], cout_p), b3p=_pad_vec(p["b3"], cout_p),
    )
    if p["use_conv_shortcut"]:
        p.update(wscm=_pack_1x1(p["wsc"], cin_p, cout_p),
                 gscp=_pad_vec(p["gsc"], cout_p), bscp=_pad_vec(p["bsc"], cout_p))
    return p


# ---------------------------------------------------------------------------
# Forward
# ---------------------------------------------------------------------------
def bottleneck_forward(p, x_nchw):
    stride = p["stride"]
    cin, cout = p["cin"], p["cout"]
    cin_p, cmid_p, cout_p = p["cin_p"], p["cmid_p"], p["cout_p"]
    use_fused_conv2 = (stride == 1) and (not _CONSERVATIVE)

    # NCHW -> NHWC once at the block boundary.
    # TODO(synk): when stacking blocks keep activations NHWC across blocks and do a
    # single layout transpose at the network boundary.
    x = jnp.transpose(x_nchw, (0, 2, 3, 1)).astype(jnp.float32)
    N, H, W, _ = x.shape
    Ho = (H - 1) // stride + 1
    Wo = (W - 1) // stride + 1
    m1, m2 = N * H * W, N * Ho * Wo

    # ---- conv1 (1x1) : matmul + BN1 partial sums ---------------------------
    tm1 = _pick_tm(m1, [(cin_p, cmid_p)])
    m1_pad = _ceil_to(m1, tm1)
    x1 = _pad2d(x.reshape(m1, cin), m1_pad, cin_p, jnp.bfloat16)
    y1, st1 = matmul_with_stats(x1, p["w1m"], tm1)
    sb1 = _fold_stats(st1, m1, p["g1p"], p["b1p"])

    # ---- tile size for the m2 = N*Ho*Wo domain ------------------------------
    kc2 = [(cmid_p, cout_p), (cout_p, cout_p)]
    if p["use_conv_shortcut"]:
        kc2.append((cin_p, cout_p))
    if not use_fused_conv2:
        kc2.append((9 * cmid_p, cmid_p))
    tm2 = _pick_tm(m2, kc2)
    m2_pad = _ceil_to(m2, tm2)

    # ---- conv2 (3x3, pad 1) + BN2 partial sums ------------------------------
    if use_fused_conv2:
        # BN1+ReLU + in-kernel halo im2col + matmul fused: the 9x patch matrix
        # never touches HBM.
        y1v = y1 if m1_pad == m1 else y1[:m1]
        y2, st2 = conv2_fused_s1(y1v, sb1, p["w2m"], N, H, W)
        if m2_pad != m2:
            y2 = jnp.pad(y2, ((0, m2_pad - m2), (0, 0)))
    else:
        a1 = bn_act(y1, sb1, tm1, jnp.bfloat16, relu=True)
        a1 = (a1 if m1_pad == m1 else a1[:m1]).reshape(N, H, W, cmid_p)
        patches, _ = _im2col_3x3(a1, stride)                    # (m2, 9*cmid_p) bf16
        patches = _pad2d(patches, m2_pad, 9 * cmid_p, jnp.bfloat16)
        y2, st2 = matmul_with_stats(patches, p["w2m"], tm2)
    sb2 = _fold_stats(st2, m2, p["g2p"], p["b2p"])

    # ---- conv3 (1x1, BN2+ReLU fused in) + shortcut conv fused alongside -----
    if p["use_conv_shortcut"]:
        if stride == 1:
            xs = _align_rows(x1, m1, m2_pad)                    # reuse padded bf16 x
        else:
            xs = _pad2d(x[:, ::stride, ::stride, :].reshape(m2, cin),
                        m2_pad, cin_p, jnp.bfloat16)
        y3, st3, ysc, stsc = conv3_with_shortcut(y2, sb2, p["w3m"], xs,
                                                 p["wscm"], tm2)
        sbsc = _fold_stats(stsc, m2, p["gscp"], p["bscp"])
    else:
        y3, st3 = conv3_only(y2, sb2, p["w3m"], tm2)
        ysc = _align_rows(x1, m1, m2_pad)        # identity: cin_p == cout_p, m1 == m2
        sbsc = jnp.zeros((8, cout_p), jnp.float32).at[0].set(1.0)

    # Zero-padded y2 rows normalize to relu(bias2) inside the conv3 kernel; subtract
    # their constant contribution from the BN3 sums instead of masking every tile.
    corr = None
    if m2_pad > m2:
        v = jnp.dot(jnp.maximum(sb2[1], 0.0).astype(jnp.bfloat16).astype(jnp.float32),
                    p["w3m"].astype(jnp.float32))
        corr = (float(m2_pad - m2), v)
    sb3 = _fold_stats(st3, m2, p["g3p"], p["b3p"], corr)

    # ---- fused epilogue: BN3 + shortcut-BN + residual add + ReLU ------------
    out = bn_add_relu(y3, sb3, ysc, sbsc, tm2)
    out = out[:m2, :cout].reshape(N, Ho, Wo, cout)
    return jnp.transpose(out, (0, 3, 1, 2))                     # back to NCHW


# ---------------------------------------------------------------------------
# Pure-JAX reference (for correctness check)
# ---------------------------------------------------------------------------
def _conv_ref(x_nhwc, w_oihw, stride, pad):
    return jax.lax.conv_general_dilated(
        x_nhwc, jnp.transpose(w_oihw, (2, 3, 1, 0)),
        window_strides=(stride, stride), padding=[(pad, pad), (pad, pad)],
        dimension_numbers=("NHWC", "HWIO", "NHWC"))


def _bn_ref(y, g, b):
    mean = y.mean(axis=(0, 1, 2), keepdims=True)
    var = ((y - mean) ** 2).mean(axis=(0, 1, 2), keepdims=True)
    return (y - mean) * jax.lax.rsqrt(var + EPS) * g.reshape(1, 1, 1, -1) + b.reshape(1, 1, 1, -1)


def bottleneck_ref(p, x_nchw):
    stride = p["stride"]
    x = jnp.transpose(x_nchw, (0, 2, 3, 1)).astype(jnp.float32)
    y = jnp.maximum(_bn_ref(_conv_ref(x, p["w1"], 1, 0), p["g1"], p["b1"]), 0.0)
    y = jnp.maximum(_bn_ref(_conv_ref(y, p["w2"], stride, 1), p["g2"], p["b2"]), 0.0)
    y = _bn_ref(_conv_ref(y, p["w3"], 1, 0), p["g3"], p["b3"])
    if p["use_conv_shortcut"]:
        sc = _bn_ref(_conv_ref(x, p["wsc"], stride, 0), p["gsc"], p["bsc"])
    else:
        sc = x
    out = jnp.maximum(y + sc, 0.0)
    return jnp.transpose(out, (0, 3, 1, 2))


def _max_abs_err(a, b):
    return float(jnp.max(jnp.abs(a - b)))


def _rel_l2_err(a, b):
    return float(jnp.linalg.norm((a - b).ravel()) /
                 (jnp.linalg.norm(b.ravel()) + 1e-12))


# ---------------------------------------------------------------------------
if __name__ == "__main__":
    key = jax.random.PRNGKey(0)
    kx1, kx2, kp1, kp2 = jax.random.split(key, 4)

    def run(params, x):
        try:
            fwd = jax.jit(functools.partial(bottleneck_forward, params))
            return jax.block_until_ready(fwd(x))
        except Exception:
            # Tuned config failed on this chip -> retry with the validated
            # conservative settings (XLA im2col path, 28MiB VMEM, default buffering).
            _set_conservative()
            fwd = jax.jit(functools.partial(bottleneck_forward, params))
            return jax.block_until_ready(fwd(x))

    # Case 1: stride=2, channel change -> conv1x1 + BN shortcut path.
    #   BottleNeckResidualBlock(in_channels=4, out_channels=8, stride=2)
    x1_in = jax.random.normal(kx1, (2, 4, 16, 16), jnp.float32)      # NCHW
    params1 = init_bottleneck_block(kp1, in_channels=4, out_channels=8, stride=2)
    out1 = run(params1, x1_in)
    ref1 = bottleneck_ref(params1, x1_in)
    assert out1.shape == (2, 32, 8, 8), out1.shape
    assert _max_abs_err(out1, ref1) < 0.15, _max_abs_err(out1, ref1)
    assert _rel_l2_err(out1, ref1) < 2e-2, _rel_l2_err(out1, ref1)

    # Case 2: stride=1, in_channels == 4*out_channels -> identity shortcut,
    # fully fused in-kernel im2col path.
    #   BottleNeckResidualBlock(in_channels=16, out_channels=4, stride=1)
    x2_in = jax.random.normal(kx2, (2, 16, 16, 16), jnp.float32)     # NCHW
    params2 = init_bottleneck_block(kp2, in_channels=16, out_channels=4, stride=1)
    out2 = run(params2, x2_in)
    ref2 = bottleneck_ref(params2, x2_in)
    assert out2.shape == (2, 16, 16, 16), out2.shape
    assert _max_abs_err(out2, ref2) < 0.15, _max_abs_err(out2, ref2)
    assert _rel_l2_err(out2, ref2) < 2e-2, _rel_l2_err(out2, ref2)

    print("KERNEL_OK")
</pallas_src>

<mosaic_0001>
module attributes {stable_mosaic.version = 11 : i64} {
  func.func @_matmul_stats_kernel(%arg0: i32, %arg1: memref<256x128xbf16, #tpu.memory_space<vmem>>, %arg2: memref<128x128xbf16, #tpu.memory_space<vmem>>, %arg3: memref<256x128xbf16, #tpu.memory_space<vmem>>, %arg4: memref<8x128xf32, #tpu.memory_space<vmem>>) attributes {dimension_semantics = [#tpu.dimension_semantics<parallel>], iteration_bounds = array<i64: 2>, scalar_prefetch = 0 : i64, scratch_operands = 0 : i64, tpu.core_type = #tpu.core_type<tc>, window_params = [{transform_indices = @transform_0, window_bounds = array<i64: 256, 128>}, {pipeline_mode = #tpu.pipeline_mode<synchronous>, transform_indices = @transform_1, window_bounds = array<i64: 128, 128>}, {transform_indices = @transform_2, window_bounds = array<i64: 256, 128>}, {transform_indices = @transform_3, window_bounds = array<i64: 8, 128>}]} {
    %c0 = arith.constant 0 : index
    %c0_0 = arith.constant 0 : index
    %0 = vector.load %arg1[%c0, %c0_0] : memref<256x128xbf16, #tpu.memory_space<vmem>>, vector<256x128xbf16>
    %c0_1 = arith.constant 0 : index
    %c0_2 = arith.constant 0 : index
    %1 = vector.load %arg2[%c0_1, %c0_2] : memref<128x128xbf16, #tpu.memory_space<vmem>>, vector<128x128xbf16>
    %cst = arith.constant dense<0.000000e+00> : vector<256x128xf32>
    %2 = tpu.matmul %0, %1, %cst {dimension_numbers = #tpu.dot_dimension_numbers<[1], [0], [0], [1], [0, 0, 1, 1], [], []>} : vector<256x128xbf16>, vector<128x128xbf16>, vector<256x128xf32> -> vector<256x128xf32>
    %3 = arith.truncf %2 : vector<256x128xf32> to vector<256x128xbf16>
    %c0_3 = arith.constant 0 : index
    %c0_4 = arith.constant 0 : index
    %4 = vector.load %arg3[%c0_3, %c0_4] : memref<256x128xbf16, #tpu.memory_space<vmem>>, vector<256x128xbf16>
    tpu.vector_store %arg3[%c0_3, %c0_4], %3 {strides = array<i32>} : memref<256x128xbf16, #tpu.memory_space<vmem>>, vector<256x128xbf16>,
    %cst_5 = arith.constant dense<0.000000e+00> : vector<128xf32>
    %5 = vector.multi_reduction <add>, %2, %cst_5 [0] : vector<256x128xf32> to vector<128xf32>
    %6 = vector.shape_cast %5 : vector<128xf32> to vector<1x128xf32>
    %7 = arith.mulf %2, %2 : vector<256x128xf32>
    %cst_6 = arith.constant dense<0.000000e+00> : vector<128xf32>
    %8 = vector.multi_reduction <add>, %7, %cst_6 [0] : vector<256x128xf32> to vector<128xf32>
    %9 = vector.shape_cast %8 : vector<128xf32> to vector<1x128xf32>
    %10 = tpu.iota {dimensions = array<i32: 0>} : vector<8x128xi32>
    %c0_i32 = arith.constant 0 : i32
    %11 = vector.broadcast %c0_i32 : i32 to vector<8x128xi32>
    %12 = arith.cmpi eq, %10, %11 : vector<8x128xi32>
    %cst_7 = arith.constant 0.000000e+00 : f32
    %13 = vector.shape_cast %6 : vector<1x128xf32> to vector<1x128xf32>
    %14 = vector.broadcast %13 : vector<1x128xf32> to vector<8x128xf32>
    %15 = vector.broadcast %cst_7 : f32 to vector<8x128xf32>
    %16 = arith.select %12, %14, %15 : vector<8x128xi1>, vector<8x128xf32>
    %c1_i32 = arith.constant 1 : i32
    %17 = vector.broadcast %c1_i32 : i32 to vector<8x128xi32>
    %18 = arith.cmpi eq, %10, %17 : vector<8x128xi32>
    %cst_8 = arith.constant 0.000000e+00 : f32
    %19 = vector.shape_cast %9 : vector<1x128xf32> to vector<1x128xf32>
    %20 = vector.broadcast %19 : vector<1x128xf32> to vector<8x128xf32>
    %21 = vector.broadcast %cst_8 : f32 to vector<8x128xf32>
    %22 = arith.select %18, %20, %21 : vector<8x128xi1>, vector<8x128xf32>
    %23 = arith.addf %16, %22 : vector<8x128xf32>
    %c0_9 = arith.constant 0 : index
    %c0_10 = arith.constant 0 : index
    %24 = vector.load %arg4[%c0_9, %c0_10] : memref<8x128xf32, #tpu.memory_space<vmem>>, vector<8x128xf32>
    tpu.vector_store %arg4[%c0_9, %c0_10], %23 {strides = array<i32>} : memref<8x128xf32, #tpu.memory_space<vmem>>, vector<8x128xf32>,
    return
  }
  func.func @transform_0(%arg0: i32) -> (i32, i32) {
    %c0_i32 = arith.constant 0 : i32
    %c0_i32_0 = arith.constant 0 : i32
    return %arg0, %c0_i32 : i32, i32
  }
  func.func @transform_1(%arg0: i32) -> (i32, i32) {
    %c0_i32 = arith.constant 0 : i32
    %c0_i32_0 = arith.constant 0 : i32
    %c0_i32_1 = arith.constant 0 : i32
    return %c0_i32, %c0_i32_0 : i32, i32
  }
  func.func @transform_2(%arg0: i32) -> (i32, i32) {
    %c0_i32 = arith.constant 0 : i32
    %c0_i32_0 = arith.constant 0 : i32
    return %arg0, %c0_i32 : i32, i32
  }
  func.func @transform_3(%arg0: i32) -> (i32, i32) {
    %c0_i32 = arith.constant 0 : i32
    %c0_i32_0 = arith.constant 0 : i32
    return %arg0, %c0_i32 : i32, i32
  }
}

module attributes {stable_mosaic.version = 11 : i64} {
  func.func @_bn_act_kernel(%arg0: i32, %arg1: memref<256x128xbf16, #tpu.memory_space<vmem>>, %arg2: memref<8x128xf32, #tpu.memory_space<vmem>>, %arg3: memref<256x128xbf16, #tpu.memory_space<vmem>>) attributes {dimension_semantics = [#tpu.dimension_semantics<parallel>], iteration_bounds = array<i64: 2>, scalar_prefetch = 0 : i64, scratch_operands = 0 : i64, tpu.core_type = #tpu.core_type<tc>, window_params = [{transform_indices = @transform_0, window_bounds = array<i64: 256, 128>}, {pipeline_mode = #tpu.pipeline_mode<synchronous>, transform_indices = @transform_1, window_bounds = array<i64: 8, 128>}, {transform_indices = @transform_2, window_bounds = array<i64: 256, 128>}]} {
    %c0 = arith.constant 0 : index
    %c0_0 = arith.constant 0 : index
    %0 = vector.load %arg2[%c0, %c0_0] : memref<8x128xf32, #tpu.memory_space<vmem>>, vector<8x128xf32>
    %c0_1 = arith.constant 0 : index
    %c0_2 = arith.constant 0 : index
    %1 = vector.load %arg1[%c0_1, %c0_2] : memref<256x128xbf16, #tpu.memory_space<vmem>>, vector<256x128xbf16>
    %2 = arith.extf %1 : vector<256x128xbf16> to vector<256x128xf32>
    %3 = vector.extract_strided_slice %0 {offsets = [0, 0], sizes = [1, 128], strides = [1, 1]} : vector<8x128xf32> to vector<1x128xf32>
    %4 = vector.broadcast %3 : vector<1x128xf32> to vector<256x128xf32>
    %5 = arith.mulf %2, %4 : vector<256x128xf32>
    %6 = vector.extract_strided_slice %0 {offsets = [1, 0], sizes = [1, 128], strides = [1, 1]} : vector<8x128xf32> to vector<1x128xf32>
    %7 = vector.broadcast %6 : vector<1x128xf32> to vector<256x128xf32>
    %8 = arith.addf %5, %7 : vector<256x128xf32>
    %cst = arith.constant 0.000000e+00 : f32
    %9 = vector.broadcast %cst : f32 to vector<256x128xf32>
    %10 = arith.maximumf %8, %9 : vector<256x128xf32>
    %11 = arith.truncf %10 : vector<256x128xf32> to vector<256x128xbf16>
    %c0_3 = arith.constant 0 : index
    %c0_4 = arith.constant 0 : index
    %12 = vector.load %arg3[%c0_3, %c0_4] : memref<256x128xbf16, #tpu.memory_space<vmem>>, vector<256x128xbf16>
    tpu.vector_store %arg3[%c0_3, %c0_4], %11 {strides = array<i32>} : memref<256x128xbf16, #tpu.memory_space<vmem>>, vector<256x128xbf16>,
    return
  }
  func.func @transform_0(%arg0: i32) -> (i32, i32) {
    %c0_i32 = arith.constant 0 : i32
    %c0_i32_0 = arith.constant 0 : i32
    return %arg0, %c0_i32 : i32, i32
  }
  func.func @transform_1(%arg0: i32) -> (i32, i32) {
    %c0_i32 = arith.constant 0 : i32
    %c0_i32_0 = arith.constant 0 : i32
    %c0_i32_1 = arith.constant 0 : i32
    return %c0_i32, %c0_i32_0 : i32, i32
  }
  func.func @transform_2(%arg0: i32) -> (i32, i32) {
    %c0_i32 = arith.constant 0 : i32
    %c0_i32_0 = arith.constant 0 : i32
    return %arg0, %c0_i32 : i32, i32
  }
}

module attributes {stable_mosaic.version = 11 : i64} {
  func.func @_matmul_stats_kernel(%arg0: i32, %arg1: memref<64x1152xbf16, #tpu.memory_space<vmem>>, %arg2: memref<1152x128xbf16, #tpu.memory_space<vmem>>, %arg3: memref<64x128xbf16, #tpu.memory_space<vmem>>, %arg4: memref<8x128xf32, #tpu.memory_space<vmem>>) attributes {dimension_semantics = [#tpu.dimension_semantics<parallel>], iteration_bounds = array<i64: 2>, scalar_prefetch = 0 : i64, scratch_operands = 0 : i64, tpu.core_type = #tpu.core_type<tc>, window_params = [{transform_indices = @transform_0, window_bounds = array<i64: 64, 1152>}, {pipeline_mode = #tpu.pipeline_mode<synchronous>, transform_indices = @transform_1, window_bounds = array<i64: 1152, 128>}, {transform_indices = @transform_2, window_bounds = array<i64: 64, 128>}, {transform_indices = @transform_3, window_bounds = array<i64: 8, 128>}]} {
    %c0 = arith.constant 0 : index
    %c0_0 = arith.constant 0 : index
    %0 = vector.load %arg1[%c0, %c0_0] : memref<64x1152xbf16, #tpu.memory_space<vmem>>, vector<64x1152xbf16>
    %c0_1 = arith.constant 0 : index
    %c0_2 = arith.constant 0 : index
    %1 = vector.load %arg2[%c0_1, %c0_2] : memref<1152x128xbf16, #tpu.memory_space<vmem>>, vector<1152x128xbf16>
    %cst = arith.constant dense<0.000000e+00> : vector<64x128xf32>
    %2 = tpu.matmul %0, %1, %cst {dimension_numbers = #tpu.dot_dimension_numbers<[1], [0], [0], [1], [0, 0, 1, 1], [], []>} : vector<64x1152xbf16>, vector<1152x128xbf16>, vector<64x128xf32> -> vector<64x128xf32>
    %3 = arith.truncf %2 : vector<64x128xf32> to vector<64x128xbf16>
    %c0_3 = arith.constant 0 : index
    %c0_4 = arith.constant 0 : index
    %4 = vector.load %arg3[%c0_3, %c0_4] : memref<64x128xbf16, #tpu.memory_space<vmem>>, vector<64x128xbf16>
    tpu.vector_store %arg3[%c0_3, %c0_4], %3 {strides = array<i32>} : memref<64x128xbf16, #tpu.memory_space<vmem>>, vector<64x128xbf16>,
    %cst_5 = arith.constant dense<0.000000e+00> : vector<128xf32>
    %5 = vector.multi_reduction <add>, %2, %cst_5 [0] : vector<64x128xf32> to vector<128xf32>
    %6 = vector.shape_cast %5 : vector<128xf32> to vector<1x128xf32>
    %7 = arith.mulf %2, %2 : vector<64x128xf32>
    %cst_6 = arith.constant dense<0.000000e+00> : vector<128xf32>
    %8 = vector.multi_reduction <add>, %7, %cst_6 [0] : vector<64x128xf32> to vector<128xf32>
    %9 = vector.shape_cast %8 : vector<128xf32> to vector<1x128xf32>
    %10 = tpu.iota {dimensions = array<i32: 0>} : vector<8x128xi32>
    %c0_i32 = arith.constant 0 : i32
    %11 = vector.broadcast %c0_i32 : i32 to vector<8x128xi32>
    %12 = arith.cmpi eq, %10, %11 : vector<8x128xi32>
    %cst_7 = arith.constant 0.000000e+00 : f32
    %13 = vector.shape_cast %6 : vector<1x128xf32> to vector<1x128xf32>
    %14 = vector.broadcast %13 : vector<1x128xf32> to vector<8x128xf32>
    %15 = vector.broadcast %cst_7 : f32 to vector<8x128xf32>
    %16 = arith.select %12, %14, %15 : vector<8x128xi1>, vector<8x128xf32>
    %c1_i32 = arith.constant 1 : i32
    %17 = vector.broadcast %c1_i32 : i32 to vector<8x128xi32>
    %18 = arith.cmpi eq, %10, %17 : vector<8x128xi32>
    %cst_8 = arith.constant 0.000000e+00 : f32
    %19 = vector.shape_cast %9 : vector<1x128xf32> to vector<1x128xf32>
    %20 = vector.broadcast %19 : vector<1x128xf32> to vector<8x128xf32>
    %21 = vector.broadcast %cst_8 : f32 to vector<8x128xf32>
    %22 = arith.select %18, %20, %21 : vector<8x128xi1>, vector<8x128xf32>
    %23 = arith.addf %16, %22 : vector<8x128xf32>
    %c0_9 = arith.constant 0 : index
    %c0_10 = arith.constant 0 : index
    %24 = vector.load %arg4[%c0_9, %c0_10] : memref<8x128xf32, #tpu.memory_space<vmem>>, vector<8x128xf32>
    tpu.vector_store %arg4[%c0_9, %c0_10], %23 {strides = array<i32>} : memref<8x128xf32, #tpu.memory_space<vmem>>, vector<8x128xf32>,
    return
  }
  func.func @transform_0(%arg0: i32) -> (i32, i32) {
    %c0_i32 = arith.constant 0 : i32
    %c0_i32_0 = arith.constant 0 : i32
    return %arg0, %c0_i32 : i32, i32
  }
  func.func @transform_1(%arg0: i32) -> (i32, i32) {
    %c0_i32 = arith.constant 0 : i32
    %c0_i32_0 = arith.constant 0 : i32
    %c0_i32_1 = arith.constant 0 : i32
    return %c0_i32, %c0_i32_0 : i32, i32
  }
  func.func @transform_2(%arg0: i32) -> (i32, i32) {
    %c0_i32 = arith.constant 0 : i32
    %c0_i32_0 = arith.constant 0 : i32
    return %arg0, %c0_i32 : i32, i32
  }
  func.func @transform_3(%arg0: i32) -> (i32, i32) {
    %c0_i32 = arith.constant 0 : i32
    %c0_i32_0 = arith.constant 0 : i32
    return %arg0, %c0_i32 : i32, i32
  }
}

module attributes {stable_mosaic.version = 11 : i64} {
  func.func @_conv3_sc_kernel(%arg0: i32, %arg1: memref<64x128xbf16, #tpu.memory_space<vmem>>, %arg2: memref<8x128xf32, #tpu.memory_space<vmem>>, %arg3: memref<128x128xbf16, #tpu.memory_space<vmem>>, %arg4: memref<64x128xbf16, #tpu.memory_space<vmem>>, %arg5: memref<128x128xbf16, #tpu.memory_space<vmem>>, %arg6: memref<64x128xbf16, #tpu.memory_space<vmem>>, %arg7: memref<8x128xf32, #tpu.memory_space<vmem>>, %arg8: memref<64x128xbf16, #tpu.memory_space<vmem>>, %arg9: memref<8x128xf32, #tpu.memory_space<vmem>>) attributes {dimension_semantics = [#tpu.dimension_semantics<parallel>], iteration_bounds = array<i64: 2>, scalar_prefetch = 0 : i64, scratch_operands = 0 : i64, tpu.core_type = #tpu.core_type<tc>, window_params = [{transform_indices = @transform_0, window_bounds = array<i64: 64, 128>}, {pipeline_mode = #tpu.pipeline_mode<synchronous>, transform_indices = @transform_1, window_bounds = array<i64: 8, 128>}, {pipeline_mode = #tpu.pipeline_mode<synchronous>, transform_indices = @transform_2, window_bounds = array<i64: 128, 128>}, {transform_indices = @transform_3, window_bounds = array<i64: 64, 128>}, {pipeline_mode = #tpu.pipeline_mode<synchronous>, transform_indices = @transform_4, window_bounds = array<i64: 128, 128>}, {transform_indices = @transform_5, window_bounds = array<i64: 64, 128>}, {transform_indices = @transform_6, window_bounds = array<i64: 8, 128>}, {transform_indices = @transform_7, window_bounds = array<i64: 64, 128>}, {transform_indices = @transform_8, window_bounds = array<i64: 8, 128>}]} {
    %c0 = arith.constant 0 : index
    %c0_0 = arith.constant 0 : index
    %0 = vector.load %arg2[%c0, %c0_0] : memref<8x128xf32, #tpu.memory_space<vmem>>, vector<8x128xf32>
    %c0_1 = arith.constant 0 : index
    %c0_2 = arith.constant 0 : index
    %1 = vector.load %arg1[%c0_1, %c0_2] : memref<64x128xbf16, #tpu.memory_space<vmem>>, vector<64x128xbf16>
    %2 = arith.extf %1 : vector<64x128xbf16> to vector<64x128xf32>
    %3 = vector.extract_strided_slice %0 {offsets = [0, 0], sizes = [1, 128], strides = [1, 1]} : vector<8x128xf32> to vector<1x128xf32>
    %4 = vector.broadcast %3 : vector<1x128xf32> to vector<64x128xf32>
    %5 = arith.mulf %2, %4 : vector<64x128xf32>
    %6 = vector.extract_strided_slice %0 {offsets = [1, 0], sizes = [1, 128], strides = [1, 1]} : vector<8x128xf32> to vector<1x128xf32>
    %7 = vector.broadcast %6 : vector<1x128xf32> to vector<64x128xf32>
    %8 = arith.addf %5, %7 : vector<64x128xf32>
    %cst = arith.constant 0.000000e+00 : f32
    %9 = vector.broadcast %cst : f32 to vector<64x128xf32>
    %10 = arith.maximumf %8, %9 : vector<64x128xf32>
    %11 = arith.truncf %10 : vector<64x128xf32> to vector<64x128xbf16>
    %c0_3 = arith.constant 0 : index
    %c0_4 = arith.constant 0 : index
    %12 = vector.load %arg3[%c0_3, %c0_4] : memref<128x128xbf16, #tpu.memory_space<vmem>>, vector<128x128xbf16>
    %cst_5 = arith.constant dense<0.000000e+00> : vector<64x128xf32>
    %13 = tpu.matmul %11, %12, %cst_5 {dimension_numbers = #tpu.dot_dimension_numbers<[1], [0], [0], [1], [0, 0, 1, 1], [], []>} : vector<64x128xbf16>, vector<128x128xbf16>, vector<64x128xf32> -> vector<64x128xf32>
    %14 = arith.truncf %13 : vector<64x128xf32> to vector<64x128xbf16>
    %c0_6 = arith.constant 0 : index
    %c0_7 = arith.constant 0 : index
    %15 = vector.load %arg6[%c0_6, %c0_7] : memref<64x128xbf16, #tpu.memory_space<vmem>>, vector<64x128xbf16>
    tpu.vector_store %arg6[%c0_6, %c0_7], %14 {strides = array<i32>} : memref<64x128xbf16, #tpu.memory_space<vmem>>, vector<64x128xbf16>,
    %cst_8 = arith.constant dense<0.000000e+00> : vector<128xf32>
    %16 = vector.multi_reduction <add>, %13, %cst_8 [0] : vector<64x128xf32> to vector<128xf32>
    %17 = vector.shape_cast %16 : vector<128xf32> to vector<1x128xf32>
    %18 = arith.mulf %13, %13 : vector<64x128xf32>
    %cst_9 = arith.constant dense<0.000000e+00> : vector<128xf32>
    %19 = vector.multi_reduction <add>, %18, %cst_9 [0] : vector<64x128xf32> to vector<128xf32>
    %20 = vector.shape_cast %19 : vector<128xf32> to vector<1x128xf32>
    %21 = tpu.iota {dimensions = array<i32: 0>} : vector<8x128xi32>
    %c0_i32 = arith.constant 0 : i32
    %22 = vector.broadcast %c0_i32 : i32 to vector<8x128xi32>
    %23 = arith.cmpi eq, %21, %22 : vector<8x128xi32>
    %cst_10 = arith.constant 0.000000e+00 : f32
    %24 = vector.shape_cast %17 : vector<1x128xf32> to vector<1x128xf32>
    %25 = vector.broadcast %24 : vector<1x128xf32> to vector<8x128xf32>
    %26 = vector.broadcast %cst_10 : f32 to vector<8x128xf32>
    %27 = arith.select %23, %25, %26 : vector<8x128xi1>, vector<8x128xf32>
    %c1_i32 = arith.constant 1 : i32
    %28 = vector.broadcast %c1_i32 : i32 to vector<8x128xi32>
    %29 = arith.cmpi eq, %21, %28 : vector<8x128xi32>
    %cst_11 = arith.constant 0.000000e+00 : f32
    %30 = vector.shape_cast %20 : vector<1x128xf32> to vector<1x128xf32>
    %31 = vector.broadcast %30 : vector<1x128xf32> to vector<8x128xf32>
    %32 = vector.broadcast %cst_11 : f32 to vector<8x128xf32>
    %33 = arith.select %29, %31, %32 : vector<8x128xi1>, vector<8x128xf32>
    %34 = arith.addf %27, %33 : vector<8x128xf32>
    %c0_12 = arith.constant 0 : index
    %c0_13 = arith.constant 0 : index
    %35 = vector.load %arg7[%c0_12, %c0_13] : memref<8x128xf32, #tpu.memory_space<vmem>>, vector<8x128xf32>
    tpu.vector_store %arg7[%c0_12, %c0_13], %34 {strides = array<i32>} : memref<8x128xf32, #tpu.memory_space<vmem>>, vector<8x128xf32>,
    %c0_14 = arith.constant 0 : index
    %c0_15 = arith.constant 0 : index
    %36 = vector.load %arg4[%c0_14, %c0_15] : memref<64x128xbf16, #tpu.memory_space<vmem>>, vector<64x128xbf16>
    %c0_16 = arith.constant 0 : index
    %c0_17 = arith.constant 0 : index
    %37 = vector.load %arg5[%c0_16, %c0_17] : memref<128x128xbf16, #tpu.memory_space<vmem>>, vector<128x128xbf16>
    %cst_18 = arith.constant dense<0.000000e+00> : vector<64x128xf32>
    %38 = tpu.matmul %36, %37, %cst_18 {dimension_numbers = #tpu.dot_dimension_numbers<[1], [0], [0], [1], [0, 0, 1, 1], [], []>} : vector<64x128xbf16>, vector<128x128xbf16>, vector<64x128xf32> -> vector<64x128xf32>
    %39 = arith.truncf %38 : vector<64x128xf32> to vector<64x128xbf16>
    %c0_19 = arith.constant 0 : index
    %c0_20 = arith.constant 0 : index
    %40 = vector.load %arg8[%c0_19, %c0_20] : memref<64x128xbf16, #tpu.memory_space<vmem>>, vector<64x128xbf16>
    tpu.vector_store %arg8[%c0_19, %c0_20], %39 {strides = array<i32>} : memref<64x128xbf16, #tpu.memory_space<vmem>>, vector<64x128xbf16>,
    %cst_21 = arith.constant dense<0.000000e+00> : vector<128xf32>
    %41 = vector.multi_reduction <add>, %38, %cst_21 [0] : vector<64x128xf32> to vector<128xf32>
    %42 = vector.shape_cast %41 : vector<128xf32> to vector<1x128xf32>
    %43 = arith.mulf %38, %38 : vector<64x128xf32>
    %cst_22 = arith.constant dense<0.000000e+00> : vector<128xf32>
    %44 = vector.multi_reduction <add>, %43, %cst_22 [0] : vector<64x128xf32> to vector<128xf32>
    %45 = vector.shape_cast %44 : vector<128xf32> to vector<1x128xf32>
    %46 = tpu.iota {dimensions = array<i32: 0>} : vector<8x128xi32>
    %c0_i32_23 = arith.constant 0 : i32
    %47 = vector.broadcast %c0_i32_23 : i32 to vector<8x128xi32>
    %48 = arith.cmpi eq, %46, %47 : vector<8x128xi32>
    %cst_24 = arith.constant 0.000000e+00 : f32
    %49 = vector.shape_cast %42 : vector<1x128xf32> to vector<1x128xf32>
    %50 = vector.broadcast %49 : vector<1x128xf32> to vector<8x128xf32>
    %51 = vector.broadcast %cst_24 : f32 to vector<8x128xf32>
    %52 = arith.select %48, %50, %51 : vector<8x128xi1>, vector<8x128xf32>
    %c1_i32_25 = arith.constant 1 : i32
    %53 = vector.broadcast %c1_i32_25 : i32 to vector<8x128xi32>
    %54 = arith.cmpi eq, %46, %53 : vector<8x128xi32>
    %cst_26 = arith.constant 0.000000e+00 : f32
    %55 = vector.shape_cast %45 : vector<1x128xf32> to vector<1x128xf32>
    %56 = vector.broadcast %55 : vector<1x128xf32> to vector<8x128xf32>
    %57 = vector.broadcast %cst_26 : f32 to vector<8x128xf32>
    %58 = arith.select %54, %56, %57 : vector<8x128xi1>, vector<8x128xf32>
    %59 = arith.addf %52, %58 : vector<8x128xf32>
    %c0_27 = arith.constant 0 : index
    %c0_28 = arith.constant 0 : index
    %60 = vector.load %arg9[%c0_27, %c0_28] : memref<8x128xf32, #tpu.memory_space<vmem>>, vector<8x128xf32>
    tpu.vector_store %arg9[%c0_27, %c0_28], %59 {strides = array<i32>} : memref<8x128xf32, #tpu.memory_space<vmem>>, vector<8x128xf32>,
    return
  }
  func.func @transform_0(%arg0: i32) -> (i32, i32) {
    %c0_i32 = arith.constant 0 : i32
    %c0_i32_0 = arith.constant 0 : i32
    return %arg0, %c0_i32 : i32, i32
  }
  func.func @transform_1(%arg0: i32) -> (i32, i32) {
    %c0_i32 = arith.constant 0 : i32
    %c0_i32_0 = arith.constant 0 : i32
    %c0_i32_1 = arith.constant 0 : i32
    return %c0_i32, %c0_i32_0 : i32, i32
  }
  func.func @transform_2(%arg0: i32) -> (i32, i32) {
    %c0_i32 = arith.constant 0 : i32
    %c0_i32_0 = arith.constant 0 : i32
    %c0_i32_1 = arith.constant 0 : i32
    return %c0_i32, %c0_i32_0 : i32, i32
  }
  func.func @transform_3(%arg0: i32) -> (i32, i32) {
    %c0_i32 = arith.constant 0 : i32
    %c0_i32_0 = arith.constant 0 : i32
    return %arg0, %c0_i32 : i32, i32
  }
  func.func @transform_4(%arg0: i32) -> (i32, i32) {
    %c0_i32 = arith.constant 0 : i32
    %c0_i32_0 = arith.constant 0 : i32
    %c0_i32_1 = arith.constant 0 : i32
    return %c0_i32, %c0_i32_0 : i32, i32
  }
  func.func @transform_5(%arg0: i32) -> (i32, i32) {
    %c0_i32 = arith.constant 0 : i32
    %c0_i32_0 = arith.constant 0 : i32
    return %arg0, %c0_i32 : i32, i32
  }
  func.func @transform_6(%arg0: i32) -> (i32, i32) {
    %c0_i32 = arith.constant 0 : i32
    %c0_i32_0 = arith.constant 0 : i32
    return %arg0, %c0_i32 : i32, i32
  }
  func.func @transform_7(%arg0: i32) -> (i32, i32) {
    %c0_i32 = arith.constant 0 : i32
    %c0_i32_0 = arith.constant 0 : i32
    return %arg0, %c0_i32 : i32, i32
  }
  func.func @transform_8(%arg0: i32) -> (i32, i32) {
    %c0_i32 = arith.constant 0 : i32
    %c0_i32_0 = arith.constant 0 : i32
    return %arg0, %c0_i32 : i32, i32
  }
}

module attributes {stable_mosaic.version = 11 : i64} {
  func.func @_bn_add_relu_kernel(%arg0: i32, %arg1: memref<64x128xbf16, #tpu.memory_space<vmem>>, %arg2: memref<8x128xf32, #tpu.memory_space<vmem>>, %arg3: memref<64x128xbf16, #tpu.memory_space<vmem>>, %arg4: memref<8x128xf32, #tpu.memory_space<vmem>>, %arg5: memref<64x128xf32, #tpu.memory_space<vmem>>) attributes {dimension_semantics = [#tpu.dimension_semantics<parallel>], iteration_bounds = array<i64: 2>, scalar_prefetch = 0 : i64, scratch_operands = 0 : i64, tpu.core_type = #tpu.core_type<tc>, window_params = [{transform_indices = @transform_0, window_bounds = array<i64: 64, 128>}, {pipeline_mode = #tpu.pipeline_mode<synchronous>, transform_indices = @transform_1, window_bounds = array<i64: 8, 128>}, {transform_indices = @transform_2, window_bounds = array<i64: 64, 128>}, {pipeline_mode = #tpu.pipeline_mode<synchronous>, transform_indices = @transform_3, window_bounds = array<i64: 8, 128>}, {transform_indices = @transform_4, window_bounds = array<i64: 64, 128>}]} {
    %c0 = arith.constant 0 : index
    %c0_0 = arith.constant 0 : index
    %0 = vector.load %arg2[%c0, %c0_0] : memref<8x128xf32, #tpu.memory_space<vmem>>, vector<8x128xf32>
    %c0_1 = arith.constant 0 : index
    %c0_2 = arith.constant 0 : index
    %1 = vector.load %arg1[%c0_1, %c0_2] : memref<64x128xbf16, #tpu.memory_space<vmem>>, vector<64x128xbf16>
    %2 = arith.extf %1 : vector<64x128xbf16> to vector<64x128xf32>
    %3 = vector.extract_strided_slice %0 {offsets = [0, 0], sizes = [1, 128], strides = [1, 1]} : vector<8x128xf32> to vector<1x128xf32>
    %4 = vector.broadcast %3 : vector<1x128xf32> to vector<64x128xf32>
    %5 = arith.mulf %2, %4 : vector<64x128xf32>
    %6 = vector.extract_strided_slice %0 {offsets = [1, 0], sizes = [1, 128], strides = [1, 1]} : vector<8x128xf32> to vector<1x128xf32>
    %7 = vector.broadcast %6 : vector<1x128xf32> to vector<64x128xf32>
    %8 = arith.addf %5, %7 : vector<64x128xf32>
    %c0_3 = arith.constant 0 : index
    %c0_4 = arith.constant 0 : index
    %9 = vector.load %arg4[%c0_3, %c0_4] : memref<8x128xf32, #tpu.memory_space<vmem>>, vector<8x128xf32>
    %c0_5 = arith.constant 0 : index
    %c0_6 = arith.constant 0 : index
    %10 = vector.load %arg3[%c0_5, %c0_6] : memref<64x128xbf16, #tpu.memory_space<vmem>>, vector<64x128xbf16>
    %11 = arith.extf %10 : vector<64x128xbf16> to vector<64x128xf32>
    %12 = vector.extract_strided_slice %9 {offsets = [0, 0], sizes = [1, 128], strides = [1, 1]} : vector<8x128xf32> to vector<1x128xf32>
    %13 = vector.broadcast %12 : vector<1x128xf32> to vector<64x128xf32>
    %14 = arith.mulf %11, %13 : vector<64x128xf32>
    %15 = vector.extract_strided_slice %9 {offsets = [1, 0], sizes = [1, 128], strides = [1, 1]} : vector<8x128xf32> to vector<1x128xf32>
    %16 = vector.broadcast %15 : vector<1x128xf32> to vector<64x128xf32>
    %17 = arith.addf %14, %16 : vector<64x128xf32>
    %18 = arith.addf %8, %17 : vector<64x128xf32>
    %cst = arith.constant 0.000000e+00 : f32
    %19 = vector.broadcast %cst : f32 to vector<64x128xf32>
    %20 = arith.maximumf %18, %19 : vector<64x128xf32>
    %c0_7 = arith.constant 0 : index
    %c0_8 = arith.constant 0 : index
    %21 = vector.load %arg5[%c0_7, %c0_8] : memref<64x128xf32, #tpu.memory_space<vmem>>, vector<64x128xf32>
    tpu.vector_store %arg5[%c0_7, %c0_8], %20 {strides = array<i32>} : memref<64x128xf32, #tpu.memory_space<vmem>>, vector<64x128xf32>,
    return
  }
  func.func @transform_0(%arg0: i32) -> (i32, i32) {
    %c0_i32 = arith.constant 0 : i32
    %c0_i32_0 = arith.constant 0 : i32
    return %arg0, %c0_i32 : i32, i32
  }
  func.func @transform_1(%arg0: i32) -> (i32, i32) {
    %c0_i32 = arith.constant 0 : i32
    %c0_i32_0 = arith.constant 0 : i32
    %c0_i32_1 = arith.constant 0 : i32
    return %c0_i32, %c0_i32_0 : i32, i32
  }
  func.func @transform_2(%arg0: i32) -> (i32, i32) {
    %c0_i32 = arith.constant 0 : i32
    %c0_i32_0 = arith.constant 0 : i32
    return %arg0, %c0_i32 : i32, i32
  }
  func.func @transform_3(%arg0: i32) -> (i32, i32) {
    %c0_i32 = arith.constant 0 : i32
    %c0_i32_0 = arith.constant 0 : i32
    %c0_i32_1 = arith.constant 0 : i32
    return %c0_i32, %c0_i32_0 : i32, i32
  }
  func.func @transform_4(%arg0: i32) -> (i32, i32) {
    %c0_i32 = arith.constant 0 : i32
    %c0_i32_0 = arith.constant 0 : i32
    return %arg0, %c0_i32 : i32, i32
  }
}

module attributes {stable_mosaic.version = 11 : i64} {
  func.func @_matmul_stats_kernel(%arg0: i32, %arg1: memref<256x128xbf16, #tpu.memory_space<vmem>>, %arg2: memref<128x128xbf16, #tpu.memory_space<vmem>>, %arg3: memref<256x128xbf16, #tpu.memory_space<vmem>>, %arg4: memref<8x128xf32, #tpu.memory_space<vmem>>) attributes {dimension_semantics = [#tpu.dimension_semantics<parallel>], iteration_bounds = array<i64: 2>, scalar_prefetch = 0 : i64, scratch_operands = 0 : i64, tpu.core_type = #tpu.core_type<tc>, window_params = [{transform_indices = @transform_0, window_bounds = array<i64: 256, 128>}, {pipeline_mode = #tpu.pipeline_mode<synchronous>, transform_indices = @transform_1, window_bounds = array<i64: 128, 128>}, {transform_indices = @transform_2, window_bounds = array<i64: 256, 128>}, {transform_indices = @transform_3, window_bounds = array<i64: 8, 128>}]} {
    %c0 = arith.constant 0 : index
    %c0_0 = arith.constant 0 : index
    %0 = vector.load %arg1[%c0, %c0_0] : memref<256x128xbf16, #tpu.memory_space<vmem>>, vector<256x128xbf16>
    %c0_1 = arith.constant 0 : index
    %c0_2 = arith.constant 0 : index
    %1 = vector.load %arg2[%c0_1, %c0_2] : memref<128x128xbf16, #tpu.memory_space<vmem>>, vector<128x128xbf16>
    %cst = arith.constant dense<0.000000e+00> : vector<256x128xf32>
    %2 = tpu.matmul %0, %1, %cst {dimension_numbers = #tpu.dot_dimension_numbers<[1], [0], [0], [1], [0, 0, 1, 1], [], []>} : vector<256x128xbf16>, vector<128x128xbf16>, vector<256x128xf32> -> vector<256x128xf32>
    %3 = arith.truncf %2 : vector<256x128xf32> to vector<256x128xbf16>
    %c0_3 = arith.constant 0 : index
    %c0_4 = arith.constant 0 : index
    %4 = vector.load %arg3[%c0_3, %c0_4] : memref<256x128xbf16, #tpu.memory_space<vmem>>, vector<256x128xbf16>
    tpu.vector_store %arg3[%c0_3, %c0_4], %3 {strides = array<i32>} : memref<256x128xbf16, #tpu.memory_space<vmem>>, vector<256x128xbf16>,
    %cst_5 = arith.constant dense<0.000000e+00> : vector<128xf32>
    %5 = vector.multi_reduction <add>, %2, %cst_5 [0] : vector<256x128xf32> to vector<128xf32>
    %6 = vector.shape_cast %5 : vector<128xf32> to vector<1x128xf32>
    %7 = arith.mulf %2, %2 : vector<256x128xf32>
    %cst_6 = arith.constant dense<0.000000e+00> : vector<128xf32>
    %8 = vector.multi_reduction <add>, %7, %cst_6 [0] : vector<256x128xf32> to vector<128xf32>
    %9 = vector.shape_cast %8 : vector<128xf32> to vector<1x128xf32>
    %10 = tpu.iota {dimensions = array<i32: 0>} : vector<8x128xi32>
    %c0_i32 = arith.constant 0 : i32
    %11 = vector.broadcast %c0_i32 : i32 to vector<8x128xi32>
    %12 = arith.cmpi eq, %10, %11 : vector<8x128xi32>
    %cst_7 = arith.constant 0.000000e+00 : f32
    %13 = vector.shape_cast %6 : vector<1x128xf32> to vector<1x128xf32>
    %14 = vector.broadcast %13 : vector<1x128xf32> to vector<8x128xf32>
    %15 = vector.broadcast %cst_7 : f32 to vector<8x128xf32>
    %16 = arith.select %12, %14, %15 : vector<8x128xi1>, vector<8x128xf32>
    %c1_i32 = arith.constant 1 : i32
    %17 = vector.broadcast %c1_i32 : i32 to vector<8x128xi32>
    %18 = arith.cmpi eq, %10, %17 : vector<8x128xi32>
    %cst_8 = arith.constant 0.000000e+00 : f32
    %19 = vector.shape_cast %9 : vector<1x128xf32> to vector<1x128xf32>
    %20 = vector.broadcast %19 : vector<1x128xf32> to vector<8x128xf32>
    %21 = vector.broadcast %cst_8 : f32 to vector<8x128xf32>
    %22 = arith.select %18, %20, %21 : vector<8x128xi1>, vector<8x128xf32>
    %23 = arith.addf %16, %22 : vector<8x128xf32>
    %c0_9 = arith.constant 0 : index
    %c0_10 = arith.constant 0 : index
    %24 = vector.load %arg4[%c0_9, %c0_10] : memref<8x128xf32, #tpu.memory_space<vmem>>, vector<8x128xf32>
    tpu.vector_store %arg4[%c0_9, %c0_10], %23 {strides = array<i32>} : memref<8x128xf32, #tpu.memory_space<vmem>>, vector<8x128xf32>,
    return
  }
  func.func @transform_0(%arg0: i32) -> (i32, i32) {
    %c0_i32 = arith.constant 0 : i32
    %c0_i32_0 = arith.constant 0 : i32
    return %arg0, %c0_i32 : i32, i32
  }
  func.func @transform_1(%arg0: i32) -> (i32, i32) {
    %c0_i32 = arith.constant 0 : i32
    %c0_i32_0 = arith.constant 0 : i32
    %c0_i32_1 = arith.constant 0 : i32
    return %c0_i32, %c0_i32_0 : i32, i32
  }
  func.func @transform_2(%arg0: i32) -> (i32, i32) {
    %c0_i32 = arith.constant 0 : i32
    %c0_i32_0 = arith.constant 0 : i32
    return %arg0, %c0_i32 : i32, i32
  }
  func.func @transform_3(%arg0: i32) -> (i32, i32) {
    %c0_i32 = arith.constant 0 : i32
    %c0_i32_0 = arith.constant 0 : i32
    return %arg0, %c0_i32 : i32, i32
  }
}

module attributes {stable_mosaic.version = 11 : i64} {
  func.func @_bn_act_kernel(%arg0: i32, %arg1: memref<256x128xbf16, #tpu.memory_space<vmem>>, %arg2: memref<8x128xf32, #tpu.memory_space<vmem>>, %arg3: memref<256x128xbf16, #tpu.memory_space<vmem>>) attributes {dimension_semantics = [#tpu.dimension_semantics<parallel>], iteration_bounds = array<i64: 2>, scalar_prefetch = 0 : i64, scratch_operands = 0 : i64, tpu.core_type = #tpu.core_type<tc>, window_params = [{transform_indices = @transform_0, window_bounds = array<i64: 256, 128>}, {pipeline_mode = #tpu.pipeline_mode<synchronous>, transform_indices = @transform_1, window_bounds = array<i64: 8, 128>}, {transform_indices = @transform_2, window_bounds = array<i64: 256, 128>}]} {
    %c0 = arith.constant 0 : index
    %c0_0 = arith.constant 0 : index
    %0 = vector.load %arg2[%c0, %c0_0] : memref<8x128xf32, #tpu.memory_space<vmem>>, vector<8x128xf32>
    %c0_1 = arith.constant 0 : index
    %c0_2 = arith.constant 0 : index
    %1 = vector.load %arg1[%c0_1, %c0_2] : memref<256x128xbf16, #tpu.memory_space<vmem>>, vector<256x128xbf16>
    %2 = arith.extf %1 : vector<256x128xbf16> to vector<256x128xf32>
    %3 = vector.extract_strided_slice %0 {offsets = [0, 0], sizes = [1, 128], strides = [1, 1]} : vector<8x128xf32> to vector<1x128xf32>
    %4 = vector.broadcast %3 : vector<1x128xf32> to vector<256x128xf32>
    %5 = arith.mulf %2, %4 : vector<256x128xf32>
    %6 = vector.extract_strided_slice %0 {offsets = [1, 0], sizes = [1, 128], strides = [1, 1]} : vector<8x128xf32> to vector<1x128xf32>
    %7 = vector.broadcast %6 : vector<1x128xf32> to vector<256x128xf32>
    %8 = arith.addf %5, %7 : vector<256x128xf32>
    %cst = arith.constant 0.000000e+00 : f32
    %9 = vector.broadcast %cst : f32 to vector<256x128xf32>
    %10 = arith.maximumf %8, %9 : vector<256x128xf32>
    %11 = arith.truncf %10 : vector<256x128xf32> to vector<256x128xbf16>
    %c0_3 = arith.constant 0 : index
    %c0_4 = arith.constant 0 : index
    %12 = vector.load %arg3[%c0_3, %c0_4] : memref<256x128xbf16, #tpu.memory_space<vmem>>, vector<256x128xbf16>
    tpu.vector_store %arg3[%c0_3, %c0_4], %11 {strides = array<i32>} : memref<256x128xbf16, #tpu.memory_space<vmem>>, vector<256x128xbf16>,
    return
  }
  func.func @transform_0(%arg0: i32) -> (i32, i32) {
    %c0_i32 = arith.constant 0 : i32
    %c0_i32_0 = arith.constant 0 : i32
    return %arg0, %c0_i32 : i32, i32
  }
  func.func @transform_1(%arg0: i32) -> (i32, i32) {
    %c0_i32 = arith.constant 0 : i32
    %c0_i32_0 = arith.constant 0 : i32
    %c0_i32_1 = arith.constant 0 : i32
    return %c0_i32, %c0_i32_0 : i32, i32
  }
  func.func @transform_2(%arg0: i32) -> (i32, i32) {
    %c0_i32 = arith.constant 0 : i32
    %c0_i32_0 = arith.constant 0 : i32
    return %arg0, %c0_i32 : i32, i32
  }
}

module attributes {stable_mosaic.version = 11 : i64} {
  func.func @_matmul_stats_kernel(%arg0: i32, %arg1: memref<64x1152xbf16, #tpu.memory_space<vmem>>, %arg2: memref<1152x128xbf16, #tpu.memory_space<vmem>>, %arg3: memref<64x128xbf16, #tpu.memory_space<vmem>>, %arg4: memref<8x128xf32, #tpu.memory_space<vmem>>) attributes {dimension_semantics = [#tpu.dimension_semantics<parallel>], iteration_bounds = array<i64: 2>, scalar_prefetch = 0 : i64, scratch_operands = 0 : i64, tpu.core_type = #tpu.core_type<tc>, window_params = [{transform_indices = @transform_0, window_bounds = array<i64: 64, 1152>}, {pipeline_mode = #tpu.pipeline_mode<synchronous>, transform_indices = @transform_1, window_bounds = array<i64: 1152, 128>}, {transform_indices = @transform_2, window_bounds = array<i64: 64, 128>}, {transform_indices = @transform_3, window_bounds = array<i64: 8, 128>}]} {
    %c0 = arith.constant 0 : index
    %c0_0 = arith.constant 0 : index
    %0 = vector.load %arg1[%c0, %c0_0] : memref<64x1152xbf16, #tpu.memory_space<vmem>>, vector<64x1152xbf16>
    %c0_1 = arith.constant 0 : index
    %c0_2 = arith.constant 0 : index
    %1 = vector.load %arg2[%c0_1, %c0_2] : memref<1152x128xbf16, #tpu.memory_space<vmem>>, vector<1152x128xbf16>
    %cst = arith.constant dense<0.000000e+00> : vector<64x128xf32>
    %2 = tpu.matmul %0, %1, %cst {dimension_numbers = #tpu.dot_dimension_numbers<[1], [0], [0], [1], [0, 0, 1, 1], [], []>} : vector<64x1152xbf16>, vector<1152x128xbf16>, vector<64x128xf32> -> vector<64x128xf32>
    %3 = arith.truncf %2 : vector<64x128xf32> to vector<64x128xbf16>
    %c0_3 = arith.constant 0 : index
    %c0_4 = arith.constant 0 : index
    %4 = vector.load %arg3[%c0_3, %c0_4] : memref<64x128xbf16, #tpu.memory_space<vmem>>, vector<64x128xbf16>
    tpu.vector_store %arg3[%c0_3, %c0_4], %3 {strides = array<i32>} : memref<64x128xbf16, #tpu.memory_space<vmem>>, vector<64x128xbf16>,
    %cst_5 = arith.constant dense<0.000000e+00> : vector<128xf32>
    %5 = vector.multi_reduction <add>, %2, %cst_5 [0] : vector<64x128xf32> to vector<128xf32>
    %6 = vector.shape_cast %5 : vector<128xf32> to vector<1x128xf32>
    %7 = arith.mulf %2, %2 : vector<64x128xf32>
    %cst_6 = arith.constant dense<0.000000e+00> : vector<128xf32>
    %8 = vector.multi_reduction <add>, %7, %cst_6 [0] : vector<64x128xf32> to vector<128xf32>
    %9 = vector.shape_cast %8 : vector<128xf32> to vector<1x128xf32>
    %10 = tpu.iota {dimensions = array<i32: 0>} : vector<8x128xi32>
    %c0_i32 = arith.constant 0 : i32
    %11 = vector.broadcast %c0_i32 : i32 to vector<8x128xi32>
    %12 = arith.cmpi eq, %10, %11 : vector<8x128xi32>
    %cst_7 = arith.constant 0.000000e+00 : f32
    %13 = vector.shape_cast %6 : vector<1x128xf32> to vector<1x128xf32>
    %14 = vector.broadcast %13 : vector<1x128xf32> to vector<8x128xf32>
    %15 = vector.broadcast %cst_7 : f32 to vector<8x128xf32>
    %16 = arith.select %12, %14, %15 : vector<8x128xi1>, vector<8x128xf32>
    %c1_i32 = arith.constant 1 : i32
    %17 = vector.broadcast %c1_i32 : i32 to vector<8x128xi32>
    %18 = arith.cmpi eq, %10, %17 : vector<8x128xi32>
    %cst_8 = arith.constant 0.000000e+00 : f32
    %19 = vector.shape_cast %9 : vector<1x128xf32> to vector<1x128xf32>
    %20 = vector.broadcast %19 : vector<1x128xf32> to vector<8x128xf32>
    %21 = vector.broadcast %cst_8 : f32 to vector<8x128xf32>
    %22 = arith.select %18, %20, %21 : vector<8x128xi1>, vector<8x128xf32>
    %23 = arith.addf %16, %22 : vector<8x128xf32>
    %c0_9 = arith.constant 0 : index
    %c0_10 = arith.constant 0 : index
    %24 = vector.load %arg4[%c0_9, %c0_10] : memref<8x128xf32, #tpu.memory_space<vmem>>, vector<8x128xf32>
    tpu.vector_store %arg4[%c0_9, %c0_10], %23 {strides = array<i32>} : memref<8x128xf32, #tpu.memory_space<vmem>>, vector<8x128xf32>,
    return
  }
  func.func @transform_0(%arg0: i32) -> (i32, i32) {
    %c0_i32 = arith.constant 0 : i32
    %c0_i32_0 = arith.constant 0 : i32
    return %arg0, %c0_i32 : i32, i32
  }
  func.func @transform_1(%arg0: i32) -> (i32, i32) {
    %c0_i32 = arith.constant 0 : i32
    %c0_i32_0 = arith.constant 0 : i32
    %c0_i32_1 = arith.constant 0 : i32
    return %c0_i32, %c0_i32_0 : i32, i32
  }
  func.func @transform_2(%arg0: i32) -> (i32, i32) {
    %c0_i32 = arith.constant 0 : i32
    %c0_i32_0 = arith.constant 0 : i32
    return %arg0, %c0_i32 : i32, i32
  }
  func.func @transform_3(%arg0: i32) -> (i32, i32) {
    %c0_i32 = arith.constant 0 : i32
    %c0_i32_0 = arith.constant 0 : i32
    return %arg0, %c0_i32 : i32, i32
  }
}

module attributes {stable_mosaic.version = 11 : i64} {
  func.func @_conv3_sc_kernel(%arg0: i32, %arg1: memref<64x128xbf16, #tpu.memory_space<vmem>>, %arg2: memref<8x128xf32, #tpu.memory_space<vmem>>, %arg3: memref<128x128xbf16, #tpu.memory_space<vmem>>, %arg4: memref<64x128xbf16, #tpu.memory_space<vmem>>, %arg5: memref<128x128xbf16, #tpu.memory_space<vmem>>, %arg6: memref<64x128xbf16, #tpu.memory_space<vmem>>, %arg7: memref<8x128xf32, #tpu.memory_space<vmem>>, %arg8: memref<64x128xbf16, #tpu.memory_space<vmem>>, %arg9: memref<8x128xf32, #tpu.memory_space<vmem>>) attributes {dimension_semantics = [#tpu.dimension_semantics<parallel>], iteration_bounds = array<i64: 2>, scalar_prefetch = 0 : i64, scratch_operands = 0 : i64, tpu.core_type = #tpu.core_type<tc>, window_params = [{transform_indices = @transform_0, window_bounds = array<i64: 64, 128>}, {pipeline_mode = #tpu.pipeline_mode<synchronous>, transform_indices = @transform_1, window_bounds = array<i64: 8, 128>}, {pipeline_mode = #tpu.pipeline_mode<synchronous>, transform_indices = @transform_2, window_bounds = array<i64: 128, 128>}, {transform_indices = @transform_3, window_bounds = array<i64: 64, 128>}, {pipeline_mode = #tpu.pipeline_mode<synchronous>, transform_indices = @transform_4, window_bounds = array<i64: 128, 128>}, {transform_indices = @transform_5, window_bounds = array<i64: 64, 128>}, {transform_indices = @transform_6, window_bounds = array<i64: 8, 128>}, {transform_indices = @transform_7, window_bounds = array<i64: 64, 128>}, {transform_indices = @transform_8, window_bounds = array<i64: 8, 128>}]} {
    %c0 = arith.constant 0 : index
    %c0_0 = arith.constant 0 : index
    %0 = vector.load %arg2[%c0, %c0_0] : memref<8x128xf32, #tpu.memory_space<vmem>>, vector<8x128xf32>
    %c0_1 = arith.constant 0 : index
    %c0_2 = arith.constant 0 : index
    %1 = vector.load %arg1[%c0_1, %c0_2] : memref<64x128xbf16, #tpu.memory_space<vmem>>, vector<64x128xbf16>
    %2 = arith.extf %1 : vector<64x128xbf16> to vector<64x128xf32>
    %3 = vector.extract_strided_slice %0 {offsets = [0, 0], sizes = [1, 128], strides = [1, 1]} : vector<8x128xf32> to vector<1x128xf32>
    %4 = vector.broadcast %3 : vector<1x128xf32> to vector<64x128xf32>
    %5 = arith.mulf %2, %4 : vector<64x128xf32>
    %6 = vector.extract_strided_slice %0 {offsets = [1, 0], sizes = [1, 128], strides = [1, 1]} : vector<8x128xf32> to vector<1x128xf32>
    %7 = vector.broadcast %6 : vector<1x128xf32> to vector<64x128xf32>
    %8 = arith.addf %5, %7 : vector<64x128xf32>
    %cst = arith.constant 0.000000e+00 : f32
    %9 = vector.broadcast %cst : f32 to vector<64x128xf32>
    %10 = arith.maximumf %8, %9 : vector<64x128xf32>
    %11 = arith.truncf %10 : vector<64x128xf32> to vector<64x128xbf16>
    %c0_3 = arith.constant 0 : index
    %c0_4 = arith.constant 0 : index
    %12 = vector.load %arg3[%c0_3, %c0_4] : memref<128x128xbf16, #tpu.memory_space<vmem>>, vector<128x128xbf16>
    %cst_5 = arith.constant dense<0.000000e+00> : vector<64x128xf32>
    %13 = tpu.matmul %11, %12, %cst_5 {dimension_numbers = #tpu.dot_dimension_numbers<[1], [0], [0], [1], [0, 0, 1, 1], [], []>} : vector<64x128xbf16>, vector<128x128xbf16>, vector<64x128xf32> -> vector<64x128xf32>
    %14 = arith.truncf %13 : vector<64x128xf32> to vector<64x128xbf16>
    %c0_6 = arith.constant 0 : index
    %c0_7 = arith.constant 0 : index
    %15 = vector.load %arg6[%c0_6, %c0_7] : memref<64x128xbf16, #tpu.memory_space<vmem>>, vector<64x128xbf16>
    tpu.vector_store %arg6[%c0_6, %c0_7], %14 {strides = array<i32>} : memref<64x128xbf16, #tpu.memory_space<vmem>>, vector<64x128xbf16>,
    %cst_8 = arith.constant dense<0.000000e+00> : vector<128xf32>
    %16 = vector.multi_reduction <add>, %13, %cst_8 [0] : vector<64x128xf32> to vector<128xf32>
    %17 = vector.shape_cast %16 : vector<128xf32> to vector<1x128xf32>
    %18 = arith.mulf %13, %13 : vector<64x128xf32>
    %cst_9 = arith.constant dense<0.000000e+00> : vector<128xf32>
    %19 = vector.multi_reduction <add>, %18, %cst_9 [0] : vector<64x128xf32> to vector<128xf32>
    %20 = vector.shape_cast %19 : vector<128xf32> to vector<1x128xf32>
    %21 = tpu.iota {dimensions = array<i32: 0>} : vector<8x128xi32>
    %c0_i32 = arith.constant 0 : i32
    %22 = vector.broadcast %c0_i32 : i32 to vector<8x128xi32>
    %23 = arith.cmpi eq, %21, %22 : vector<8x128xi32>
    %cst_10 = arith.constant 0.000000e+00 : f32
    %24 = vector.shape_cast %17 : vector<1x128xf32> to vector<1x128xf32>
    %25 = vector.broadcast %24 : vector<1x128xf32> to vector<8x128xf32>
    %26 = vector.broadcast %cst_10 : f32 to vector<8x128xf32>
    %27 = arith.select %23, %25, %26 : vector<8x128xi1>, vector<8x128xf32>
    %c1_i32 = arith.constant 1 : i32
    %28 = vector.broadcast %c1_i32 : i32 to vector<8x128xi32>
    %29 = arith.cmpi eq, %21, %28 : vector<8x128xi32>
    %cst_11 = arith.constant 0.000000e+00 : f32
    %30 = vector.shape_cast %20 : vector<1x128xf32> to vector<1x128xf32>
    %31 = vector.broadcast %30 : vector<1x128xf32> to vector<8x128xf32>
    %32 = vector.broadcast %cst_11 : f32 to vector<8x128xf32>
    %33 = arith.select %29, %31, %32 : vector<8x128xi1>, vector<8x128xf32>
    %34 = arith.addf %27, %33 : vector<8x128xf32>
    %c0_12 = arith.constant 0 : index
    %c0_13 = arith.constant 0 : index
    %35 = vector.load %arg7[%c0_12, %c0_13] : memref<8x128xf32, #tpu.memory_space<vmem>>, vector<8x128xf32>
    tpu.vector_store %arg7[%c0_12, %c0_13], %34 {strides = array<i32>} : memref<8x128xf32, #tpu.memory_space<vmem>>, vector<8x128xf32>,
    %c0_14 = arith.constant 0 : index
    %c0_15 = arith.constant 0 : index
    %36 = vector.load %arg4[%c0_14, %c0_15] : memref<64x128xbf16, #tpu.memory_space<vmem>>, vector<64x128xbf16>
    %c0_16 = arith.constant 0 : index
    %c0_17 = arith.constant 0 : index
    %37 = vector.load %arg5[%c0_16, %c0_17] : memref<128x128xbf16, #tpu.memory_space<vmem>>, vector<128x128xbf16>
    %cst_18 = arith.constant dense<0.000000e+00> : vector<64x128xf32>
    %38 = tpu.matmul %36, %37, %cst_18 {dimension_numbers = #tpu.dot_dimension_numbers<[1], [0], [0], [1], [0, 0, 1, 1], [], []>} : vector<64x128xbf16>, vector<128x128xbf16>, vector<64x128xf32> -> vector<64x128xf32>
    %39 = arith.truncf %38 : vector<64x128xf32> to vector<64x128xbf16>
    %c0_19 = arith.constant 0 : index
    %c0_20 = arith.constant 0 : index
    %40 = vector.load %arg8[%c0_19, %c0_20] : memref<64x128xbf16, #tpu.memory_space<vmem>>, vector<64x128xbf16>
    tpu.vector_store %arg8[%c0_19, %c0_20], %39 {strides = array<i32>} : memref<64x128xbf16, #tpu.memory_space<vmem>>, vector<64x128xbf16>,
    %cst_21 = arith.constant dense<0.000000e+00> : vector<128xf32>
    %41 = vector.multi_reduction <add>, %38, %cst_21 [0] : vector<64x128xf32> to vector<128xf32>
    %42 = vector.shape_cast %41 : vector<128xf32> to vector<1x128xf32>
    %43 = arith.mulf %38, %38 : vector<64x128xf32>
    %cst_22 = arith.constant dense<0.000000e+00> : vector<128xf32>
    %44 = vector.multi_reduction <add>, %43, %cst_22 [0] : vector<64x128xf32> to vector<128xf32>
    %45 = vector.shape_cast %44 : vector<128xf32> to vector<1x128xf32>
    %46 = tpu.iota {dimensions = array<i32: 0>} : vector<8x128xi32>
    %c0_i32_23 = arith.constant 0 : i32
    %47 = vector.broadcast %c0_i32_23 : i32 to vector<8x128xi32>
    %48 = arith.cmpi eq, %46, %47 : vector<8x128xi32>
    %cst_24 = arith.constant 0.000000e+00 : f32
    %49 = vector.shape_cast %42 : vector<1x128xf32> to vector<1x128xf32>
    %50 = vector.broadcast %49 : vector<1x128xf32> to vector<8x128xf32>
    %51 = vector.broadcast %cst_24 : f32 to vector<8x128xf32>
    %52 = arith.select %48, %50, %51 : vector<8x128xi1>, vector<8x128xf32>
    %c1_i32_25 = arith.constant 1 : i32
    %53 = vector.broadcast %c1_i32_25 : i32 to vector<8x128xi32>
    %54 = arith.cmpi eq, %46, %53 : vector<8x128xi32>
    %cst_26 = arith.constant 0.000000e+00 : f32
    %55 = vector.shape_cast %45 : vector<1x128xf32> to vector<1x128xf32>
    %56 = vector.broadcast %55 : vector<1x128xf32> to vector<8x128xf32>
    %57 = vector.broadcast %cst_26 : f32 to vector<8x128xf32>
    %58 = arith.select %54, %56, %57 : vector<8x128xi1>, vector<8x128xf32>
    %59 = arith.addf %52, %58 : vector<8x128xf32>
    %c0_27 = arith.constant 0 : index
    %c0_28 = arith.constant 0 : index
    %60 = vector.load %arg9[%c0_27, %c0_28] : memref<8x128xf32, #tpu.memory_space<vmem>>, vector<8x128xf32>
    tpu.vector_store %arg9[%c0_27, %c0_28], %59 {strides = array<i32>} : memref<8x128xf32, #tpu.memory_space<vmem>>, vector<8x128xf32>,
    return
  }
  func.func @transform_0(%arg0: i32) -> (i32, i32) {
    %c0_i32 = arith.constant 0 : i32
    %c0_i32_0 = arith.constant 0 : i32
    return %arg0, %c0_i32 : i32, i32
  }
  func.func @transform_1(%arg0: i32) -> (i32, i32) {
    %c0_i32 = arith.constant 0 : i32
    %c0_i32_0 = arith.constant 0 : i32
    %c0_i32_1 = arith.constant 0 : i32
    return %c0_i32, %c0_i32_0 : i32, i32
  }
  func.func @transform_2(%arg0: i32) -> (i32, i32) {
    %c0_i32 = arith.constant 0 : i32
    %c0_i32_0 = arith.constant 0 : i32
    %c0_i32_1 = arith.constant 0 : i32
    return %c0_i32, %c0_i32_0 : i32, i32
  }
  func.func @transform_3(%arg0: i32) -> (i32, i32) {
    %c0_i32 = arith.constant 0 : i32
    %c0_i32_0 = arith.constant 0 : i32
    return %arg0, %c0_i32 : i32, i32
  }
  func.func @transform_4(%arg0: i32) -> (i32, i32) {
    %c0_i32 = arith.constant 0 : i32
    %c0_i32_0 = arith.constant 0 : i32
    %c0_i32_1 = arith.constant 0 : i32
    return %c0_i32, %c0_i32_0 : i32, i32
  }
  func.func @transform_5(%arg0: i32) -> (i32, i32) {
    %c0_i32 = arith.constant 0 : i32
    %c0_i32_0 = arith.constant 0 : i32
    return %arg0, %c0_i32 : i32, i32
  }
  func.func @transform_6(%arg0: i32) -> (i32, i32) {
    %c0_i32 = arith.constant 0 : i32
    %c0_i32_0 = arith.constant 0 : i32
    return %arg0, %c0_i32 : i32, i32
  }
  func.func @transform_7(%arg0: i32) -> (i32, i32) {
    %c0_i32 = arith.constant 0 : i32
    %c0_i32_0 = arith.constant 0 : i32
    return %arg0, %c0_i32 : i32, i32
  }
  func.func @transform_8(%arg0: i32) -> (i32, i32) {
    %c0_i32 = arith.constant 0 : i32
    %c0_i32_0 = arith.constant 0 : i32
    return %arg0, %c0_i32 : i32, i32
  }
}

module attributes {stable_mosaic.version = 11 : i64} {
  func.func @_bn_add_relu_kernel(%arg0: i32, %arg1: memref<64x128xbf16, #tpu.memory_space<vmem>>, %arg2: memref<8x128xf32, #tpu.memory_space<vmem>>, %arg3: memref<64x128xbf16, #tpu.memory_space<vmem>>, %arg4: memref<8x128xf32, #tpu.memory_space<vmem>>, %arg5: memref<64x128xf32, #tpu.memory_space<vmem>>) attributes {dimension_semantics = [#tpu.dimension_semantics<parallel>], iteration_bounds = array<i64: 2>, scalar_prefetch = 0 : i64, scratch_operands = 0 : i64, tpu.core_type = #tpu.core_type<tc>, window_params = [{transform_indices = @transform_0, window_bounds = array<i64: 64, 128>}, {pipeline_mode = #tpu.pipeline_mode<synchronous>, transform_indices = @transform_1, window_bounds = array<i64: 8, 128>}, {transform_indices = @transform_2, window_bounds = array<i64: 64, 128>}, {pipeline_mode = #tpu.pipeline_mode<synchronous>, transform_indices = @transform_3, window_bounds = array<i64: 8, 128>}, {transform_indices = @transform_4, window_bounds = array<i64: 64, 128>}]} {
    %c0 = arith.constant 0 : index
    %c0_0 = arith.constant 0 : index
    %0 = vector.load %arg2[%c0, %c0_0] : memref<8x128xf32, #tpu.memory_space<vmem>>, vector<8x128xf32>
    %c0_1 = arith.constant 0 : index
    %c0_2 = arith.constant 0 : index
    %1 = vector.load %arg1[%c0_1, %c0_2] : memref<64x128xbf16, #tpu.memory_space<vmem>>, vector<64x128xbf16>
    %2 = arith.extf %1 : vector<64x128xbf16> to vector<64x128xf32>
    %3 = vector.extract_strided_slice %0 {offsets = [0, 0], sizes = [1, 128], strides = [1, 1]} : vector<8x128xf32> to vector<1x128xf32>
    %4 = vector.broadcast %3 : vector<1x128xf32> to vector<64x128xf32>
    %5 = arith.mulf %2, %4 : vector<64x128xf32>
    %6 = vector.extract_strided_slice %0 {offsets = [1, 0], sizes = [1, 128], strides = [1, 1]} : vector<8x128xf32> to vector<1x128xf32>
    %7 = vector.broadcast %6 : vector<1x128xf32> to vector<64x128xf32>
    %8 = arith.addf %5, %7 : vector<64x128xf32>
    %c0_3 = arith.constant 0 : index
    %c0_4 = arith.constant 0 : index
    %9 = vector.load %arg4[%c0_3, %c0_4] : memref<8x128xf32, #tpu.memory_space<vmem>>, vector<8x128xf32>
    %c0_5 = arith.constant 0 : index
    %c0_6 = arith.constant 0 : index
    %10 = vector.load %arg3[%c0_5, %c0_6] : memref<64x128xbf16, #tpu.memory_space<vmem>>, vector<64x128xbf16>
    %11 = arith.extf %10 : vector<64x128xbf16> to vector<64x128xf32>
    %12 = vector.extract_strided_slice %9 {offsets = [0, 0], sizes = [1, 128], strides = [1, 1]} : vector<8x128xf32> to vector<1x128xf32>
    %13 = vector.broadcast %12 : vector<1x128xf32> to vector<64x128xf32>
    %14 = arith.mulf %11, %13 : vector<64x128xf32>
    %15 = vector.extract_strided_slice %9 {offsets = [1, 0], sizes = [1, 128], strides = [1, 1]} : vector<8x128xf32> to vector<1x128xf32>
    %16 = vector.broadcast %15 : vector<1x128xf32> to vector<64x128xf32>
    %17 = arith.addf %14, %16 : vector<64x128xf32>
    %18 = arith.addf %8, %17 : vector<64x128xf32>
    %cst = arith.constant 0.000000e+00 : f32
    %19 = vector.broadcast %cst : f32 to vector<64x128xf32>
    %20 = arith.maximumf %18, %19 : vector<64x128xf32>
    %c0_7 = arith.constant 0 : index
    %c0_8 = arith.constant 0 : index
    %21 = vector.load %arg5[%c0_7, %c0_8] : memref<64x128xf32, #tpu.memory_space<vmem>>, vector<64x128xf32>
    tpu.vector_store %arg5[%c0_7, %c0_8], %20 {strides = array<i32>} : memref<64x128xf32, #tpu.memory_space<vmem>>, vector<64x128xf32>,
    return
  }
  func.func @transform_0(%arg0: i32) -> (i32, i32) {
    %c0_i32 = arith.constant 0 : i32
    %c0_i32_0 = arith.constant 0 : i32
    return %arg0, %c0_i32 : i32, i32
  }
  func.func @transform_1(%arg0: i32) -> (i32, i32) {
    %c0_i32 = arith.constant 0 : i32
    %c0_i32_0 = arith.constant 0 : i32
    %c0_i32_1 = arith.constant 0 : i32
    return %c0_i32, %c0_i32_0 : i32, i32
  }
  func.func @transform_2(%arg0: i32) -> (i32, i32) {
    %c0_i32 = arith.constant 0 : i32
    %c0_i32_0 = arith.constant 0 : i32
    return %arg0, %c0_i32 : i32, i32
  }
  func.func @transform_3(%arg0: i32) -> (i32, i32) {
    %c0_i32 = arith.constant 0 : i32
    %c0_i32_0 = arith.constant 0 : i32
    %c0_i32_1 = arith.constant 0 : i32
    return %c0_i32, %c0_i32_0 : i32, i32
  }
  func.func @transform_4(%arg0: i32) -> (i32, i32) {
    %c0_i32 = arith.constant 0 : i32
    %c0_i32_0 = arith.constant 0 : i32
    return %arg0, %c0_i32 : i32, i32
  }
}

</mosaic_0001>

<llo_original>
// kernel: bottleneck_forward.5
$region0: #{bottleneck_forward.5}
  #allocation0 [shape = 'u32[]', space=smem, size = 0x4, offset = 0x4, fixed_abs, tag = 'smem constant byte address 0x4 - core index']
  #allocation1 [shape = 'u32[144,128]{1,0:T(1,128)}', space=vmem, size = 0x12000, scoped, tag = 'internal scratch']
  %s0 = inlined_call_operand.vmem [shape: bf16[512,128], index: 0, kind: input, shape index: {}]
  %s1 = inlined_call_operand.vmem [shape: bf16[128,128], index: 1, kind: input, shape index: {}]
  %s2 = inlined_call_operand.vmem [shape: bf16[512,128], index: 2, kind: output, shape index: {0}]
  %s3 = inlined_call_operand.vmem [shape: f32[16,128], index: 3, kind: output, shape index: {1}]
  %4 = xla_tuple %s2, %s3
  %s5 = sld [smem:[#allocation0]]
  $region49: #{bottleneck_forward.5} parent=0
    _
  %s7 = ssub.s32 1, %s5
  %s8 = scalar_select 0, %s7, %s5
  loop: start=0, step=1, limit=4
  $region2: #{bottleneck_forward.5} parent=0 // loop_pre_header
    _
  $region3: #{bottleneck_forward.5} parent=0 // loop_header
    %s10 = sphi 0, %s14
    %p11 = scmp.ge.s32.totalorder %s10, 4
    %s20 = sphi 0, %s22
    %s23 = sphi 0, %s20
    %s24 = sphi 0, %s23
    %s40 = sphi 0, %s24
    %s44 = sphi 0, %s44
    %s46 = sphi 0, %s44
    %s47 = sphi 0, %s46
    %s61 = sphi 0, %s47
    %s67 = sphi 0, %s69
    %s70 = sphi 0, %s67
    %s71 = sphi 0, %s70
    %s87 = sphi 0, %s71
    %s93 = sphi 0, %s95
    %s96 = sphi 0, %s93
    %s97 = sphi 0, %s96
    %s113 = sphi 0, %s97
  $region4: #{bottleneck_forward.5} parent=0 // loop_header_branch
    %13 = sbr.rel (%p11) target = $region8
  $region5: #{bottleneck_forward.5} parent=0 // loop_body
    %s15 = ssub.s32 %s10, 1
    %s16 = ssub.s32 %s10, 2
    %s17 = sadd.s32 %s10, 1
    %s18 = ssub.s32 %s10, %s17
    %p19 = scmp.eq.s32.totalorder %s18, 0
    %s21 = sadd.s32 %s20, 1
    %s22 = scalar_select %p19, %s20, %s21
    %p25 = pneg %p19
    %p26 = scmp.eq.s32.totalorder %s10, 1
    %p27 = por %p25, %p26
    %p28 = scmp.ne.s32.totalorder %s20, %s23
    %p29 = scmp.eq.s32.totalorder %s10, 0
    %p30 = por %p28, %p29
    %p31 = scmp.ne.s32.totalorder %s20, %s23
    %p32 = scmp.eq.s32.totalorder %s15, 1
    %p33 = por %p31, %p32
    %p34 = scmp.ne.s32.totalorder %s23, %s24
    %p35 = scmp.eq.s32.totalorder %s15, 0
    %p36 = por %p34, %p35
    %p37 = scmp.ne.s32.totalorder %s23, %s24
    %p38 = scmp.eq.s32.totalorder %s16, 1
    %p39 = por %p37, %p38
    %p41 = scmp.ne.s32.totalorder %s24, %s40
    %p42 = scmp.eq.s32.totalorder %s16, 0
    %p43 = por %p41, %p42
    %s45 = sadd.s32 %s44, 1
    %p48 = scmp.eq.s32.totalorder %s10, 1
    %p49 = scmp.ne.s32.totalorder %s44, %s46
    %p50 = scmp.eq.s32.totalorder %s10, 0
    %p51 = por %p49, %p50
    %p52 = scmp.ne.s32.totalorder %s44, %s46
    %p53 = scmp.eq.s32.totalorder %s15, 1
    %p54 = por %p52, %p53
    %p55 = scmp.ne.s32.totalorder %s46, %s47
    %p56 = scmp.eq.s32.totalorder %s15, 0
    %p57 = por %p55, %p56
    %p58 = scmp.ne.s32.totalorder %s46, %s47
    %p59 = scmp.eq.s32.totalorder %s16, 1
    %p60 = por %p58, %p59
    %p62 = scmp.ne.s32.totalorder %s47, %s61
    %p63 = scmp.eq.s32.totalorder %s16, 0
    %p64 = por %p62, %p63
    %s65 = ssub.s32 %s10, %s17
    %p66 = scmp.eq.s32.totalorder %s65, 0
    %s68 = sadd.s32 %s67, 1
    %s69 = scalar_select %p66, %s67, %s68
    %p72 = pneg %p66
    %p73 = scmp.eq.s32.totalorder %s10, 1
    %p74 = por %p72, %p73
    %p75 = scmp.ne.s32.totalorder %s67, %s70
    %p76 = scmp.eq.s32.totalorder %s10, 0
    %p77 = por %p75, %p76
    %p78 = scmp.ne.s32.totalorder %s67, %s70
    %p79 = scmp.eq.s32.totalorder %s15, 1
    %p80 = por %p78, %p79
    %p81 = scmp.ne.s32.totalorder %s70, %s71
    %p82 = scmp.eq.s32.totalorder %s15, 0
    %p83 = por %p81, %p82
    %p84 = scmp.ne.s32.totalorder %s70, %s71
    %p85 = scmp.eq.s32.totalorder %s16, 1
    %p86 = por %p84, %p85
    %p88 = scmp.ne.s32.totalorder %s71, %s87
    %p89 = scmp.eq.s32.totalorder %s16, 0
    %p90 = por %p88, %p89
    %s91 = ssub.s32 %s10, %s17
    %p92 = scmp.eq.s32.totalorder %s91, 0
    %s94 = sadd.s32 %s93, 1
    %s95 = scalar_select %p92, %s93, %s94
    %p98 = pneg %p92
    %p99 = scmp.eq.s32.totalorder %s10, 1
    %p100 = por %p98, %p99
    %p101 = scmp.ne.s32.totalorder %s93, %s96
    %p102 = scmp.eq.s32.totalorder %s10, 0
    %p103 = por %p101, %p102
    %p104 = scmp.ne.s32.totalorder %s93, %s96
    %p105 = scmp.eq.s32.totalorder %s15, 1
    %p106 = por %p104, %p105
    %p107 = scmp.ne.s32.totalorder %s96, %s97
    %p108 = scmp.eq.s32.totalorder %s15, 0
    %p109 = por %p107, %p108
    %p110 = scmp.ne.s32.totalorder %s96, %s97
    %p111 = scmp.eq.s32.totalorder %s16, 1
    %p112 = por %p110, %p111
    %p114 = scmp.ne.s32.totalorder %s97, %s113
    %p115 = scmp.eq.s32.totalorder %s16, 0
    %p116 = por %p114, %p115
    %p117 = scmp.le.s32.totalorder 1, %s10
    %p118 = scmp.lt.s32.totalorder %s10, 3
    %p119 = pnand %p117, %p118
    %p120 = pneg %p119
    // Predicated region
    $region9: #{bottleneck_forward.5} parent=5 // pred_check
      _
    $region10: #{bottleneck_forward.5} parent=5 // pred_check_branch
      %122 = sbr.rel (%p119) target = $region12
    $region11: #{bottleneck_forward.5} parent=5 // pred_region
      %s123 = ssub.s32 %s10, 1
      // Predicated region
      $region13: #{bottleneck_forward.5} parent=11 // pred_check
        %p124 = pneg %p57
      $region14: #{bottleneck_forward.5} parent=11 // pred_check_branch
        %126 = sbr.rel (%p124) target = $region16
      $region15: #{bottleneck_forward.5} parent=11 // pred_region
        _
      $region16: #{bottleneck_forward.5} parent=11 // pred_fallthru
        _
    $region12: #{bottleneck_forward.5} parent=5 // pred_fallthru
      _
    %p127 = scmp.lt.s32.totalorder %s10, 2
    // Predicated region
    $region17: #{bottleneck_forward.5} parent=5 // pred_check
      %p128 = pneg %p127
    $region18: #{bottleneck_forward.5} parent=5 // pred_check_branch
      %130 = sbr.rel (%p128) target = $region20
    $region19: #{bottleneck_forward.5} parent=5 // pred_region
      // Predicated region
      $region21: #{bottleneck_forward.5} parent=19 // pred_check
        %p131 = pneg %p30
      $region22: #{bottleneck_forward.5} parent=19 // pred_check_branch
        %133 = sbr.rel (%p131) target = $region24
      $region23: #{bottleneck_forward.5} parent=19 // pred_region
        %s134 = smul.u32 32, %s10
        %p135 = scmp.lt.s32.totalorder %s134, 63
        %s136 = scalar_select %p135, %s134, 63
        %s137 = smul.addr %s136, 4
        %s138 = scalar_lea.vmem %s0, %s137
        %s139 = smul.u32 32, %s10
      $region24: #{bottleneck_forward.5} parent=19 // pred_fallthru
        _
    $region20: #{bottleneck_forward.5} parent=5 // pred_fallthru
      _
    %p140 = scmp.le.s32.totalorder 1, %s10
    %p141 = scmp.lt.s32.totalorder %s10, 3
    %p142 = pnand %p140, %p141
    %p143 = pneg %p142
    // Predicated region
    $region25: #{bottleneck_forward.5} parent=5 // pred_check
      _
    $region26: #{bottleneck_forward.5} parent=5 // pred_check_branch
      %145 = sbr.rel (%p142) target = $region28
    $region27: #{bottleneck_forward.5} parent=5 // pred_region
      %s146 = ssub.s32 %s10, 1
      %s147 = smul.u32 32, %s15
      %p148 = scmp.lt.s32.totalorder %s147, 63
      %s149 = scalar_select %p148, %s147, 63
      %s150 = smul.addr %s149, 4
      %s151 = scalar_lea.vmem %s0, %s150
      %p152 = pneg %p36
      %p153 = pneg %p33
      %p154 = pneg %p57
      %p155 = pneg %p54
      %p156 = pneg %p83
      %p157 = pneg %p80
      %s158 = smul.u32 32, %s15
      %p159 = scmp.lt.s32.totalorder %s158, 63
      %s160 = scalar_select %p159, %s158, 63
      %s161 = smul.addr %s160, 4
      %s162 = scalar_lea.vmem %s2, %s161
      %p163 = pneg %p109
      %p164 = pneg %p106
      %p165 = scmp.lt.s32.totalorder %s15, 1
      %s166 = scalar_select %p165, %s15, 1
      %s167 = smul.addr %s166, 8
      %s168 = scalar_lea.vmem %s3, %s167
      %s169 = smul.u32 32, %s15
      %p170 = scmp.lt.s32.totalorder %s169, 63
      %s171 = scalar_select %p170, %s169, 63
      %s172 = smul.addr %s171, 4
      %s173 = scalar_lea.vmem %s0, %s172
      %s174 = smul.u32 32, %s15
      %s175 = smul.u32 32, %s15
      %p176 = scmp.lt.s32.totalorder %s175, 63
      %s177 = scalar_select %p176, %s175, 63
      %s178 = smul.addr %s177, 4
      %s179 = scalar_lea.vmem %s2, %s178
      %s180 = smul.u32 32, %s15
      %p181 = scmp.lt.s32.totalorder %s15, 1
      %s182 = scalar_select %p181, %s15, 1
      %s183 = smul.addr %s182, 8
      %s184 = scalar_lea.vmem %s3, %s183
      %v186 = vld [vmem:[%s173] sm:$0xf]
      %v187 = vld [vmem:[%s173 + $0x4] sm:$0xf]
      %v188 = vld [vmem:[%s173 + $0x8] sm:$0xf]
      %v189 = vld [vmem:[%s173 + $0xc] sm:$0xf]
      %v190 = vld [vmem:[%s173 + $0x10] sm:$0xf]
      %v191 = vld [vmem:[%s173 + $0x14] sm:$0xf]
      %v192 = vld [vmem:[%s173 + $0x18] sm:$0xf]
      %v193 = vld [vmem:[%s173 + $0x1c] sm:$0xf]
      %v194 = vld [vmem:[%s173 + $0x20] sm:$0xf]
      %v195 = vld [vmem:[%s173 + $0x24] sm:$0xf]
      %v196 = vld [vmem:[%s173 + $0x28] sm:$0xf]
      %v197 = vld [vmem:[%s173 + $0x2c] sm:$0xf]
      %v198 = vld [vmem:[%s173 + $0x30] sm:$0xf]
      %v199 = vld [vmem:[%s173 + $0x34] sm:$0xf]
      %v200 = vld [vmem:[%s173 + $0x38] sm:$0xf]
      %v201 = vld [vmem:[%s173 + $0x3c] sm:$0xf]
      %v202 = vld [vmem:[%s173 + $0x40] sm:$0xf]
      %v203 = vld [vmem:[%s173 + $0x44] sm:$0xf]
      %v204 = vld [vmem:[%s173 + $0x48] sm:$0xf]
      %v205 = vld [vmem:[%s173 + $0x4c] sm:$0xf]
      %v206 = vld [vmem:[%s173 + $0x50] sm:$0xf]
      %v207 = vld [vmem:[%s173 + $0x54] sm:$0xf]
      %v208 = vld [vmem:[%s173 + $0x58] sm:$0xf]
      %v209 = vld [vmem:[%s173 + $0x5c] sm:$0xf]
      %v210 = vld [vmem:[%s173 + $0x60] sm:$0xf]
      %v211 = vld [vmem:[%s173 + $0x64] sm:$0xf]
      %v212 = vld [vmem:[%s173 + $0x68] sm:$0xf]
      %v213 = vld [vmem:[%s173 + $0x6c] sm:$0xf]
      %v214 = vld [vmem:[%s173 + $0x70] sm:$0xf]
      %v215 = vld [vmem:[%s173 + $0x74] sm:$0xf]
      %v216 = vld [vmem:[%s173 + $0x78] sm:$0xf]
      %v217 = vld [vmem:[%s173 + $0x7c] sm:$0xf]
      %v218 = vld [vmem:[%s1] sm:$0xf]
      %v219 = vld [vmem:[%s1 + $0x4] sm:$0xf]
      %v220 = vld [vmem:[%s1 + $0x8] sm:$0xf]
      %v221 = vld [vmem:[%s1 + $0xc] sm:$0xf]
      %v222 = vld [vmem:[%s1 + $0x10] sm:$0xf]
      %v223 = vld [vmem:[%s1 + $0x14] sm:$0xf]
      %v224 = vld [vmem:[%s1 + $0x18] sm:$0xf]
      %v225 = vld [vmem:[%s1 + $0x1c] sm:$0xf]
      %v226 = vld [vmem:[%s1 + $0x20] sm:$0xf]
      %v227 = vld [vmem:[%s1 + $0x24] sm:$0xf]
      %v228 = vld [vmem:[%s1 + $0x28] sm:$0xf]
      %v229 = vld [vmem:[%s1 + $0x2c] sm:$0xf]
      %v230 = vld [vmem:[%s1 + $0x30] sm:$0xf]
      %v231 = vld [vmem:[%s1 + $0x34] sm:$0xf]
      %v232 = vld [vmem:[%s1 + $0x38] sm:$0xf]
      %v233 = vld [vmem:[%s1 + $0x3c] sm:$0xf]
      %v266 = vunpack.c.l.b16 %v186
      %v267 = vunpack.c.l.b16 %v187
      %v268 = vunpack.c.l.b16 %v188
      %v269 = vunpack.c.l.b16 %v189
      %v270 = vunpack.c.l.b16 %v190
      %v271 = vunpack.c.l.b16 %v191
      %v272 = vunpack.c.l.b16 %v192
      %v273 = vunpack.c.l.b16 %v193
      %v274 = vunpack.c.l.b16 %v194
      %v275 = vunpack.c.l.b16 %v195
      %v276 = vunpack.c.l.b16 %v196
      %v277 = vunpack.c.l.b16 %v197
      %v278 = vunpack.c.l.b16 %v198
      %v279 = vunpack.c.l.b16 %v199
      %v280 = vunpack.c.l.b16 %v200
      %v281 = vunpack.c.l.b16 %v201
      %v282 = vunpack.c.l.b16 %v202
      %v283 = vunpack.c.l.b16 %v203
      %v284 = vunpack.c.l.b16 %v204
      %v285 = vunpack.c.l.b16 %v205
      %v286 = vunpack.c.l.b16 %v206
      %v287 = vunpack.c.l.b16 %v207
      %v288 = vunpack.c.l.b16 %v208
      %v289 = vunpack.c.l.b16 %v209
      %v290 = vunpack.c.l.b16 %v210
      %v291 = vunpack.c.l.b16 %v211
      %v292 = vunpack.c.l.b16 %v212
      %v293 = vunpack.c.l.b16 %v213
      %v294 = vunpack.c.l.b16 %v214
      %v295 = vunpack.c.l.b16 %v215
      %v296 = vunpack.c.l.b16 %v216
      %v297 = vunpack.c.l.b16 %v217
      %v298 = vpack.c.b16 %v267, %v266
      %v299 = vpack.c.b16 %v269, %v268
      %v300 = vpack.c.b16 %v271, %v270
      %v301 = vpack.c.b16 %v273, %v272
      %v302 = vpack.c.b16 %v275, %v274
      %v303 = vpack.c.b16 %v277, %v276
      %v304 = vpack.c.b16 %v279, %v278
      %v305 = vpack.c.b16 %v281, %v280
      %v306 = vpack.c.b16 %v283, %v282
      %v307 = vpack.c.b16 %v285, %v284
      %v308 = vpack.c.b16 %v287, %v286
      %v309 = vpack.c.b16 %v289, %v288
      %v310 = vpack.c.b16 %v291, %v290
      %v311 = vpack.c.b16 %v293, %v292
      %v312 = vpack.c.b16 %v295, %v294
      %v313 = vpack.c.b16 %v297, %v296
      %v346 = vunpack.c.l.b16 %v218
      %v347 = vunpack.c.l.b16 %v219
      %v348 = vunpack.c.l.b16 %v220
      %v349 = vunpack.c.l.b16 %v221
      %v350 = vunpack.c.l.b16 %v222
      %v351 = vunpack.c.l.b16 %v223
      %v352 = vunpack.c.l.b16 %v224
      %v353 = vunpack.c.l.b16 %v225
      %v354 = vunpack.c.l.b16 %v226
      %v355 = vunpack.c.l.b16 %v227
      %v356 = vunpack.c.l.b16 %v228
      %v357 = vunpack.c.l.b16 %v229
      %v358 = vunpack.c.l.b16 %v230
      %v359 = vunpack.c.l.b16 %v231
      %v360 = vunpack.c.l.b16 %v232
      %v361 = vunpack.c.l.b16 %v233
      %v362 = vpack.c.b16 %v347, %v346
      %v363 = vpack.c.b16 %v349, %v348
      %v364 = vpack.c.b16 %v351, %v350
      %v365 = vpack.c.b16 %v353, %v352
      %v366 = vpack.c.b16 %v355, %v354
      %v367 = vpack.c.b16 %v357, %v356
      %v368 = vpack.c.b16 %v359, %v358
      %v369 = vpack.c.b16 %v361, %v360
      %378 = vmatprep.subr.bf16.mxu0 0
      %379 = vmatpush1.bf16.msra.mxu0 %v362
      %380 = vmatprep.subr.bf16.mxu0 0
      %381 = vmatpush1.bf16.msra.mxu0 %v363
      %382 = vmatprep.subr.bf16.mxu0 0
      %383 = vmatpush1.bf16.msra.mxu0 %v364
      %384 = vmatprep.subr.bf16.mxu0 0
      %385 = vmatpush1.bf16.msra.mxu0 %v365
      %386 = vmatprep.subr.bf16.mxu0 0
      %387 = vmatpush1.bf16.msra.mxu0 %v366
      %388 = vmatprep.subr.bf16.mxu0 0
      %389 = vmatpush1.bf16.msra.mxu0 %v367
      %390 = vmatprep.subr.bf16.mxu0 0
      %391 = vmatpush1.bf16.msra.mxu0 %v368
      %392 = vmatprep.subr.bf16.mxu0 0
      %393 = vmatpush1.bf16.msra.mxu0 %v369
      %394 = vmatprep.subr.bf16.mxu0 0
      %395 = vmatpush1.bf16.msra.mxu0 0
      %396 = vmatprep.subr.bf16.mxu0 0
      %397 = vmatpush1.bf16.msra.mxu0 0
      %398 = vmatprep.subr.bf16.mxu0 0
      %399 = vmatpush1.bf16.msra.mxu0 0
      %400 = vmatprep.subr.bf16.mxu0 0
      %401 = vmatpush1.bf16.msra.mxu0 0
      %402 = vmatprep.subr.bf16.mxu0 0
      %403 = vmatpush1.bf16.msra.mxu0 0
      %404 = vmatprep.subr.bf16.mxu0 0
      %405 = vmatpush1.bf16.msra.mxu0 0
      %406 = vmatprep.subr.bf16.mxu0 0
      %407 = vmatpush1.bf16.msra.mxu0 0
      %408 = vmatprep.subr.bf16.mxu0 0
      %409 = vmatpush1.bf16.msra.mxu0 0
      %410 = vmatprep.mubr.bf16.mxu0 0
      %411 = vmatmul.mubr.bf16.gmra.mrb[0].mxu0 %v298
      %v412 = vpop.f32.mrb[0].mxu0
      %v413 = vadd.f32 0.0, %v412
      %v414 = vpop.f32.mrb[0].mxu0
      %v415 = vpop.f32.mrb[0].mxu0
      %v416 = vadd.f32 0.0, %v415
      %v417 = vpop.f32.mrb[0].mxu0
      %418 = vmatprep.mubr.bf16.mxu0 0
      %419 = vmatmul.mubr.bf16.gmra.mrb[0].mxu0 %v299
      %v420 = vpop.f32.mrb[0].mxu0
      %v421 = vadd.f32 0.0, %v420
      %v422 = vpop.f32.mrb[0].mxu0
      %v423 = vpop.f32.mrb[0].mxu0
      %v424 = vadd.f32 0.0, %v423
      %v425 = vpop.f32.mrb[0].mxu0
      %426 = vmatprep.mubr.bf16.mxu0 0
      %427 = vmatmul.mubr.bf16.gmra.mrb[0].mxu0 %v300
      %v428 = vpop.f32.mrb[0].mxu0
      %v429 = vadd.f32 0.0, %v428
      %v430 = vpop.f32.mrb[0].mxu0
      %v431 = vpop.f32.mrb[0].mxu0
      %v432 = vadd.f32 0.0, %v431
      %v433 = vpop.f32.mrb[0].mxu0
      %434 = vmatprep.mubr.bf16.mxu0 0
      %435 = vmatmul.mubr.bf16.gmra.mrb[0].mxu0 %v301
      %v436 = vpop.f32.mrb[0].mxu0
      %v437 = vadd.f32 0.0, %v436
      %v438 = vpop.f32.mrb[0].mxu0
      %v439 = vpop.f32.mrb[0].mxu0
      %v440 = vadd.f32 0.0, %v439
      %v441 = vpop.f32.mrb[0].mxu0
      %442 = vmatprep.mubr.bf16.mxu0 0
      %443 = vmatmul.mubr.bf16.gmra.mrb[0].mxu0 %v302
      %v444 = vpop.f32.mrb[0].mxu0
      %v445 = vadd.f32 0.0, %v444
      %v446 = vpop.f32.mrb[0].mxu0
      %v447 = vpop.f32.mrb[0].mxu0
      %v448 = vadd.f32 0.0, %v447
      %v449 = vpop.f32.mrb[0].mxu0
      %450 = vmatprep.mubr.bf16.mxu0 0
      %451 = vmatmul.mubr.bf16.gmra.mrb[0].mxu0 %v303
      %v452 = vpop.f32.mrb[0].mxu0
      %v453 = vadd.f32 0.0, %v452
      %v454 = vpop.f32.mrb[0].mxu0
      %v455 = vpop.f32.mrb[0].mxu0
      %v456 = vadd.f32 0.0, %v455
      %v457 = vpop.f32.mrb[0].mxu0
      %458 = vmatprep.mubr.bf16.mxu0 0
      %459 = vmatmul.mubr.bf16.gmra.mrb[0].mxu0 %v304
      %v460 = vpop.f32.mrb[0].mxu0
      %v461 = vadd.f32 0.0, %v460
      %v462 = vpop.f32.mrb[0].mxu0
      %v463 = vpop.f32.mrb[0].mxu0
      %v464 = vadd.f32 0.0, %v463
      %v465 = vpop.f32.mrb[0].mxu0
      %466 = vmatprep.mubr.bf16.mxu0 0
      %467 = vmatmul.mubr.bf16.gmra.mrb[0].mxu0 %v305
      %v468 = vpop.f32.mrb[0].mxu0
      %v469 = vadd.f32 0.0, %v468
      %v470 = vpop.f32.mrb[0].mxu0
      %v471 = vpop.f32.mrb[0].mxu0
      %v472 = vadd.f32 0.0, %v471
      %v473 = vpop.f32.mrb[0].mxu0
      %474 = vmatprep.mubr.bf16.mxu0 0
      %475 = vmatmul.mubr.bf16.gmra.mrb[0].mxu0 %v306
      %v476 = vpop.f32.mrb[0].mxu0
      %v477 = vadd.f32 0.0, %v476
      %v478 = vpop.f32.mrb[0].mxu0
      %v479 = vpop.f32.mrb[0].mxu0
      %v480 = vadd.f32 0.0, %v479
      %v481 = vpop.f32.mrb[0].mxu0
      %482 = vmatprep.mubr.bf16.mxu0 0
      %483 = vmatmul.mubr.bf16.gmra.mrb[0].mxu0 %v307
      %v484 = vpop.f32.mrb[0].mxu0
      %v485 = vadd.f32 0.0, %v484
      %v486 = vpop.f32.mrb[0].mxu0
      %v487 = vpop.f32.mrb[0].mxu0
      %v488 = vadd.f32 0.0, %v487
      %v489 = vpop.f32.mrb[0].mxu0
      %490 = vmatprep.mubr.bf16.mxu0 0
      %491 = vmatmul.mubr.bf16.gmra.mrb[0].mxu0 %v308
      %v492 = vpop.f32.mrb[0].mxu0
      %v493 = vadd.f32 0.0, %v492
      %v494 = vpop.f32.mrb[0].mxu0
      %v495 = vpop.f32.mrb[0].mxu0
      %v496 = vadd.f32 0.0, %v495
      %v497 = vpop.f32.mrb[0].mxu0
      %498 = vmatprep.mubr.bf16.mxu0 0
      %499 = vmatmul.mubr.bf16.gmra.mrb[0].mxu0 %v309
      %v500 = vpop.f32.mrb[0].mxu0
      %v501 = vadd.f32 0.0, %v500
      %v502 = vpop.f32.mrb[0].mxu0
      %v503 = vpop.f32.mrb[0].mxu0
      %v504 = vadd.f32 0.0, %v503
      %v505 = vpop.f32.mrb[0].mxu0
      %506 = vmatprep.mubr.bf16.mxu0 0
      %507 = vmatmul.mubr.bf16.gmra.mrb[0].mxu0 %v310
      %v508 = vpop.f32.mrb[0].mxu0
      %v509 = vadd.f32 0.0, %v508
      %v510 = vpop.f32.mrb[0].mxu0
      %v511 = vpop.f32.mrb[0].mxu0
      %v512 = vadd.f32 0.0, %v511
      %v513 = vpop.f32.mrb[0].mxu0
      %514 = vmatprep.mubr.bf16.mxu0 0
      %515 = vmatmul.mubr.bf16.gmra.mrb[0].mxu0 %v311
      %v516 = vpop.f32.mrb[0].mxu0
      %v517 = vadd.f32 0.0, %v516
      %v518 = vpop.f32.mrb[0].mxu0
      %v519 = vpop.f32.mrb[0].mxu0
      %v520 = vadd.f32 0.0, %v519
      %v521 = vpop.f32.mrb[0].mxu0
      %522 = vmatprep.mubr.bf16.mxu0 0
      %523 = vmatmul.mubr.bf16.gmra.mrb[0].mxu0 %v312
      %v524 = vpop.f32.mrb[0].mxu0
      %v525 = vadd.f32 0.0, %v524
      %v526 = vpop.f32.mrb[0].mxu0
      %v527 = vpop.f32.mrb[0].mxu0
      %v528 = vadd.f32 0.0, %v527
      %v529 = vpop.f32.mrb[0].mxu0
      %530 = vmatprep.mubr.bf16.mxu0 0
      %531 = vmatmul.mubr.bf16.gmra.mrb[0].mxu0 %v313
      %v532 = vpop.f32.mrb[0].mxu0
      %v533 = vadd.f32 0.0, %v532
      %v534 = vpop.f32.mrb[0].mxu0
      %v535 = vpop.f32.mrb[0].mxu0
      %v536 = vadd.f32 0.0, %v535
      %v537 = vpop.f32.mrb[0].mxu0
      %538 = vdwg.mxu0
      %v539 = vpack.c.bf16 %v416, %v413
      %v540 = vpack.c.bf16 %v424, %v421
      %v541 = vpack.c.bf16 %v432, %v429
      %v542 = vpack.c.bf16 %v440, %v437
      %v543 = vpack.c.bf16 %v448, %v445
      %v544 = vpack.c.bf16 %v456, %v453
      %v545 = vpack.c.bf16 %v464, %v461
      %v546 = vpack.c.bf16 %v472, %v469
      %v547 = vpack.c.bf16 %v480, %v477
      %v548 = vpack.c.bf16 %v488, %v485
      %v549 = vpack.c.bf16 %v496, %v493
      %v550 = vpack.c.bf16 %v504, %v501
      %v551 = vpack.c.bf16 %v512, %v509
      %v552 = vpack.c.bf16 %v520, %v517
      %v553 = vpack.c.bf16 %v528, %v525
      %v554 = vpack.c.bf16 %v536, %v533
      %v571 = vunpack.c.l.b16 %v539
      %v572 = vunpack.c.h.b16 %v539
      %v573 = vunpack.c.l.b16 %v540
      %v574 = vunpack.c.h.b16 %v540
      %v575 = vunpack.c.l.b16 %v541
      %v576 = vunpack.c.h.b16 %v541
      %v577 = vunpack.c.l.b16 %v542
      %v578 = vunpack.c.h.b16 %v542
      %v579 = vunpack.c.l.b16 %v543
      %v580 = vunpack.c.h.b16 %v543
      %v581 = vunpack.c.l.b16 %v544
      %v582 = vunpack.c.h.b16 %v544
      %v583 = vunpack.c.l.b16 %v545
      %v584 = vunpack.c.h.b16 %v545
      %v585 = vunpack.c.l.b16 %v546
      %v586 = vunpack.c.h.b16 %v546
      %v587 = vunpack.c.l.b16 %v547
      %v588 = vunpack.c.h.b16 %v547
      %v589 = vunpack.c.l.b16 %v548
      %v590 = vunpack.c.h.b16 %v548
      %v591 = vunpack.c.l.b16 %v549
      %v592 = vunpack.c.h.b16 %v549
      %v593 = vunpack.c.l.b16 %v550
      %v594 = vunpack.c.h.b16 %v550
      %v595 = vunpack.c.l.b16 %v551
      %v596 = vunpack.c.h.b16 %v551
      %v597 = vunpack.c.l.b16 %v552
      %v598 = vunpack.c.h.b16 %v552
      %v599 = vunpack.c.l.b16 %v553
      %v600 = vunpack.c.h.b16 %v553
      %v601 = vunpack.c.l.b16 %v554
      %v602 = vunpack.c.h.b16 %v554
      %v603 = vpack.c.b16 %v571, %v571
      %v604 = vpack.c.b16 %v572, %v572
      %v605 = vpack.c.b16 %v573, %v573
      %v606 = vpack.c.b16 %v574, %v574
      %v607 = vpack.c.b16 %v575, %v575
      %v608 = vpack.c.b16 %v576, %v576
      %v609 = vpack.c.b16 %v577, %v577
      %v610 = vpack.c.b16 %v578, %v578
      %v611 = vpack.c.b16 %v579, %v579
      %v612 = vpack.c.b16 %v580, %v580
      %v613 = vpack.c.b16 %v581, %v581
      %v614 = vpack.c.b16 %v582, %v582
      %v615 = vpack.c.b16 %v583, %v583
      %v616 = vpack.c.b16 %v584, %v584
      %v617 = vpack.c.b16 %v585, %v585
      %v618 = vpack.c.b16 %v586, %v586
      %v619 = vpack.c.b16 %v587, %v587
      %v620 = vpack.c.b16 %v588, %v588
      %v621 = vpack.c.b16 %v589, %v589
      %v622 = vpack.c.b16 %v590, %v590
      %v623 = vpack.c.b16 %v591, %v591
      %v624 = vpack.c.b16 %v592, %v592
      %v625 = vpack.c.b16 %v593, %v593
      %v626 = vpack.c.b16 %v594, %v594
      %v627 = vpack.c.b16 %v595, %v595
      %v628 = vpack.c.b16 %v596, %v596
      %v629 = vpack.c.b16 %v597, %v597
      %v630 = vpack.c.b16 %v598, %v598
      %v631 = vpack.c.b16 %v599, %v599
      %v632 = vpack.c.b16 %v600, %v600
      %v633 = vpack.c.b16 %v601, %v601
      %v634 = vpack.c.b16 %v602, %v602
      %667 = vst [vmem:[%s179] sm:$0xf] %v603
      %668 = vst [vmem:[%s179 + $0x4] sm:$0xf] %v604
      %669 = vst [vmem:[%s179 + $0x8] sm:$0xf] %v605
      %670 = vst [vmem:[%s179 + $0xc] sm:$0xf] %v606
      %671 = vst [vmem:[%s179 + $0x10] sm:$0xf] %v607
      %672 = vst [vmem:[%s179 + $0x14] sm:$0xf] %v608
      %673 = vst [vmem:[%s179 + $0x18] sm:$0xf] %v609
      %674 = vst [vmem:[%s179 + $0x1c] sm:$0xf] %v610
      %675 = vst [vmem:[%s179 + $0x20] sm:$0xf] %v611
      %676 = vst [vmem:[%s179 + $0x24] sm:$0xf] %v612
      %677 = vst [vmem:[%s179 + $0x28] sm:$0xf] %v613
      %678 = vst [vmem:[%s179 + $0x2c] sm:$0xf] %v614
      %679 = vst [vmem:[%s179 + $0x30] sm:$0xf] %v615
      %680 = vst [vmem:[%s179 + $0x34] sm:$0xf] %v616
      %681 = vst [vmem:[%s179 + $0x38] sm:$0xf] %v617
      %682 = vst [vmem:[%s179 + $0x3c] sm:$0xf] %v618
      %683 = vst [vmem:[%s179 + $0x40] sm:$0xf] %v619
      %684 = vst [vmem:[%s179 + $0x44] sm:$0xf] %v620
      %685 = vst [vmem:[%s179 + $0x48] sm:$0xf] %v621
      %686 = vst [vmem:[%s179 + $0x4c] sm:$0xf] %v622
      %687 = vst [vmem:[%s179 + $0x50] sm:$0xf] %v623
      %688 = vst [vmem:[%s179 + $0x54] sm:$0xf] %v624
      %689 = vst [vmem:[%s179 + $0x58] sm:$0xf] %v625
      %690 = vst [vmem:[%s179 + $0x5c] sm:$0xf] %v626
      %691 = vst [vmem:[%s179 + $0x60] sm:$0xf] %v627
      %692 = vst [vmem:[%s179 + $0x64] sm:$0xf] %v628
      %693 = vst [vmem:[%s179 + $0x68] sm:$0xf] %v629
      %694 = vst [vmem:[%s179 + $0x6c] sm:$0xf] %v630
      %695 = vst [vmem:[%s179 + $0x70] sm:$0xf] %v631
      %696 = vst [vmem:[%s179 + $0x74] sm:$0xf] %v632
      %697 = vst [vmem:[%s179 + $0x78] sm:$0xf] %v633
      %698 = vst [vmem:[%s179 + $0x7c] sm:$0xf] %v634
      %v699 = vadd.f32 %v413, %v416
      %v700 = vadd.f32 %v699, %v421
      %v701 = vadd.f32 %v700, %v424
      %v702 = vadd.f32 %v701, %v429
      %v703 = vadd.f32 %v702, %v432
      %v704 = vadd.f32 %v703, %v437
      %v705 = vadd.f32 %v704, %v440
      %v706 = vadd.f32 %v705, %v445
      %v707 = vadd.f32 %v706, %v448
      %v708 = vadd.f32 %v707, %v453
      %v709 = vadd.f32 %v708, %v456
      %v710 = vadd.f32 %v709, %v461
      %v711 = vadd.f32 %v710, %v464
      %v712 = vadd.f32 %v711, %v469
      %v713 = vadd.f32 %v712, %v472
      %v714 = vadd.f32 %v713, %v477
      %v715 = vadd.f32 %v714, %v480
      %v716 = vadd.f32 %v715, %v485
      %v717 = vadd.f32 %v716, %v488
      %v718 = vadd.f32 %v717, %v493
      %v719 = vadd.f32 %v718, %v496
      %v720 = vadd.f32 %v719, %v501
      %v721 = vadd.f32 %v720, %v504
      %v722 = vadd.f32 %v721, %v509
      %v723 = vadd.f32 %v722, %v512
      %v724 = vadd.f32 %v723, %v517
      %v725 = vadd.f32 %v724, %v520
      %v726 = vadd.f32 %v725, %v525
      %v727 = vadd.f32 %v726, %v528
      %v728 = vadd.f32 %v727, %v533
      %v729 = vadd.f32 %v728, %v536
      %v730 = vrot.slane %v729, 4
      %v731 = vadd.f32 %v729, %v730
      %v732 = vrot.slane %v731, 2
      %v733 = vadd.f32 %v731, %v732
      %v734 = vrot.slane %v733, 1
      %v735 = vadd.f32 %v733, %v734
      %v736 = vmul.f32 %v413, %v413
      %v737 = vmul.f32 %v416, %v416
      %v738 = vmul.f32 %v421, %v421
      %v739 = vmul.f32 %v424, %v424
      %v740 = vmul.f32 %v429, %v429
      %v741 = vmul.f32 %v432, %v432
      %v742 = vmul.f32 %v437, %v437
      %v743 = vmul.f32 %v440, %v440
      %v744 = vmul.f32 %v445, %v445
      %v745 = vmul.f32 %v448, %v448
      %v746 = vmul.f32 %v453, %v453
      %v747 = vmul.f32 %v456, %v456
      %v748 = vmul.f32 %v461, %v461
      %v749 = vmul.f32 %v464, %v464
      %v750 = vmul.f32 %v469, %v469
      %v751 = vmul.f32 %v472, %v472
      %v752 = vmul.f32 %v477, %v477
      %v753 = vmul.f32 %v480, %v480
      %v754 = vmul.f32 %v485, %v485
      %v755 = vmul.f32 %v488, %v488
      %v756 = vmul.f32 %v493, %v493
      %v757 = vmul.f32 %v496, %v496
      %v758 = vmul.f32 %v501, %v501
      %v759 = vmul.f32 %v504, %v504
      %v760 = vmul.f32 %v509, %v509
      %v761 = vmul.f32 %v512, %v512
      %v762 = vmul.f32 %v517, %v517
      %v763 = vmul.f32 %v520, %v520
      %v764 = vmul.f32 %v525, %v525
      %v765 = vmul.f32 %v528, %v528
      %v766 = vmul.f32 %v533, %v533
      %v767 = vmul.f32 %v536, %v536
      %v768 = vadd.f32 %v736, %v737
      %v769 = vadd.f32 %v768, %v738
      %v770 = vadd.f32 %v769, %v739
      %v771 = vadd.f32 %v770, %v740
      %v772 = vadd.f32 %v771, %v741
      %v773 = vadd.f32 %v772, %v742
      %v774 = vadd.f32 %v773, %v743
      %v775 = vadd.f32 %v774, %v744
      %v776 = vadd.f32 %v775, %v745
      %v777 = vadd.f32 %v776, %v746
      %v778 = vadd.f32 %v777, %v747
      %v779 = vadd.f32 %v778, %v748
      %v780 = vadd.f32 %v779, %v749
      %v781 = vadd.f32 %v780, %v750
      %v782 = vadd.f32 %v781, %v751
      %v783 = vadd.f32 %v782, %v752
      %v784 = vadd.f32 %v783, %v753
      %v785 = vadd.f32 %v784, %v754
      %v786 = vadd.f32 %v785, %v755
      %v787 = vadd.f32 %v786, %v756
      %v788 = vadd.f32 %v787, %v757
      %v789 = vadd.f32 %v788, %v758
      %v790 = vadd.f32 %v789, %v759
      %v791 = vadd.f32 %v790, %v760
      %v792 = vadd.f32 %v791, %v761
      %v793 = vadd.f32 %v792, %v762
      %v794 = vadd.f32 %v793, %v763
      %v795 = vadd.f32 %v794, %v764
      %v796 = vadd.f32 %v795, %v765
      %v797 = vadd.f32 %v796, %v766
      %v798 = vadd.f32 %v797, %v767
      %v799 = vrot.slane %v798, 4
      %v800 = vadd.f32 %v798, %v799
      %v801 = vrot.slane %v800, 2
      %v802 = vadd.f32 %v800, %v801
      %v803 = vrot.slane %v802, 1
      %v804 = vadd.f32 %v802, %v803
      %v805 = vlaneseq
      %v806 = vshrl.u32 %v805, 7
      %vm807 = vcmp.eq.s32.totalorder %v806, 0
      %v808 = vsel %vm807, %v735, 0.0
      %vm809 = vcmp.eq.s32.totalorder %v806, 1
      %v810 = vsel %vm809, %v804, 0.0
      %v811 = vadd.f32 %v808, %v810
      %812 = vst [vmem:[%s184] sm:$0xff] %v811
      %s813 = smul.u32 32, %s15
      %p814 = scmp.lt.s32.totalorder %s813, 63
      %s815 = scalar_select %p814, %s813, 63
      %s816 = smul.addr %s815, 4
      %s817 = scalar_lea.vmem %s2, %s816
      %p818 = scmp.lt.s32.totalorder %s15, 1
      %s819 = scalar_select %p818, %s15, 1
      %s820 = smul.addr %s819, 8
      %s821 = scalar_lea.vmem %s3, %s820
      // Predicated region
      $region29: #{bottleneck_forward.5} parent=27 // pred_check
        %p822 = pneg %p80
      $region30: #{bottleneck_forward.5} parent=27 // pred_check_branch
        %824 = sbr.rel (%p822) target = $region32
      $region31: #{bottleneck_forward.5} parent=27 // pred_region
        %s825 = smul.u32 32, %s15
      $region32: #{bottleneck_forward.5} parent=27 // pred_fallthru
        _
      // Predicated region
      $region33: #{bottleneck_forward.5} parent=27 // pred_check
        %p826 = pneg %p106
      $region34: #{bottleneck_forward.5} parent=27 // pred_check_branch
        %828 = sbr.rel (%p826) target = $region36
      $region35: #{bottleneck_forward.5} parent=27 // pred_region
        _
      $region36: #{bottleneck_forward.5} parent=27 // pred_fallthru
        _
    $region28: #{bottleneck_forward.5} parent=5 // pred_fallthru
      _
    %p829 = scmp.le.s32.totalorder 2, %s10
    // Predicated region
    $region37: #{bottleneck_forward.5} parent=5 // pred_check
      %p830 = pneg %p829
    $region38: #{bottleneck_forward.5} parent=5 // pred_check_branch
      %832 = sbr.rel (%p830) target = $region40
    $region39: #{bottleneck_forward.5} parent=5 // pred_region
      %s833 = ssub.s32 %s10, 2
      // Predicated region
      $region41: #{bottleneck_forward.5} parent=39 // pred_check
        %p834 = pneg %p86
      $region42: #{bottleneck_forward.5} parent=39 // pred_check_branch
        %836 = sbr.rel (%p834) target = $region44
      $region43: #{bottleneck_forward.5} parent=39 // pred_region
        %s837 = smul.u32 32, %s16
        %p838 = scmp.lt.s32.totalorder %s837, 63
        %s839 = scalar_select %p838, %s837, 63
        %s840 = smul.addr %s839, 4
        %s841 = scalar_lea.vmem %s2, %s840
      $region44: #{bottleneck_forward.5} parent=39 // pred_fallthru
        _
      // Predicated region
      $region45: #{bottleneck_forward.5} parent=39 // pred_check
        %p842 = pneg %p112
      $region46: #{bottleneck_forward.5} parent=39 // pred_check_branch
        %844 = sbr.rel (%p842) target = $region48
      $region47: #{bottleneck_forward.5} parent=39 // pred_region
        %p845 = scmp.lt.s32.totalorder %s16, 1
        %s846 = scalar_select %p845, %s16, 1
        %s847 = smul.addr %s846, 8
        %s848 = scalar_lea.vmem %s3, %s847
      $region48: #{bottleneck_forward.5} parent=39 // pred_fallthru
        _
    $region40: #{bottleneck_forward.5} parent=5 // pred_fallthru
      _
  $region6: #{bottleneck_forward.5} parent=0 // loop_footer
    %s14 = sadd.s32 1, %s10
  $region7: #{bottleneck_forward.5} parent=0 // loop_footer_branch
    %9 = sbr.rel target = $region3
  $region8: #{bottleneck_forward.5} parent=0 // loop_exit
    _

// kernel: bottleneck_forward.6
$region0: #{bottleneck_forward.6}
  #allocation0 [shape = 'u32[]', space=smem, size = 0x4, offset = 0x4, fixed_abs, tag = 'smem constant byte address 0x4 - core index']
  #allocation1 [shape = 'u32[144,128]{1,0:T(1,128)}', space=vmem, size = 0x12000, scoped, tag = 'internal scratch']
  %s0 = inlined_call_operand.vmem [shape: bf16[512,128], index: 0, kind: input, shape index: {}]
  %s1 = inlined_call_operand.vmem [shape: f32[8,128], index: 1, kind: input, shape index: {}]
  %s2 = inlined_call_operand.vmem [shape: bf16[512,128], index: 2, kind: output, shape index: {}]
  %s3 = sld [smem:[#allocation0]]
  $region41: #{bottleneck_forward.6} parent=0
    _
  %s5 = ssub.s32 1, %s3
  %s6 = scalar_select 0, %s5, %s3
  loop: start=0, step=1, limit=4
  $region2: #{bottleneck_forward.6} parent=0 // loop_pre_header
    _
  $region3: #{bottleneck_forward.6} parent=0 // loop_header
    %s8 = sphi 0, %s12
    %p9 = scmp.ge.s32.totalorder %s8, 4
    %s18 = sphi 0, %s20
    %s21 = sphi 0, %s18
    %s22 = sphi 0, %s21
    %s38 = sphi 0, %s22
    %s42 = sphi 0, %s42
    %s44 = sphi 0, %s42
    %s45 = sphi 0, %s44
    %s59 = sphi 0, %s45
    %s65 = sphi 0, %s67
    %s68 = sphi 0, %s65
    %s69 = sphi 0, %s68
    %s85 = sphi 0, %s69
  $region4: #{bottleneck_forward.6} parent=0 // loop_header_branch
    %11 = sbr.rel (%p9) target = $region8
  $region5: #{bottleneck_forward.6} parent=0 // loop_body
    %s13 = ssub.s32 %s8, 1
    %s14 = ssub.s32 %s8, 2
    %s15 = sadd.s32 %s8, 1
    %s16 = ssub.s32 %s8, %s15
    %p17 = scmp.eq.s32.totalorder %s16, 0
    %s19 = sadd.s32 %s18, 1
    %s20 = scalar_select %p17, %s18, %s19
    %p23 = pneg %p17
    %p24 = scmp.eq.s32.totalorder %s8, 1
    %p25 = por %p23, %p24
    %p26 = scmp.ne.s32.totalorder %s18, %s21
    %p27 = scmp.eq.s32.totalorder %s8, 0
    %p28 = por %p26, %p27
    %p29 = scmp.ne.s32.totalorder %s18, %s21
    %p30 = scmp.eq.s32.totalorder %s13, 1
    %p31 = por %p29, %p30
    %p32 = scmp.ne.s32.totalorder %s21, %s22
    %p33 = scmp.eq.s32.totalorder %s13, 0
    %p34 = por %p32, %p33
    %p35 = scmp.ne.s32.totalorder %s21, %s22
    %p36 = scmp.eq.s32.totalorder %s14, 1
    %p37 = por %p35, %p36
    %p39 = scmp.ne.s32.totalorder %s22, %s38
    %p40 = scmp.eq.s32.totalorder %s14, 0
    %p41 = por %p39, %p40
    %s43 = sadd.s32 %s42, 1
    %p46 = scmp.eq.s32.totalorder %s8, 1
    %p47 = scmp.ne.s32.totalorder %s42, %s44
    %p48 = scmp.eq.s32.totalorder %s8, 0
    %p49 = por %p47, %p48
    %p50 = scmp.ne.s32.totalorder %s42, %s44
    %p51 = scmp.eq.s32.totalorder %s13, 1
    %p52 = por %p50, %p51
    %p53 = scmp.ne.s32.totalorder %s44, %s45
    %p54 = scmp.eq.s32.totalorder %s13, 0
    %p55 = por %p53, %p54
    %p56 = scmp.ne.s32.totalorder %s44, %s45
    %p57 = scmp.eq.s32.totalorder %s14, 1
    %p58 = por %p56, %p57
    %p60 = scmp.ne.s32.totalorder %s45, %s59
    %p61 = scmp.eq.s32.totalorder %s14, 0
    %p62 = por %p60, %p61
    %s63 = ssub.s32 %s8, %s15
    %p64 = scmp.eq.s32.totalorder %s63, 0
    %s66 = sadd.s32 %s65, 1
    %s67 = scalar_select %p64, %s65, %s66
    %p70 = pneg %p64
    %p71 = scmp.eq.s32.totalorder %s8, 1
    %p72 = por %p70, %p71
    %p73 = scmp.ne.s32.totalorder %s65, %s68
    %p74 = scmp.eq.s32.totalorder %s8, 0
    %p75 = por %p73, %p74
    %p76 = scmp.ne.s32.totalorder %s65, %s68
    %p77 = scmp.eq.s32.totalorder %s13, 1
    %p78 = por %p76, %p77
    %p79 = scmp.ne.s32.totalorder %s68, %s69
    %p80 = scmp.eq.s32.totalorder %s13, 0
    %p81 = por %p79, %p80
    %p82 = scmp.ne.s32.totalorder %s68, %s69
    %p83 = scmp.eq.s32.totalorder %s14, 1
    %p84 = por %p82, %p83
    %p86 = scmp.ne.s32.totalorder %s69, %s85
    %p87 = scmp.eq.s32.totalorder %s14, 0
    %p88 = por %p86, %p87
    %p89 = scmp.le.s32.totalorder 1, %s8
    %p90 = scmp.lt.s32.totalorder %s8, 3
    %p91 = pnand %p89, %p90
    %p92 = pneg %p91
    // Predicated region
    $region9: #{bottleneck_forward.6} parent=5 // pred_check
      _
    $region10: #{bottleneck_forward.6} parent=5 // pred_check_branch
      %94 = sbr.rel (%p91) target = $region12
    $region11: #{bottleneck_forward.6} parent=5 // pred_region
      %s95 = ssub.s32 %s8, 1
      // Predicated region
      $region13: #{bottleneck_forward.6} parent=11 // pred_check
        %p96 = pneg %p55
      $region14: #{bottleneck_forward.6} parent=11 // pred_check_branch
        %98 = sbr.rel (%p96) target = $region16
      $region15: #{bottleneck_forward.6} parent=11 // pred_region
        _
      $region16: #{bottleneck_forward.6} parent=11 // pred_fallthru
        _
    $region12: #{bottleneck_forward.6} parent=5 // pred_fallthru
      _
    %p99 = scmp.lt.s32.totalorder %s8, 2
    // Predicated region
    $region17: #{bottleneck_forward.6} parent=5 // pred_check
      %p100 = pneg %p99
    $region18: #{bottleneck_forward.6} parent=5 // pred_check_branch
      %102 = sbr.rel (%p100) target = $region20
    $region19: #{bottleneck_forward.6} parent=5 // pred_region
      // Predicated region
      $region21: #{bottleneck_forward.6} parent=19 // pred_check
        %p103 = pneg %p28
      $region22: #{bottleneck_forward.6} parent=19 // pred_check_branch
        %105 = sbr.rel (%p103) target = $region24
      $region23: #{bottleneck_forward.6} parent=19 // pred_region
        %s106 = smul.u32 32, %s8
        %p107 = scmp.lt.s32.totalorder %s106, 63
        %s108 = scalar_select %p107, %s106, 63
        %s109 = smul.addr %s108, 4
        %s110 = scalar_lea.vmem %s0, %s109
        %s111 = smul.u32 32, %s8
      $region24: #{bottleneck_forward.6} parent=19 // pred_fallthru
        _
    $region20: #{bottleneck_forward.6} parent=5 // pred_fallthru
      _
    %p112 = scmp.le.s32.totalorder 1, %s8
    %p113 = scmp.lt.s32.totalorder %s8, 3
    %p114 = pnand %p112, %p113
    %p115 = pneg %p114
    // Predicated region
    $region25: #{bottleneck_forward.6} parent=5 // pred_check
      _
    $region26: #{bottleneck_forward.6} parent=5 // pred_check_branch
      %117 = sbr.rel (%p114) target = $region28
    $region27: #{bottleneck_forward.6} parent=5 // pred_region
      %s118 = ssub.s32 %s8, 1
      %s119 = smul.u32 32, %s13
      %p120 = scmp.lt.s32.totalorder %s119, 63
      %s121 = scalar_select %p120, %s119, 63
      %s122 = smul.addr %s121, 4
      %s123 = scalar_lea.vmem %s0, %s122
      %p124 = pneg %p34
      %p125 = pneg %p31
      %p126 = pneg %p55
      %p127 = pneg %p52
      %p128 = pneg %p81
      %p129 = pneg %p78
      %s130 = smul.u32 32, %s13
      %p131 = scmp.lt.s32.totalorder %s130, 63
      %s132 = scalar_select %p131, %s130, 63
      %s133 = smul.addr %s132, 4
      %s134 = scalar_lea.vmem %s2, %s133
      %s135 = smul.u32 32, %s13
      %p136 = scmp.lt.s32.totalorder %s135, 63
      %s137 = scalar_select %p136, %s135, 63
      %s138 = smul.addr %s137, 4
      %s139 = scalar_lea.vmem %s0, %s138
      %s140 = smul.u32 32, %s13
      %s141 = smul.u32 32, %s13
      %p142 = scmp.lt.s32.totalorder %s141, 63
      %s143 = scalar_select %p142, %s141, 63
      %s144 = smul.addr %s143, 4
      %s145 = scalar_lea.vmem %s2, %s144
      %s146 = smul.u32 32, %s13
      %v147 = vld [vmem:[%s1] sm:$0xff]
      %v148 = vld [vmem:[%s139] sm:$0xf]
      %v149 = vld [vmem:[%s139 + $0x4] sm:$0xf]
      %v150 = vld [vmem:[%s139 + $0x8] sm:$0xf]
      %v151 = vld [vmem:[%s139 + $0xc] sm:$0xf]
      %v152 = vld [vmem:[%s139 + $0x10] sm:$0xf]
      %v153 = vld [vmem:[%s139 + $0x14] sm:$0xf]
      %v154 = vld [vmem:[%s139 + $0x18] sm:$0xf]
      %v155 = vld [vmem:[%s139 + $0x1c] sm:$0xf]
      %v156 = vld [vmem:[%s139 + $0x20] sm:$0xf]
      %v157 = vld [vmem:[%s139 + $0x24] sm:$0xf]
      %v158 = vld [vmem:[%s139 + $0x28] sm:$0xf]
      %v159 = vld [vmem:[%s139 + $0x2c] sm:$0xf]
      %v160 = vld [vmem:[%s139 + $0x30] sm:$0xf]
      %v161 = vld [vmem:[%s139 + $0x34] sm:$0xf]
      %v162 = vld [vmem:[%s139 + $0x38] sm:$0xf]
      %v163 = vld [vmem:[%s139 + $0x3c] sm:$0xf]
      %v164 = vld [vmem:[%s139 + $0x40] sm:$0xf]
      %v165 = vld [vmem:[%s139 + $0x44] sm:$0xf]
      %v166 = vld [vmem:[%s139 + $0x48] sm:$0xf]
      %v167 = vld [vmem:[%s139 + $0x4c] sm:$0xf]
      %v168 = vld [vmem:[%s139 + $0x50] sm:$0xf]
      %v169 = vld [vmem:[%s139 + $0x54] sm:$0xf]
      %v170 = vld [vmem:[%s139 + $0x58] sm:$0xf]
      %v171 = vld [vmem:[%s139 + $0x5c] sm:$0xf]
      %v172 = vld [vmem:[%s139 + $0x60] sm:$0xf]
      %v173 = vld [vmem:[%s139 + $0x64] sm:$0xf]
      %v174 = vld [vmem:[%s139 + $0x68] sm:$0xf]
      %v175 = vld [vmem:[%s139 + $0x6c] sm:$0xf]
      %v176 = vld [vmem:[%s139 + $0x70] sm:$0xf]
      %v177 = vld [vmem:[%s139 + $0x74] sm:$0xf]
      %v178 = vld [vmem:[%s139 + $0x78] sm:$0xf]
      %v179 = vld [vmem:[%s139 + $0x7c] sm:$0xf]
      %v180 = vunpack.c.l.bf16 %v148
      %v181 = vunpack.c.l.bf16 %v149
      %v182 = vunpack.c.l.bf16 %v150
      %v183 = vunpack.c.l.bf16 %v151
      %v184 = vunpack.c.l.bf16 %v152
      %v185 = vunpack.c.l.bf16 %v153
      %v186 = vunpack.c.l.bf16 %v154
      %v187 = vunpack.c.l.bf16 %v155
      %v188 = vunpack.c.l.bf16 %v156
      %v189 = vunpack.c.l.bf16 %v157
      %v190 = vunpack.c.l.bf16 %v158
      %v191 = vunpack.c.l.bf16 %v159
      %v192 = vunpack.c.l.bf16 %v160
      %v193 = vunpack.c.l.bf16 %v161
      %v194 = vunpack.c.l.bf16 %v162
      %v195 = vunpack.c.l.bf16 %v163
      %v196 = vunpack.c.l.bf16 %v164
      %v197 = vunpack.c.l.bf16 %v165
      %v198 = vunpack.c.l.bf16 %v166
      %v199 = vunpack.c.l.bf16 %v167
      %v200 = vunpack.c.l.bf16 %v168
      %v201 = vunpack.c.l.bf16 %v169
      %v202 = vunpack.c.l.bf16 %v170
      %v203 = vunpack.c.l.bf16 %v171
      %v204 = vunpack.c.l.bf16 %v172
      %v205 = vunpack.c.l.bf16 %v173
      %v206 = vunpack.c.l.bf16 %v174
      %v207 = vunpack.c.l.bf16 %v175
      %v208 = vunpack.c.l.bf16 %v176
      %v209 = vunpack.c.l.bf16 %v177
      %v210 = vunpack.c.l.bf16 %v178
      %v211 = vunpack.c.l.bf16 %v179
      %v212 = vlaneseq
      %v213 = vshrl.u32 %v212, 7
      %v214 = vsub.s32 0, %v213
      %v215 = vrot.slane %v147, %v214
      %v216 = vmul.f32 %v180, %v215
      %v217 = vmul.f32 %v181, %v215
      %v218 = vmul.f32 %v182, %v215
      %v219 = vmul.f32 %v183, %v215
      %v220 = vmul.f32 %v184, %v215
      %v221 = vmul.f32 %v185, %v215
      %v222 = vmul.f32 %v186, %v215
      %v223 = vmul.f32 %v187, %v215
      %v224 = vmul.f32 %v188, %v215
      %v225 = vmul.f32 %v189, %v215
      %v226 = vmul.f32 %v190, %v215
      %v227 = vmul.f32 %v191, %v215
      %v228 = vmul.f32 %v192, %v215
      %v229 = vmul.f32 %v193, %v215
      %v230 = vmul.f32 %v194, %v215
      %v231 = vmul.f32 %v195, %v215
      %v232 = vmul.f32 %v196, %v215
      %v233 = vmul.f32 %v197, %v215
      %v234 = vmul.f32 %v198, %v215
      %v235 = vmul.f32 %v199, %v215
      %v236 = vmul.f32 %v200, %v215
      %v237 = vmul.f32 %v201, %v215
      %v238 = vmul.f32 %v202, %v215
      %v239 = vmul.f32 %v203, %v215
      %v240 = vmul.f32 %v204, %v215
      %v241 = vmul.f32 %v205, %v215
      %v242 = vmul.f32 %v206, %v215
      %v243 = vmul.f32 %v207, %v215
      %v244 = vmul.f32 %v208, %v215
      %v245 = vmul.f32 %v209, %v215
      %v246 = vmul.f32 %v210, %v215
      %v247 = vmul.f32 %v211, %v215
      %v248 = vlaneseq
      %v249 = vshrl.u32 %v248, 7
      %v250 = vsub.s32 1, %v249
      %v251 = vrot.slane %v147, %v250
      %v252 = vadd.f32 %v216, %v251
      %v253 = vadd.f32 %v217, %v251
      %v254 = vadd.f32 %v218, %v251
      %v255 = vadd.f32 %v219, %v251
      %v256 = vadd.f32 %v220, %v251
      %v257 = vadd.f32 %v221, %v251
      %v258 = vadd.f32 %v222, %v251
      %v259 = vadd.f32 %v223, %v251
      %v260 = vadd.f32 %v224, %v251
      %v261 = vadd.f32 %v225, %v251
      %v262 = vadd.f32 %v226, %v251
      %v263 = vadd.f32 %v227, %v251
      %v264 = vadd.f32 %v228, %v251
      %v265 = vadd.f32 %v229, %v251
      %v266 = vadd.f32 %v230, %v251
      %v267 = vadd.f32 %v231, %v251
      %v268 = vadd.f32 %v232, %v251
      %v269 = vadd.f32 %v233, %v251
      %v270 = vadd.f32 %v234, %v251
      %v271 = vadd.f32 %v235, %v251
      %v272 = vadd.f32 %v236, %v251
      %v273 = vadd.f32 %v237, %v251
      %v274 = vadd.f32 %v238, %v251
      %v275 = vadd.f32 %v239, %v251
      %v276 = vadd.f32 %v240, %v251
      %v277 = vadd.f32 %v241, %v251
      %v278 = vadd.f32 %v242, %v251
      %v279 = vadd.f32 %v243, %v251
      %v280 = vadd.f32 %v244, %v251
      %v281 = vadd.f32 %v245, %v251
      %v282 = vadd.f32 %v246, %v251
      %v283 = vadd.f32 %v247, %v251
      %v284 = vmax.f32 %v252, 0.0
      %v285 = vmax.f32 %v253, 0.0
      %v286 = vmax.f32 %v254, 0.0
      %v287 = vmax.f32 %v255, 0.0
      %v288 = vmax.f32 %v256, 0.0
      %v289 = vmax.f32 %v257, 0.0
      %v290 = vmax.f32 %v258, 0.0
      %v291 = vmax.f32 %v259, 0.0
      %v292 = vmax.f32 %v260, 0.0
      %v293 = vmax.f32 %v261, 0.0
      %v294 = vmax.f32 %v262, 0.0
      %v295 = vmax.f32 %v263, 0.0
      %v296 = vmax.f32 %v264, 0.0
      %v297 = vmax.f32 %v265, 0.0
      %v298 = vmax.f32 %v266, 0.0
      %v299 = vmax.f32 %v267, 0.0
      %v300 = vmax.f32 %v268, 0.0
      %v301 = vmax.f32 %v269, 0.0
      %v302 = vmax.f32 %v270, 0.0
      %v303 = vmax.f32 %v271, 0.0
      %v304 = vmax.f32 %v272, 0.0
      %v305 = vmax.f32 %v273, 0.0
      %v306 = vmax.f32 %v274, 0.0
      %v307 = vmax.f32 %v275, 0.0
      %v308 = vmax.f32 %v276, 0.0
      %v309 = vmax.f32 %v277, 0.0
      %v310 = vmax.f32 %v278, 0.0
      %v311 = vmax.f32 %v279, 0.0
      %v312 = vmax.f32 %v280, 0.0
      %v313 = vmax.f32 %v281, 0.0
      %v314 = vmax.f32 %v282, 0.0
      %v315 = vmax.f32 %v283, 0.0
      %v316 = vpack.c.bf16 %v285, %v284
      %v317 = vpack.c.bf16 %v287, %v286
      %v318 = vpack.c.bf16 %v289, %v288
      %v319 = vpack.c.bf16 %v291, %v290
      %v320 = vpack.c.bf16 %v293, %v292
      %v321 = vpack.c.bf16 %v295, %v294
      %v322 = vpack.c.bf16 %v297, %v296
      %v323 = vpack.c.bf16 %v299, %v298
      %v324 = vpack.c.bf16 %v301, %v300
      %v325 = vpack.c.bf16 %v303, %v302
      %v326 = vpack.c.bf16 %v305, %v304
      %v327 = vpack.c.bf16 %v307, %v306
      %v328 = vpack.c.bf16 %v309, %v308
      %v329 = vpack.c.bf16 %v311, %v310
      %v330 = vpack.c.bf16 %v313, %v312
      %v331 = vpack.c.bf16 %v315, %v314
      %v348 = vunpack.c.l.b16 %v316
      %v349 = vunpack.c.h.b16 %v316
      %v350 = vunpack.c.l.b16 %v317
      %v351 = vunpack.c.h.b16 %v317
      %v352 = vunpack.c.l.b16 %v318
      %v353 = vunpack.c.h.b16 %v318
      %v354 = vunpack.c.l.b16 %v319
      %v355 = vunpack.c.h.b16 %v319
      %v356 = vunpack.c.l.b16 %v320
      %v357 = vunpack.c.h.b16 %v320
      %v358 = vunpack.c.l.b16 %v321
      %v359 = vunpack.c.h.b16 %v321
      %v360 = vunpack.c.l.b16 %v322
      %v361 = vunpack.c.h.b16 %v322
      %v362 = vunpack.c.l.b16 %v323
      %v363 = vunpack.c.h.b16 %v323
      %v364 = vunpack.c.l.b16 %v324
      %v365 = vunpack.c.h.b16 %v324
      %v366 = vunpack.c.l.b16 %v325
      %v367 = vunpack.c.h.b16 %v325
      %v368 = vunpack.c.l.b16 %v326
      %v369 = vunpack.c.h.b16 %v326
      %v370 = vunpack.c.l.b16 %v327
      %v371 = vunpack.c.h.b16 %v327
      %v372 = vunpack.c.l.b16 %v328
      %v373 = vunpack.c.h.b16 %v328
      %v374 = vunpack.c.l.b16 %v329
      %v375 = vunpack.c.h.b16 %v329
      %v376 = vunpack.c.l.b16 %v330
      %v377 = vunpack.c.h.b16 %v330
      %v378 = vunpack.c.l.b16 %v331
      %v379 = vunpack.c.h.b16 %v331
      %v380 = vpack.c.b16 %v348, %v348
      %v381 = vpack.c.b16 %v349, %v349
      %v382 = vpack.c.b16 %v350, %v350
      %v383 = vpack.c.b16 %v351, %v351
      %v384 = vpack.c.b16 %v352, %v352
      %v385 = vpack.c.b16 %v353, %v353
      %v386 = vpack.c.b16 %v354, %v354
      %v387 = vpack.c.b16 %v355, %v355
      %v388 = vpack.c.b16 %v356, %v356
      %v389 = vpack.c.b16 %v357, %v357
      %v390 = vpack.c.b16 %v358, %v358
      %v391 = vpack.c.b16 %v359, %v359
      %v392 = vpack.c.b16 %v360, %v360
      %v393 = vpack.c.b16 %v361, %v361
      %v394 = vpack.c.b16 %v362, %v362
      %v395 = vpack.c.b16 %v363, %v363
      %v396 = vpack.c.b16 %v364, %v364
      %v397 = vpack.c.b16 %v365, %v365
      %v398 = vpack.c.b16 %v366, %v366
      %v399 = vpack.c.b16 %v367, %v367
      %v400 = vpack.c.b16 %v368, %v368
      %v401 = vpack.c.b16 %v369, %v369
      %v402 = vpack.c.b16 %v370, %v370
      %v403 = vpack.c.b16 %v371, %v371
      %v404 = vpack.c.b16 %v372, %v372
      %v405 = vpack.c.b16 %v373, %v373
      %v406 = vpack.c.b16 %v374, %v374
      %v407 = vpack.c.b16 %v375, %v375
      %v408 = vpack.c.b16 %v376, %v376
      %v409 = vpack.c.b16 %v377, %v377
      %v410 = vpack.c.b16 %v378, %v378
      %v411 = vpack.c.b16 %v379, %v379
      %444 = vst [vmem:[%s145] sm:$0xf] %v380
      %445 = vst [vmem:[%s145 + $0x4] sm:$0xf] %v381
      %446 = vst [vmem:[%s145 + $0x8] sm:$0xf] %v382
      %447 = vst [vmem:[%s145 + $0xc] sm:$0xf] %v383
      %448 = vst [vmem:[%s145 + $0x10] sm:$0xf] %v384
      %449 = vst [vmem:[%s145 + $0x14] sm:$0xf] %v385
      %450 = vst [vmem:[%s145 + $0x18] sm:$0xf] %v386
      %451 = vst [vmem:[%s145 + $0x1c] sm:$0xf] %v387
      %452 = vst [vmem:[%s145 + $0x20] sm:$0xf] %v388
      %453 = vst [vmem:[%s145 + $0x24] sm:$0xf] %v389
      %454 = vst [vmem:[%s145 + $0x28] sm:$0xf] %v390
      %455 = vst [vmem:[%s145 + $0x2c] sm:$0xf] %v391
      %456 = vst [vmem:[%s145 + $0x30] sm:$0xf] %v392
      %457 = vst [vmem:[%s145 + $0x34] sm:$0xf] %v393
      %458 = vst [vmem:[%s145 + $0x38] sm:$0xf] %v394
      %459 = vst [vmem:[%s145 + $0x3c] sm:$0xf] %v395
      %460 = vst [vmem:[%s145 + $0x40] sm:$0xf] %v396
      %461 = vst [vmem:[%s145 + $0x44] sm:$0xf] %v397
      %462 = vst [vmem:[%s145 + $0x48] sm:$0xf] %v398
      %463 = vst [vmem:[%s145 + $0x4c] sm:$0xf] %v399
      %464 = vst [vmem:[%s145 + $0x50] sm:$0xf] %v400
      %465 = vst [vmem:[%s145 + $0x54] sm:$0xf] %v401
      %466 = vst [vmem:[%s145 + $0x58] sm:$0xf] %v402
      %467 = vst [vmem:[%s145 + $0x5c] sm:$0xf] %v403
      %468 = vst [vmem:[%s145 + $0x60] sm:$0xf] %v404
      %469 = vst [vmem:[%s145 + $0x64] sm:$0xf] %v405
      %470 = vst [vmem:[%s145 + $0x68] sm:$0xf] %v406
      %471 = vst [vmem:[%s145 + $0x6c] sm:$0xf] %v407
      %472 = vst [vmem:[%s145 + $0x70] sm:$0xf] %v408
      %473 = vst [vmem:[%s145 + $0x74] sm:$0xf] %v409
      %474 = vst [vmem:[%s145 + $0x78] sm:$0xf] %v410
      %475 = vst [vmem:[%s145 + $0x7c] sm:$0xf] %v411
      %s476 = smul.u32 32, %s13
      %p477 = scmp.lt.s32.totalorder %s476, 63
      %s478 = scalar_select %p477, %s476, 63
      %s479 = smul.addr %s478, 4
      %s480 = scalar_lea.vmem %s2, %s479
      // Predicated region
      $region29: #{bottleneck_forward.6} parent=27 // pred_check
        %p481 = pneg %p78
      $region30: #{bottleneck_forward.6} parent=27 // pred_check_branch
        %483 = sbr.rel (%p481) target = $region32
      $region31: #{bottleneck_forward.6} parent=27 // pred_region
        %s484 = smul.u32 32, %s13
      $region32: #{bottleneck_forward.6} parent=27 // pred_fallthru
        _
    $region28: #{bottleneck_forward.6} parent=5 // pred_fallthru
      _
    %p485 = scmp.le.s32.totalorder 2, %s8
    // Predicated region
    $region33: #{bottleneck_forward.6} parent=5 // pred_check
      %p486 = pneg %p485
    $region34: #{bottleneck_forward.6} parent=5 // pred_check_branch
      %488 = sbr.rel (%p486) target = $region36
    $region35: #{bottleneck_forward.6} parent=5 // pred_region
      %s489 = ssub.s32 %s8, 2
      // Predicated region
      $region37: #{bottleneck_forward.6} parent=35 // pred_check
        %p490 = pneg %p84
      $region38: #{bottleneck_forward.6} parent=35 // pred_check_branch
        %492 = sbr.rel (%p490) target = $region40
      $region39: #{bottleneck_forward.6} parent=35 // pred_region
        %s493 = smul.u32 32, %s14
        %p494 = scmp.lt.s32.totalorder %s493, 63
        %s495 = scalar_select %p494, %s493, 63
        %s496 = smul.addr %s495, 4
        %s497 = scalar_lea.vmem %s2, %s496
      $region40: #{bottleneck_forward.6} parent=35 // pred_fallthru
        _
    $region36: #{bottleneck_forward.6} parent=5 // pred_fallthru
      _
  $region6: #{bottleneck_forward.6} parent=0 // loop_footer
    %s12 = sadd.s32 1, %s8
  $region7: #{bottleneck_forward.6} parent=0 // loop_footer_branch
    %7 = sbr.rel target = $region3
  $region8: #{bottleneck_forward.6} parent=0 // loop_exit
    _

// kernel: bottleneck_forward.9
$region0: #{bottleneck_forward.9}
  #allocation0 [shape = 'u32[]', space=smem, size = 0x4, offset = 0x4, fixed_abs, tag = 'smem constant byte address 0x4 - core index']
  #allocation1 [shape = 'u32[144,128]{1,0:T(1,128)}', space=vmem, size = 0x12000, scoped, tag = 'internal scratch']
  %s0 = inlined_call_operand.vmem [shape: bf16[128,128], index: 0, kind: input, shape index: {}]
  %s1 = inlined_call_operand.vmem [shape: f32[8,128], index: 1, kind: input, shape index: {}]
  %s2 = inlined_call_operand.vmem [shape: bf16[128,128], index: 2, kind: input, shape index: {}]
  %s3 = inlined_call_operand.vmem [shape: f32[8,128], index: 3, kind: input, shape index: {}]
  %s4 = inlined_call_operand.hbm [shape: f32[128,128], index: 4, kind: output, shape index: {}]
  %s5 = sld [smem:[#allocation0]]
  $region49: #{bottleneck_forward.9} parent=0
    _
  %s7 = ssub.s32 1, %s5
  %s8 = scalar_select 0, %s7, %s5
  $region1: #{bottleneck_forward.9} parent=0
    #allocation2 [shape = 'u8[65536]{0}', space=vmem, size = 0x10000, scoped, tag = 'output window, operand 0']
    #allocation3 [shape = 's32[2]{0}', space=sflag, size = 0x8, scoped, tag = 'scoped memory for bottleneck_forward.9']
    %9 = vsyncpa [#allocation3], 0
    %s10 = scalar_lea.sflag [#allocation3], 1
    %11 = vsyncpa %s10, 0
    loop: start=0, step=1, limit=4
    $region2: #{bottleneck_forward.9} parent=1 // loop_pre_header
      _
    $region3: #{bottleneck_forward.9} parent=1 // loop_header
      %s13 = sphi 0, %s17
      %p14 = scmp.ge.s32.totalorder %s13, 4
      %s23 = sphi 0, %s25
      %s26 = sphi 0, %s23
      %s27 = sphi 0, %s26
      %s43 = sphi 0, %s27
      %s47 = sphi 0, %s47
      %s49 = sphi 0, %s47
      %s50 = sphi 0, %s49
      %s64 = sphi 0, %s50
      %s70 = sphi 0, %s72
      %s73 = sphi 0, %s70
      %s74 = sphi 0, %s73
      %s90 = sphi 0, %s74
      %s94 = sphi 0, %s94
      %s96 = sphi 0, %s94
      %s97 = sphi 0, %s96
      %s111 = sphi 0, %s97
      %s117 = sphi 0, %s119
      %s120 = sphi 0, %s117
      %s121 = sphi 0, %s120
      %s137 = sphi 0, %s121
    $region4: #{bottleneck_forward.9} parent=1 // loop_header_branch
      %16 = sbr.rel (%p14) target = $region8
    $region5: #{bottleneck_forward.9} parent=1 // loop_body
      %s18 = ssub.s32 %s13, 1
      %s19 = ssub.s32 %s13, 2
      %s20 = sadd.s32 %s13, 1
      %s21 = ssub.s32 %s13, %s20
      %p22 = scmp.eq.s32.totalorder %s21, 0
      %s24 = sadd.s32 %s23, 1
      %s25 = scalar_select %p22, %s23, %s24
      %p28 = pneg %p22
      %p29 = scmp.eq.s32.totalorder %s13, 1
      %p30 = por %p28, %p29
      %p31 = scmp.ne.s32.totalorder %s23, %s26
      %p32 = scmp.eq.s32.totalorder %s13, 0
      %p33 = por %p31, %p32
      %p34 = scmp.ne.s32.totalorder %s23, %s26
      %p35 = scmp.eq.s32.totalorder %s18, 1
      %p36 = por %p34, %p35
      %p37 = scmp.ne.s32.totalorder %s26, %s27
      %p38 = scmp.eq.s32.totalorder %s18, 0
      %p39 = por %p37, %p38
      %p40 = scmp.ne.s32.totalorder %s26, %s27
      %p41 = scmp.eq.s32.totalorder %s19, 1
      %p42 = por %p40, %p41
      %p44 = scmp.ne.s32.totalorder %s27, %s43
      %p45 = scmp.eq.s32.totalorder %s19, 0
      %p46 = por %p44, %p45
      %s48 = sadd.s32 %s47, 1
      %p51 = scmp.eq.s32.totalorder %s13, 1
      %p52 = scmp.ne.s32.totalorder %s47, %s49
      %p53 = scmp.eq.s32.totalorder %s13, 0
      %p54 = por %p52, %p53
      %p55 = scmp.ne.s32.totalorder %s47, %s49
      %p56 = scmp.eq.s32.totalorder %s18, 1
      %p57 = por %p55, %p56
      %p58 = scmp.ne.s32.totalorder %s49, %s50
      %p59 = scmp.eq.s32.totalorder %s18, 0
      %p60 = por %p58, %p59
      %p61 = scmp.ne.s32.totalorder %s49, %s50
      %p62 = scmp.eq.s32.totalorder %s19, 1
      %p63 = por %p61, %p62
      %p65 = scmp.ne.s32.totalorder %s50, %s64
      %p66 = scmp.eq.s32.totalorder %s19, 0
      %p67 = por %p65, %p66
      %s68 = ssub.s32 %s13, %s20
      %p69 = scmp.eq.s32.totalorder %s68, 0
      %s71 = sadd.s32 %s70, 1
      %s72 = scalar_select %p69, %s70, %s71
      %p75 = pneg %p69
      %p76 = scmp.eq.s32.totalorder %s13, 1
      %p77 = por %p75, %p76
      %p78 = scmp.ne.s32.totalorder %s70, %s73
      %p79 = scmp.eq.s32.totalorder %s13, 0
      %p80 = por %p78, %p79
      %p81 = scmp.ne.s32.totalorder %s70, %s73
      %p82 = scmp.eq.s32.totalorder %s18, 1
      %p83 = por %p81, %p82
      %p84 = scmp.ne.s32.totalorder %s73, %s74
      %p85 = scmp.eq.s32.totalorder %s18, 0
      %p86 = por %p84, %p85
      %p87 = scmp.ne.s32.totalorder %s73, %s74
      %p88 = scmp.eq.s32.totalorder %s19, 1
      %p89 = por %p87, %p88
      %p91 = scmp.ne.s32.totalorder %s74, %s90
      %p92 = scmp.eq.s32.totalorder %s19, 0
      %p93 = por %p91, %p92
      %s95 = sadd.s32 %s94, 1
      %p98 = scmp.eq.s32.totalorder %s13, 1
      %p99 = scmp.ne.s32.totalorder %s94, %s96
      %p100 = scmp.eq.s32.totalorder %s13, 0
      %p101 = por %p99, %p100
      %p102 = scmp.ne.s32.totalorder %s94, %s96
      %p103 = scmp.eq.s32.totalorder %s18, 1
      %p104 = por %p102, %p103
      %p105 = scmp.ne.s32.totalorder %s96, %s97
      %p106 = scmp.eq.s32.totalorder %s18, 0
      %p107 = por %p105, %p106
      %p108 = scmp.ne.s32.totalorder %s96, %s97
      %p109 = scmp.eq.s32.totalorder %s19, 1
      %p110 = por %p108, %p109
      %p112 = scmp.ne.s32.totalorder %s97, %s111
      %p113 = scmp.eq.s32.totalorder %s19, 0
      %p114 = por %p112, %p113
      %s115 = ssub.s32 %s13, %s20
      %p116 = scmp.eq.s32.totalorder %s115, 0
      %s118 = sadd.s32 %s117, 1
      %s119 = scalar_select %p116, %s117, %s118
      %p122 = pneg %p116
      %p123 = scmp.eq.s32.totalorder %s13, 1
      %p124 = por %p122, %p123
      %p125 = scmp.ne.s32.totalorder %s117, %s120
      %p126 = scmp.eq.s32.totalorder %s13, 0
      %p127 = por %p125, %p126
      %p128 = scmp.ne.s32.totalorder %s117, %s120
      %p129 = scmp.eq.s32.totalorder %s18, 1
      %p130 = por %p128, %p129
      %p131 = scmp.ne.s32.totalorder %s120, %s121
      %p132 = scmp.eq.s32.totalorder %s18, 0
      %p133 = por %p131, %p132
      %p134 = scmp.ne.s32.totalorder %s120, %s121
      %p135 = scmp.eq.s32.totalorder %s19, 1
      %p136 = por %p134, %p135
      %p138 = scmp.ne.s32.totalorder %s121, %s137
      %p139 = scmp.eq.s32.totalorder %s19, 0
      %p140 = por %p138, %p139
      %p141 = scmp.le.s32.totalorder 1, %s13
      %p142 = scmp.lt.s32.totalorder %s13, 3
      %p143 = pnand %p141, %p142
      %p144 = pneg %p143
      // Predicated region
      $region9: #{bottleneck_forward.9} parent=5 // pred_check
        _
      $region10: #{bottleneck_forward.9} parent=5 // pred_check_branch
        %146 = sbr.rel (%p143) target = $region12
      $region11: #{bottleneck_forward.9} parent=5 // pred_region
        %s147 = ssub.s32 %s13, 1
        // Predicated region
        $region13: #{bottleneck_forward.9} parent=11 // pred_check
          %p148 = pneg %p60
        $region14: #{bottleneck_forward.9} parent=11 // pred_check_branch
          %150 = sbr.rel (%p148) target = $region16
        $region15: #{bottleneck_forward.9} parent=11 // pred_region
          _
        $region16: #{bottleneck_forward.9} parent=11 // pred_fallthru
          _
        // Predicated region
        $region17: #{bottleneck_forward.9} parent=11 // pred_check
          %p151 = pneg %p107
        $region18: #{bottleneck_forward.9} parent=11 // pred_check_branch
          %153 = sbr.rel (%p151) target = $region20
        $region19: #{bottleneck_forward.9} parent=11 // pred_region
          _
        $region20: #{bottleneck_forward.9} parent=11 // pred_fallthru
          _
      $region12: #{bottleneck_forward.9} parent=5 // pred_fallthru
        _
      %p154 = scmp.lt.s32.totalorder %s13, 2
      // Predicated region
      $region21: #{bottleneck_forward.9} parent=5 // pred_check
        %p155 = pneg %p154
      $region22: #{bottleneck_forward.9} parent=5 // pred_check_branch
        %157 = sbr.rel (%p155) target = $region24
      $region23: #{bottleneck_forward.9} parent=5 // pred_region
        // Predicated region
        $region25: #{bottleneck_forward.9} parent=23 // pred_check
          %p158 = pneg %p33
        $region26: #{bottleneck_forward.9} parent=23 // pred_check_branch
          %160 = sbr.rel (%p158) target = $region28
        $region27: #{bottleneck_forward.9} parent=23 // pred_region
          %s161 = smul.u32 8, %s13
          %p162 = scmp.lt.s32.totalorder %s161, 15
          %s163 = scalar_select %p162, %s161, 15
          %s164 = smul.addr %s163, 4
          %s165 = scalar_lea.vmem %s0, %s164
          %s166 = smul.u32 8, %s13
        $region28: #{bottleneck_forward.9} parent=23 // pred_fallthru
          _
        // Predicated region
        $region29: #{bottleneck_forward.9} parent=23 // pred_check
          %p167 = pneg %p80
        $region30: #{bottleneck_forward.9} parent=23 // pred_check_branch
          %169 = sbr.rel (%p167) target = $region32
        $region31: #{bottleneck_forward.9} parent=23 // pred_region
          %s170 = smul.u32 8, %s13
          %p171 = scmp.lt.s32.totalorder %s170, 15
          %s172 = scalar_select %p171, %s170, 15
          %s173 = smul.addr %s172, 4
          %s174 = scalar_lea.vmem %s2, %s173
          %s175 = smul.u32 8, %s13
        $region32: #{bottleneck_forward.9} parent=23 // pred_fallthru
          _
      $region24: #{bottleneck_forward.9} parent=5 // pred_fallthru
        _
      %p176 = scmp.le.s32.totalorder 1, %s13
      %p177 = scmp.lt.s32.totalorder %s13, 3
      %p178 = pnand %p176, %p177
      %p179 = pneg %p178
      // Predicated region
      $region33: #{bottleneck_forward.9} parent=5 // pred_check
        _
      $region34: #{bottleneck_forward.9} parent=5 // pred_check_branch
        %181 = sbr.rel (%p178) target = $region36
      $region35: #{bottleneck_forward.9} parent=5 // pred_region
        %s182 = ssub.s32 %s13, 1
        %s183 = smul.u32 8, %s18
        %p184 = scmp.lt.s32.totalorder %s183, 15
        %s185 = scalar_select %p184, %s183, 15
        %s186 = smul.addr %s185, 4
        %s187 = scalar_lea.vmem %s0, %s186
        %p188 = pneg %p39
        %p189 = pneg %p36
        %p190 = pneg %p60
        %p191 = pneg %p57
        %s192 = smul.u32 8, %s18
        %p193 = scmp.lt.s32.totalorder %s192, 15
        %s194 = scalar_select %p193, %s192, 15
        %s195 = smul.addr %s194, 4
        %s196 = scalar_lea.vmem %s2, %s195
        %p197 = pneg %p86
        %p198 = pneg %p83
        %p199 = pneg %p107
        %p200 = pneg %p104
        %p201 = pneg %p133
        %p202 = pneg %p130
        %s203 = sand.u32 %s120, 1
        %s204 = scalar_lea.sflag [#allocation3], %s203
        %s205 = sand.u32 %s120, 1
        %s206 = smul.addr %s205, 64
        %s207 = scalar_lea.vmem [#allocation2], %s206
        %s208 = smul.u32 8, %s18
        %p209 = scmp.lt.s32.totalorder %s208, 15
        %s210 = scalar_select %p209, %s208, 15
        %s211 = smul.addr %s210, 4
        %s212 = scalar_lea.vmem %s0, %s211
        %s213 = smul.u32 8, %s18
        %s214 = smul.u32 8, %s18
        %p215 = scmp.lt.s32.totalorder %s214, 15
        %s216 = scalar_select %p215, %s214, 15
        %s217 = smul.addr %s216, 4
        %s218 = scalar_lea.vmem %s2, %s217
        %s219 = smul.u32 8, %s18
        %s220 = smul.u32 8, %s18
        %v221 = vld [vmem:[%s1] sm:$0xff]
        %v222 = vld [vmem:[%s212] sm:$0xf]
        %v223 = vld [vmem:[%s212 + $0x4] sm:$0xf]
        %v224 = vld [vmem:[%s212 + $0x8] sm:$0xf]
        %v225 = vld [vmem:[%s212 + $0xc] sm:$0xf]
        %v226 = vld [vmem:[%s212 + $0x10] sm:$0xf]
        %v227 = vld [vmem:[%s212 + $0x14] sm:$0xf]
        %v228 = vld [vmem:[%s212 + $0x18] sm:$0xf]
        %v229 = vld [vmem:[%s212 + $0x1c] sm:$0xf]
        %v230 = vunpack.c.l.bf16 %v222
        %v231 = vunpack.c.l.bf16 %v223
        %v232 = vunpack.c.l.bf16 %v224
        %v233 = vunpack.c.l.bf16 %v225
        %v234 = vunpack.c.l.bf16 %v226
        %v235 = vunpack.c.l.bf16 %v227
        %v236 = vunpack.c.l.bf16 %v228
        %v237 = vunpack.c.l.bf16 %v229
        %v238 = vlaneseq
        %v239 = vshrl.u32 %v238, 7
        %v240 = vsub.s32 0, %v239
        %v241 = vrot.slane %v221, %v240
        %v242 = vmul.f32 %v230, %v241
        %v243 = vmul.f32 %v231, %v241
        %v244 = vmul.f32 %v232, %v241
        %v245 = vmul.f32 %v233, %v241
        %v246 = vmul.f32 %v234, %v241
        %v247 = vmul.f32 %v235, %v241
        %v248 = vmul.f32 %v236, %v241
        %v249 = vmul.f32 %v237, %v241
        %v250 = vlaneseq
        %v251 = vshrl.u32 %v250, 7
        %v252 = vsub.s32 1, %v251
        %v253 = vrot.slane %v221, %v252
        %v254 = vadd.f32 %v242, %v253
        %v255 = vadd.f32 %v243, %v253
        %v256 = vadd.f32 %v244, %v253
        %v257 = vadd.f32 %v245, %v253
        %v258 = vadd.f32 %v246, %v253
        %v259 = vadd.f32 %v247, %v253
        %v260 = vadd.f32 %v248, %v253
        %v261 = vadd.f32 %v249, %v253
        %v262 = vld [vmem:[%s3] sm:$0xff]
        %v263 = vld [vmem:[%s218] sm:$0xf]
        %v264 = vld [vmem:[%s218 + $0x4] sm:$0xf]
        %v265 = vld [vmem:[%s218 + $0x8] sm:$0xf]
        %v266 = vld [vmem:[%s218 + $0xc] sm:$0xf]
        %v267 = vld [vmem:[%s218 + $0x10] sm:$0xf]
        %v268 = vld [vmem:[%s218 + $0x14] sm:$0xf]
        %v269 = vld [vmem:[%s218 + $0x18] sm:$0xf]
        %v270 = vld [vmem:[%s218 + $0x1c] sm:$0xf]
        %v271 = vunpack.c.l.bf16 %v263
        %v272 = vunpack.c.l.bf16 %v264
        %v273 = vunpack.c.l.bf16 %v265
        %v274 = vunpack.c.l.bf16 %v266
        %v275 = vunpack.c.l.bf16 %v267
        %v276 = vunpack.c.l.bf16 %v268
        %v277 = vunpack.c.l.bf16 %v269
        %v278 = vunpack.c.l.bf16 %v270
        %v279 = vlaneseq
        %v280 = vshrl.u32 %v279, 7
        %v281 = vsub.s32 0, %v280
        %v282 = vrot.slane %v262, %v281
        %v283 = vmul.f32 %v271, %v282
        %v284 = vmul.f32 %v272, %v282
        %v285 = vmul.f32 %v273, %v282
        %v286 = vmul.f32 %v274, %v282
        %v287 = vmul.f32 %v275, %v282
        %v288 = vmul.f32 %v276, %v282
        %v289 = vmul.f32 %v277, %v282
        %v290 = vmul.f32 %v278, %v282
        %v291 = vlaneseq
        %v292 = vshrl.u32 %v291, 7
        %v293 = vsub.s32 1, %v292
        %v294 = vrot.slane %v262, %v293
        %v295 = vadd.f32 %v283, %v294
        %v296 = vadd.f32 %v284, %v294
        %v297 = vadd.f32 %v285, %v294
        %v298 = vadd.f32 %v286, %v294
        %v299 = vadd.f32 %v287, %v294
        %v300 = vadd.f32 %v288, %v294
        %v301 = vadd.f32 %v289, %v294
        %v302 = vadd.f32 %v290, %v294
        %v303 = vadd.f32 %v254, %v295
        %v304 = vadd.f32 %v255, %v296
        %v305 = vadd.f32 %v256, %v297
        %v306 = vadd.f32 %v257, %v298
        %v307 = vadd.f32 %v258, %v299
        %v308 = vadd.f32 %v259, %v300
        %v309 = vadd.f32 %v260, %v301
        %v310 = vadd.f32 %v261, %v302
        %v311 = vmax.f32 %v303, 0.0
        %v312 = vmax.f32 %v304, 0.0
        %v313 = vmax.f32 %v305, 0.0
        %v314 = vmax.f32 %v306, 0.0
        %v315 = vmax.f32 %v307, 0.0
        %v316 = vmax.f32 %v308, 0.0
        %v317 = vmax.f32 %v309, 0.0
        %v318 = vmax.f32 %v310, 0.0
        %319 = vst [vmem:[%s207] sm:$0xff] %v311
        %320 = vst [vmem:[%s207 + $0x8] sm:$0xff] %v312
        %321 = vst [vmem:[%s207 + $0x10] sm:$0xff] %v313
        %322 = vst [vmem:[%s207 + $0x18] sm:$0xff] %v314
        %323 = vst [vmem:[%s207 + $0x20] sm:$0xff] %v315
        %324 = vst [vmem:[%s207 + $0x28] sm:$0xff] %v316
        %325 = vst [vmem:[%s207 + $0x30] sm:$0xff] %v317
        %326 = vst [vmem:[%s207 + $0x38] sm:$0xff] %v318
        %s327 = sand.u32 %s120, 1
        %s328 = scalar_lea.sflag [#allocation3], %s327
        %s329 = sand.u32 %s120, 1
        %s330 = smul.addr %s329, 64
        %s331 = scalar_lea.vmem [#allocation2], %s330
        // Predicated region
        $region37: #{bottleneck_forward.9} parent=35 // pred_check
          %p332 = pneg %p130
        $region38: #{bottleneck_forward.9} parent=35 // pred_check_branch
          %334 = sbr.rel (%p332) target = $region40
        $region39: #{bottleneck_forward.9} parent=35 // pred_region
          %s335 = smul.u32 8, %s18
          %s337 = ssub.s32 1024, 1024
          %338 = vsyncadd %s328, %s337
          %s339 = smul.addr %s335, 128
          %s340 = scalar_lea.hbm %s4, %s339
          %s341 = sshll.u32 %s331, 4
          %s342 = int_to_ptr.vmem [resolvable:$true] %s341
          %347 = dma.vmem_to_hbm [thread:$0]  %s342, 1024, %s340, %s328, 128, 128, 8
        $region40: #{bottleneck_forward.9} parent=35 // pred_fallthru
          _
      $region36: #{bottleneck_forward.9} parent=5 // pred_fallthru
        _
      %p348 = scmp.le.s32.totalorder 2, %s13
      // Predicated region
      $region41: #{bottleneck_forward.9} parent=5 // pred_check
        %p349 = pneg %p348
      $region42: #{bottleneck_forward.9} parent=5 // pred_check_branch
        %351 = sbr.rel (%p349) target = $region44
      $region43: #{bottleneck_forward.9} parent=5 // pred_region
        %s352 = ssub.s32 %s13, 2
        // Predicated region
        $region45: #{bottleneck_forward.9} parent=43 // pred_check
          %p353 = pneg %p136
        $region46: #{bottleneck_forward.9} parent=43 // pred_check_branch
          %355 = sbr.rel (%p353) target = $region48
        $region47: #{bottleneck_forward.9} parent=43 // pred_region
          %s356 = sand.u32 %s121, 1
          %s357 = scalar_lea.sflag [#allocation3], %s356
          %s358 = sand.u32 %s121, 1
          %s359 = smul.addr %s358, 64
          %s360 = scalar_lea.vmem [#allocation2], %s359
          %361 = dma.done %s357, 1024
        $region48: #{bottleneck_forward.9} parent=43 // pred_fallthru
          _
      $region44: #{bottleneck_forward.9} parent=5 // pred_fallthru
        _
    $region6: #{bottleneck_forward.9} parent=1 // loop_footer
      %s17 = sadd.s32 1, %s13
    $region7: #{bottleneck_forward.9} parent=1 // loop_footer_branch
      %12 = sbr.rel target = $region3
    $region8: #{bottleneck_forward.9} parent=1 // loop_exit
      _
    %362 = vsyncpa [#allocation3], 1
    %s363 = scalar_lea.sflag [#allocation3], 1
    %364 = vsyncpa %s363, 1

// kernel: bottleneck_forward.8
$region0: #{bottleneck_forward.8}
  #allocation0 [shape = 'u32[]', space=smem, size = 0x4, offset = 0x4, fixed_abs, tag = 'smem constant byte address 0x4 - core index']
  #allocation1 [shape = 'u32[144,128]{1,0:T(1,128)}', space=vmem, size = 0x12000, scoped, tag = 'internal scratch']
  %s0 = inlined_call_operand.vmem [shape: bf16[128,128], index: 0, kind: input, shape index: {}]
  %s1 = inlined_call_operand.vmem [shape: f32[8,128], index: 1, kind: input, shape index: {}]
  %s2 = inlined_call_operand.vmem [shape: bf16[128,128], index: 2, kind: input, shape index: {}]
  %s3 = inlined_call_operand.vmem [shape: bf16[128,128], index: 3, kind: input, shape index: {}]
  %s4 = inlined_call_operand.vmem [shape: bf16[128,128], index: 4, kind: input, shape index: {}]
  %s5 = inlined_call_operand.vmem [shape: bf16[128,128], index: 5, kind: output, shape index: {0}]
  %s6 = inlined_call_operand.vmem [shape: f32[16,128], index: 6, kind: output, shape index: {1}]
  %s7 = inlined_call_operand.vmem [shape: bf16[128,128], index: 7, kind: output, shape index: {2}]
  %s8 = inlined_call_operand.vmem [shape: f32[16,128], index: 8, kind: output, shape index: {3}]
  %9 = xla_tuple %s5, %s6, %s7, %s8
  %s10 = sld [smem:[#allocation0]]
  $region77: #{bottleneck_forward.8} parent=0
    _
  %s12 = ssub.s32 1, %s10
  %s13 = scalar_select 0, %s12, %s10
  loop: start=0, step=1, limit=4
  $region2: #{bottleneck_forward.8} parent=0 // loop_pre_header
    _
  $region3: #{bottleneck_forward.8} parent=0 // loop_header
    %s15 = sphi 0, %s19
    %p16 = scmp.ge.s32.totalorder %s15, 4
    %s25 = sphi 0, %s27
    %s28 = sphi 0, %s25
    %s29 = sphi 0, %s28
    %s45 = sphi 0, %s29
    %s49 = sphi 0, %s49
    %s51 = sphi 0, %s49
    %s52 = sphi 0, %s51
    %s66 = sphi 0, %s52
    %s70 = sphi 0, %s70
    %s72 = sphi 0, %s70
    %s73 = sphi 0, %s72
    %s87 = sphi 0, %s73
    %s93 = sphi 0, %s95
    %s96 = sphi 0, %s93
    %s97 = sphi 0, %s96
    %s113 = sphi 0, %s97
    %s117 = sphi 0, %s117
    %s119 = sphi 0, %s117
    %s120 = sphi 0, %s119
    %s134 = sphi 0, %s120
    %s140 = sphi 0, %s142
    %s143 = sphi 0, %s140
    %s144 = sphi 0, %s143
    %s160 = sphi 0, %s144
    %s166 = sphi 0, %s168
    %s169 = sphi 0, %s166
    %s170 = sphi 0, %s169
    %s186 = sphi 0, %s170
    %s192 = sphi 0, %s194
    %s195 = sphi 0, %s192
    %s196 = sphi 0, %s195
    %s212 = sphi 0, %s196
    %s218 = sphi 0, %s220
    %s221 = sphi 0, %s218
    %s222 = sphi 0, %s221
    %s238 = sphi 0, %s222
  $region4: #{bottleneck_forward.8} parent=0 // loop_header_branch
    %18 = sbr.rel (%p16) target = $region8
  $region5: #{bottleneck_forward.8} parent=0 // loop_body
    %s20 = ssub.s32 %s15, 1
    %s21 = ssub.s32 %s15, 2
    %s22 = sadd.s32 %s15, 1
    %s23 = ssub.s32 %s15, %s22
    %p24 = scmp.eq.s32.totalorder %s23, 0
    %s26 = sadd.s32 %s25, 1
    %s27 = scalar_select %p24, %s25, %s26
    %p30 = pneg %p24
    %p31 = scmp.eq.s32.totalorder %s15, 1
    %p32 = por %p30, %p31
    %p33 = scmp.ne.s32.totalorder %s25, %s28
    %p34 = scmp.eq.s32.totalorder %s15, 0
    %p35 = por %p33, %p34
    %p36 = scmp.ne.s32.totalorder %s25, %s28
    %p37 = scmp.eq.s32.totalorder %s20, 1
    %p38 = por %p36, %p37
    %p39 = scmp.ne.s32.totalorder %s28, %s29
    %p40 = scmp.eq.s32.totalorder %s20, 0
    %p41 = por %p39, %p40
    %p42 = scmp.ne.s32.totalorder %s28, %s29
    %p43 = scmp.eq.s32.totalorder %s21, 1
    %p44 = por %p42, %p43
    %p46 = scmp.ne.s32.totalorder %s29, %s45
    %p47 = scmp.eq.s32.totalorder %s21, 0
    %p48 = por %p46, %p47
    %s50 = sadd.s32 %s49, 1
    %p53 = scmp.eq.s32.totalorder %s15, 1
    %p54 = scmp.ne.s32.totalorder %s49, %s51
    %p55 = scmp.eq.s32.totalorder %s15, 0
    %p56 = por %p54, %p55
    %p57 = scmp.ne.s32.totalorder %s49, %s51
    %p58 = scmp.eq.s32.totalorder %s20, 1
    %p59 = por %p57, %p58
    %p60 = scmp.ne.s32.totalorder %s51, %s52
    %p61 = scmp.eq.s32.totalorder %s20, 0
    %p62 = por %p60, %p61
    %p63 = scmp.ne.s32.totalorder %s51, %s52
    %p64 = scmp.eq.s32.totalorder %s21, 1
    %p65 = por %p63, %p64
    %p67 = scmp.ne.s32.totalorder %s52, %s66
    %p68 = scmp.eq.s32.totalorder %s21, 0
    %p69 = por %p67, %p68
    %s71 = sadd.s32 %s70, 1
    %p74 = scmp.eq.s32.totalorder %s15, 1
    %p75 = scmp.ne.s32.totalorder %s70, %s72
    %p76 = scmp.eq.s32.totalorder %s15, 0
    %p77 = por %p75, %p76
    %p78 = scmp.ne.s32.totalorder %s70, %s72
    %p79 = scmp.eq.s32.totalorder %s20, 1
    %p80 = por %p78, %p79
    %p81 = scmp.ne.s32.totalorder %s72, %s73
    %p82 = scmp.eq.s32.totalorder %s20, 0
    %p83 = por %p81, %p82
    %p84 = scmp.ne.s32.totalorder %s72, %s73
    %p85 = scmp.eq.s32.totalorder %s21, 1
    %p86 = por %p84, %p85
    %p88 = scmp.ne.s32.totalorder %s73, %s87
    %p89 = scmp.eq.s32.totalorder %s21, 0
    %p90 = por %p88, %p89
    %s91 = ssub.s32 %s15, %s22
    %p92 = scmp.eq.s32.totalorder %s91, 0
    %s94 = sadd.s32 %s93, 1
    %s95 = scalar_select %p92, %s93, %s94
    %p98 = pneg %p92
    %p99 = scmp.eq.s32.totalorder %s15, 1
    %p100 = por %p98, %p99
    %p101 = scmp.ne.s32.totalorder %s93, %s96
    %p102 = scmp.eq.s32.totalorder %s15, 0
    %p103 = por %p101, %p102
    %p104 = scmp.ne.s32.totalorder %s93, %s96
    %p105 = scmp.eq.s32.totalorder %s20, 1
    %p106 = por %p104, %p105
    %p107 = scmp.ne.s32.totalorder %s96, %s97
    %p108 = scmp.eq.s32.totalorder %s20, 0
    %p109 = por %p107, %p108
    %p110 = scmp.ne.s32.totalorder %s96, %s97
    %p111 = scmp.eq.s32.totalorder %s21, 1
    %p112 = por %p110, %p111
    %p114 = scmp.ne.s32.totalorder %s97, %s113
    %p115 = scmp.eq.s32.totalorder %s21, 0
    %p116 = por %p114, %p115
    %s118 = sadd.s32 %s117, 1
    %p121 = scmp.eq.s32.totalorder %s15, 1
    %p122 = scmp.ne.s32.totalorder %s117, %s119
    %p123 = scmp.eq.s32.totalorder %s15, 0
    %p124 = por %p122, %p123
    %p125 = scmp.ne.s32.totalorder %s117, %s119
    %p126 = scmp.eq.s32.totalorder %s20, 1
    %p127 = por %p125, %p126
    %p128 = scmp.ne.s32.totalorder %s119, %s120
    %p129 = scmp.eq.s32.totalorder %s20, 0
    %p130 = por %p128, %p129
    %p131 = scmp.ne.s32.totalorder %s119, %s120
    %p132 = scmp.eq.s32.totalorder %s21, 1
    %p133 = por %p131, %p132
    %p135 = scmp.ne.s32.totalorder %s120, %s134
    %p136 = scmp.eq.s32.totalorder %s21, 0
    %p137 = por %p135, %p136
    %s138 = ssub.s32 %s15, %s22
    %p139 = scmp.eq.s32.totalorder %s138, 0
    %s141 = sadd.s32 %s140, 1
    %s142 = scalar_select %p139, %s140, %s141
    %p145 = pneg %p139
    %p146 = scmp.eq.s32.totalorder %s15, 1
    %p147 = por %p145, %p146
    %p148 = scmp.ne.s32.totalorder %s140, %s143
    %p149 = scmp.eq.s32.totalorder %s15, 0
    %p150 = por %p148, %p149
    %p151 = scmp.ne.s32.totalorder %s140, %s143
    %p152 = scmp.eq.s32.totalorder %s20, 1
    %p153 = por %p151, %p152
    %p154 = scmp.ne.s32.totalorder %s143, %s144
    %p155 = scmp.eq.s32.totalorder %s20, 0
    %p156 = por %p154, %p155
    %p157 = scmp.ne.s32.totalorder %s143, %s144
    %p158 = scmp.eq.s32.totalorder %s21, 1
    %p159 = por %p157, %p158
    %p161 = scmp.ne.s32.totalorder %s144, %s160
    %p162 = scmp.eq.s32.totalorder %s21, 0
    %p163 = por %p161, %p162
    %s164 = ssub.s32 %s15, %s22
    %p165 = scmp.eq.s32.totalorder %s164, 0
    %s167 = sadd.s32 %s166, 1
    %s168 = scalar_select %p165, %s166, %s167
    %p171 = pneg %p165
    %p172 = scmp.eq.s32.totalorder %s15, 1
    %p173 = por %p171, %p172
    %p174 = scmp.ne.s32.totalorder %s166, %s169
    %p175 = scmp.eq.s32.totalorder %s15, 0
    %p176 = por %p174, %p175
    %p177 = scmp.ne.s32.totalorder %s166, %s169
    %p178 = scmp.eq.s32.totalorder %s20, 1
    %p179 = por %p177, %p178
    %p180 = scmp.ne.s32.totalorder %s169, %s170
    %p181 = scmp.eq.s32.totalorder %s20, 0
    %p182 = por %p180, %p181
    %p183 = scmp.ne.s32.totalorder %s169, %s170
    %p184 = scmp.eq.s32.totalorder %s21, 1
    %p185 = por %p183, %p184
    %p187 = scmp.ne.s32.totalorder %s170, %s186
    %p188 = scmp.eq.s32.totalorder %s21, 0
    %p189 = por %p187, %p188
    %s190 = ssub.s32 %s15, %s22
    %p191 = scmp.eq.s32.totalorder %s190, 0
    %s193 = sadd.s32 %s192, 1
    %s194 = scalar_select %p191, %s192, %s193
    %p197 = pneg %p191
    %p198 = scmp.eq.s32.totalorder %s15, 1
    %p199 = por %p197, %p198
    %p200 = scmp.ne.s32.totalorder %s192, %s195
    %p201 = scmp.eq.s32.totalorder %s15, 0
    %p202 = por %p200, %p201
    %p203 = scmp.ne.s32.totalorder %s192, %s195
    %p204 = scmp.eq.s32.totalorder %s20, 1
    %p205 = por %p203, %p204
    %p206 = scmp.ne.s32.totalorder %s195, %s196
    %p207 = scmp.eq.s32.totalorder %s20, 0
    %p208 = por %p206, %p207
    %p209 = scmp.ne.s32.totalorder %s195, %s196
    %p210 = scmp.eq.s32.totalorder %s21, 1
    %p211 = por %p209, %p210
    %p213 = scmp.ne.s32.totalorder %s196, %s212
    %p214 = scmp.eq.s32.totalorder %s21, 0
    %p215 = por %p213, %p214
    %s216 = ssub.s32 %s15, %s22
    %p217 = scmp.eq.s32.totalorder %s216, 0
    %s219 = sadd.s32 %s218, 1
    %s220 = scalar_select %p217, %s218, %s219
    %p223 = pneg %p217
    %p224 = scmp.eq.s32.totalorder %s15, 1
    %p225 = por %p223, %p224
    %p226 = scmp.ne.s32.totalorder %s218, %s221
    %p227 = scmp.eq.s32.totalorder %s15, 0
    %p228 = por %p226, %p227
    %p229 = scmp.ne.s32.totalorder %s218, %s221
    %p230 = scmp.eq.s32.totalorder %s20, 1
    %p231 = por %p229, %p230
    %p232 = scmp.ne.s32.totalorder %s221, %s222
    %p233 = scmp.eq.s32.totalorder %s20, 0
    %p234 = por %p232, %p233
    %p235 = scmp.ne.s32.totalorder %s221, %s222
    %p236 = scmp.eq.s32.totalorder %s21, 1
    %p237 = por %p235, %p236
    %p239 = scmp.ne.s32.totalorder %s222, %s238
    %p240 = scmp.eq.s32.totalorder %s21, 0
    %p241 = por %p239, %p240
    %p242 = scmp.le.s32.totalorder 1, %s15
    %p243 = scmp.lt.s32.totalorder %s15, 3
    %p244 = pnand %p242, %p243
    %p245 = pneg %p244
    // Predicated region
    $region9: #{bottleneck_forward.8} parent=5 // pred_check
      _
    $region10: #{bottleneck_forward.8} parent=5 // pred_check_branch
      %247 = sbr.rel (%p244) target = $region12
    $region11: #{bottleneck_forward.8} parent=5 // pred_region
      %s248 = ssub.s32 %s15, 1
      // Predicated region
      $region13: #{bottleneck_forward.8} parent=11 // pred_check
        %p249 = pneg %p62
      $region14: #{bottleneck_forward.8} parent=11 // pred_check_branch
        %251 = sbr.rel (%p249) target = $region16
      $region15: #{bottleneck_forward.8} parent=11 // pred_region
        _
      $region16: #{bottleneck_forward.8} parent=11 // pred_fallthru
        _
      // Predicated region
      $region17: #{bottleneck_forward.8} parent=11 // pred_check
        %p252 = pneg %p83
      $region18: #{bottleneck_forward.8} parent=11 // pred_check_branch
        %254 = sbr.rel (%p252) target = $region20
      $region19: #{bottleneck_forward.8} parent=11 // pred_region
        _
      $region20: #{bottleneck_forward.8} parent=11 // pred_fallthru
        _
      // Predicated region
      $region21: #{bottleneck_forward.8} parent=11 // pred_check
        %p255 = pneg %p130
      $region22: #{bottleneck_forward.8} parent=11 // pred_check_branch
        %257 = sbr.rel (%p255) target = $region24
      $region23: #{bottleneck_forward.8} parent=11 // pred_region
        _
      $region24: #{bottleneck_forward.8} parent=11 // pred_fallthru
        _
    $region12: #{bottleneck_forward.8} parent=5 // pred_fallthru
      _
    %p258 = scmp.lt.s32.totalorder %s15, 2
    // Predicated region
    $region25: #{bottleneck_forward.8} parent=5 // pred_check
      %p259 = pneg %p258
    $region26: #{bottleneck_forward.8} parent=5 // pred_check_branch
      %261 = sbr.rel (%p259) target = $region28
    $region27: #{bottleneck_forward.8} parent=5 // pred_region
      // Predicated region
      $region29: #{bottleneck_forward.8} parent=27 // pred_check
        %p262 = pneg %p35
      $region30: #{bottleneck_forward.8} parent=27 // pred_check_branch
        %264 = sbr.rel (%p262) target = $region32
      $region31: #{bottleneck_forward.8} parent=27 // pred_region
        %s265 = smul.u32 8, %s15
        %p266 = scmp.lt.s32.totalorder %s265, 15
        %s267 = scalar_select %p266, %s265, 15
        %s268 = smul.addr %s267, 4
        %s269 = scalar_lea.vmem %s0, %s268
        %s270 = smul.u32 8, %s15
      $region32: #{bottleneck_forward.8} parent=27 // pred_fallthru
        _
      // Predicated region
      $region33: #{bottleneck_forward.8} parent=27 // pred_check
        %p271 = pneg %p103
      $region34: #{bottleneck_forward.8} parent=27 // pred_check_branch
        %273 = sbr.rel (%p271) target = $region36
      $region35: #{bottleneck_forward.8} parent=27 // pred_region
        %s274 = smul.u32 8, %s15
        %p275 = scmp.lt.s32.totalorder %s274, 15
        %s276 = scalar_select %p275, %s274, 15
        %s277 = smul.addr %s276, 4
        %s278 = scalar_lea.vmem %s3, %s277
        %s279 = smul.u32 8, %s15
      $region36: #{bottleneck_forward.8} parent=27 // pred_fallthru
        _
    $region28: #{bottleneck_forward.8} parent=5 // pred_fallthru
      _
    %p280 = scmp.le.s32.totalorder 1, %s15
    %p281 = scmp.lt.s32.totalorder %s15, 3
    %p282 = pnand %p280, %p281
    %p283 = pneg %p282
    // Predicated region
    $region37: #{bottleneck_forward.8} parent=5 // pred_check
      _
    $region38: #{bottleneck_forward.8} parent=5 // pred_check_branch
      %285 = sbr.rel (%p282) target = $region40
    $region39: #{bottleneck_forward.8} parent=5 // pred_region
      %s286 = ssub.s32 %s15, 1
      %s287 = smul.u32 8, %s20
      %p288 = scmp.lt.s32.totalorder %s287, 15
      %s289 = scalar_select %p288, %s287, 15
      %s290 = smul.addr %s289, 4
      %s291 = scalar_lea.vmem %s0, %s290
      %p292 = pneg %p41
      %p293 = pneg %p38
      %p294 = pneg %p62
      %p295 = pneg %p59
      %p296 = pneg %p83
      %p297 = pneg %p80
      %s298 = smul.u32 8, %s20
      %p299 = scmp.lt.s32.totalorder %s298, 15
      %s300 = scalar_select %p299, %s298, 15
      %s301 = smul.addr %s300, 4
      %s302 = scalar_lea.vmem %s3, %s301
      %p303 = pneg %p109
      %p304 = pneg %p106
      %p305 = pneg %p130
      %p306 = pneg %p127
      %p307 = pneg %p156
      %p308 = pneg %p153
      %s309 = smul.u32 8, %s20
      %p310 = scmp.lt.s32.totalorder %s309, 15
      %s311 = scalar_select %p310, %s309, 15
      %s312 = smul.addr %s311, 4
      %s313 = scalar_lea.vmem %s5, %s312
      %p314 = pneg %p182
      %p315 = pneg %p179
      %p316 = scmp.lt.s32.totalorder %s20, 1
      %s317 = scalar_select %p316, %s20, 1
      %s318 = smul.addr %s317, 8
      %s319 = scalar_lea.vmem %s6, %s318
      %p320 = pneg %p208
      %p321 = pneg %p205
      %s322 = smul.u32 8, %s20
      %p323 = scmp.lt.s32.totalorder %s322, 15
      %s324 = scalar_select %p323, %s322, 15
      %s325 = smul.addr %s324, 4
      %s326 = scalar_lea.vmem %s7, %s325
      %p327 = pneg %p234
      %p328 = pneg %p231
      %p329 = scmp.lt.s32.totalorder %s20, 1
      %s330 = scalar_select %p329, %s20, 1
      %s331 = smul.addr %s330, 8
      %s332 = scalar_lea.vmem %s8, %s331
      %s333 = smul.u32 8, %s20
      %p334 = scmp.lt.s32.totalorder %s333, 15
      %s335 = scalar_select %p334, %s333, 15
      %s336 = smul.addr %s335, 4
      %s337 = scalar_lea.vmem %s0, %s336
      %s338 = smul.u32 8, %s20
      %s339 = smul.u32 8, %s20
      %p340 = scmp.lt.s32.totalorder %s339, 15
      %s341 = scalar_select %p340, %s339, 15
      %s342 = smul.addr %s341, 4
      %s343 = scalar_lea.vmem %s3, %s342
      %s344 = smul.u32 8, %s20
      %s345 = smul.u32 8, %s20
      %p346 = scmp.lt.s32.totalorder %s345, 15
      %s347 = scalar_select %p346, %s345, 15
      %s348 = smul.addr %s347, 4
      %s349 = scalar_lea.vmem %s5, %s348
      %s350 = smul.u32 8, %s20
      %p351 = scmp.lt.s32.totalorder %s20, 1
      %s352 = scalar_select %p351, %s20, 1
      %s353 = smul.addr %s352, 8
      %s354 = scalar_lea.vmem %s6, %s353
      %s355 = smul.u32 8, %s20
      %p356 = scmp.lt.s32.totalorder %s355, 15
      %s357 = scalar_select %p356, %s355, 15
      %s358 = smul.addr %s357, 4
      %s359 = scalar_lea.vmem %s7, %s358
      %s360 = smul.u32 8, %s20
      %p361 = scmp.lt.s32.totalorder %s20, 1
      %s362 = scalar_select %p361, %s20, 1
      %s363 = smul.addr %s362, 8
      %s364 = scalar_lea.vmem %s8, %s363
      %v366 = vld [vmem:[%s1] sm:$0xff]
      %v367 = vld [vmem:[%s337] sm:$0xf]
      %v368 = vld [vmem:[%s337 + $0x4] sm:$0xf]
      %v369 = vld [vmem:[%s337 + $0x8] sm:$0xf]
      %v370 = vld [vmem:[%s337 + $0xc] sm:$0xf]
      %v371 = vld [vmem:[%s337 + $0x10] sm:$0xf]
      %v372 = vld [vmem:[%s337 + $0x14] sm:$0xf]
      %v373 = vld [vmem:[%s337 + $0x18] sm:$0xf]
      %v374 = vld [vmem:[%s337 + $0x1c] sm:$0xf]
      %v375 = vunpack.c.l.bf16 %v367
      %v376 = vunpack.c.l.bf16 %v368
      %v377 = vunpack.c.l.bf16 %v369
      %v378 = vunpack.c.l.bf16 %v370
      %v379 = vunpack.c.l.bf16 %v371
      %v380 = vunpack.c.l.bf16 %v372
      %v381 = vunpack.c.l.bf16 %v373
      %v382 = vunpack.c.l.bf16 %v374
      %v383 = vlaneseq
      %v384 = vshrl.u32 %v383, 7
      %v385 = vsub.s32 0, %v384
      %v386 = vrot.slane %v366, %v385
      %v387 = vmul.f32 %v375, %v386
      %v388 = vmul.f32 %v376, %v386
      %v389 = vmul.f32 %v377, %v386
      %v390 = vmul.f32 %v378, %v386
      %v391 = vmul.f32 %v379, %v386
      %v392 = vmul.f32 %v380, %v386
      %v393 = vmul.f32 %v381, %v386
      %v394 = vmul.f32 %v382, %v386
      %v395 = vlaneseq
      %v396 = vshrl.u32 %v395, 7
      %v397 = vsub.s32 1, %v396
      %v398 = vrot.slane %v366, %v397
      %v399 = vadd.f32 %v387, %v398
      %v400 = vadd.f32 %v388, %v398
      %v401 = vadd.f32 %v389, %v398
      %v402 = vadd.f32 %v390, %v398
      %v403 = vadd.f32 %v391, %v398
      %v404 = vadd.f32 %v392, %v398
      %v405 = vadd.f32 %v393, %v398
      %v406 = vadd.f32 %v394, %v398
      %v407 = vmax.f32 %v399, 0.0
      %v408 = vmax.f32 %v400, 0.0
      %v409 = vmax.f32 %v401, 0.0
      %v410 = vmax.f32 %v402, 0.0
      %v411 = vmax.f32 %v403, 0.0
      %v412 = vmax.f32 %v404, 0.0
      %v413 = vmax.f32 %v405, 0.0
      %v414 = vmax.f32 %v406, 0.0
      %v415 = vpack.c.bf16 %v408, %v407
      %v416 = vpack.c.bf16 %v410, %v409
      %v417 = vpack.c.bf16 %v412, %v411
      %v418 = vpack.c.bf16 %v414, %v413
      %v419 = vld [vmem:[%s2] sm:$0xf]
      %v420 = vld [vmem:[%s2 + $0x4] sm:$0xf]
      %v421 = vld [vmem:[%s2 + $0x8] sm:$0xf]
      %v422 = vld [vmem:[%s2 + $0xc] sm:$0xf]
      %v423 = vld [vmem:[%s2 + $0x10] sm:$0xf]
      %v424 = vld [vmem:[%s2 + $0x14] sm:$0xf]
      %v425 = vld [vmem:[%s2 + $0x18] sm:$0xf]
      %v426 = vld [vmem:[%s2 + $0x1c] sm:$0xf]
      %v427 = vld [vmem:[%s2 + $0x20] sm:$0xf]
      %v428 = vld [vmem:[%s2 + $0x24] sm:$0xf]
      %v429 = vld [vmem:[%s2 + $0x28] sm:$0xf]
      %v430 = vld [vmem:[%s2 + $0x2c] sm:$0xf]
      %v431 = vld [vmem:[%s2 + $0x30] sm:$0xf]
      %v432 = vld [vmem:[%s2 + $0x34] sm:$0xf]
      %v433 = vld [vmem:[%s2 + $0x38] sm:$0xf]
      %v434 = vld [vmem:[%s2 + $0x3c] sm:$0xf]
      %v451 = vunpack.c.l.b16 %v419
      %v452 = vunpack.c.l.b16 %v420
      %v453 = vunpack.c.l.b16 %v421
      %v454 = vunpack.c.l.b16 %v422
      %v455 = vunpack.c.l.b16 %v423
      %v456 = vunpack.c.l.b16 %v424
      %v457 = vunpack.c.l.b16 %v425
      %v458 = vunpack.c.l.b16 %v426
      %v459 = vunpack.c.l.b16 %v427
      %v460 = vunpack.c.l.b16 %v428
      %v461 = vunpack.c.l.b16 %v429
      %v462 = vunpack.c.l.b16 %v430
      %v463 = vunpack.c.l.b16 %v431
      %v464 = vunpack.c.l.b16 %v432
      %v465 = vunpack.c.l.b16 %v433
      %v466 = vunpack.c.l.b16 %v434
      %v467 = vpack.c.b16 %v452, %v451
      %v468 = vpack.c.b16 %v454, %v453
      %v469 = vpack.c.b16 %v456, %v455
      %v470 = vpack.c.b16 %v458, %v457
      %v471 = vpack.c.b16 %v460, %v459
      %v472 = vpack.c.b16 %v462, %v461
      %v473 = vpack.c.b16 %v464, %v463
      %v474 = vpack.c.b16 %v466, %v465
      %483 = vmatprep.subr.bf16.mxu0 0
      %484 = vmatpush1.bf16.msra.mxu0 %v467
      %485 = vmatprep.subr.bf16.mxu0 0
      %486 = vmatpush1.bf16.msra.mxu0 %v468
      %487 = vmatprep.subr.bf16.mxu0 0
      %488 = vmatpush1.bf16.msra.mxu0 %v469
      %489 = vmatprep.subr.bf16.mxu0 0
      %490 = vmatpush1.bf16.msra.mxu0 %v470
      %491 = vmatprep.subr.bf16.mxu0 0
      %492 = vmatpush1.bf16.msra.mxu0 %v471
      %493 = vmatprep.subr.bf16.mxu0 0
      %494 = vmatpush1.bf16.msra.mxu0 %v472
      %495 = vmatprep.subr.bf16.mxu0 0
      %496 = vmatpush1.bf16.msra.mxu0 %v473
      %497 = vmatprep.subr.bf16.mxu0 0
      %498 = vmatpush1.bf16.msra.mxu0 %v474
      %499 = vmatprep.subr.bf16.mxu0 0
      %500 = vmatpush1.bf16.msra.mxu0 0
      %501 = vmatprep.subr.bf16.mxu0 0
      %502 = vmatpush1.bf16.msra.mxu0 0
      %503 = vmatprep.subr.bf16.mxu0 0
      %504 = vmatpush1.bf16.msra.mxu0 0
      %505 = vmatprep.subr.bf16.mxu0 0
      %506 = vmatpush1.bf16.msra.mxu0 0
      %507 = vmatprep.subr.bf16.mxu0 0
      %508 = vmatpush1.bf16.msra.mxu0 0
      %509 = vmatprep.subr.bf16.mxu0 0
      %510 = vmatpush1.bf16.msra.mxu0 0
      %511 = vmatprep.subr.bf16.mxu0 0
      %512 = vmatpush1.bf16.msra.mxu0 0
      %513 = vmatprep.subr.bf16.mxu0 0
      %514 = vmatpush1.bf16.msra.mxu0 0
      %515 = vmatprep.mubr.bf16.mxu0 0
      %516 = vmatmul.mubr.bf16.gmra.mrb[0].mxu0 %v415
      %v517 = vpop.f32.mrb[0].mxu0
      %v518 = vadd.f32 0.0, %v517
      %v519 = vpop.f32.mrb[0].mxu0
      %v520 = vpop.f32.mrb[0].mxu0
      %v521 = vadd.f32 0.0, %v520
      %v522 = vpop.f32.mrb[0].mxu0
      %523 = vmatprep.mubr.bf16.mxu0 0
      %524 = vmatmul.mubr.bf16.gmra.mrb[0].mxu0 %v416
      %v525 = vpop.f32.mrb[0].mxu0
      %v526 = vadd.f32 0.0, %v525
      %v527 = vpop.f32.mrb[0].mxu0
      %v528 = vpop.f32.mrb[0].mxu0
      %v529 = vadd.f32 0.0, %v528
      %v530 = vpop.f32.mrb[0].mxu0
      %531 = vmatprep.mubr.bf16.mxu0 0
      %532 = vmatmul.mubr.bf16.gmra.mrb[0].mxu0 %v417
      %v533 = vpop.f32.mrb[0].mxu0
      %v534 = vadd.f32 0.0, %v533
      %v535 = vpop.f32.mrb[0].mxu0
      %v536 = vpop.f32.mrb[0].mxu0
      %v537 = vadd.f32 0.0, %v536
      %v538 = vpop.f32.mrb[0].mxu0
      %539 = vmatprep.mubr.bf16.mxu0 0
      %540 = vmatmul.mubr.bf16.gmra.mrb[0].mxu0 %v418
      %v541 = vpop.f32.mrb[0].mxu0
      %v542 = vadd.f32 0.0, %v541
      %v543 = vpop.f32.mrb[0].mxu0
      %v544 = vpop.f32.mrb[0].mxu0
      %v545 = vadd.f32 0.0, %v544
      %v546 = vpop.f32.mrb[0].mxu0
      %547 = vdwg.mxu0
      %v548 = vpack.c.bf16 %v521, %v518
      %v549 = vpack.c.bf16 %v529, %v526
      %v550 = vpack.c.bf16 %v537, %v534
      %v551 = vpack.c.bf16 %v545, %v542
      %v556 = vunpack.c.l.b16 %v548
      %v557 = vunpack.c.h.b16 %v548
      %v558 = vunpack.c.l.b16 %v549
      %v559 = vunpack.c.h.b16 %v549
      %v560 = vunpack.c.l.b16 %v550
      %v561 = vunpack.c.h.b16 %v550
      %v562 = vunpack.c.l.b16 %v551
      %v563 = vunpack.c.h.b16 %v551
      %v564 = vpack.c.b16 %v556, %v556
      %v565 = vpack.c.b16 %v557, %v557
      %v566 = vpack.c.b16 %v558, %v558
      %v567 = vpack.c.b16 %v559, %v559
      %v568 = vpack.c.b16 %v560, %v560
      %v569 = vpack.c.b16 %v561, %v561
      %v570 = vpack.c.b16 %v562, %v562
      %v571 = vpack.c.b16 %v563, %v563
      %580 = vst [vmem:[%s349] sm:$0xf] %v564
      %581 = vst [vmem:[%s349 + $0x4] sm:$0xf] %v565
      %582 = vst [vmem:[%s349 + $0x8] sm:$0xf] %v566
      %583 = vst [vmem:[%s349 + $0xc] sm:$0xf] %v567
      %584 = vst [vmem:[%s349 + $0x10] sm:$0xf] %v568
      %585 = vst [vmem:[%s349 + $0x14] sm:$0xf] %v569
      %586 = vst [vmem:[%s349 + $0x18] sm:$0xf] %v570
      %587 = vst [vmem:[%s349 + $0x1c] sm:$0xf] %v571
      %v588 = vadd.f32 %v518, %v521
      %v589 = vadd.f32 %v588, %v526
      %v590 = vadd.f32 %v589, %v529
      %v591 = vadd.f32 %v590, %v534
      %v592 = vadd.f32 %v591, %v537
      %v593 = vadd.f32 %v592, %v542
      %v594 = vadd.f32 %v593, %v545
      %v595 = vrot.slane %v594, 4
      %v596 = vadd.f32 %v594, %v595
      %v597 = vrot.slane %v596, 2
      %v598 = vadd.f32 %v596, %v597
      %v599 = vrot.slane %v598, 1
      %v600 = vadd.f32 %v598, %v599
      %v601 = vmul.f32 %v518, %v518
      %v602 = vmul.f32 %v521, %v521
      %v603 = vmul.f32 %v526, %v526
      %v604 = vmul.f32 %v529, %v529
      %v605 = vmul.f32 %v534, %v534
      %v606 = vmul.f32 %v537, %v537
      %v607 = vmul.f32 %v542, %v542
      %v608 = vmul.f32 %v545, %v545
      %v609 = vadd.f32 %v601, %v602
      %v610 = vadd.f32 %v609, %v603
      %v611 = vadd.f32 %v610, %v604
      %v612 = vadd.f32 %v611, %v605
      %v613 = vadd.f32 %v612, %v606
      %v614 = vadd.f32 %v613, %v607
      %v615 = vadd.f32 %v614, %v608
      %v616 = vrot.slane %v615, 4
      %v617 = vadd.f32 %v615, %v616
      %v618 = vrot.slane %v617, 2
      %v619 = vadd.f32 %v617, %v618
      %v620 = vrot.slane %v619, 1
      %v621 = vadd.f32 %v619, %v620
      %v622 = vlaneseq
      %v623 = vshrl.u32 %v622, 7
      %vm624 = vcmp.eq.s32.totalorder %v623, 0
      %v625 = vsel %vm624, %v600, 0.0
      %vm626 = vcmp.eq.s32.totalorder %v623, 1
      %v627 = vsel %vm626, %v621, 0.0
      %v628 = vadd.f32 %v625, %v627
      %629 = vst [vmem:[%s354] sm:$0xff] %v628
      %v630 = vld [vmem:[%s343] sm:$0xf]
      %v631 = vld [vmem:[%s343 + $0x4] sm:$0xf]
      %v632 = vld [vmem:[%s343 + $0x8] sm:$0xf]
      %v633 = vld [vmem:[%s343 + $0xc] sm:$0xf]
      %v634 = vld [vmem:[%s343 + $0x10] sm:$0xf]
      %v635 = vld [vmem:[%s343 + $0x14] sm:$0xf]
      %v636 = vld [vmem:[%s343 + $0x18] sm:$0xf]
      %v637 = vld [vmem:[%s343 + $0x1c] sm:$0xf]
      %v638 = vld [vmem:[%s4] sm:$0xf]
      %v639 = vld [vmem:[%s4 + $0x4] sm:$0xf]
      %v640 = vld [vmem:[%s4 + $0x8] sm:$0xf]
      %v641 = vld [vmem:[%s4 + $0xc] sm:$0xf]
      %v642 = vld [vmem:[%s4 + $0x10] sm:$0xf]
      %v643 = vld [vmem:[%s4 + $0x14] sm:$0xf]
      %v644 = vld [vmem:[%s4 + $0x18] sm:$0xf]
      %v645 = vld [vmem:[%s4 + $0x1c] sm:$0xf]
      %v646 = vld [vmem:[%s4 + $0x20] sm:$0xf]
      %v647 = vld [vmem:[%s4 + $0x24] sm:$0xf]
      %v648 = vld [vmem:[%s4 + $0x28] sm:$0xf]
      %v649 = vld [vmem:[%s4 + $0x2c] sm:$0xf]
      %v650 = vld [vmem:[%s4 + $0x30] sm:$0xf]
      %v651 = vld [vmem:[%s4 + $0x34] sm:$0xf]
      %v652 = vld [vmem:[%s4 + $0x38] sm:$0xf]
      %v653 = vld [vmem:[%s4 + $0x3c] sm:$0xf]
      %v662 = vunpack.c.l.b16 %v630
      %v663 = vunpack.c.l.b16 %v631
      %v664 = vunpack.c.l.b16 %v632
      %v665 = vunpack.c.l.b16 %v633
      %v666 = vunpack.c.l.b16 %v634
      %v667 = vunpack.c.l.b16 %v635
      %v668 = vunpack.c.l.b16 %v636
      %v669 = vunpack.c.l.b16 %v637
      %v670 = vpack.c.b16 %v663, %v662
      %v671 = vpack.c.b16 %v665, %v664
      %v672 = vpack.c.b16 %v667, %v666
      %v673 = vpack.c.b16 %v669, %v668
      %v694 = vunpack.c.l.b16 %v638
      %v695 = vunpack.c.l.b16 %v639
      %v696 = vunpack.c.l.b16 %v640
      %v697 = vunpack.c.l.b16 %v641
      %v698 = vunpack.c.l.b16 %v642
      %v699 = vunpack.c.l.b16 %v643
      %v700 = vunpack.c.l.b16 %v644
      %v701 = vunpack.c.l.b16 %v645
      %v702 = vunpack.c.l.b16 %v646
      %v703 = vunpack.c.l.b16 %v647
      %v704 = vunpack.c.l.b16 %v648
      %v705 = vunpack.c.l.b16 %v649
      %v706 = vunpack.c.l.b16 %v650
      %v707 = vunpack.c.l.b16 %v651
      %v708 = vunpack.c.l.b16 %v652
      %v709 = vunpack.c.l.b16 %v653
      %v710 = vpack.c.b16 %v695, %v694
      %v711 = vpack.c.b16 %v697, %v696
      %v712 = vpack.c.b16 %v699, %v698
      %v713 = vpack.c.b16 %v701, %v700
      %v714 = vpack.c.b16 %v703, %v702
      %v715 = vpack.c.b16 %v705, %v704
      %v716 = vpack.c.b16 %v707, %v706
      %v717 = vpack.c.b16 %v709, %v708
      %726 = vmatprep.subr.bf16.mxu0 0
      %727 = vmatpush1.bf16.msra.mxu0 %v710
      %728 = vmatprep.subr.bf16.mxu0 0
      %729 = vmatpush1.bf16.msra.mxu0 %v711
      %730 = vmatprep.subr.bf16.mxu0 0
      %731 = vmatpush1.bf16.msra.mxu0 %v712
      %732 = vmatprep.subr.bf16.mxu0 0
      %733 = vmatpush1.bf16.msra.mxu0 %v713
      %734 = vmatprep.subr.bf16.mxu0 0
      %735 = vmatpush1.bf16.msra.mxu0 %v714
      %736 = vmatprep.subr.bf16.mxu0 0
      %737 = vmatpush1.bf16.msra.mxu0 %v715
      %738 = vmatprep.subr.bf16.mxu0 0
      %739 = vmatpush1.bf16.msra.mxu0 %v716
      %740 = vmatprep.subr.bf16.mxu0 0
      %741 = vmatpush1.bf16.msra.mxu0 %v717
      %742 = vmatprep.subr.bf16.mxu0 0
      %743 = vmatpush1.bf16.msra.mxu0 0
      %744 = vmatprep.subr.bf16.mxu0 0
      %745 = vmatpush1.bf16.msra.mxu0 0
      %746 = vmatprep.subr.bf16.mxu0 0
      %747 = vmatpush1.bf16.msra.mxu0 0
      %748 = vmatprep.subr.bf16.mxu0 0
      %749 = vmatpush1.bf16.msra.mxu0 0
      %750 = vmatprep.subr.bf16.mxu0 0
      %751 = vmatpush1.bf16.msra.mxu0 0
      %752 = vmatprep.subr.bf16.mxu0 0
      %753 = vmatpush1.bf16.msra.mxu0 0
      %754 = vmatprep.subr.bf16.mxu0 0
      %755 = vmatpush1.bf16.msra.mxu0 0
      %756 = vmatprep.subr.bf16.mxu0 0
      %757 = vmatpush1.bf16.msra.mxu0 0
      %758 = vmatprep.mubr.bf16.mxu0 0
      %759 = vmatmul.mubr.bf16.gmra.mrb[0].mxu0 %v670
      %v760 = vpop.f32.mrb[0].mxu0
      %v761 = vadd.f32 0.0, %v760
      %v762 = vpop.f32.mrb[0].mxu0
      %v763 = vpop.f32.mrb[0].mxu0
      %v764 = vadd.f32 0.0, %v763
      %v765 = vpop.f32.mrb[0].mxu0
      %766 = vmatprep.mubr.bf16.mxu0 0
      %767 = vmatmul.mubr.bf16.gmra.mrb[0].mxu0 %v671
      %v768 = vpop.f32.mrb[0].mxu0
      %v769 = vadd.f32 0.0, %v768
      %v770 = vpop.f32.mrb[0].mxu0
      %v771 = vpop.f32.mrb[0].mxu0
      %v772 = vadd.f32 0.0, %v771
      %v773 = vpop.f32.mrb[0].mxu0
      %774 = vmatprep.mubr.bf16.mxu0 0
      %775 = vmatmul.mubr.bf16.gmra.mrb[0].mxu0 %v672
      %v776 = vpop.f32.mrb[0].mxu0
      %v777 = vadd.f32 0.0, %v776
      %v778 = vpop.f32.mrb[0].mxu0
      %v779 = vpop.f32.mrb[0].mxu0
      %v780 = vadd.f32 0.0, %v779
      %v781 = vpop.f32.mrb[0].mxu0
      %782 = vmatprep.mubr.bf16.mxu0 0
      %783 = vmatmul.mubr.bf16.gmra.mrb[0].mxu0 %v673
      %v784 = vpop.f32.mrb[0].mxu0
      %v785 = vadd.f32 0.0, %v784
      %v786 = vpop.f32.mrb[0].mxu0
      %v787 = vpop.f32.mrb[0].mxu0
      %v788 = vadd.f32 0.0, %v787
      %v789 = vpop.f32.mrb[0].mxu0
      %790 = vdwg.mxu0
      %v791 = vpack.c.bf16 %v764, %v761
      %v792 = vpack.c.bf16 %v772, %v769
      %v793 = vpack.c.bf16 %v780, %v777
      %v794 = vpack.c.bf16 %v788, %v785
      %v799 = vunpack.c.l.b16 %v791
      %v800 = vunpack.c.h.b16 %v791
      %v801 = vunpack.c.l.b16 %v792
      %v802 = vunpack.c.h.b16 %v792
      %v803 = vunpack.c.l.b16 %v793
      %v804 = vunpack.c.h.b16 %v793
      %v805 = vunpack.c.l.b16 %v794
      %v806 = vunpack.c.h.b16 %v794
      %v807 = vpack.c.b16 %v799, %v799
      %v808 = vpack.c.b16 %v800, %v800
      %v809 = vpack.c.b16 %v801, %v801
      %v810 = vpack.c.b16 %v802, %v802
      %v811 = vpack.c.b16 %v803, %v803
      %v812 = vpack.c.b16 %v804, %v804
      %v813 = vpack.c.b16 %v805, %v805
      %v814 = vpack.c.b16 %v806, %v806
      %823 = vst [vmem:[%s359] sm:$0xf] %v807
      %824 = vst [vmem:[%s359 + $0x4] sm:$0xf] %v808
      %825 = vst [vmem:[%s359 + $0x8] sm:$0xf] %v809
      %826 = vst [vmem:[%s359 + $0xc] sm:$0xf] %v810
      %827 = vst [vmem:[%s359 + $0x10] sm:$0xf] %v811
      %828 = vst [vmem:[%s359 + $0x14] sm:$0xf] %v812
      %829 = vst [vmem:[%s359 + $0x18] sm:$0xf] %v813
      %830 = vst [vmem:[%s359 + $0x1c] sm:$0xf] %v814
      %v831 = vadd.f32 %v761, %v764
      %v832 = vadd.f32 %v831, %v769
      %v833 = vadd.f32 %v832, %v772
      %v834 = vadd.f32 %v833, %v777
      %v835 = vadd.f32 %v834, %v780
      %v836 = vadd.f32 %v835, %v785
      %v837 = vadd.f32 %v836, %v788
      %v838 = vrot.slane %v837, 4
      %v839 = vadd.f32 %v837, %v838
      %v840 = vrot.slane %v839, 2
      %v841 = vadd.f32 %v839, %v840
      %v842 = vrot.slane %v841, 1
      %v843 = vadd.f32 %v841, %v842
      %v844 = vmul.f32 %v761, %v761
      %v845 = vmul.f32 %v764, %v764
      %v846 = vmul.f32 %v769, %v769
      %v847 = vmul.f32 %v772, %v772
      %v848 = vmul.f32 %v777, %v777
      %v849 = vmul.f32 %v780, %v780
      %v850 = vmul.f32 %v785, %v785
      %v851 = vmul.f32 %v788, %v788
      %v852 = vadd.f32 %v844, %v845
      %v853 = vadd.f32 %v852, %v846
      %v854 = vadd.f32 %v853, %v847
      %v855 = vadd.f32 %v854, %v848
      %v856 = vadd.f32 %v855, %v849
      %v857 = vadd.f32 %v856, %v850
      %v858 = vadd.f32 %v857, %v851
      %v859 = vrot.slane %v858, 4
      %v860 = vadd.f32 %v858, %v859
      %v861 = vrot.slane %v860, 2
      %v862 = vadd.f32 %v860, %v861
      %v863 = vrot.slane %v862, 1
      %v864 = vadd.f32 %v862, %v863
      %v865 = vsel %vm624, %v843, 0.0
      %v866 = vsel %vm626, %v864, 0.0
      %v867 = vadd.f32 %v865, %v866
      %868 = vst [vmem:[%s364] sm:$0xff] %v867
      %s869 = smul.u32 8, %s20
      %p870 = scmp.lt.s32.totalorder %s869, 15
      %s871 = scalar_select %p870, %s869, 15
      %s872 = smul.addr %s871, 4
      %s873 = scalar_lea.vmem %s5, %s872
      %p874 = scmp.lt.s32.totalorder %s20, 1
      %s875 = scalar_select %p874, %s20, 1
      %s876 = smul.addr %s875, 8
      %s877 = scalar_lea.vmem %s6, %s876
      %s878 = smul.u32 8, %s20
      %p879 = scmp.lt.s32.totalorder %s878, 15
      %s880 = scalar_select %p879, %s878, 15
      %s881 = smul.addr %s880, 4
      %s882 = scalar_lea.vmem %s7, %s881
      %p883 = scmp.lt.s32.totalorder %s20, 1
      %s884 = scalar_select %p883, %s20, 1
      %s885 = smul.addr %s884, 8
      %s886 = scalar_lea.vmem %s8, %s885
      // Predicated region
      $region41: #{bottleneck_forward.8} parent=39 // pred_check
        %p887 = pneg %p153
      $region42: #{bottleneck_forward.8} parent=39 // pred_check_branch
        %889 = sbr.rel (%p887) target = $region44
      $region43: #{bottleneck_forward.8} parent=39 // pred_region
        %s890 = smul.u32 8, %s20
      $region44: #{bottleneck_forward.8} parent=39 // pred_fallthru
        _
      // Predicated region
      $region45: #{bottleneck_forward.8} parent=39 // pred_check
        %p891 = pneg %p179
      $region46: #{bottleneck_forward.8} parent=39 // pred_check_branch
        %893 = sbr.rel (%p891) target = $region48
      $region47: #{bottleneck_forward.8} parent=39 // pred_region
        _
      $region48: #{bottleneck_forward.8} parent=39 // pred_fallthru
        _
      // Predicated region
      $region49: #{bottleneck_forward.8} parent=39 // pred_check
        %p894 = pneg %p205
      $region50: #{bottleneck_forward.8} parent=39 // pred_check_branch
        %896 = sbr.rel (%p894) target = $region52
      $region51: #{bottleneck_forward.8} parent=39 // pred_region
        %s897 = smul.u32 8, %s20
      $region52: #{bottleneck_forward.8} parent=39 // pred_fallthru
        _
      // Predicated region
      $region53: #{bottleneck_forward.8} parent=39 // pred_check
        %p898 = pneg %p231
      $region54: #{bottleneck_forward.8} parent=39 // pred_check_branch
        %900 = sbr.rel (%p898) target = $region56
      $region55: #{bottleneck_forward.8} parent=39 // pred_region
        _
      $region56: #{bottleneck_forward.8} parent=39 // pred_fallthru
        _
    $region40: #{bottleneck_forward.8} parent=5 // pred_fallthru
      _
    %p901 = scmp.le.s32.totalorder 2, %s15
    // Predicated region
    $region57: #{bottleneck_forward.8} parent=5 // pred_check
      %p902 = pneg %p901
    $region58: #{bottleneck_forward.8} parent=5 // pred_check_branch
      %904 = sbr.rel (%p902) target = $region60
    $region59: #{bottleneck_forward.8} parent=5 // pred_region
      %s905 = ssub.s32 %s15, 2
      // Predicated region
      $region61: #{bottleneck_forward.8} parent=59 // pred_check
        %p906 = pneg %p159
      $region62: #{bottleneck_forward.8} parent=59 // pred_check_branch
        %908 = sbr.rel (%p906) target = $region64
      $region63: #{bottleneck_forward.8} parent=59 // pred_region
        %s909 = smul.u32 8, %s21
        %p910 = scmp.lt.s32.totalorder %s909, 15
        %s911 = scalar_select %p910, %s909, 15
        %s912 = smul.addr %s911, 4
        %s913 = scalar_lea.vmem %s5, %s912
      $region64: #{bottleneck_forward.8} parent=59 // pred_fallthru
        _
      // Predicated region
      $region65: #{bottleneck_forward.8} parent=59 // pred_check
        %p914 = pneg %p185
      $region66: #{bottleneck_forward.8} parent=59 // pred_check_branch
        %916 = sbr.rel (%p914) target = $region68
      $region67: #{bottleneck_forward.8} parent=59 // pred_region
        %p917 = scmp.lt.s32.totalorder %s21, 1
        %s918 = scalar_select %p917, %s21, 1
        %s919 = smul.addr %s918, 8
        %s920 = scalar_lea.vmem %s6, %s919
      $region68: #{bottleneck_forward.8} parent=59 // pred_fallthru
        _
      // Predicated region
      $region69: #{bottleneck_forward.8} parent=59 // pred_check
        %p921 = pneg %p211
      $region70: #{bottleneck_forward.8} parent=59 // pred_check_branch
        %923 = sbr.rel (%p921) target = $region72
      $region71: #{bottleneck_forward.8} parent=59 // pred_region
        %s924 = smul.u32 8, %s21
        %p925 = scmp.lt.s32.totalorder %s924, 15
        %s926 = scalar_select %p925, %s924, 15
        %s927 = smul.addr %s926, 4
        %s928 = scalar_lea.vmem %s7, %s927
      $region72: #{bottleneck_forward.8} parent=59 // pred_fallthru
        _
      // Predicated region
      $region73: #{bottleneck_forward.8} parent=59 // pred_check
        %p929 = pneg %p237
      $region74: #{bottleneck_forward.8} parent=59 // pred_check_branch
        %931 = sbr.rel (%p929) target = $region76
      $region75: #{bottleneck_forward.8} parent=59 // pred_region
        %p932 = scmp.lt.s32.totalorder %s21, 1
        %s933 = scalar_select %p932, %s21, 1
        %s934 = smul.addr %s933, 8
        %s935 = scalar_lea.vmem %s8, %s934
      $region76: #{bottleneck_forward.8} parent=59 // pred_fallthru
        _
    $region60: #{bottleneck_forward.8} parent=5 // pred_fallthru
      _
  $region6: #{bottleneck_forward.8} parent=0 // loop_footer
    %s19 = sadd.s32 1, %s15
  $region7: #{bottleneck_forward.8} parent=0 // loop_footer_branch
    %14 = sbr.rel target = $region3
  $region8: #{bottleneck_forward.8} parent=0 // loop_exit
    _

// kernel: bottleneck_forward.7
$region0: #{bottleneck_forward.7}
  #allocation0 [shape = 'u32[]', space=smem, size = 0x4, offset = 0x4, fixed_abs, tag = 'smem constant byte address 0x4 - core index']
  #allocation1 [shape = 'u32[144,128]{1,0:T(1,128)}', space=vmem, size = 0x12000, scoped, tag = 'internal scratch']
  %s0 = inlined_call_operand.vmem [shape: bf16[128,1152], index: 0, kind: input, shape index: {}]
  %s1 = inlined_call_operand.vmem [shape: bf16[1152,128], index: 1, kind: input, shape index: {}]
  %s2 = inlined_call_operand.vmem [shape: bf16[128,128], index: 2, kind: output, shape index: {0}]
  %s3 = inlined_call_operand.vmem [shape: f32[16,128], index: 3, kind: output, shape index: {1}]
  %4 = xla_tuple %s2, %s3
  %s5 = sld [smem:[#allocation0]]
  $region49: #{bottleneck_forward.7} parent=0
    _
  %s7 = ssub.s32 1, %s5
  %s8 = scalar_select 0, %s7, %s5
  loop: start=0, step=1, limit=4
  $region2: #{bottleneck_forward.7} parent=0 // loop_pre_header
    _
  $region3: #{bottleneck_forward.7} parent=0 // loop_header
    %s10 = sphi 0, %s14
    %p11 = scmp.ge.s32.totalorder %s10, 4
    %s20 = sphi 0, %s22
    %s23 = sphi 0, %s20
    %s24 = sphi 0, %s23
    %s40 = sphi 0, %s24
    %s44 = sphi 0, %s44
    %s46 = sphi 0, %s44
    %s47 = sphi 0, %s46
    %s61 = sphi 0, %s47
    %s67 = sphi 0, %s69
    %s70 = sphi 0, %s67
    %s71 = sphi 0, %s70
    %s87 = sphi 0, %s71
    %s93 = sphi 0, %s95
    %s96 = sphi 0, %s93
    %s97 = sphi 0, %s96
    %s113 = sphi 0, %s97
  $region4: #{bottleneck_forward.7} parent=0 // loop_header_branch
    %13 = sbr.rel (%p11) target = $region8
  $region5: #{bottleneck_forward.7} parent=0 // loop_body
    %s15 = ssub.s32 %s10, 1
    %s16 = ssub.s32 %s10, 2
    %s17 = sadd.s32 %s10, 1
    %s18 = ssub.s32 %s10, %s17
    %p19 = scmp.eq.s32.totalorder %s18, 0
    %s21 = sadd.s32 %s20, 1
    %s22 = scalar_select %p19, %s20, %s21
    %p25 = pneg %p19
    %p26 = scmp.eq.s32.totalorder %s10, 1
    %p27 = por %p25, %p26
    %p28 = scmp.ne.s32.totalorder %s20, %s23
    %p29 = scmp.eq.s32.totalorder %s10, 0
    %p30 = por %p28, %p29
    %p31 = scmp.ne.s32.totalorder %s20, %s23
    %p32 = scmp.eq.s32.totalorder %s15, 1
    %p33 = por %p31, %p32
    %p34 = scmp.ne.s32.totalorder %s23, %s24
    %p35 = scmp.eq.s32.totalorder %s15, 0
    %p36 = por %p34, %p35
    %p37 = scmp.ne.s32.totalorder %s23, %s24
    %p38 = scmp.eq.s32.totalorder %s16, 1
    %p39 = por %p37, %p38
    %p41 = scmp.ne.s32.totalorder %s24, %s40
    %p42 = scmp.eq.s32.totalorder %s16, 0
    %p43 = por %p41, %p42
    %s45 = sadd.s32 %s44, 1
    %p48 = scmp.eq.s32.totalorder %s10, 1
    %p49 = scmp.ne.s32.totalorder %s44, %s46
    %p50 = scmp.eq.s32.totalorder %s10, 0
    %p51 = por %p49, %p50
    %p52 = scmp.ne.s32.totalorder %s44, %s46
    %p53 = scmp.eq.s32.totalorder %s15, 1
    %p54 = por %p52, %p53
    %p55 = scmp.ne.s32.totalorder %s46, %s47
    %p56 = scmp.eq.s32.totalorder %s15, 0
    %p57 = por %p55, %p56
    %p58 = scmp.ne.s32.totalorder %s46, %s47
    %p59 = scmp.eq.s32.totalorder %s16, 1
    %p60 = por %p58, %p59
    %p62 = scmp.ne.s32.totalorder %s47, %s61
    %p63 = scmp.eq.s32.totalorder %s16, 0
    %p64 = por %p62, %p63
    %s65 = ssub.s32 %s10, %s17
    %p66 = scmp.eq.s32.totalorder %s65, 0
    %s68 = sadd.s32 %s67, 1
    %s69 = scalar_select %p66, %s67, %s68
    %p72 = pneg %p66
    %p73 = scmp.eq.s32.totalorder %s10, 1
    %p74 = por %p72, %p73
    %p75 = scmp.ne.s32.totalorder %s67, %s70
    %p76 = scmp.eq.s32.totalorder %s10, 0
    %p77 = por %p75, %p76
    %p78 = scmp.ne.s32.totalorder %s67, %s70
    %p79 = scmp.eq.s32.totalorder %s15, 1
    %p80 = por %p78, %p79
    %p81 = scmp.ne.s32.totalorder %s70, %s71
    %p82 = scmp.eq.s32.totalorder %s15, 0
    %p83 = por %p81, %p82
    %p84 = scmp.ne.s32.totalorder %s70, %s71
    %p85 = scmp.eq.s32.totalorder %s16, 1
    %p86 = por %p84, %p85
    %p88 = scmp.ne.s32.totalorder %s71, %s87
    %p89 = scmp.eq.s32.totalorder %s16, 0
    %p90 = por %p88, %p89
    %s91 = ssub.s32 %s10, %s17
    %p92 = scmp.eq.s32.totalorder %s91, 0
    %s94 = sadd.s32 %s93, 1
    %s95 = scalar_select %p92, %s93, %s94
    %p98 = pneg %p92
    %p99 = scmp.eq.s32.totalorder %s10, 1
    %p100 = por %p98, %p99
    %p101 = scmp.ne.s32.totalorder %s93, %s96
    %p102 = scmp.eq.s32.totalorder %s10, 0
    %p103 = por %p101, %p102
    %p104 = scmp.ne.s32.totalorder %s93, %s96
    %p105 = scmp.eq.s32.totalorder %s15, 1
    %p106 = por %p104, %p105
    %p107 = scmp.ne.s32.totalorder %s96, %s97
    %p108 = scmp.eq.s32.totalorder %s15, 0
    %p109 = por %p107, %p108
    %p110 = scmp.ne.s32.totalorder %s96, %s97
    %p111 = scmp.eq.s32.totalorder %s16, 1
    %p112 = por %p110, %p111
    %p114 = scmp.ne.s32.totalorder %s97, %s113
    %p115 = scmp.eq.s32.totalorder %s16, 0
    %p116 = por %p114, %p115
    %p117 = scmp.le.s32.totalorder 1, %s10
    %p118 = scmp.lt.s32.totalorder %s10, 3
    %p119 = pnand %p117, %p118
    %p120 = pneg %p119
    // Predicated region
    $region9: #{bottleneck_forward.7} parent=5 // pred_check
      _
    $region10: #{bottleneck_forward.7} parent=5 // pred_check_branch
      %122 = sbr.rel (%p119) target = $region12
    $region11: #{bottleneck_forward.7} parent=5 // pred_region
      %s123 = ssub.s32 %s10, 1
      // Predicated region
      $region13: #{bottleneck_forward.7} parent=11 // pred_check
        %p124 = pneg %p57
      $region14: #{bottleneck_forward.7} parent=11 // pred_check_branch
        %126 = sbr.rel (%p124) target = $region16
      $region15: #{bottleneck_forward.7} parent=11 // pred_region
        _
      $region16: #{bottleneck_forward.7} parent=11 // pred_fallthru
        _
    $region12: #{bottleneck_forward.7} parent=5 // pred_fallthru
      _
    %p127 = scmp.lt.s32.totalorder %s10, 2
    // Predicated region
    $region17: #{bottleneck_forward.7} parent=5 // pred_check
      %p128 = pneg %p127
    $region18: #{bottleneck_forward.7} parent=5 // pred_check_branch
      %130 = sbr.rel (%p128) target = $region20
    $region19: #{bottleneck_forward.7} parent=5 // pred_region
      // Predicated region
      $region21: #{bottleneck_forward.7} parent=19 // pred_check
        %p131 = pneg %p30
      $region22: #{bottleneck_forward.7} parent=19 // pred_check_branch
        %133 = sbr.rel (%p131) target = $region24
      $region23: #{bottleneck_forward.7} parent=19 // pred_region
        %s134 = smul.u32 8, %s10
        %p135 = scmp.lt.s32.totalorder %s134, 15
        %s136 = scalar_select %p135, %s134, 15
        %s137 = smul.addr %s136, 9
        %s138 = smul.addr %s137, 4
        %s139 = scalar_lea.vmem %s0, %s138
        %s140 = smul.u32 8, %s10
      $region24: #{bottleneck_forward.7} parent=19 // pred_fallthru
        _
    $region20: #{bottleneck_forward.7} parent=5 // pred_fallthru
      _
    %p141 = scmp.le.s32.totalorder 1, %s10
    %p142 = scmp.lt.s32.totalorder %s10, 3
    %p143 = pnand %p141, %p142
    %p144 = pneg %p143
    // Predicated region
    $region25: #{bottleneck_forward.7} parent=5 // pred_check
      _
    $region26: #{bottleneck_forward.7} parent=5 // pred_check_branch
      %146 = sbr.rel (%p143) target = $region28
    $region27: #{bottleneck_forward.7} parent=5 // pred_region
      %s147 = ssub.s32 %s10, 1
      %s148 = smul.u32 8, %s15
      %p149 = scmp.lt.s32.totalorder %s148, 15
      %s150 = scalar_select %p149, %s148, 15
      %s151 = smul.addr %s150, 9
      %s152 = smul.addr %s151, 4
      %s153 = scalar_lea.vmem %s0, %s152
      %p154 = pneg %p36
      %p155 = pneg %p33
      %p156 = pneg %p57
      %p157 = pneg %p54
      %p158 = pneg %p83
      %p159 = pneg %p80
      %s160 = smul.u32 8, %s15
      %p161 = scmp.lt.s32.totalorder %s160, 15
      %s162 = scalar_select %p161, %s160, 15
      %s163 = smul.addr %s162, 4
      %s164 = scalar_lea.vmem %s2, %s163
      %p165 = pneg %p109
      %p166 = pneg %p106
      %p167 = scmp.lt.s32.totalorder %s15, 1
      %s168 = scalar_select %p167, %s15, 1
      %s169 = smul.addr %s168, 8
      %s170 = scalar_lea.vmem %s3, %s169
      %s171 = smul.u32 8, %s15
      %p172 = scmp.lt.s32.totalorder %s171, 15
      %s173 = scalar_select %p172, %s171, 15
      %s174 = smul.addr %s173, 9
      %s175 = smul.addr %s174, 4
      %s176 = scalar_lea.vmem %s0, %s175
      %s177 = smul.u32 8, %s15
      %s178 = smul.u32 8, %s15
      %p179 = scmp.lt.s32.totalorder %s178, 15
      %s180 = scalar_select %p179, %s178, 15
      %s181 = smul.addr %s180, 4
      %s182 = scalar_lea.vmem %s2, %s181
      %s183 = smul.u32 8, %s15
      %p184 = scmp.lt.s32.totalorder %s15, 1
      %s185 = scalar_select %p184, %s15, 1
      %s186 = smul.addr %s185, 8
      %s187 = scalar_lea.vmem %s3, %s186
      %v189 = vld [vmem:[%s176] sm:$0xff]
      %v190 = vld [vmem:[%s176 + $0x8] sm:$0xff]
      %v191 = vld [vmem:[%s176 + $0x10] sm:$0xff]
      %v192 = vld [vmem:[%s176 + $0x18] sm:$0xff]
      %v193 = vld [vmem:[%s176 + $0x20] sm:$0xf]
      %v194 = vld [vmem:[%s176 + $0x24] sm:$0xff]
      %v195 = vld [vmem:[%s176 + $0x2c] sm:$0xff]
      %v196 = vld [vmem:[%s176 + $0x34] sm:$0xff]
      %v197 = vld [vmem:[%s176 + $0x3c] sm:$0xff]
      %v198 = vld [vmem:[%s176 + $0x44] sm:$0xf]
      %v199 = vld [vmem:[%s176 + $0x48] sm:$0xff]
      %v200 = vld [vmem:[%s176 + $0x50] sm:$0xff]
      %v201 = vld [vmem:[%s176 + $0x58] sm:$0xff]
      %v202 = vld [vmem:[%s176 + $0x60] sm:$0xff]
      %v203 = vld [vmem:[%s176 + $0x68] sm:$0xf]
      %v204 = vld [vmem:[%s176 + $0x6c] sm:$0xff]
      %v205 = vld [vmem:[%s176 + $0x74] sm:$0xff]
      %v206 = vld [vmem:[%s176 + $0x7c] sm:$0xff]
      %v207 = vld [vmem:[%s176 + $0x84] sm:$0xff]
      %v208 = vld [vmem:[%s176 + $0x8c] sm:$0xf]
      %v209 = vld [vmem:[%s176 + $0x90] sm:$0xff]
      %v210 = vld [vmem:[%s176 + $0x98] sm:$0xff]
      %v211 = vld [vmem:[%s176 + $0xa0] sm:$0xff]
      %v212 = vld [vmem:[%s176 + $0xa8] sm:$0xff]
      %v213 = vld [vmem:[%s176 + $0xb0] sm:$0xf]
      %v214 = vld [vmem:[%s176 + $0xb4] sm:$0xff]
      %v215 = vld [vmem:[%s176 + $0xbc] sm:$0xff]
      %v216 = vld [vmem:[%s176 + $0xc4] sm:$0xff]
      %v217 = vld [vmem:[%s176 + $0xcc] sm:$0xff]
      %v218 = vld [vmem:[%s176 + $0xd4] sm:$0xf]
      %v219 = vld [vmem:[%s176 + $0xd8] sm:$0xff]
      %v220 = vld [vmem:[%s176 + $0xe0] sm:$0xff]
      %v221 = vld [vmem:[%s176 + $0xe8] sm:$0xff]
      %v222 = vld [vmem:[%s176 + $0xf0] sm:$0xff]
      %v223 = vld [vmem:[%s176 + $0xf8] sm:$0xf]
      %v224 = vld [vmem:[%s176 + $0xfc] sm:$0xff]
      %v225 = vld [vmem:[%s176 + $0x104] sm:$0xff]
      %v226 = vld [vmem:[%s176 + $0x10c] sm:$0xff]
      %v227 = vld [vmem:[%s176 + $0x114] sm:$0xff]
      %v228 = vld [vmem:[%s176 + $0x11c] sm:$0xf]
      %v229 = vld [vmem:[%s1] sm:$0xf]
      %v230 = vld [vmem:[%s1 + $0x4] sm:$0xf]
      %v231 = vld [vmem:[%s1 + $0x8] sm:$0xf]
      %v232 = vld [vmem:[%s1 + $0xc] sm:$0xf]
      %v233 = vld [vmem:[%s1 + $0x10] sm:$0xf]
      %v234 = vld [vmem:[%s1 + $0x14] sm:$0xf]
      %v235 = vld [vmem:[%s1 + $0x18] sm:$0xf]
      %v236 = vld [vmem:[%s1 + $0x1c] sm:$0xf]
      %v237 = vld [vmem:[%s1 + $0x20] sm:$0xf]
      %v238 = vld [vmem:[%s1 + $0x24] sm:$0xf]
      %v239 = vld [vmem:[%s1 + $0x28] sm:$0xf]
      %v240 = vld [vmem:[%s1 + $0x2c] sm:$0xf]
      %v241 = vld [vmem:[%s1 + $0x30] sm:$0xf]
      %v242 = vld [vmem:[%s1 + $0x34] sm:$0xf]
      %v243 = vld [vmem:[%s1 + $0x38] sm:$0xf]
      %v244 = vld [vmem:[%s1 + $0x3c] sm:$0xf]
      %v245 = vld [vmem:[%s1 + $0x40] sm:$0xf]
      %v246 = vld [vmem:[%s1 + $0x44] sm:$0xf]
      %v247 = vld [vmem:[%s1 + $0x48] sm:$0xf]
      %v248 = vld [vmem:[%s1 + $0x4c] sm:$0xf]
      %v249 = vld [vmem:[%s1 + $0x50] sm:$0xf]
      %v250 = vld [vmem:[%s1 + $0x54] sm:$0xf]
      %v251 = vld [vmem:[%s1 + $0x58] sm:$0xf]
      %v252 = vld [vmem:[%s1 + $0x5c] sm:$0xf]
      %v253 = vld [vmem:[%s1 + $0x60] sm:$0xf]
      %v254 = vld [vmem:[%s1 + $0x64] sm:$0xf]
      %v255 = vld [vmem:[%s1 + $0x68] sm:$0xf]
      %v256 = vld [vmem:[%s1 + $0x6c] sm:$0xf]
      %v257 = vld [vmem:[%s1 + $0x70] sm:$0xf]
      %v258 = vld [vmem:[%s1 + $0x74] sm:$0xf]
      %v259 = vld [vmem:[%s1 + $0x78] sm:$0xf]
      %v260 = vld [vmem:[%s1 + $0x7c] sm:$0xf]
      %v261 = vld [vmem:[%s1 + $0x80] sm:$0xf]
      %v262 = vld [vmem:[%s1 + $0x84] sm:$0xf]
      %v263 = vld [vmem:[%s1 + $0x88] sm:$0xf]
      %v264 = vld [vmem:[%s1 + $0x8c] sm:$0xf]
      %v265 = vld [vmem:[%s1 + $0x90] sm:$0xf]
      %v266 = vld [vmem:[%s1 + $0x94] sm:$0xf]
      %v267 = vld [vmem:[%s1 + $0x98] sm:$0xf]
      %v268 = vld [vmem:[%s1 + $0x9c] sm:$0xf]
      %v269 = vld [vmem:[%s1 + $0xa0] sm:$0xf]
      %v270 = vld [vmem:[%s1 + $0xa4] sm:$0xf]
      %v271 = vld [vmem:[%s1 + $0xa8] sm:$0xf]
      %v272 = vld [vmem:[%s1 + $0xac] sm:$0xf]
      %v273 = vld [vmem:[%s1 + $0xb0] sm:$0xf]
      %v274 = vld [vmem:[%s1 + $0xb4] sm:$0xf]
      %v275 = vld [vmem:[%s1 + $0xb8] sm:$0xf]
      %v276 = vld [vmem:[%s1 + $0xbc] sm:$0xf]
      %v277 = vld [vmem:[%s1 + $0xc0] sm:$0xf]
      %v278 = vld [vmem:[%s1 + $0xc4] sm:$0xf]
      %v279 = vld [vmem:[%s1 + $0xc8] sm:$0xf]
      %v280 = vld [vmem:[%s1 + $0xcc] sm:$0xf]
      %v281 = vld [vmem:[%s1 + $0xd0] sm:$0xf]
      %v282 = vld [vmem:[%s1 + $0xd4] sm:$0xf]
      %v283 = vld [vmem:[%s1 + $0xd8] sm:$0xf]
      %v284 = vld [vmem:[%s1 + $0xdc] sm:$0xf]
      %v285 = vld [vmem:[%s1 + $0xe0] sm:$0xf]
      %v286 = vld [vmem:[%s1 + $0xe4] sm:$0xf]
      %v287 = vld [vmem:[%s1 + $0xe8] sm:$0xf]
      %v288 = vld [vmem:[%s1 + $0xec] sm:$0xf]
      %v289 = vld [vmem:[%s1 + $0xf0] sm:$0xf]
      %v290 = vld [vmem:[%s1 + $0xf4] sm:$0xf]
      %v291 = vld [vmem:[%s1 + $0xf8] sm:$0xf]
      %v292 = vld [vmem:[%s1 + $0xfc] sm:$0xf]
      %v293 = vld [vmem:[%s1 + $0x100] sm:$0xf]
      %v294 = vld [vmem:[%s1 + $0x104] sm:$0xf]
      %v295 = vld [vmem:[%s1 + $0x108] sm:$0xf]
      %v296 = vld [vmem:[%s1 + $0x10c] sm:$0xf]
      %v297 = vld [vmem:[%s1 + $0x110] sm:$0xf]
      %v298 = vld [vmem:[%s1 + $0x114] sm:$0xf]
      %v299 = vld [vmem:[%s1 + $0x118] sm:$0xf]
      %v300 = vld [vmem:[%s1 + $0x11c] sm:$0xf]
      %v301 = vld [vmem:[%s1 + $0x120] sm:$0xf]
      %v302 = vld [vmem:[%s1 + $0x124] sm:$0xf]
      %v303 = vld [vmem:[%s1 + $0x128] sm:$0xf]
      %v304 = vld [vmem:[%s1 + $0x12c] sm:$0xf]
      %v305 = vld [vmem:[%s1 + $0x130] sm:$0xf]
      %v306 = vld [vmem:[%s1 + $0x134] sm:$0xf]
      %v307 = vld [vmem:[%s1 + $0x138] sm:$0xf]
      %v308 = vld [vmem:[%s1 + $0x13c] sm:$0xf]
      %v309 = vld [vmem:[%s1 + $0x140] sm:$0xf]
      %v310 = vld [vmem:[%s1 + $0x144] sm:$0xf]
      %v311 = vld [vmem:[%s1 + $0x148] sm:$0xf]
      %v312 = vld [vmem:[%s1 + $0x14c] sm:$0xf]
      %v313 = vld [vmem:[%s1 + $0x150] sm:$0xf]
      %v314 = vld [vmem:[%s1 + $0x154] sm:$0xf]
      %v315 = vld [vmem:[%s1 + $0x158] sm:$0xf]
      %v316 = vld [vmem:[%s1 + $0x15c] sm:$0xf]
      %v317 = vld [vmem:[%s1 + $0x160] sm:$0xf]
      %v318 = vld [vmem:[%s1 + $0x164] sm:$0xf]
      %v319 = vld [vmem:[%s1 + $0x168] sm:$0xf]
      %v320 = vld [vmem:[%s1 + $0x16c] sm:$0xf]
      %v321 = vld [vmem:[%s1 + $0x170] sm:$0xf]
      %v322 = vld [vmem:[%s1 + $0x174] sm:$0xf]
      %v323 = vld [vmem:[%s1 + $0x178] sm:$0xf]
      %v324 = vld [vmem:[%s1 + $0x17c] sm:$0xf]
      %v325 = vld [vmem:[%s1 + $0x180] sm:$0xf]
      %v326 = vld [vmem:[%s1 + $0x184] sm:$0xf]
      %v327 = vld [vmem:[%s1 + $0x188] sm:$0xf]
      %v328 = vld [vmem:[%s1 + $0x18c] sm:$0xf]
      %v329 = vld [vmem:[%s1 + $0x190] sm:$0xf]
      %v330 = vld [vmem:[%s1 + $0x194] sm:$0xf]
      %v331 = vld [vmem:[%s1 + $0x198] sm:$0xf]
      %v332 = vld [vmem:[%s1 + $0x19c] sm:$0xf]
      %v333 = vld [vmem:[%s1 + $0x1a0] sm:$0xf]
      %v334 = vld [vmem:[%s1 + $0x1a4] sm:$0xf]
      %v335 = vld [vmem:[%s1 + $0x1a8] sm:$0xf]
      %v336 = vld [vmem:[%s1 + $0x1ac] sm:$0xf]
      %v337 = vld [vmem:[%s1 + $0x1b0] sm:$0xf]
      %v338 = vld [vmem:[%s1 + $0x1b4] sm:$0xf]
      %v339 = vld [vmem:[%s1 + $0x1b8] sm:$0xf]
      %v340 = vld [vmem:[%s1 + $0x1bc] sm:$0xf]
      %v341 = vld [vmem:[%s1 + $0x1c0] sm:$0xf]
      %v342 = vld [vmem:[%s1 + $0x1c4] sm:$0xf]
      %v343 = vld [vmem:[%s1 + $0x1c8] sm:$0xf]
      %v344 = vld [vmem:[%s1 + $0x1cc] sm:$0xf]
      %v345 = vld [vmem:[%s1 + $0x1d0] sm:$0xf]
      %v346 = vld [vmem:[%s1 + $0x1d4] sm:$0xf]
      %v347 = vld [vmem:[%s1 + $0x1d8] sm:$0xf]
      %v348 = vld [vmem:[%s1 + $0x1dc] sm:$0xf]
      %v349 = vld [vmem:[%s1 + $0x1e0] sm:$0xf]
      %v350 = vld [vmem:[%s1 + $0x1e4] sm:$0xf]
      %v351 = vld [vmem:[%s1 + $0x1e8] sm:$0xf]
      %v352 = vld [vmem:[%s1 + $0x1ec] sm:$0xf]
      %v353 = vld [vmem:[%s1 + $0x1f0] sm:$0xf]
      %v354 = vld [vmem:[%s1 + $0x1f4] sm:$0xf]
      %v355 = vld [vmem:[%s1 + $0x1f8] sm:$0xf]
      %v356 = vld [vmem:[%s1 + $0x1fc] sm:$0xf]
      %v357 = vld [vmem:[%s1 + $0x200] sm:$0xf]
      %v358 = vld [vmem:[%s1 + $0x204] sm:$0xf]
      %v359 = vld [vmem:[%s1 + $0x208] sm:$0xf]
      %v360 = vld [vmem:[%s1 + $0x20c] sm:$0xf]
      %v361 = vld [vmem:[%s1 + $0x210] sm:$0xf]
      %v362 = vld [vmem:[%s1 + $0x214] sm:$0xf]
      %v363 = vld [vmem:[%s1 + $0x218] sm:$0xf]
      %v364 = vld [vmem:[%s1 + $0x21c] sm:$0xf]
      %v365 = vld [vmem:[%s1 + $0x220] sm:$0xf]
      %v366 = vld [vmem:[%s1 + $0x224] sm:$0xf]
      %v367 = vld [vmem:[%s1 + $0x228] sm:$0xf]
      %v368 = vld [vmem:[%s1 + $0x22c] sm:$0xf]
      %v369 = vld [vmem:[%s1 + $0x230] sm:$0xf]
      %v370 = vld [vmem:[%s1 + $0x234] sm:$0xf]
      %v371 = vld [vmem:[%s1 + $0x238] sm:$0xf]
      %v372 = vld [vmem:[%s1 + $0x23c] sm:$0xf]
      %v413 = vunpack.c.l.b16 %v189
      %v414 = vunpack.c.h.b16 %v189
      %v415 = vunpack.c.l.b16 %v190
      %v416 = vunpack.c.h.b16 %v190
      %v417 = vunpack.c.l.b16 %v191
      %v418 = vunpack.c.h.b16 %v191
      %v419 = vunpack.c.l.b16 %v192
      %v420 = vunpack.c.h.b16 %v192
      %v421 = vunpack.c.l.b16 %v193
      %v422 = vunpack.c.l.b16 %v194
      %v423 = vunpack.c.h.b16 %v194
      %v424 = vunpack.c.l.b16 %v195
      %v425 = vunpack.c.h.b16 %v195
      %v426 = vunpack.c.l.b16 %v196
      %v427 = vunpack.c.h.b16 %v196
      %v428 = vunpack.c.l.b16 %v197
      %v429 = vunpack.c.h.b16 %v197
      %v430 = vunpack.c.l.b16 %v198
      %v431 = vunpack.c.l.b16 %v199
      %v432 = vunpack.c.h.b16 %v199
      %v433 = vunpack.c.l.b16 %v200
      %v434 = vunpack.c.h.b16 %v200
      %v435 = vunpack.c.l.b16 %v201
      %v436 = vunpack.c.h.b16 %v201
      %v437 = vunpack.c.l.b16 %v202
      %v438 = vunpack.c.h.b16 %v202
      %v439 = vunpack.c.l.b16 %v203
      %v440 = vunpack.c.l.b16 %v204
      %v441 = vunpack.c.h.b16 %v204
      %v442 = vunpack.c.l.b16 %v205
      %v443 = vunpack.c.h.b16 %v205
      %v444 = vunpack.c.l.b16 %v206
      %v445 = vunpack.c.h.b16 %v206
      %v446 = vunpack.c.l.b16 %v207
      %v447 = vunpack.c.h.b16 %v207
      %v448 = vunpack.c.l.b16 %v208
      %v449 = vunpack.c.l.b16 %v209
      %v450 = vunpack.c.h.b16 %v209
      %v451 = vunpack.c.l.b16 %v210
      %v452 = vunpack.c.h.b16 %v210
      %v453 = vunpack.c.l.b16 %v211
      %v454 = vunpack.c.h.b16 %v211
      %v455 = vunpack.c.l.b16 %v212
      %v456 = vunpack.c.h.b16 %v212
      %v457 = vunpack.c.l.b16 %v213
      %v458 = vunpack.c.l.b16 %v214
      %v459 = vunpack.c.h.b16 %v214
      %v460 = vunpack.c.l.b16 %v215
      %v461 = vunpack.c.h.b16 %v215
      %v462 = vunpack.c.l.b16 %v216
      %v463 = vunpack.c.h.b16 %v216
      %v464 = vunpack.c.l.b16 %v217
      %v465 = vunpack.c.h.b16 %v217
      %v466 = vunpack.c.l.b16 %v218
      %v467 = vunpack.c.l.b16 %v219
      %v468 = vunpack.c.h.b16 %v219
      %v469 = vunpack.c.l.b16 %v220
      %v470 = vunpack.c.h.b16 %v220
      %v471 = vunpack.c.l.b16 %v221
      %v472 = vunpack.c.h.b16 %v221
      %v473 = vunpack.c.l.b16 %v222
      %v474 = vunpack.c.h.b16 %v222
      %v475 = vunpack.c.l.b16 %v223
      %v476 = vunpack.c.l.b16 %v224
      %v477 = vunpack.c.h.b16 %v224
      %v478 = vunpack.c.l.b16 %v225
      %v479 = vunpack.c.h.b16 %v225
      %v480 = vunpack.c.l.b16 %v226
      %v481 = vunpack.c.h.b16 %v226
      %v482 = vunpack.c.l.b16 %v227
      %v483 = vunpack.c.h.b16 %v227
      %v484 = vunpack.c.l.b16 %v228
      %v485 = vpack.c.b16 %v422, %v413
      %v486 = vpack.c.b16 %v423, %v414
      %v487 = vpack.c.b16 %v424, %v415
      %v488 = vpack.c.b16 %v425, %v416
      %v489 = vpack.c.b16 %v426, %v417
      %v490 = vpack.c.b16 %v427, %v418
      %v491 = vpack.c.b16 %v428, %v419
      %v492 = vpack.c.b16 %v429, %v420
      %v493 = vpack.c.b16 %v430, %v421
      %v494 = vpack.c.b16 %v440, %v431
      %v495 = vpack.c.b16 %v441, %v432
      %v496 = vpack.c.b16 %v442, %v433
      %v497 = vpack.c.b16 %v443, %v434
      %v498 = vpack.c.b16 %v444, %v435
      %v499 = vpack.c.b16 %v445, %v436
      %v500 = vpack.c.b16 %v446, %v437
      %v501 = vpack.c.b16 %v447, %v438
      %v502 = vpack.c.b16 %v448, %v439
      %v503 = vpack.c.b16 %v458, %v449
      %v504 = vpack.c.b16 %v459, %v450
      %v505 = vpack.c.b16 %v460, %v451
      %v506 = vpack.c.b16 %v461, %v452
      %v507 = vpack.c.b16 %v462, %v453
      %v508 = vpack.c.b16 %v463, %v454
      %v509 = vpack.c.b16 %v464, %v455
      %v510 = vpack.c.b16 %v465, %v456
      %v511 = vpack.c.b16 %v466, %v457
      %v512 = vpack.c.b16 %v476, %v467
      %v513 = vpack.c.b16 %v477, %v468
      %v514 = vpack.c.b16 %v478, %v469
      %v515 = vpack.c.b16 %v479, %v470
      %v516 = vpack.c.b16 %v480, %v471
      %v517 = vpack.c.b16 %v481, %v472
      %v518 = vpack.c.b16 %v482, %v473
      %v519 = vpack.c.b16 %v483, %v474
      %v520 = vpack.c.b16 %v484, %v475
      %v701 = vunpack.c.l.b16 %v229
      %v702 = vunpack.c.l.b16 %v230
      %v703 = vunpack.c.l.b16 %v231
      %v704 = vunpack.c.l.b16 %v232
      %v705 = vunpack.c.l.b16 %v233
      %v706 = vunpack.c.l.b16 %v234
      %v707 = vunpack.c.l.b16 %v235
      %v708 = vunpack.c.l.b16 %v236
      %v709 = vunpack.c.l.b16 %v237
      %v710 = vunpack.c.l.b16 %v238
      %v711 = vunpack.c.l.b16 %v239
      %v712 = vunpack.c.l.b16 %v240
      %v713 = vunpack.c.l.b16 %v241
      %v714 = vunpack.c.l.b16 %v242
      %v715 = vunpack.c.l.b16 %v243
      %v716 = vunpack.c.l.b16 %v244
      %v717 = vunpack.c.l.b16 %v245
      %v718 = vunpack.c.l.b16 %v246
      %v719 = vunpack.c.l.b16 %v247
      %v720 = vunpack.c.l.b16 %v248
      %v721 = vunpack.c.l.b16 %v249
      %v722 = vunpack.c.l.b16 %v250
      %v723 = vunpack.c.l.b16 %v251
      %v724 = vunpack.c.l.b16 %v252
      %v725 = vunpack.c.l.b16 %v253
      %v726 = vunpack.c.l.b16 %v254
      %v727 = vunpack.c.l.b16 %v255
      %v728 = vunpack.c.l.b16 %v256
      %v729 = vunpack.c.l.b16 %v257
      %v730 = vunpack.c.l.b16 %v258
      %v731 = vunpack.c.l.b16 %v259
      %v732 = vunpack.c.l.b16 %v260
      %v733 = vunpack.c.l.b16 %v261
      %v734 = vunpack.c.l.b16 %v262
      %v735 = vunpack.c.l.b16 %v263
      %v736 = vunpack.c.l.b16 %v264
      %v737 = vunpack.c.l.b16 %v265
      %v738 = vunpack.c.l.b16 %v266
      %v739 = vunpack.c.l.b16 %v267
      %v740 = vunpack.c.l.b16 %v268
      %v741 = vunpack.c.l.b16 %v269
      %v742 = vunpack.c.l.b16 %v270
      %v743 = vunpack.c.l.b16 %v271
      %v744 = vunpack.c.l.b16 %v272
      %v745 = vunpack.c.l.b16 %v273
      %v746 = vunpack.c.l.b16 %v274
      %v747 = vunpack.c.l.b16 %v275
      %v748 = vunpack.c.l.b16 %v276
      %v749 = vunpack.c.l.b16 %v277
      %v750 = vunpack.c.l.b16 %v278
      %v751 = vunpack.c.l.b16 %v279
      %v752 = vunpack.c.l.b16 %v280
      %v753 = vunpack.c.l.b16 %v281
      %v754 = vunpack.c.l.b16 %v282
      %v755 = vunpack.c.l.b16 %v283
      %v756 = vunpack.c.l.b16 %v284
      %v757 = vunpack.c.l.b16 %v285
      %v758 = vunpack.c.l.b16 %v286
      %v759 = vunpack.c.l.b16 %v287
      %v760 = vunpack.c.l.b16 %v288
      %v761 = vunpack.c.l.b16 %v289
      %v762 = vunpack.c.l.b16 %v290
      %v763 = vunpack.c.l.b16 %v291
      %v764 = vunpack.c.l.b16 %v292
      %v765 = vunpack.c.l.b16 %v293
      %v766 = vunpack.c.l.b16 %v294
      %v767 = vunpack.c.l.b16 %v295
      %v768 = vunpack.c.l.b16 %v296
      %v769 = vunpack.c.l.b16 %v297
      %v770 = vunpack.c.l.b16 %v298
      %v771 = vunpack.c.l.b16 %v299
      %v772 = vunpack.c.l.b16 %v300
      %v773 = vunpack.c.l.b16 %v301
      %v774 = vunpack.c.l.b16 %v302
      %v775 = vunpack.c.l.b16 %v303
      %v776 = vunpack.c.l.b16 %v304
      %v777 = vunpack.c.l.b16 %v305
      %v778 = vunpack.c.l.b16 %v306
      %v779 = vunpack.c.l.b16 %v307
      %v780 = vunpack.c.l.b16 %v308
      %v781 = vunpack.c.l.b16 %v309
      %v782 = vunpack.c.l.b16 %v310
      %v783 = vunpack.c.l.b16 %v311
      %v784 = vunpack.c.l.b16 %v312
      %v785 = vunpack.c.l.b16 %v313
      %v786 = vunpack.c.l.b16 %v314
      %v787 = vunpack.c.l.b16 %v315
      %v788 = vunpack.c.l.b16 %v316
      %v789 = vunpack.c.l.b16 %v317
      %v790 = vunpack.c.l.b16 %v318
      %v791 = vunpack.c.l.b16 %v319
      %v792 = vunpack.c.l.b16 %v320
      %v793 = vunpack.c.l.b16 %v321
      %v794 = vunpack.c.l.b16 %v322
      %v795 = vunpack.c.l.b16 %v323
      %v796 = vunpack.c.l.b16 %v324
      %v797 = vunpack.c.l.b16 %v325
      %v798 = vunpack.c.l.b16 %v326
      %v799 = vunpack.c.l.b16 %v327
      %v800 = vunpack.c.l.b16 %v328
      %v801 = vunpack.c.l.b16 %v329
      %v802 = vunpack.c.l.b16 %v330
      %v803 = vunpack.c.l.b16 %v331
      %v804 = vunpack.c.l.b16 %v332
      %v805 = vunpack.c.l.b16 %v333
      %v806 = vunpack.c.l.b16 %v334
      %v807 = vunpack.c.l.b16 %v335
      %v808 = vunpack.c.l.b16 %v336
      %v809 = vunpack.c.l.b16 %v337
      %v810 = vunpack.c.l.b16 %v338
      %v811 = vunpack.c.l.b16 %v339
      %v812 = vunpack.c.l.b16 %v340
      %v813 = vunpack.c.l.b16 %v341
      %v814 = vunpack.c.l.b16 %v342
      %v815 = vunpack.c.l.b16 %v343
      %v816 = vunpack.c.l.b16 %v344
      %v817 = vunpack.c.l.b16 %v345
      %v818 = vunpack.c.l.b16 %v346
      %v819 = vunpack.c.l.b16 %v347
      %v820 = vunpack.c.l.b16 %v348
      %v821 = vunpack.c.l.b16 %v349
      %v822 = vunpack.c.l.b16 %v350
      %v823 = vunpack.c.l.b16 %v351
      %v824 = vunpack.c.l.b16 %v352
      %v825 = vunpack.c.l.b16 %v353
      %v826 = vunpack.c.l.b16 %v354
      %v827 = vunpack.c.l.b16 %v355
      %v828 = vunpack.c.l.b16 %v356
      %v829 = vunpack.c.l.b16 %v357
      %v830 = vunpack.c.l.b16 %v358
      %v831 = vunpack.c.l.b16 %v359
      %v832 = vunpack.c.l.b16 %v360
      %v833 = vunpack.c.l.b16 %v361
      %v834 = vunpack.c.l.b16 %v362
      %v835 = vunpack.c.l.b16 %v363
      %v836 = vunpack.c.l.b16 %v364
      %v837 = vunpack.c.l.b16 %v365
      %v838 = vunpack.c.l.b16 %v366
      %v839 = vunpack.c.l.b16 %v367
      %v840 = vunpack.c.l.b16 %v368
      %v841 = vunpack.c.l.b16 %v369
      %v842 = vunpack.c.l.b16 %v370
      %v843 = vunpack.c.l.b16 %v371
      %v844 = vunpack.c.l.b16 %v372
      %v845 = vpack.c.b16 %v702, %v701
      %v846 = vpack.c.b16 %v704, %v703
      %v847 = vpack.c.b16 %v706, %v705
      %v848 = vpack.c.b16 %v708, %v707
      %v849 = vpack.c.b16 %v710, %v709
      %v850 = vpack.c.b16 %v712, %v711
      %v851 = vpack.c.b16 %v714, %v713
      %v852 = vpack.c.b16 %v716, %v715
      %v853 = vpack.c.b16 %v718, %v717
      %v854 = vpack.c.b16 %v720, %v719
      %v855 = vpack.c.b16 %v722, %v721
      %v856 = vpack.c.b16 %v724, %v723
      %v857 = vpack.c.b16 %v726, %v725
      %v858 = vpack.c.b16 %v728, %v727
      %v859 = vpack.c.b16 %v730, %v729
      %v860 = vpack.c.b16 %v732, %v731
      %v861 = vpack.c.b16 %v734, %v733
      %v862 = vpack.c.b16 %v736, %v735
      %v863 = vpack.c.b16 %v738, %v737
      %v864 = vpack.c.b16 %v740, %v739
      %v865 = vpack.c.b16 %v742, %v741
      %v866 = vpack.c.b16 %v744, %v743
      %v867 = vpack.c.b16 %v746, %v745
      %v868 = vpack.c.b16 %v748, %v747
      %v869 = vpack.c.b16 %v750, %v749
      %v870 = vpack.c.b16 %v752, %v751
      %v871 = vpack.c.b16 %v754, %v753
      %v872 = vpack.c.b16 %v756, %v755
      %v873 = vpack.c.b16 %v758, %v757
      %v874 = vpack.c.b16 %v760, %v759
      %v875 = vpack.c.b16 %v762, %v761
      %v876 = vpack.c.b16 %v764, %v763
      %v877 = vpack.c.b16 %v766, %v765
      %v878 = vpack.c.b16 %v768, %v767
      %v879 = vpack.c.b16 %v770, %v769
      %v880 = vpack.c.b16 %v772, %v771
      %v881 = vpack.c.b16 %v774, %v773
      %v882 = vpack.c.b16 %v776, %v775
      %v883 = vpack.c.b16 %v778, %v777
      %v884 = vpack.c.b16 %v780, %v779
      %v885 = vpack.c.b16 %v782, %v781
      %v886 = vpack.c.b16 %v784, %v783
      %v887 = vpack.c.b16 %v786, %v785
      %v888 = vpack.c.b16 %v788, %v787
      %v889 = vpack.c.b16 %v790, %v789
      %v890 = vpack.c.b16 %v792, %v791
      %v891 = vpack.c.b16 %v794, %v793
      %v892 = vpack.c.b16 %v796, %v795
      %v893 = vpack.c.b16 %v798, %v797
      %v894 = vpack.c.b16 %v800, %v799
      %v895 = vpack.c.b16 %v802, %v801
      %v896 = vpack.c.b16 %v804, %v803
      %v897 = vpack.c.b16 %v806, %v805
      %v898 = vpack.c.b16 %v808, %v807
      %v899 = vpack.c.b16 %v810, %v809
      %v900 = vpack.c.b16 %v812, %v811
      %v901 = vpack.c.b16 %v814, %v813
      %v902 = vpack.c.b16 %v816, %v815
      %v903 = vpack.c.b16 %v818, %v817
      %v904 = vpack.c.b16 %v820, %v819
      %v905 = vpack.c.b16 %v822, %v821
      %v906 = vpack.c.b16 %v824, %v823
      %v907 = vpack.c.b16 %v826, %v825
      %v908 = vpack.c.b16 %v828, %v827
      %v909 = vpack.c.b16 %v830, %v829
      %v910 = vpack.c.b16 %v832, %v831
      %v911 = vpack.c.b16 %v834, %v833
      %v912 = vpack.c.b16 %v836, %v835
      %v913 = vpack.c.b16 %v838, %v837
      %v914 = vpack.c.b16 %v840, %v839
      %v915 = vpack.c.b16 %v842, %v841
      %v916 = vpack.c.b16 %v844, %v843
      %989 = vmatprep.subr.bf16.mxu0 0
      %990 = vmatpush1.bf16.msra.mxu0 %v845
      %991 = vmatprep.subr.bf16.mxu0 0
      %992 = vmatpush1.bf16.msra.mxu0 %v846
      %993 = vmatprep.subr.bf16.mxu0 0
      %994 = vmatpush1.bf16.msra.mxu0 %v847
      %995 = vmatprep.subr.bf16.mxu0 0
      %996 = vmatpush1.bf16.msra.mxu0 %v848
      %997 = vmatprep.subr.bf16.mxu0 0
      %998 = vmatpush1.bf16.msra.mxu0 %v849
      %999 = vmatprep.subr.bf16.mxu0 0
      %1000 = vmatpush1.bf16.msra.mxu0 %v850
      %1001 = vmatprep.subr.bf16.mxu0 0
      %1002 = vmatpush1.bf16.msra.mxu0 %v851
      %1003 = vmatprep.subr.bf16.mxu0 0
      %1004 = vmatpush1.bf16.msra.mxu0 %v852
      %1005 = vmatprep.subr.bf16.mxu0 0
      %1006 = vmatpush1.bf16.msra.mxu0 %v853
      %1007 = vmatprep.subr.bf16.mxu0 0
      %1008 = vmatpush1.bf16.msra.mxu0 %v854
      %1009 = vmatprep.subr.bf16.mxu0 0
      %1010 = vmatpush1.bf16.msra.mxu0 %v855
      %1011 = vmatprep.subr.bf16.mxu0 0
      %1012 = vmatpush1.bf16.msra.mxu0 %v856
      %1013 = vmatprep.subr.bf16.mxu0 0
      %1014 = vmatpush1.bf16.msra.mxu0 %v857
      %1015 = vmatprep.subr.bf16.mxu0 0
      %1016 = vmatpush1.bf16.msra.mxu0 %v858
      %1017 = vmatprep.subr.bf16.mxu0 0
      %1018 = vmatpush1.bf16.msra.mxu0 %v859
      %1019 = vmatprep.subr.bf16.mxu0 0
      %1020 = vmatpush1.bf16.msra.mxu0 %v860
      %1021 = vmatprep.mubr.bf16.mxu0 %v486
      %1022 = vmatmul.mubr.bf16.gmra.mrb[0].mxu0 %v485
      %v1023 = vpop.f32.mrb[0].mxu0
      %v1024 = vadd.f32 0.0, %v1023
      %v1025 = vpop.f32.mrb[0].mxu0
      %v1026 = vpop.f32.mrb[0].mxu0
      %v1027 = vadd.f32 0.0, %v1026
      %v1028 = vpop.f32.mrb[0].mxu0
      %1029 = vmatprep.mubr.bf16.mxu0 %v495
      %1030 = vmatmul.mubr.bf16.gmra.mrb[0].mxu0 %v494
      %v1031 = vpop.f32.mrb[0].mxu0
      %v1032 = vadd.f32 0.0, %v1031
      %v1033 = vpop.f32.mrb[0].mxu0
      %v1034 = vpop.f32.mrb[0].mxu0
      %v1035 = vadd.f32 0.0, %v1034
      %v1036 = vpop.f32.mrb[0].mxu0
      %1037 = vmatprep.mubr.bf16.mxu0 %v504
      %1038 = vmatmul.mubr.bf16.gmra.mrb[0].mxu0 %v503
      %v1039 = vpop.f32.mrb[0].mxu0
      %v1040 = vadd.f32 0.0, %v1039
      %v1041 = vpop.f32.mrb[0].mxu0
      %v1042 = vpop.f32.mrb[0].mxu0
      %v1043 = vadd.f32 0.0, %v1042
      %v1044 = vpop.f32.mrb[0].mxu0
      %1045 = vmatprep.mubr.bf16.mxu0 %v513
      %1046 = vmatmul.mubr.bf16.gmra.mrb[0].mxu0 %v512
      %v1047 = vpop.f32.mrb[0].mxu0
      %v1048 = vadd.f32 0.0, %v1047
      %v1049 = vpop.f32.mrb[0].mxu0
      %v1050 = vpop.f32.mrb[0].mxu0
      %v1051 = vadd.f32 0.0, %v1050
      %v1052 = vpop.f32.mrb[0].mxu0
      %1053 = vdwg.mxu0
      %1054 = vmatprep.subr.bf16.mxu0 0
      %1055 = vmatpush1.bf16.msra.mxu0 %v861
      %1056 = vmatprep.subr.bf16.mxu0 0
      %1057 = vmatpush1.bf16.msra.mxu0 %v862
      %1058 = vmatprep.subr.bf16.mxu0 0
      %1059 = vmatpush1.bf16.msra.mxu0 %v863
      %1060 = vmatprep.subr.bf16.mxu0 0
      %1061 = vmatpush1.bf16.msra.mxu0 %v864
      %1062 = vmatprep.subr.bf16.mxu0 0
      %1063 = vmatpush1.bf16.msra.mxu0 %v865
      %1064 = vmatprep.subr.bf16.mxu0 0
      %1065 = vmatpush1.bf16.msra.mxu0 %v866
      %1066 = vmatprep.subr.bf16.mxu0 0
      %1067 = vmatpush1.bf16.msra.mxu0 %v867
      %1068 = vmatprep.subr.bf16.mxu0 0
      %1069 = vmatpush1.bf16.msra.mxu0 %v868
      %1070 = vmatprep.subr.bf16.mxu0 0
      %1071 = vmatpush1.bf16.msra.mxu0 %v869
      %1072 = vmatprep.subr.bf16.mxu0 0
      %1073 = vmatpush1.bf16.msra.mxu0 %v870
      %1074 = vmatprep.subr.bf16.mxu0 0
      %1075 = vmatpush1.bf16.msra.mxu0 %v871
      %1076 = vmatprep.subr.bf16.mxu0 0
      %1077 = vmatpush1.bf16.msra.mxu0 %v872
      %1078 = vmatprep.subr.bf16.mxu0 0
      %1079 = vmatpush1.bf16.msra.mxu0 %v873
      %1080 = vmatprep.subr.bf16.mxu0 0
      %1081 = vmatpush1.bf16.msra.mxu0 %v874
      %1082 = vmatprep.subr.bf16.mxu0 0
      %1083 = vmatpush1.bf16.msra.mxu0 %v875
      %1084 = vmatprep.subr.bf16.mxu0 0
      %1085 = vmatpush1.bf16.msra.mxu0 %v876
      %1086 = vmatprep.mubr.bf16.mxu0 %v488
      %1087 = vmatmul.mubr.bf16.gmra.mrb[0].mxu0 %v487
      %v1088 = vpop.f32.mrb[0].mxu0
      %v1089 = vadd.f32 %v1024, %v1088
      %v1090 = vpop.f32.mrb[0].mxu0
      %v1091 = vpop.f32.mrb[0].mxu0
      %v1092 = vadd.f32 %v1027, %v1091
      %v1093 = vpop.f32.mrb[0].mxu0
      %1094 = vmatprep.mubr.bf16.mxu0 %v497
      %1095 = vmatmul.mubr.bf16.gmra.mrb[0].mxu0 %v496
      %v1096 = vpop.f32.mrb[0].mxu0
      %v1097 = vadd.f32 %v1032, %v1096
      %v1098 = vpop.f32.mrb[0].mxu0
      %v1099 = vpop.f32.mrb[0].mxu0
      %v1100 = vadd.f32 %v1035, %v1099
      %v1101 = vpop.f32.mrb[0].mxu0
      %1102 = vmatprep.mubr.bf16.mxu0 %v506
      %1103 = vmatmul.mubr.bf16.gmra.mrb[0].mxu0 %v505
      %v1104 = vpop.f32.mrb[0].mxu0
      %v1105 = vadd.f32 %v1040, %v1104
      %v1106 = vpop.f32.mrb[0].mxu0
      %v1107 = vpop.f32.mrb[0].mxu0
      %v1108 = vadd.f32 %v1043, %v1107
      %v1109 = vpop.f32.mrb[0].mxu0
      %1110 = vmatprep.mubr.bf16.mxu0 %v515
      %1111 = vmatmul.mubr.bf16.gmra.mrb[0].mxu0 %v514
      %v1112 = vpop.f32.mrb[0].mxu0
      %v1113 = vadd.f32 %v1048, %v1112
      %v1114 = vpop.f32.mrb[0].mxu0
      %v1115 = vpop.f32.mrb[0].mxu0
      %v1116 = vadd.f32 %v1051, %v1115
      %v1117 = vpop.f32.mrb[0].mxu0
      %1118 = vdwg.mxu0
      %1119 = vmatprep.subr.bf16.mxu0 0
      %1120 = vmatpush1.bf16.msra.mxu0 %v877
      %1121 = vmatprep.subr.bf16.mxu0 0
      %1122 = vmatpush1.bf16.msra.mxu0 %v878
      %1123 = vmatprep.subr.bf16.mxu0 0
      %1124 = vmatpush1.bf16.msra.mxu0 %v879
      %1125 = vmatprep.subr.bf16.mxu0 0
      %1126 = vmatpush1.bf16.msra.mxu0 %v880
      %1127 = vmatprep.subr.bf16.mxu0 0
      %1128 = vmatpush1.bf16.msra.mxu0 %v881
      %1129 = vmatprep.subr.bf16.mxu0 0
      %1130 = vmatpush1.bf16.msra.mxu0 %v882
      %1131 = vmatprep.subr.bf16.mxu0 0
      %1132 = vmatpush1.bf16.msra.mxu0 %v883
      %1133 = vmatprep.subr.bf16.mxu0 0
      %1134 = vmatpush1.bf16.msra.mxu0 %v884
      %1135 = vmatprep.subr.bf16.mxu0 0
      %1136 = vmatpush1.bf16.msra.mxu0 %v885
      %1137 = vmatprep.subr.bf16.mxu0 0
      %1138 = vmatpush1.bf16.msra.mxu0 %v886
      %1139 = vmatprep.subr.bf16.mxu0 0
      %1140 = vmatpush1.bf16.msra.mxu0 %v887
      %1141 = vmatprep.subr.bf16.mxu0 0
      %1142 = vmatpush1.bf16.msra.mxu0 %v888
      %1143 = vmatprep.subr.bf16.mxu0 0
      %1144 = vmatpush1.bf16.msra.mxu0 %v889
      %1145 = vmatprep.subr.bf16.mxu0 0
      %1146 = vmatpush1.bf16.msra.mxu0 %v890
      %1147 = vmatprep.subr.bf16.mxu0 0
      %1148 = vmatpush1.bf16.msra.mxu0 %v891
      %1149 = vmatprep.subr.bf16.mxu0 0
      %1150 = vmatpush1.bf16.msra.mxu0 %v892
      %1151 = vmatprep.mubr.bf16.mxu0 %v490
      %1152 = vmatmul.mubr.bf16.gmra.mrb[0].mxu0 %v489
      %v1153 = vpop.f32.mrb[0].mxu0
      %v1154 = vadd.f32 %v1089, %v1153
      %v1155 = vpop.f32.mrb[0].mxu0
      %v1156 = vpop.f32.mrb[0].mxu0
      %v1157 = vadd.f32 %v1092, %v1156
      %v1158 = vpop.f32.mrb[0].mxu0
      %1159 = vmatprep.mubr.bf16.mxu0 %v499
      %1160 = vmatmul.mubr.bf16.gmra.mrb[0].mxu0 %v498
      %v1161 = vpop.f32.mrb[0].mxu0
      %v1162 = vadd.f32 %v1097, %v1161
      %v1163 = vpop.f32.mrb[0].mxu0
      %v1164 = vpop.f32.mrb[0].mxu0
      %v1165 = vadd.f32 %v1100, %v1164
      %v1166 = vpop.f32.mrb[0].mxu0
      %1167 = vmatprep.mubr.bf16.mxu0 %v508
      %1168 = vmatmul.mubr.bf16.gmra.mrb[0].mxu0 %v507
      %v1169 = vpop.f32.mrb[0].mxu0
      %v1170 = vadd.f32 %v1105, %v1169
      %v1171 = vpop.f32.mrb[0].mxu0
      %v1172 = vpop.f32.mrb[0].mxu0
      %v1173 = vadd.f32 %v1108, %v1172
      %v1174 = vpop.f32.mrb[0].mxu0
      %1175 = vmatprep.mubr.bf16.mxu0 %v517
      %1176 = vmatmul.mubr.bf16.gmra.mrb[0].mxu0 %v516
      %v1177 = vpop.f32.mrb[0].mxu0
      %v1178 = vadd.f32 %v1113, %v1177
      %v1179 = vpop.f32.mrb[0].mxu0
      %v1180 = vpop.f32.mrb[0].mxu0
      %v1181 = vadd.f32 %v1116, %v1180
      %v1182 = vpop.f32.mrb[0].mxu0
      %1183 = vdwg.mxu0
      %1184 = vmatprep.subr.bf16.mxu0 0
      %1185 = vmatpush1.bf16.msra.mxu0 %v893
      %1186 = vmatprep.subr.bf16.mxu0 0
      %1187 = vmatpush1.bf16.msra.mxu0 %v894
      %1188 = vmatprep.subr.bf16.mxu0 0
      %1189 = vmatpush1.bf16.msra.mxu0 %v895
      %1190 = vmatprep.subr.bf16.mxu0 0
      %1191 = vmatpush1.bf16.msra.mxu0 %v896
      %1192 = vmatprep.subr.bf16.mxu0 0
      %1193 = vmatpush1.bf16.msra.mxu0 %v897
      %1194 = vmatprep.subr.bf16.mxu0 0
      %1195 = vmatpush1.bf16.msra.mxu0 %v898
      %1196 = vmatprep.subr.bf16.mxu0 0
      %1197 = vmatpush1.bf16.msra.mxu0 %v899
      %1198 = vmatprep.subr.bf16.mxu0 0
      %1199 = vmatpush1.bf16.msra.mxu0 %v900
      %1200 = vmatprep.subr.bf16.mxu0 0
      %1201 = vmatpush1.bf16.msra.mxu0 %v901
      %1202 = vmatprep.subr.bf16.mxu0 0
      %1203 = vmatpush1.bf16.msra.mxu0 %v902
      %1204 = vmatprep.subr.bf16.mxu0 0
      %1205 = vmatpush1.bf16.msra.mxu0 %v903
      %1206 = vmatprep.subr.bf16.mxu0 0
      %1207 = vmatpush1.bf16.msra.mxu0 %v904
      %1208 = vmatprep.subr.bf16.mxu0 0
      %1209 = vmatpush1.bf16.msra.mxu0 %v905
      %1210 = vmatprep.subr.bf16.mxu0 0
      %1211 = vmatpush1.bf16.msra.mxu0 %v906
      %1212 = vmatprep.subr.bf16.mxu0 0
      %1213 = vmatpush1.bf16.msra.mxu0 %v907
      %1214 = vmatprep.subr.bf16.mxu0 0
      %1215 = vmatpush1.bf16.msra.mxu0 %v908
      %1216 = vmatprep.mubr.bf16.mxu0 %v492
      %1217 = vmatmul.mubr.bf16.gmra.mrb[0].mxu0 %v491
      %v1218 = vpop.f32.mrb[0].mxu0
      %v1219 = vadd.f32 %v1154, %v1218
      %v1220 = vpop.f32.mrb[0].mxu0
      %v1221 = vpop.f32.mrb[0].mxu0
      %v1222 = vadd.f32 %v1157, %v1221
      %v1223 = vpop.f32.mrb[0].mxu0
      %1224 = vmatprep.mubr.bf16.mxu0 %v501
      %1225 = vmatmul.mubr.bf16.gmra.mrb[0].mxu0 %v500
      %v1226 = vpop.f32.mrb[0].mxu0
      %v1227 = vadd.f32 %v1162, %v1226
      %v1228 = vpop.f32.mrb[0].mxu0
      %v1229 = vpop.f32.mrb[0].mxu0
      %v1230 = vadd.f32 %v1165, %v1229
      %v1231 = vpop.f32.mrb[0].mxu0
      %1232 = vmatprep.mubr.bf16.mxu0 %v510
      %1233 = vmatmul.mubr.bf16.gmra.mrb[0].mxu0 %v509
      %v1234 = vpop.f32.mrb[0].mxu0
      %v1235 = vadd.f32 %v1170, %v1234
      %v1236 = vpop.f32.mrb[0].mxu0
      %v1237 = vpop.f32.mrb[0].mxu0
      %v1238 = vadd.f32 %v1173, %v1237
      %v1239 = vpop.f32.mrb[0].mxu0
      %1240 = vmatprep.mubr.bf16.mxu0 %v519
      %1241 = vmatmul.mubr.bf16.gmra.mrb[0].mxu0 %v518
      %v1242 = vpop.f32.mrb[0].mxu0
      %v1243 = vadd.f32 %v1178, %v1242
      %v1244 = vpop.f32.mrb[0].mxu0
      %v1245 = vpop.f32.mrb[0].mxu0
      %v1246 = vadd.f32 %v1181, %v1245
      %v1247 = vpop.f32.mrb[0].mxu0
      %1248 = vdwg.mxu0
      %1249 = vmatprep.subr.bf16.mxu0 0
      %1250 = vmatpush1.bf16.msra.mxu0 %v909
      %1251 = vmatprep.subr.bf16.mxu0 0
      %1252 = vmatpush1.bf16.msra.mxu0 %v910
      %1253 = vmatprep.subr.bf16.mxu0 0
      %1254 = vmatpush1.bf16.msra.mxu0 %v911
      %1255 = vmatprep.subr.bf16.mxu0 0
      %1256 = vmatpush1.bf16.msra.mxu0 %v912
      %1257 = vmatprep.subr.bf16.mxu0 0
      %1258 = vmatpush1.bf16.msra.mxu0 %v913
      %1259 = vmatprep.subr.bf16.mxu0 0
      %1260 = vmatpush1.bf16.msra.mxu0 %v914
      %1261 = vmatprep.subr.bf16.mxu0 0
      %1262 = vmatpush1.bf16.msra.mxu0 %v915
      %1263 = vmatprep.subr.bf16.mxu0 0
      %1264 = vmatpush1.bf16.msra.mxu0 %v916
      %1265 = vmatprep.subr.bf16.mxu0 0
      %1266 = vmatpush1.bf16.msra.mxu0 0
      %1267 = vmatprep.subr.bf16.mxu0 0
      %1268 = vmatpush1.bf16.msra.mxu0 0
      %1269 = vmatprep.subr.bf16.mxu0 0
      %1270 = vmatpush1.bf16.msra.mxu0 0
      %1271 = vmatprep.subr.bf16.mxu0 0
      %1272 = vmatpush1.bf16.msra.mxu0 0
      %1273 = vmatprep.subr.bf16.mxu0 0
      %1274 = vmatpush1.bf16.msra.mxu0 0
      %1275 = vmatprep.subr.bf16.mxu0 0
      %1276 = vmatpush1.bf16.msra.mxu0 0
      %1277 = vmatprep.subr.bf16.mxu0 0
      %1278 = vmatpush1.bf16.msra.mxu0 0
      %1279 = vmatprep.subr.bf16.mxu0 0
      %1280 = vmatpush1.bf16.msra.mxu0 0
      %1281 = vmatprep.mubr.bf16.mxu0 0
      %1282 = vmatmul.mubr.bf16.gmra.mrb[0].mxu0 %v493
      %v1283 = vpop.f32.mrb[0].mxu0
      %v1284 = vadd.f32 %v1219, %v1283
      %v1285 = vpop.f32.mrb[0].mxu0
      %v1286 = vpop.f32.mrb[0].mxu0
      %v1287 = vadd.f32 %v1222, %v1286
      %v1288 = vpop.f32.mrb[0].mxu0
      %1289 = vmatprep.mubr.bf16.mxu0 0
      %1290 = vmatmul.mubr.bf16.gmra.mrb[0].mxu0 %v502
      %v1291 = vpop.f32.mrb[0].mxu0
      %v1292 = vadd.f32 %v1227, %v1291
      %v1293 = vpop.f32.mrb[0].mxu0
      %v1294 = vpop.f32.mrb[0].mxu0
      %v1295 = vadd.f32 %v1230, %v1294
      %v1296 = vpop.f32.mrb[0].mxu0
      %1297 = vmatprep.mubr.bf16.mxu0 0
      %1298 = vmatmul.mubr.bf16.gmra.mrb[0].mxu0 %v511
      %v1299 = vpop.f32.mrb[0].mxu0
      %v1300 = vadd.f32 %v1235, %v1299
      %v1301 = vpop.f32.mrb[0].mxu0
      %v1302 = vpop.f32.mrb[0].mxu0
      %v1303 = vadd.f32 %v1238, %v1302
      %v1304 = vpop.f32.mrb[0].mxu0
      %1305 = vmatprep.mubr.bf16.mxu0 0
      %1306 = vmatmul.mubr.bf16.gmra.mrb[0].mxu0 %v520
      %v1307 = vpop.f32.mrb[0].mxu0
      %v1308 = vadd.f32 %v1243, %v1307
      %v1309 = vpop.f32.mrb[0].mxu0
      %v1310 = vpop.f32.mrb[0].mxu0
      %v1311 = vadd.f32 %v1246, %v1310
      %v1312 = vpop.f32.mrb[0].mxu0
      %1313 = vdwg.mxu0
      %v1314 = vpack.c.bf16 %v1287, %v1284
      %v1315 = vpack.c.bf16 %v1295, %v1292
      %v1316 = vpack.c.bf16 %v1303, %v1300
      %v1317 = vpack.c.bf16 %v1311, %v1308
      %v1322 = vunpack.c.l.b16 %v1314
      %v1323 = vunpack.c.h.b16 %v1314
      %v1324 = vunpack.c.l.b16 %v1315
      %v1325 = vunpack.c.h.b16 %v1315
      %v1326 = vunpack.c.l.b16 %v1316
      %v1327 = vunpack.c.h.b16 %v1316
      %v1328 = vunpack.c.l.b16 %v1317
      %v1329 = vunpack.c.h.b16 %v1317
      %v1330 = vpack.c.b16 %v1322, %v1322
      %v1331 = vpack.c.b16 %v1323, %v1323
      %v1332 = vpack.c.b16 %v1324, %v1324
      %v1333 = vpack.c.b16 %v1325, %v1325
      %v1334 = vpack.c.b16 %v1326, %v1326
      %v1335 = vpack.c.b16 %v1327, %v1327
      %v1336 = vpack.c.b16 %v1328, %v1328
      %v1337 = vpack.c.b16 %v1329, %v1329
      %1346 = vst [vmem:[%s182] sm:$0xf] %v1330
      %1347 = vst [vmem:[%s182 + $0x4] sm:$0xf] %v1331
      %1348 = vst [vmem:[%s182 + $0x8] sm:$0xf] %v1332
      %1349 = vst [vmem:[%s182 + $0xc] sm:$0xf] %v1333
      %1350 = vst [vmem:[%s182 + $0x10] sm:$0xf] %v1334
      %1351 = vst [vmem:[%s182 + $0x14] sm:$0xf] %v1335
      %1352 = vst [vmem:[%s182 + $0x18] sm:$0xf] %v1336
      %1353 = vst [vmem:[%s182 + $0x1c] sm:$0xf] %v1337
      %v1354 = vadd.f32 %v1284, %v1287
      %v1355 = vadd.f32 %v1354, %v1292
      %v1356 = vadd.f32 %v1355, %v1295
      %v1357 = vadd.f32 %v1356, %v1300
      %v1358 = vadd.f32 %v1357, %v1303
      %v1359 = vadd.f32 %v1358, %v1308
      %v1360 = vadd.f32 %v1359, %v1311
      %v1361 = vrot.slane %v1360, 4
      %v1362 = vadd.f32 %v1360, %v1361
      %v1363 = vrot.slane %v1362, 2
      %v1364 = vadd.f32 %v1362, %v1363
      %v1365 = vrot.slane %v1364, 1
      %v1366 = vadd.f32 %v1364, %v1365
      %v1367 = vmul.f32 %v1284, %v1284
      %v1368 = vmul.f32 %v1287, %v1287
      %v1369 = vmul.f32 %v1292, %v1292
      %v1370 = vmul.f32 %v1295, %v1295
      %v1371 = vmul.f32 %v1300, %v1300
      %v1372 = vmul.f32 %v1303, %v1303
      %v1373 = vmul.f32 %v1308, %v1308
      %v1374 = vmul.f32 %v1311, %v1311
      %v1375 = vadd.f32 %v1367, %v1368
      %v1376 = vadd.f32 %v1375, %v1369
      %v1377 = vadd.f32 %v1376, %v1370
      %v1378 = vadd.f32 %v1377, %v1371
      %v1379 = vadd.f32 %v1378, %v1372
      %v1380 = vadd.f32 %v1379, %v1373
      %v1381 = vadd.f32 %v1380, %v1374
      %v1382 = vrot.slane %v1381, 4
      %v1383 = vadd.f32 %v1381, %v1382
      %v1384 = vrot.slane %v1383, 2
      %v1385 = vadd.f32 %v1383, %v1384
      %v1386 = vrot.slane %v1385, 1
      %v1387 = vadd.f32 %v1385, %v1386
      %v1388 = vlaneseq
      %v1389 = vshrl.u32 %v1388, 7
      %vm1390 = vcmp.eq.s32.totalorder %v1389, 0
      %v1391 = vsel %vm1390, %v1366, 0.0
      %vm1392 = vcmp.eq.s32.totalorder %v1389, 1
      %v1393 = vsel %vm1392, %v1387, 0.0
      %v1394 = vadd.f32 %v1391, %v1393
      %1395 = vst [vmem:[%s187] sm:$0xff] %v1394
      %s1396 = smul.u32 8, %s15
      %p1397 = scmp.lt.s32.totalorder %s1396, 15
      %s1398 = scalar_select %p1397, %s1396, 15
      %s1399 = smul.addr %s1398, 4
      %s1400 = scalar_lea.vmem %s2, %s1399
      %p1401 = scmp.lt.s32.totalorder %s15, 1
      %s1402 = scalar_select %p1401, %s15, 1
      %s1403 = smul.addr %s1402, 8
      %s1404 = scalar_lea.vmem %s3, %s1403
      // Predicated region
      $region29: #{bottleneck_forward.7} parent=27 // pred_check
        %p1405 = pneg %p80
      $region30: #{bottleneck_forward.7} parent=27 // pred_check_branch
        %1407 = sbr.rel (%p1405) target = $region32
      $region31: #{bottleneck_forward.7} parent=27 // pred_region
        %s1408 = smul.u32 8, %s15
      $region32: #{bottleneck_forward.7} parent=27 // pred_fallthru
        _
      // Predicated region
      $region33: #{bottleneck_forward.7} parent=27 // pred_check
        %p1409 = pneg %p106
      $region34: #{bottleneck_forward.7} parent=27 // pred_check_branch
        %1411 = sbr.rel (%p1409) target = $region36
      $region35: #{bottleneck_forward.7} parent=27 // pred_region
        _
      $region36: #{bottleneck_forward.7} parent=27 // pred_fallthru
        _
    $region28: #{bottleneck_forward.7} parent=5 // pred_fallthru
      _
    %p1412 = scmp.le.s32.totalorder 2, %s10
    // Predicated region
    $region37: #{bottleneck_forward.7} parent=5 // pred_check
      %p1413 = pneg %p1412
    $region38: #{bottleneck_forward.7} parent=5 // pred_check_branch
      %1415 = sbr.rel (%p1413) target = $region40
    $region39: #{bottleneck_forward.7} parent=5 // pred_region
      %s1416 = ssub.s32 %s10, 2
      // Predicated region
      $region41: #{bottleneck_forward.7} parent=39 // pred_check
        %p1417 = pneg %p86
      $region42: #{bottleneck_forward.7} parent=39 // pred_check_branch
        %1419 = sbr.rel (%p1417) target = $region44
      $region43: #{bottleneck_forward.7} parent=39 // pred_region
        %s1420 = smul.u32 8, %s16
        %p1421 = scmp.lt.s32.totalorder %s1420, 15
        %s1422 = scalar_select %p1421, %s1420, 15
        %s1423 = smul.addr %s1422, 4
        %s1424 = scalar_lea.vmem %s2, %s1423
      $region44: #{bottleneck_forward.7} parent=39 // pred_fallthru
        _
      // Predicated region
      $region45: #{bottleneck_forward.7} parent=39 // pred_check
        %p1425 = pneg %p112
      $region46: #{bottleneck_forward.7} parent=39 // pred_check_branch
        %1427 = sbr.rel (%p1425) target = $region48
      $region47: #{bottleneck_forward.7} parent=39 // pred_region
        %p1428 = scmp.lt.s32.totalorder %s16, 1
        %s1429 = scalar_select %p1428, %s16, 1
        %s1430 = smul.addr %s1429, 8
        %s1431 = scalar_lea.vmem %s3, %s1430
      $region48: #{bottleneck_forward.7} parent=39 // pred_fallthru
        _
    $region40: #{bottleneck_forward.7} parent=5 // pred_fallthru
      _
  $region6: #{bottleneck_forward.7} parent=0 // loop_footer
    %s14 = sadd.s32 1, %s10
  $region7: #{bottleneck_forward.7} parent=0 // loop_footer_branch
    %9 = sbr.rel target = $region3
  $region8: #{bottleneck_forward.7} parent=0 // loop_exit
    _

// kernel: bottleneck_forward.5
$region0: #{bottleneck_forward.5}
  #allocation0 [shape = 'u32[]', space=smem, size = 0x4, offset = 0x4, fixed_abs, tag = 'smem constant byte address 0x4 - core index']
  #allocation1 [shape = 'u32[144,128]{1,0:T(1,128)}', space=vmem, size = 0x12000, scoped, tag = 'internal scratch']
  %s0 = inlined_call_operand.vmem [shape: bf16[512,128], index: 0, kind: input, shape index: {}]
  %s1 = inlined_call_operand.vmem [shape: bf16[128,128], index: 1, kind: input, shape index: {}]
  %s2 = inlined_call_operand.vmem [shape: bf16[512,128], index: 2, kind: output, shape index: {0}]
  %s3 = inlined_call_operand.vmem [shape: f32[16,128], index: 3, kind: output, shape index: {1}]
  %4 = xla_tuple %s2, %s3
  %s5 = sld [smem:[#allocation0]]
  $region49: #{bottleneck_forward.5} parent=0
    _
  %s7 = ssub.s32 1, %s5
  %s8 = scalar_select 0, %s7, %s5
  loop: start=0, step=1, limit=4
  $region2: #{bottleneck_forward.5} parent=0 // loop_pre_header
    _
  $region3: #{bottleneck_forward.5} parent=0 // loop_header
    %s10 = sphi 0, %s14
    %p11 = scmp.ge.s32.totalorder %s10, 4
    %s20 = sphi 0, %s22
    %s23 = sphi 0, %s20
    %s24 = sphi 0, %s23
    %s40 = sphi 0, %s24
    %s44 = sphi 0, %s44
    %s46 = sphi 0, %s44
    %s47 = sphi 0, %s46
    %s61 = sphi 0, %s47
    %s67 = sphi 0, %s69
    %s70 = sphi 0, %s67
    %s71 = sphi 0, %s70
    %s87 = sphi 0, %s71
    %s93 = sphi 0, %s95
    %s96 = sphi 0, %s93
    %s97 = sphi 0, %s96
    %s113 = sphi 0, %s97
  $region4: #{bottleneck_forward.5} parent=0 // loop_header_branch
    %13 = sbr.rel (%p11) target = $region8
  $region5: #{bottleneck_forward.5} parent=0 // loop_body
    %s15 = ssub.s32 %s10, 1
    %s16 = ssub.s32 %s10, 2
    %s17 = sadd.s32 %s10, 1
    %s18 = ssub.s32 %s10, %s17
    %p19 = scmp.eq.s32.totalorder %s18, 0
    %s21 = sadd.s32 %s20, 1
    %s22 = scalar_select %p19, %s20, %s21
    %p25 = pneg %p19
    %p26 = scmp.eq.s32.totalorder %s10, 1
    %p27 = por %p25, %p26
    %p28 = scmp.ne.s32.totalorder %s20, %s23
    %p29 = scmp.eq.s32.totalorder %s10, 0
    %p30 = por %p28, %p29
    %p31 = scmp.ne.s32.totalorder %s20, %s23
    %p32 = scmp.eq.s32.totalorder %s15, 1
    %p33 = por %p31, %p32
    %p34 = scmp.ne.s32.totalorder %s23, %s24
    %p35 = scmp.eq.s32.totalorder %s15, 0
    %p36 = por %p34, %p35
    %p37 = scmp.ne.s32.totalorder %s23, %s24
    %p38 = scmp.eq.s32.totalorder %s16, 1
    %p39 = por %p37, %p38
    %p41 = scmp.ne.s32.totalorder %s24, %s40
    %p42 = scmp.eq.s32.totalorder %s16, 0
    %p43 = por %p41, %p42
    %s45 = sadd.s32 %s44, 1
    %p48 = scmp.eq.s32.totalorder %s10, 1
    %p49 = scmp.ne.s32.totalorder %s44, %s46
    %p50 = scmp.eq.s32.totalorder %s10, 0
    %p51 = por %p49, %p50
    %p52 = scmp.ne.s32.totalorder %s44, %s46
    %p53 = scmp.eq.s32.totalorder %s15, 1
    %p54 = por %p52, %p53
    %p55 = scmp.ne.s32.totalorder %s46, %s47
    %p56 = scmp.eq.s32.totalorder %s15, 0
    %p57 = por %p55, %p56
    %p58 = scmp.ne.s32.totalorder %s46, %s47
    %p59 = scmp.eq.s32.totalorder %s16, 1
    %p60 = por %p58, %p59
    %p62 = scmp.ne.s32.totalorder %s47, %s61
    %p63 = scmp.eq.s32.totalorder %s16, 0
    %p64 = por %p62, %p63
    %s65 = ssub.s32 %s10, %s17
    %p66 = scmp.eq.s32.totalorder %s65, 0
    %s68 = sadd.s32 %s67, 1
    %s69 = scalar_select %p66, %s67, %s68
    %p72 = pneg %p66
    %p73 = scmp.eq.s32.totalorder %s10, 1
    %p74 = por %p72, %p73
    %p75 = scmp.ne.s32.totalorder %s67, %s70
    %p76 = scmp.eq.s32.totalorder %s10, 0
    %p77 = por %p75, %p76
    %p78 = scmp.ne.s32.totalorder %s67, %s70
    %p79 = scmp.eq.s32.totalorder %s15, 1
    %p80 = por %p78, %p79
    %p81 = scmp.ne.s32.totalorder %s70, %s71
    %p82 = scmp.eq.s32.totalorder %s15, 0
    %p83 = por %p81, %p82
    %p84 = scmp.ne.s32.totalorder %s70, %s71
    %p85 = scmp.eq.s32.totalorder %s16, 1
    %p86 = por %p84, %p85
    %p88 = scmp.ne.s32.totalorder %s71, %s87
    %p89 = scmp.eq.s32.totalorder %s16, 0
    %p90 = por %p88, %p89
    %s91 = ssub.s32 %s10, %s17
    %p92 = scmp.eq.s32.totalorder %s91, 0
    %s94 = sadd.s32 %s93, 1
    %s95 = scalar_select %p92, %s93, %s94
    %p98 = pneg %p92
    %p99 = scmp.eq.s32.totalorder %s10, 1
    %p100 = por %p98, %p99
    %p101 = scmp.ne.s32.totalorder %s93, %s96
    %p102 = scmp.eq.s32.totalorder %s10, 0
    %p103 = por %p101, %p102
    %p104 = scmp.ne.s32.totalorder %s93, %s96
    %p105 = scmp.eq.s32.totalorder %s15, 1
    %p106 = por %p104, %p105
    %p107 = scmp.ne.s32.totalorder %s96, %s97
    %p108 = scmp.eq.s32.totalorder %s15, 0
    %p109 = por %p107, %p108
    %p110 = scmp.ne.s32.totalorder %s96, %s97
    %p111 = scmp.eq.s32.totalorder %s16, 1
    %p112 = por %p110, %p111
    %p114 = scmp.ne.s32.totalorder %s97, %s113
    %p115 = scmp.eq.s32.totalorder %s16, 0
    %p116 = por %p114, %p115
    %p117 = scmp.le.s32.totalorder 1, %s10
    %p118 = scmp.lt.s32.totalorder %s10, 3
    %p119 = pnand %p117, %p118
    %p120 = pneg %p119
    // Predicated region
    $region9: #{bottleneck_forward.5} parent=5 // pred_check
      _
    $region10: #{bottleneck_forward.5} parent=5 // pred_check_branch
      %122 = sbr.rel (%p119) target = $region12
    $region11: #{bottleneck_forward.5} parent=5 // pred_region
      %s123 = ssub.s32 %s10, 1
      // Predicated region
      $region13: #{bottleneck_forward.5} parent=11 // pred_check
        %p124 = pneg %p57
      $region14: #{bottleneck_forward.5} parent=11 // pred_check_branch
        %126 = sbr.rel (%p124) target = $region16
      $region15: #{bottleneck_forward.5} parent=11 // pred_region
        _
      $region16: #{bottleneck_forward.5} parent=11 // pred_fallthru
        _
    $region12: #{bottleneck_forward.5} parent=5 // pred_fallthru
      _
    %p127 = scmp.lt.s32.totalorder %s10, 2
    // Predicated region
    $region17: #{bottleneck_forward.5} parent=5 // pred_check
      %p128 = pneg %p127
    $region18: #{bottleneck_forward.5} parent=5 // pred_check_branch
      %130 = sbr.rel (%p128) target = $region20
    $region19: #{bottleneck_forward.5} parent=5 // pred_region
      // Predicated region
      $region21: #{bottleneck_forward.5} parent=19 // pred_check
        %p131 = pneg %p30
      $region22: #{bottleneck_forward.5} parent=19 // pred_check_branch
        %133 = sbr.rel (%p131) target = $region24
      $region23: #{bottleneck_forward.5} parent=19 // pred_region
        %s134 = smul.u32 32, %s10
        %p135 = scmp.lt.s32.totalorder %s134, 63
        %s136 = scalar_select %p135, %s134, 63
        %s137 = smul.addr %s136, 4
        %s138 = scalar_lea.vmem %s0, %s137
        %s139 = smul.u32 32, %s10
      $region24: #{bottleneck_forward.5} parent=19 // pred_fallthru
        _
    $region20: #{bottleneck_forward.5} parent=5 // pred_fallthru
      _
    %p140 = scmp.le.s32.totalorder 1, %s10
    %p141 = scmp.lt.s32.totalorder %s10, 3
    %p142 = pnand %p140, %p141
    %p143 = pneg %p142
    // Predicated region
    $region25: #{bottleneck_forward.5} parent=5 // pred_check
      _
    $region26: #{bottleneck_forward.5} parent=5 // pred_check_branch
      %145 = sbr.rel (%p142) target = $region28
    $region27: #{bottleneck_forward.5} parent=5 // pred_region
      %s146 = ssub.s32 %s10, 1
      %s147 = smul.u32 32, %s15
      %p148 = scmp.lt.s32.totalorder %s147, 63
      %s149 = scalar_select %p148, %s147, 63
      %s150 = smul.addr %s149, 4
      %s151 = scalar_lea.vmem %s0, %s150
      %p152 = pneg %p36
      %p153 = pneg %p33
      %p154 = pneg %p57
      %p155 = pneg %p54
      %p156 = pneg %p83
      %p157 = pneg %p80
      %s158 = smul.u32 32, %s15
      %p159 = scmp.lt.s32.totalorder %s158, 63
      %s160 = scalar_select %p159, %s158, 63
      %s161 = smul.addr %s160, 4
      %s162 = scalar_lea.vmem %s2, %s161
      %p163 = pneg %p109
      %p164 = pneg %p106
      %p165 = scmp.lt.s32.totalorder %s15, 1
      %s166 = scalar_select %p165, %s15, 1
      %s167 = smul.addr %s166, 8
      %s168 = scalar_lea.vmem %s3, %s167
      %s169 = smul.u32 32, %s15
      %p170 = scmp.lt.s32.totalorder %s169, 63
      %s171 = scalar_select %p170, %s169, 63
      %s172 = smul.addr %s171, 4
      %s173 = scalar_lea.vmem %s0, %s172
      %s174 = smul.u32 32, %s15
      %s175 = smul.u32 32, %s15
      %p176 = scmp.lt.s32.totalorder %s175, 63
      %s177 = scalar_select %p176, %s175, 63
      %s178 = smul.addr %s177, 4
      %s179 = scalar_lea.vmem %s2, %s178
      %s180 = smul.u32 32, %s15
      %p181 = scmp.lt.s32.totalorder %s15, 1
      %s182 = scalar_select %p181, %s15, 1
      %s183 = smul.addr %s182, 8
      %s184 = scalar_lea.vmem %s3, %s183
      %v186 = vld [vmem:[%s173] sm:$0xf]
      %v187 = vld [vmem:[%s173 + $0x4] sm:$0xf]
      %v188 = vld [vmem:[%s173 + $0x8] sm:$0xf]
      %v189 = vld [vmem:[%s173 + $0xc] sm:$0xf]
      %v190 = vld [vmem:[%s173 + $0x10] sm:$0xf]
      %v191 = vld [vmem:[%s173 + $0x14] sm:$0xf]
      %v192 = vld [vmem:[%s173 + $0x18] sm:$0xf]
      %v193 = vld [vmem:[%s173 + $0x1c] sm:$0xf]
      %v194 = vld [vmem:[%s173 + $0x20] sm:$0xf]
      %v195 = vld [vmem:[%s173 + $0x24] sm:$0xf]
      %v196 = vld [vmem:[%s173 + $0x28] sm:$0xf]
      %v197 = vld [vmem:[%s173 + $0x2c] sm:$0xf]
      %v198 = vld [vmem:[%s173 + $0x30] sm:$0xf]
      %v199 = vld [vmem:[%s173 + $0x34] sm:$0xf]
      %v200 = vld [vmem:[%s173 + $0x38] sm:$0xf]
      %v201 = vld [vmem:[%s173 + $0x3c] sm:$0xf]
      %v202 = vld [vmem:[%s173 + $0x40] sm:$0xf]
      %v203 = vld [vmem:[%s173 + $0x44] sm:$0xf]
      %v204 = vld [vmem:[%s173 + $0x48] sm:$0xf]
      %v205 = vld [vmem:[%s173 + $0x4c] sm:$0xf]
      %v206 = vld [vmem:[%s173 + $0x50] sm:$0xf]
      %v207 = vld [vmem:[%s173 + $0x54] sm:$0xf]
      %v208 = vld [vmem:[%s173 + $0x58] sm:$0xf]
      %v209 = vld [vmem:[%s173 + $0x5c] sm:$0xf]
      %v210 = vld [vmem:[%s173 + $0x60] sm:$0xf]
      %v211 = vld [vmem:[%s173 + $0x64] sm:$0xf]
      %v212 = vld [vmem:[%s173 + $0x68] sm:$0xf]
      %v213 = vld [vmem:[%s173 + $0x6c] sm:$0xf]
      %v214 = vld [vmem:[%s173 + $0x70] sm:$0xf]
      %v215 = vld [vmem:[%s173 + $0x74] sm:$0xf]
      %v216 = vld [vmem:[%s173 + $0x78] sm:$0xf]
      %v217 = vld [vmem:[%s173 + $0x7c] sm:$0xf]
      %v218 = vld [vmem:[%s1] sm:$0xf]
      %v219 = vld [vmem:[%s1 + $0x4] sm:$0xf]
      %v220 = vld [vmem:[%s1 + $0x8] sm:$0xf]
      %v221 = vld [vmem:[%s1 + $0xc] sm:$0xf]
      %v222 = vld [vmem:[%s1 + $0x10] sm:$0xf]
      %v223 = vld [vmem:[%s1 + $0x14] sm:$0xf]
      %v224 = vld [vmem:[%s1 + $0x18] sm:$0xf]
      %v225 = vld [vmem:[%s1 + $0x1c] sm:$0xf]
      %v226 = vld [vmem:[%s1 + $0x20] sm:$0xf]
      %v227 = vld [vmem:[%s1 + $0x24] sm:$0xf]
      %v228 = vld [vmem:[%s1 + $0x28] sm:$0xf]
      %v229 = vld [vmem:[%s1 + $0x2c] sm:$0xf]
      %v230 = vld [vmem:[%s1 + $0x30] sm:$0xf]
      %v231 = vld [vmem:[%s1 + $0x34] sm:$0xf]
      %v232 = vld [vmem:[%s1 + $0x38] sm:$0xf]
      %v233 = vld [vmem:[%s1 + $0x3c] sm:$0xf]
      %v266 = vunpack.c.l.b16 %v186
      %v267 = vunpack.c.l.b16 %v187
      %v268 = vunpack.c.l.b16 %v188
      %v269 = vunpack.c.l.b16 %v189
      %v270 = vunpack.c.l.b16 %v190
      %v271 = vunpack.c.l.b16 %v191
      %v272 = vunpack.c.l.b16 %v192
      %v273 = vunpack.c.l.b16 %v193
      %v274 = vunpack.c.l.b16 %v194
      %v275 = vunpack.c.l.b16 %v195
      %v276 = vunpack.c.l.b16 %v196
      %v277 = vunpack.c.l.b16 %v197
      %v278 = vunpack.c.l.b16 %v198
      %v279 = vunpack.c.l.b16 %v199
      %v280 = vunpack.c.l.b16 %v200
      %v281 = vunpack.c.l.b16 %v201
      %v282 = vunpack.c.l.b16 %v202
      %v283 = vunpack.c.l.b16 %v203
      %v284 = vunpack.c.l.b16 %v204
      %v285 = vunpack.c.l.b16 %v205
      %v286 = vunpack.c.l.b16 %v206
      %v287 = vunpack.c.l.b16 %v207
      %v288 = vunpack.c.l.b16 %v208
      %v289 = vunpack.c.l.b16 %v209
      %v290 = vunpack.c.l.b16 %v210
      %v291 = vunpack.c.l.b16 %v211
      %v292 = vunpack.c.l.b16 %v212
      %v293 = vunpack.c.l.b16 %v213
      %v294 = vunpack.c.l.b16 %v214
      %v295 = vunpack.c.l.b16 %v215
      %v296 = vunpack.c.l.b16 %v216
      %v297 = vunpack.c.l.b16 %v217
      %v298 = vpack.c.b16 %v267, %v266
      %v299 = vpack.c.b16 %v269, %v268
      %v300 = vpack.c.b16 %v271, %v270
      %v301 = vpack.c.b16 %v273, %v272
      %v302 = vpack.c.b16 %v275, %v274
      %v303 = vpack.c.b16 %v277, %v276
      %v304 = vpack.c.b16 %v279, %v278
      %v305 = vpack.c.b16 %v281, %v280
      %v306 = vpack.c.b16 %v283, %v282
      %v307 = vpack.c.b16 %v285, %v284
      %v308 = vpack.c.b16 %v287, %v286
      %v309 = vpack.c.b16 %v289, %v288
      %v310 = vpack.c.b16 %v291, %v290
      %v311 = vpack.c.b16 %v293, %v292
      %v312 = vpack.c.b16 %v295, %v294
      %v313 = vpack.c.b16 %v297, %v296
      %v346 = vunpack.c.l.b16 %v218
      %v347 = vunpack.c.l.b16 %v219
      %v348 = vunpack.c.l.b16 %v220
      %v349 = vunpack.c.l.b16 %v221
      %v350 = vunpack.c.l.b16 %v222
      %v351 = vunpack.c.l.b16 %v223
      %v352 = vunpack.c.l.b16 %v224
      %v353 = vunpack.c.l.b16 %v225
      %v354 = vunpack.c.l.b16 %v226
      %v355 = vunpack.c.l.b16 %v227
      %v356 = vunpack.c.l.b16 %v228
      %v357 = vunpack.c.l.b16 %v229
      %v358 = vunpack.c.l.b16 %v230
      %v359 = vunpack.c.l.b16 %v231
      %v360 = vunpack.c.l.b16 %v232
      %v361 = vunpack.c.l.b16 %v233
      %v362 = vpack.c.b16 %v347, %v346
      %v363 = vpack.c.b16 %v349, %v348
      %v364 = vpack.c.b16 %v351, %v350
      %v365 = vpack.c.b16 %v353, %v352
      %v366 = vpack.c.b16 %v355, %v354
      %v367 = vpack.c.b16 %v357, %v356
      %v368 = vpack.c.b16 %v359, %v358
      %v369 = vpack.c.b16 %v361, %v360
      %378 = vmatprep.subr.bf16.mxu0 0
      %379 = vmatpush1.bf16.msra.mxu0 %v362
      %380 = vmatprep.subr.bf16.mxu0 0
      %381 = vmatpush1.bf16.msra.mxu0 %v363
      %382 = vmatprep.subr.bf16.mxu0 0
      %383 = vmatpush1.bf16.msra.mxu0 %v364
      %384 = vmatprep.subr.bf16.mxu0 0
      %385 = vmatpush1.bf16.msra.mxu0 %v365
      %386 = vmatprep.subr.bf16.mxu0 0
      %387 = vmatpush1.bf16.msra.mxu0 %v366
      %388 = vmatprep.subr.bf16.mxu0 0
      %389 = vmatpush1.bf16.msra.mxu0 %v367
      %390 = vmatprep.subr.bf16.mxu0 0
      %391 = vmatpush1.bf16.msra.mxu0 %v368
      %392 = vmatprep.subr.bf16.mxu0 0
      %393 = vmatpush1.bf16.msra.mxu0 %v369
      %394 = vmatprep.subr.bf16.mxu0 0
      %395 = vmatpush1.bf16.msra.mxu0 0
      %396 = vmatprep.subr.bf16.mxu0 0
      %397 = vmatpush1.bf16.msra.mxu0 0
      %398 = vmatprep.subr.bf16.mxu0 0
      %399 = vmatpush1.bf16.msra.mxu0 0
      %400 = vmatprep.subr.bf16.mxu0 0
      %401 = vmatpush1.bf16.msra.mxu0 0
      %402 = vmatprep.subr.bf16.mxu0 0
      %403 = vmatpush1.bf16.msra.mxu0 0
      %404 = vmatprep.subr.bf16.mxu0 0
      %405 = vmatpush1.bf16.msra.mxu0 0
      %406 = vmatprep.subr.bf16.mxu0 0
      %407 = vmatpush1.bf16.msra.mxu0 0
      %408 = vmatprep.subr.bf16.mxu0 0
      %409 = vmatpush1.bf16.msra.mxu0 0
      %410 = vmatprep.mubr.bf16.mxu0 0
      %411 = vmatmul.mubr.bf16.gmra.mrb[0].mxu0 %v298
      %v412 = vpop.f32.mrb[0].mxu0
      %v413 = vadd.f32 0.0, %v412
      %v414 = vpop.f32.mrb[0].mxu0
      %v415 = vpop.f32.mrb[0].mxu0
      %v416 = vadd.f32 0.0, %v415
      %v417 = vpop.f32.mrb[0].mxu0
      %418 = vmatprep.mubr.bf16.mxu0 0
      %419 = vmatmul.mubr.bf16.gmra.mrb[0].mxu0 %v299
      %v420 = vpop.f32.mrb[0].mxu0
      %v421 = vadd.f32 0.0, %v420
      %v422 = vpop.f32.mrb[0].mxu0
      %v423 = vpop.f32.mrb[0].mxu0
      %v424 = vadd.f32 0.0, %v423
      %v425 = vpop.f32.mrb[0].mxu0
      %426 = vmatprep.mubr.bf16.mxu0 0
      %427 = vmatmul.mubr.bf16.gmra.mrb[0].mxu0 %v300
      %v428 = vpop.f32.mrb[0].mxu0
      %v429 = vadd.f32 0.0, %v428
      %v430 = vpop.f32.mrb[0].mxu0
      %v431 = vpop.f32.mrb[0].mxu0
      %v432 = vadd.f32 0.0, %v431
      %v433 = vpop.f32.mrb[0].mxu0
      %434 = vmatprep.mubr.bf16.mxu0 0
      %435 = vmatmul.mubr.bf16.gmra.mrb[0].mxu0 %v301
      %v436 = vpop.f32.mrb[0].mxu0
      %v437 = vadd.f32 0.0, %v436
      %v438 = vpop.f32.mrb[0].mxu0
      %v439 = vpop.f32.mrb[0].mxu0
      %v440 = vadd.f32 0.0, %v439
      %v441 = vpop.f32.mrb[0].mxu0
      %442 = vmatprep.mubr.bf16.mxu0 0
      %443 = vmatmul.mubr.bf16.gmra.mrb[0].mxu0 %v302
      %v444 = vpop.f32.mrb[0].mxu0
      %v445 = vadd.f32 0.0, %v444
      %v446 = vpop.f32.mrb[0].mxu0
      %v447 = vpop.f32.mrb[0].mxu0
      %v448 = vadd.f32 0.0, %v447
      %v449 = vpop.f32.mrb[0].mxu0
      %450 = vmatprep.mubr.bf16.mxu0 0
      %451 = vmatmul.mubr.bf16.gmra.mrb[0].mxu0 %v303
      %v452 = vpop.f32.mrb[0].mxu0
      %v453 = vadd.f32 0.0, %v452
      %v454 = vpop.f32.mrb[0].mxu0
      %v455 = vpop.f32.mrb[0].mxu0
      %v456 = vadd.f32 0.0, %v455
      %v457 = vpop.f32.mrb[0].mxu0
      %458 = vmatprep.mubr.bf16.mxu0 0
      %459 = vmatmul.mubr.bf16.gmra.mrb[0].mxu0 %v304
      %v460 = vpop.f32.mrb[0].mxu0
      %v461 = vadd.f32 0.0, %v460
      %v462 = vpop.f32.mrb[0].mxu0
      %v463 = vpop.f32.mrb[0].mxu0
      %v464 = vadd.f32 0.0, %v463
      %v465 = vpop.f32.mrb[0].mxu0
      %466 = vmatprep.mubr.bf16.mxu0 0
      %467 = vmatmul.mubr.bf16.gmra.mrb[0].mxu0 %v305
      %v468 = vpop.f32.mrb[0].mxu0
      %v469 = vadd.f32 0.0, %v468
      %v470 = vpop.f32.mrb[0].mxu0
      %v471 = vpop.f32.mrb[0].mxu0
      %v472 = vadd.f32 0.0, %v471
      %v473 = vpop.f32.mrb[0].mxu0
      %474 = vmatprep.mubr.bf16.mxu0 0
      %475 = vmatmul.mubr.bf16.gmra.mrb[0].mxu0 %v306
      %v476 = vpop.f32.mrb[0].mxu0
      %v477 = vadd.f32 0.0, %v476
      %v478 = vpop.f32.mrb[0].mxu0
      %v479 = vpop.f32.mrb[0].mxu0
      %v480 = vadd.f32 0.0, %v479
      %v481 = vpop.f32.mrb[0].mxu0
      %482 = vmatprep.mubr.bf16.mxu0 0
      %483 = vmatmul.mubr.bf16.gmra.mrb[0].mxu0 %v307
      %v484 = vpop.f32.mrb[0].mxu0
      %v485 = vadd.f32 0.0, %v484
      %v486 = vpop.f32.mrb[0].mxu0
      %v487 = vpop.f32.mrb[0].mxu0
      %v488 = vadd.f32 0.0, %v487
      %v489 = vpop.f32.mrb[0].mxu0
      %490 = vmatprep.mubr.bf16.mxu0 0
      %491 = vmatmul.mubr.bf16.gmra.mrb[0].mxu0 %v308
      %v492 = vpop.f32.mrb[0].mxu0
      %v493 = vadd.f32 0.0, %v492
      %v494 = vpop.f32.mrb[0].mxu0
      %v495 = vpop.f32.mrb[0].mxu0
      %v496 = vadd.f32 0.0, %v495
      %v497 = vpop.f32.mrb[0].mxu0
      %498 = vmatprep.mubr.bf16.mxu0 0
      %499 = vmatmul.mubr.bf16.gmra.mrb[0].mxu0 %v309
      %v500 = vpop.f32.mrb[0].mxu0
      %v501 = vadd.f32 0.0, %v500
      %v502 = vpop.f32.mrb[0].mxu0
      %v503 = vpop.f32.mrb[0].mxu0
      %v504 = vadd.f32 0.0, %v503
      %v505 = vpop.f32.mrb[0].mxu0
      %506 = vmatprep.mubr.bf16.mxu0 0
      %507 = vmatmul.mubr.bf16.gmra.mrb[0].mxu0 %v310
      %v508 = vpop.f32.mrb[0].mxu0
      %v509 = vadd.f32 0.0, %v508
      %v510 = vpop.f32.mrb[0].mxu0
      %v511 = vpop.f32.mrb[0].mxu0
      %v512 = vadd.f32 0.0, %v511
      %v513 = vpop.f32.mrb[0].mxu0
      %514 = vmatprep.mubr.bf16.mxu0 0
      %515 = vmatmul.mubr.bf16.gmra.mrb[0].mxu0 %v311
      %v516 = vpop.f32.mrb[0].mxu0
      %v517 = vadd.f32 0.0, %v516
      %v518 = vpop.f32.mrb[0].mxu0
      %v519 = vpop.f32.mrb[0].mxu0
      %v520 = vadd.f32 0.0, %v519
      %v521 = vpop.f32.mrb[0].mxu0
      %522 = vmatprep.mubr.bf16.mxu0 0
      %523 = vmatmul.mubr.bf16.gmra.mrb[0].mxu0 %v312
      %v524 = vpop.f32.mrb[0].mxu0
      %v525 = vadd.f32 0.0, %v524
      %v526 = vpop.f32.mrb[0].mxu0
      %v527 = vpop.f32.mrb[0].mxu0
      %v528 = vadd.f32 0.0, %v527
      %v529 = vpop.f32.mrb[0].mxu0
      %530 = vmatprep.mubr.bf16.mxu0 0
      %531 = vmatmul.mubr.bf16.gmra.mrb[0].mxu0 %v313
      %v532 = vpop.f32.mrb[0].mxu0
      %v533 = vadd.f32 0.0, %v532
      %v534 = vpop.f32.mrb[0].mxu0
      %v535 = vpop.f32.mrb[0].mxu0
      %v536 = vadd.f32 0.0, %v535
      %v537 = vpop.f32.mrb[0].mxu0
      %538 = vdwg.mxu0
      %v539 = vpack.c.bf16 %v416, %v413
      %v540 = vpack.c.bf16 %v424, %v421
      %v541 = vpack.c.bf16 %v432, %v429
      %v542 = vpack.c.bf16 %v440, %v437
      %v543 = vpack.c.bf16 %v448, %v445
      %v544 = vpack.c.bf16 %v456, %v453
      %v545 = vpack.c.bf16 %v464, %v461
      %v546 = vpack.c.bf16 %v472, %v469
      %v547 = vpack.c.bf16 %v480, %v477
      %v548 = vpack.c.bf16 %v488, %v485
      %v549 = vpack.c.bf16 %v496, %v493
      %v550 = vpack.c.bf16 %v504, %v501
      %v551 = vpack.c.bf16 %v512, %v509
      %v552 = vpack.c.bf16 %v520, %v517
      %v553 = vpack.c.bf16 %v528, %v525
      %v554 = vpack.c.bf16 %v536, %v533
      %v571 = vunpack.c.l.b16 %v539
      %v572 = vunpack.c.h.b16 %v539
      %v573 = vunpack.c.l.b16 %v540
      %v574 = vunpack.c.h.b16 %v540
      %v575 = vunpack.c.l.b16 %v541
      %v576 = vunpack.c.h.b16 %v541
      %v577 = vunpack.c.l.b16 %v542
      %v578 = vunpack.c.h.b16 %v542
      %v579 = vunpack.c.l.b16 %v543
      %v580 = vunpack.c.h.b16 %v543
      %v581 = vunpack.c.l.b16 %v544
      %v582 = vunpack.c.h.b16 %v544
      %v583 = vunpack.c.l.b16 %v545
      %v584 = vunpack.c.h.b16 %v545
      %v585 = vunpack.c.l.b16 %v546
      %v586 = vunpack.c.h.b16 %v546
      %v587 = vunpack.c.l.b16 %v547
      %v588 = vunpack.c.h.b16 %v547
      %v589 = vunpack.c.l.b16 %v548
      %v590 = vunpack.c.h.b16 %v548
      %v591 = vunpack.c.l.b16 %v549
      %v592 = vunpack.c.h.b16 %v549
      %v593 = vunpack.c.l.b16 %v550
      %v594 = vunpack.c.h.b16 %v550
      %v595 = vunpack.c.l.b16 %v551
      %v596 = vunpack.c.h.b16 %v551
      %v597 = vunpack.c.l.b16 %v552
      %v598 = vunpack.c.h.b16 %v552
      %v599 = vunpack.c.l.b16 %v553
      %v600 = vunpack.c.h.b16 %v553
      %v601 = vunpack.c.l.b16 %v554
      %v602 = vunpack.c.h.b16 %v554
      %v603 = vpack.c.b16 %v571, %v571
      %v604 = vpack.c.b16 %v572, %v572
      %v605 = vpack.c.b16 %v573, %v573
      %v606 = vpack.c.b16 %v574, %v574
      %v607 = vpack.c.b16 %v575, %v575
      %v608 = vpack.c.b16 %v576, %v576
      %v609 = vpack.c.b16 %v577, %v577
      %v610 = vpack.c.b16 %v578, %v578
      %v611 = vpack.c.b16 %v579, %v579
      %v612 = vpack.c.b16 %v580, %v580
      %v613 = vpack.c.b16 %v581, %v581
      %v614 = vpack.c.b16 %v582, %v582
      %v615 = vpack.c.b16 %v583, %v583
      %v616 = vpack.c.b16 %v584, %v584
      %v617 = vpack.c.b16 %v585, %v585
      %v618 = vpack.c.b16 %v586, %v586
      %v619 = vpack.c.b16 %v587, %v587
      %v620 = vpack.c.b16 %v588, %v588
      %v621 = vpack.c.b16 %v589, %v589
      %v622 = vpack.c.b16 %v590, %v590
      %v623 = vpack.c.b16 %v591, %v591
      %v624 = vpack.c.b16 %v592, %v592
      %v625 = vpack.c.b16 %v593, %v593
      %v626 = vpack.c.b16 %v594, %v594
      %v627 = vpack.c.b16 %v595, %v595
      %v628 = vpack.c.b16 %v596, %v596
      %v629 = vpack.c.b16 %v597, %v597
      %v630 = vpack.c.b16 %v598, %v598
      %v631 = vpack.c.b16 %v599, %v599
      %v632 = vpack.c.b16 %v600, %v600
      %v633 = vpack.c.b16 %v601, %v601
      %v634 = vpack.c.b16 %v602, %v602
      %667 = vst [vmem:[%s179] sm:$0xf] %v603
      %668 = vst [vmem:[%s179 + $0x4] sm:$0xf] %v604
      %669 = vst [vmem:[%s179 + $0x8] sm:$0xf] %v605
      %670 = vst [vmem:[%s179 + $0xc] sm:$0xf] %v606
      %671 = vst [vmem:[%s179 + $0x10] sm:$0xf] %v607
      %672 = vst [vmem:[%s179 + $0x14] sm:$0xf] %v608
      %673 = vst [vmem:[%s179 + $0x18] sm:$0xf] %v609
      %674 = vst [vmem:[%s179 + $0x1c] sm:$0xf] %v610
      %675 = vst [vmem:[%s179 + $0x20] sm:$0xf] %v611
      %676 = vst [vmem:[%s179 + $0x24] sm:$0xf] %v612
      %677 = vst [vmem:[%s179 + $0x28] sm:$0xf] %v613
      %678 = vst [vmem:[%s179 + $0x2c] sm:$0xf] %v614
      %679 = vst [vmem:[%s179 + $0x30] sm:$0xf] %v615
      %680 = vst [vmem:[%s179 + $0x34] sm:$0xf] %v616
      %681 = vst [vmem:[%s179 + $0x38] sm:$0xf] %v617
      %682 = vst [vmem:[%s179 + $0x3c] sm:$0xf] %v618
      %683 = vst [vmem:[%s179 + $0x40] sm:$0xf] %v619
      %684 = vst [vmem:[%s179 + $0x44] sm:$0xf] %v620
      %685 = vst [vmem:[%s179 + $0x48] sm:$0xf] %v621
      %686 = vst [vmem:[%s179 + $0x4c] sm:$0xf] %v622
      %687 = vst [vmem:[%s179 + $0x50] sm:$0xf] %v623
      %688 = vst [vmem:[%s179 + $0x54] sm:$0xf] %v624
      %689 = vst [vmem:[%s179 + $0x58] sm:$0xf] %v625
      %690 = vst [vmem:[%s179 + $0x5c] sm:$0xf] %v626
      %691 = vst [vmem:[%s179 + $0x60] sm:$0xf] %v627
      %692 = vst [vmem:[%s179 + $0x64] sm:$0xf] %v628
      %693 = vst [vmem:[%s179 + $0x68] sm:$0xf] %v629
      %694 = vst [vmem:[%s179 + $0x6c] sm:$0xf] %v630
      %695 = vst [vmem:[%s179 + $0x70] sm:$0xf] %v631
      %696 = vst [vmem:[%s179 + $0x74] sm:$0xf] %v632
      %697 = vst [vmem:[%s179 + $0x78] sm:$0xf] %v633
      %698 = vst [vmem:[%s179 + $0x7c] sm:$0xf] %v634
      %v699 = vadd.f32 %v413, %v416
      %v700 = vadd.f32 %v699, %v421
      %v701 = vadd.f32 %v700, %v424
      %v702 = vadd.f32 %v701, %v429
      %v703 = vadd.f32 %v702, %v432
      %v704 = vadd.f32 %v703, %v437
      %v705 = vadd.f32 %v704, %v440
      %v706 = vadd.f32 %v705, %v445
      %v707 = vadd.f32 %v706, %v448
      %v708 = vadd.f32 %v707, %v453
      %v709 = vadd.f32 %v708, %v456
      %v710 = vadd.f32 %v709, %v461
      %v711 = vadd.f32 %v710, %v464
      %v712 = vadd.f32 %v711, %v469
      %v713 = vadd.f32 %v712, %v472
      %v714 = vadd.f32 %v713, %v477
      %v715 = vadd.f32 %v714, %v480
      %v716 = vadd.f32 %v715, %v485
      %v717 = vadd.f32 %v716, %v488
      %v718 = vadd.f32 %v717, %v493
      %v719 = vadd.f32 %v718, %v496
      %v720 = vadd.f32 %v719, %v501
      %v721 = vadd.f32 %v720, %v504
      %v722 = vadd.f32 %v721, %v509
      %v723 = vadd.f32 %v722, %v512
      %v724 = vadd.f32 %v723, %v517
      %v725 = vadd.f32 %v724, %v520
      %v726 = vadd.f32 %v725, %v525
      %v727 = vadd.f32 %v726, %v528
      %v728 = vadd.f32 %v727, %v533
      %v729 = vadd.f32 %v728, %v536
      %v730 = vrot.slane %v729, 4
      %v731 = vadd.f32 %v729, %v730
      %v732 = vrot.slane %v731, 2
      %v733 = vadd.f32 %v731, %v732
      %v734 = vrot.slane %v733, 1
      %v735 = vadd.f32 %v733, %v734
      %v736 = vmul.f32 %v413, %v413
      %v737 = vmul.f32 %v416, %v416
      %v738 = vmul.f32 %v421, %v421
      %v739 = vmul.f32 %v424, %v424
      %v740 = vmul.f32 %v429, %v429
      %v741 = vmul.f32 %v432, %v432
      %v742 = vmul.f32 %v437, %v437
      %v743 = vmul.f32 %v440, %v440
      %v744 = vmul.f32 %v445, %v445
      %v745 = vmul.f32 %v448, %v448
      %v746 = vmul.f32 %v453, %v453
      %v747 = vmul.f32 %v456, %v456
      %v748 = vmul.f32 %v461, %v461
      %v749 = vmul.f32 %v464, %v464
      %v750 = vmul.f32 %v469, %v469
      %v751 = vmul.f32 %v472, %v472
      %v752 = vmul.f32 %v477, %v477
      %v753 = vmul.f32 %v480, %v480
      %v754 = vmul.f32 %v485, %v485
      %v755 = vmul.f32 %v488, %v488
      %v756 = vmul.f32 %v493, %v493
      %v757 = vmul.f32 %v496, %v496
      %v758 = vmul.f32 %v501, %v501
      %v759 = vmul.f32 %v504, %v504
      %v760 = vmul.f32 %v509, %v509
      %v761 = vmul.f32 %v512, %v512
      %v762 = vmul.f32 %v517, %v517
      %v763 = vmul.f32 %v520, %v520
      %v764 = vmul.f32 %v525, %v525
      %v765 = vmul.f32 %v528, %v528
      %v766 = vmul.f32 %v533, %v533
      %v767 = vmul.f32 %v536, %v536
      %v768 = vadd.f32 %v736, %v737
      %v769 = vadd.f32 %v768, %v738
      %v770 = vadd.f32 %v769, %v739
      %v771 = vadd.f32 %v770, %v740
      %v772 = vadd.f32 %v771, %v741
      %v773 = vadd.f32 %v772, %v742
      %v774 = vadd.f32 %v773, %v743
      %v775 = vadd.f32 %v774, %v744
      %v776 = vadd.f32 %v775, %v745
      %v777 = vadd.f32 %v776, %v746
      %v778 = vadd.f32 %v777, %v747
      %v779 = vadd.f32 %v778, %v748
      %v780 = vadd.f32 %v779, %v749
      %v781 = vadd.f32 %v780, %v750
      %v782 = vadd.f32 %v781, %v751
      %v783 = vadd.f32 %v782, %v752
      %v784 = vadd.f32 %v783, %v753
      %v785 = vadd.f32 %v784, %v754
      %v786 = vadd.f32 %v785, %v755
      %v787 = vadd.f32 %v786, %v756
      %v788 = vadd.f32 %v787, %v757
      %v789 = vadd.f32 %v788, %v758
      %v790 = vadd.f32 %v789, %v759
      %v791 = vadd.f32 %v790, %v760
      %v792 = vadd.f32 %v791, %v761
      %v793 = vadd.f32 %v792, %v762
      %v794 = vadd.f32 %v793, %v763
      %v795 = vadd.f32 %v794, %v764
      %v796 = vadd.f32 %v795, %v765
      %v797 = vadd.f32 %v796, %v766
      %v798 = vadd.f32 %v797, %v767
      %v799 = vrot.slane %v798, 4
      %v800 = vadd.f32 %v798, %v799
      %v801 = vrot.slane %v800, 2
      %v802 = vadd.f32 %v800, %v801
      %v803 = vrot.slane %v802, 1
      %v804 = vadd.f32 %v802, %v803
      %v805 = vlaneseq
      %v806 = vshrl.u32 %v805, 7
      %vm807 = vcmp.eq.s32.totalorder %v806, 0
      %v808 = vsel %vm807, %v735, 0.0
      %vm809 = vcmp.eq.s32.totalorder %v806, 1
      %v810 = vsel %vm809, %v804, 0.0
      %v811 = vadd.f32 %v808, %v810
      %812 = vst [vmem:[%s184] sm:$0xff] %v811
      %s813 = smul.u32 32, %s15
      %p814 = scmp.lt.s32.totalorder %s813, 63
      %s815 = scalar_select %p814, %s813, 63
      %s816 = smul.addr %s815, 4
      %s817 = scalar_lea.vmem %s2, %s816
      %p818 = scmp.lt.s32.totalorder %s15, 1
      %s819 = scalar_select %p818, %s15, 1
      %s820 = smul.addr %s819, 8
      %s821 = scalar_lea.vmem %s3, %s820
      // Predicated region
      $region29: #{bottleneck_forward.5} parent=27 // pred_check
        %p822 = pneg %p80
      $region30: #{bottleneck_forward.5} parent=27 // pred_check_branch
        %824 = sbr.rel (%p822) target = $region32
      $region31: #{bottleneck_forward.5} parent=27 // pred_region
        %s825 = smul.u32 32, %s15
      $region32: #{bottleneck_forward.5} parent=27 // pred_fallthru
        _
      // Predicated region
      $region33: #{bottleneck_forward.5} parent=27 // pred_check
        %p826 = pneg %p106
      $region34: #{bottleneck_forward.5} parent=27 // pred_check_branch
        %828 = sbr.rel (%p826) target = $region36
      $region35: #{bottleneck_forward.5} parent=27 // pred_region
        _
      $region36: #{bottleneck_forward.5} parent=27 // pred_fallthru
        _
    $region28: #{bottleneck_forward.5} parent=5 // pred_fallthru
      _
    %p829 = scmp.le.s32.totalorder 2, %s10
    // Predicated region
    $region37: #{bottleneck_forward.5} parent=5 // pred_check
      %p830 = pneg %p829
    $region38: #{bottleneck_forward.5} parent=5 // pred_check_branch
      %832 = sbr.rel (%p830) target = $region40
    $region39: #{bottleneck_forward.5} parent=5 // pred_region
      %s833 = ssub.s32 %s10, 2
      // Predicated region
      $region41: #{bottleneck_forward.5} parent=39 // pred_check
        %p834 = pneg %p86
      $region42: #{bottleneck_forward.5} parent=39 // pred_check_branch
        %836 = sbr.rel (%p834) target = $region44
      $region43: #{bottleneck_forward.5} parent=39 // pred_region
        %s837 = smul.u32 32, %s16
        %p838 = scmp.lt.s32.totalorder %s837, 63
        %s839 = scalar_select %p838, %s837, 63
        %s840 = smul.addr %s839, 4
        %s841 = scalar_lea.vmem %s2, %s840
      $region44: #{bottleneck_forward.5} parent=39 // pred_fallthru
        _
      // Predicated region
      $region45: #{bottleneck_forward.5} parent=39 // pred_check
        %p842 = pneg %p112
      $region46: #{bottleneck_forward.5} parent=39 // pred_check_branch
        %844 = sbr.rel (%p842) target = $region48
      $region47: #{bottleneck_forward.5} parent=39 // pred_region
        %p845 = scmp.lt.s32.totalorder %s16, 1
        %s846 = scalar_select %p845, %s16, 1
        %s847 = smul.addr %s846, 8
        %s848 = scalar_lea.vmem %s3, %s847
      $region48: #{bottleneck_forward.5} parent=39 // pred_fallthru
        _
    $region40: #{bottleneck_forward.5} parent=5 // pred_fallthru
      _
  $region6: #{bottleneck_forward.5} parent=0 // loop_footer
    %s14 = sadd.s32 1, %s10
  $region7: #{bottleneck_forward.5} parent=0 // loop_footer_branch
    %9 = sbr.rel target = $region3
  $region8: #{bottleneck_forward.5} parent=0 // loop_exit
    _

// kernel: bottleneck_forward.6
$region0: #{bottleneck_forward.6}
  #allocation0 [shape = 'u32[]', space=smem, size = 0x4, offset = 0x4, fixed_abs, tag = 'smem constant byte address 0x4 - core index']
  #allocation1 [shape = 'u32[144,128]{1,0:T(1,128)}', space=vmem, size = 0x12000, scoped, tag = 'internal scratch']
  %s0 = inlined_call_operand.vmem [shape: bf16[512,128], index: 0, kind: input, shape index: {}]
  %s1 = inlined_call_operand.vmem [shape: f32[8,128], index: 1, kind: input, shape index: {}]
  %s2 = inlined_call_operand.vmem [shape: bf16[512,128], index: 2, kind: output, shape index: {}]
  %s3 = sld [smem:[#allocation0]]
  $region41: #{bottleneck_forward.6} parent=0
    _
  %s5 = ssub.s32 1, %s3
  %s6 = scalar_select 0, %s5, %s3
  loop: start=0, step=1, limit=4
  $region2: #{bottleneck_forward.6} parent=0 // loop_pre_header
    _
  $region3: #{bottleneck_forward.6} parent=0 // loop_header
    %s8 = sphi 0, %s12
    %p9 = scmp.ge.s32.totalorder %s8, 4
    %s18 = sphi 0, %s20
    %s21 = sphi 0, %s18
    %s22 = sphi 0, %s21
    %s38 = sphi 0, %s22
    %s42 = sphi 0, %s42
    %s44 = sphi 0, %s42
    %s45 = sphi 0, %s44
    %s59 = sphi 0, %s45
    %s65 = sphi 0, %s67
    %s68 = sphi 0, %s65
    %s69 = sphi 0, %s68
    %s85 = sphi 0, %s69
  $region4: #{bottleneck_forward.6} parent=0 // loop_header_branch
    %11 = sbr.rel (%p9) target = $region8
  $region5: #{bottleneck_forward.6} parent=0 // loop_body
    %s13 = ssub.s32 %s8, 1
    %s14 = ssub.s32 %s8, 2
    %s15 = sadd.s32 %s8, 1
    %s16 = ssub.s32 %s8, %s15
    %p17 = scmp.eq.s32.totalorder %s16, 0
    %s19 = sadd.s32 %s18, 1
    %s20 = scalar_select %p17, %s18, %s19
    %p23 = pneg %p17
    %p24 = scmp.eq.s32.totalorder %s8, 1
    %p25 = por %p23, %p24
    %p26 = scmp.ne.s32.totalorder %s18, %s21
    %p27 = scmp.eq.s32.totalorder %s8, 0
    %p28 = por %p26, %p27
    %p29 = scmp.ne.s32.totalorder %s18, %s21
    %p30 = scmp.eq.s32.totalorder %s13, 1
    %p31 = por %p29, %p30
    %p32 = scmp.ne.s32.totalorder %s21, %s22
    %p33 = scmp.eq.s32.totalorder %s13, 0
    %p34 = por %p32, %p33
    %p35 = scmp.ne.s32.totalorder %s21, %s22
    %p36 = scmp.eq.s32.totalorder %s14, 1
    %p37 = por %p35, %p36
    %p39 = scmp.ne.s32.totalorder %s22, %s38
    %p40 = scmp.eq.s32.totalorder %s14, 0
    %p41 = por %p39, %p40
    %s43 = sadd.s32 %s42, 1
    %p46 = scmp.eq.s32.totalorder %s8, 1
    %p47 = scmp.ne.s32.totalorder %s42, %s44
    %p48 = scmp.eq.s32.totalorder %s8, 0
    %p49 = por %p47, %p48
    %p50 = scmp.ne.s32.totalorder %s42, %s44
    %p51 = scmp.eq.s32.totalorder %s13, 1
    %p52 = por %p50, %p51
    %p53 = scmp.ne.s32.totalorder %s44, %s45
    %p54 = scmp.eq.s32.totalorder %s13, 0
    %p55 = por %p53, %p54
    %p56 = scmp.ne.s32.totalorder %s44, %s45
    %p57 = scmp.eq.s32.totalorder %s14, 1
    %p58 = por %p56, %p57
    %p60 = scmp.ne.s32.totalorder %s45, %s59
    %p61 = scmp.eq.s32.totalorder %s14, 0
    %p62 = por %p60, %p61
    %s63 = ssub.s32 %s8, %s15
    %p64 = scmp.eq.s32.totalorder %s63, 0
    %s66 = sadd.s32 %s65, 1
    %s67 = scalar_select %p64, %s65, %s66
    %p70 = pneg %p64
    %p71 = scmp.eq.s32.totalorder %s8, 1
    %p72 = por %p70, %p71
    %p73 = scmp.ne.s32.totalorder %s65, %s68
    %p74 = scmp.eq.s32.totalorder %s8, 0
    %p75 = por %p73, %p74
    %p76 = scmp.ne.s32.totalorder %s65, %s68
    %p77 = scmp.eq.s32.totalorder %s13, 1
    %p78 = por %p76, %p77
    %p79 = scmp.ne.s32.totalorder %s68, %s69
    %p80 = scmp.eq.s32.totalorder %s13, 0
    %p81 = por %p79, %p80
    %p82 = scmp.ne.s32.totalorder %s68, %s69
    %p83 = scmp.eq.s32.totalorder %s14, 1
    %p84 = por %p82, %p83
    %p86 = scmp.ne.s32.totalorder %s69, %s85
    %p87 = scmp.eq.s32.totalorder %s14, 0
    %p88 = por %p86, %p87
    %p89 = scmp.le.s32.totalorder 1, %s8
    %p90 = scmp.lt.s32.totalorder %s8, 3
    %p91 = pnand %p89, %p90
    %p92 = pneg %p91
    // Predicated region
    $region9: #{bottleneck_forward.6} parent=5 // pred_check
      _
    $region10: #{bottleneck_forward.6} parent=5 // pred_check_branch
      %94 = sbr.rel (%p91) target = $region12
    $region11: #{bottleneck_forward.6} parent=5 // pred_region
      %s95 = ssub.s32 %s8, 1
      // Predicated region
      $region13: #{bottleneck_forward.6} parent=11 // pred_check
        %p96 = pneg %p55
      $region14: #{bottleneck_forward.6} parent=11 // pred_check_branch
        %98 = sbr.rel (%p96) target = $region16
      $region15: #{bottleneck_forward.6} parent=11 // pred_region
        _
      $region16: #{bottleneck_forward.6} parent=11 // pred_fallthru
        _
    $region12: #{bottleneck_forward.6} parent=5 // pred_fallthru
      _
    %p99 = scmp.lt.s32.totalorder %s8, 2
    // Predicated region
    $region17: #{bottleneck_forward.6} parent=5 // pred_check
      %p100 = pneg %p99
    $region18: #{bottleneck_forward.6} parent=5 // pred_check_branch
      %102 = sbr.rel (%p100) target = $region20
    $region19: #{bottleneck_forward.6} parent=5 // pred_region
      // Predicated region
      $region21: #{bottleneck_forward.6} parent=19 // pred_check
        %p103 = pneg %p28
      $region22: #{bottleneck_forward.6} parent=19 // pred_check_branch
        %105 = sbr.rel (%p103) target = $region24
      $region23: #{bottleneck_forward.6} parent=19 // pred_region
        %s106 = smul.u32 32, %s8
        %p107 = scmp.lt.s32.totalorder %s106, 63
        %s108 = scalar_select %p107, %s106, 63
        %s109 = smul.addr %s108, 4
        %s110 = scalar_lea.vmem %s0, %s109
        %s111 = smul.u32 32, %s8
      $region24: #{bottleneck_forward.6} parent=19 // pred_fallthru
        _
    $region20: #{bottleneck_forward.6} parent=5 // pred_fallthru
      _
    %p112 = scmp.le.s32.totalorder 1, %s8
    %p113 = scmp.lt.s32.totalorder %s8, 3
    %p114 = pnand %p112, %p113
    %p115 = pneg %p114
    // Predicated region
    $region25: #{bottleneck_forward.6} parent=5 // pred_check
      _
    $region26: #{bottleneck_forward.6} parent=5 // pred_check_branch
      %117 = sbr.rel (%p114) target = $region28
    $region27: #{bottleneck_forward.6} parent=5 // pred_region
      %s118 = ssub.s32 %s8, 1
      %s119 = smul.u32 32, %s13
      %p120 = scmp.lt.s32.totalorder %s119, 63
      %s121 = scalar_select %p120, %s119, 63
      %s122 = smul.addr %s121, 4
      %s123 = scalar_lea.vmem %s0, %s122
      %p124 = pneg %p34
      %p125 = pneg %p31
      %p126 = pneg %p55
      %p127 = pneg %p52
      %p128 = pneg %p81
      %p129 = pneg %p78
      %s130 = smul.u32 32, %s13
      %p131 = scmp.lt.s32.totalorder %s130, 63
      %s132 = scalar_select %p131, %s130, 63
      %s133 = smul.addr %s132, 4
      %s134 = scalar_lea.vmem %s2, %s133
      %s135 = smul.u32 32, %s13
      %p136 = scmp.lt.s32.totalorder %s135, 63
      %s137 = scalar_select %p136, %s135, 63
      %s138 = smul.addr %s137, 4
      %s139 = scalar_lea.vmem %s0, %s138
      %s140 = smul.u32 32, %s13
      %s141 = smul.u32 32, %s13
      %p142 = scmp.lt.s32.totalorder %s141, 63
      %s143 = scalar_select %p142, %s141, 63
      %s144 = smul.addr %s143, 4
      %s145 = scalar_lea.vmem %s2, %s144
      %s146 = smul.u32 32, %s13
      %v147 = vld [vmem:[%s1] sm:$0xff]
      %v148 = vld [vmem:[%s139] sm:$0xf]
      %v149 = vld [vmem:[%s139 + $0x4] sm:$0xf]
      %v150 = vld [vmem:[%s139 + $0x8] sm:$0xf]
      %v151 = vld [vmem:[%s139 + $0xc] sm:$0xf]
      %v152 = vld [vmem:[%s139 + $0x10] sm:$0xf]
      %v153 = vld [vmem:[%s139 + $0x14] sm:$0xf]
      %v154 = vld [vmem:[%s139 + $0x18] sm:$0xf]
      %v155 = vld [vmem:[%s139 + $0x1c] sm:$0xf]
      %v156 = vld [vmem:[%s139 + $0x20] sm:$0xf]
      %v157 = vld [vmem:[%s139 + $0x24] sm:$0xf]
      %v158 = vld [vmem:[%s139 + $0x28] sm:$0xf]
      %v159 = vld [vmem:[%s139 + $0x2c] sm:$0xf]
      %v160 = vld [vmem:[%s139 + $0x30] sm:$0xf]
      %v161 = vld [vmem:[%s139 + $0x34] sm:$0xf]
      %v162 = vld [vmem:[%s139 + $0x38] sm:$0xf]
      %v163 = vld [vmem:[%s139 + $0x3c] sm:$0xf]
      %v164 = vld [vmem:[%s139 + $0x40] sm:$0xf]
      %v165 = vld [vmem:[%s139 + $0x44] sm:$0xf]
      %v166 = vld [vmem:[%s139 + $0x48] sm:$0xf]
      %v167 = vld [vmem:[%s139 + $0x4c] sm:$0xf]
      %v168 = vld [vmem:[%s139 + $0x50] sm:$0xf]
      %v169 = vld [vmem:[%s139 + $0x54] sm:$0xf]
      %v170 = vld [vmem:[%s139 + $0x58] sm:$0xf]
      %v171 = vld [vmem:[%s139 + $0x5c] sm:$0xf]
      %v172 = vld [vmem:[%s139 + $0x60] sm:$0xf]
      %v173 = vld [vmem:[%s139 + $0x64] sm:$0xf]
      %v174 = vld [vmem:[%s139 + $0x68] sm:$0xf]
      %v175 = vld [vmem:[%s139 + $0x6c] sm:$0xf]
      %v176 = vld [vmem:[%s139 + $0x70] sm:$0xf]
      %v177 = vld [vmem:[%s139 + $0x74] sm:$0xf]
      %v178 = vld [vmem:[%s139 + $0x78] sm:$0xf]
      %v179 = vld [vmem:[%s139 + $0x7c] sm:$0xf]
      %v180 = vunpack.c.l.bf16 %v148
      %v181 = vunpack.c.l.bf16 %v149
      %v182 = vunpack.c.l.bf16 %v150
      %v183 = vunpack.c.l.bf16 %v151
      %v184 = vunpack.c.l.bf16 %v152
      %v185 = vunpack.c.l.bf16 %v153
      %v186 = vunpack.c.l.bf16 %v154
      %v187 = vunpack.c.l.bf16 %v155
      %v188 = vunpack.c.l.bf16 %v156
      %v189 = vunpack.c.l.bf16 %v157
      %v190 = vunpack.c.l.bf16 %v158
      %v191 = vunpack.c.l.bf16 %v159
      %v192 = vunpack.c.l.bf16 %v160
      %v193 = vunpack.c.l.bf16 %v161
      %v194 = vunpack.c.l.bf16 %v162
      %v195 = vunpack.c.l.bf16 %v163
      %v196 = vunpack.c.l.bf16 %v164
      %v197 = vunpack.c.l.bf16 %v165
      %v198 = vunpack.c.l.bf16 %v166
      %v199 = vunpack.c.l.bf16 %v167
      %v200 = vunpack.c.l.bf16 %v168
      %v201 = vunpack.c.l.bf16 %v169
      %v202 = vunpack.c.l.bf16 %v170
      %v203 = vunpack.c.l.bf16 %v171
      %v204 = vunpack.c.l.bf16 %v172
      %v205 = vunpack.c.l.bf16 %v173
      %v206 = vunpack.c.l.bf16 %v174
      %v207 = vunpack.c.l.bf16 %v175
      %v208 = vunpack.c.l.bf16 %v176
      %v209 = vunpack.c.l.bf16 %v177
      %v210 = vunpack.c.l.bf16 %v178
      %v211 = vunpack.c.l.bf16 %v179
      %v212 = vlaneseq
      %v213 = vshrl.u32 %v212, 7
      %v214 = vsub.s32 0, %v213
      %v215 = vrot.slane %v147, %v214
      %v216 = vmul.f32 %v180, %v215
      %v217 = vmul.f32 %v181, %v215
      %v218 = vmul.f32 %v182, %v215
      %v219 = vmul.f32 %v183, %v215
      %v220 = vmul.f32 %v184, %v215
      %v221 = vmul.f32 %v185, %v215
      %v222 = vmul.f32 %v186, %v215
      %v223 = vmul.f32 %v187, %v215
      %v224 = vmul.f32 %v188, %v215
      %v225 = vmul.f32 %v189, %v215
      %v226 = vmul.f32 %v190, %v215
      %v227 = vmul.f32 %v191, %v215
      %v228 = vmul.f32 %v192, %v215
      %v229 = vmul.f32 %v193, %v215
      %v230 = vmul.f32 %v194, %v215
      %v231 = vmul.f32 %v195, %v215
      %v232 = vmul.f32 %v196, %v215
      %v233 = vmul.f32 %v197, %v215
      %v234 = vmul.f32 %v198, %v215
      %v235 = vmul.f32 %v199, %v215
      %v236 = vmul.f32 %v200, %v215
      %v237 = vmul.f32 %v201, %v215
      %v238 = vmul.f32 %v202, %v215
      %v239 = vmul.f32 %v203, %v215
      %v240 = vmul.f32 %v204, %v215
      %v241 = vmul.f32 %v205, %v215
      %v242 = vmul.f32 %v206, %v215
      %v243 = vmul.f32 %v207, %v215
      %v244 = vmul.f32 %v208, %v215
      %v245 = vmul.f32 %v209, %v215
      %v246 = vmul.f32 %v210, %v215
      %v247 = vmul.f32 %v211, %v215
      %v248 = vlaneseq
      %v249 = vshrl.u32 %v248, 7
      %v250 = vsub.s32 1, %v249
      %v251 = vrot.slane %v147, %v250
      %v252 = vadd.f32 %v216, %v251
      %v253 = vadd.f32 %v217, %v251
      %v254 = vadd.f32 %v218, %v251
      %v255 = vadd.f32 %v219, %v251
      %v256 = vadd.f32 %v220, %v251
      %v257 = vadd.f32 %v221, %v251
      %v258 = vadd.f32 %v222, %v251
      %v259 = vadd.f32 %v223, %v251
      %v260 = vadd.f32 %v224, %v251
      %v261 = vadd.f32 %v225, %v251
      %v262 = vadd.f32 %v226, %v251
      %v263 = vadd.f32 %v227, %v251
      %v264 = vadd.f32 %v228, %v251
      %v265 = vadd.f32 %v229, %v251
      %v266 = vadd.f32 %v230, %v251
      %v267 = vadd.f32 %v231, %v251
      %v268 = vadd.f32 %v232, %v251
      %v269 = vadd.f32 %v233, %v251
      %v270 = vadd.f32 %v234, %v251
      %v271 = vadd.f32 %v235, %v251
      %v272 = vadd.f32 %v236, %v251
      %v273 = vadd.f32 %v237, %v251
      %v274 = vadd.f32 %v238, %v251
      %v275 = vadd.f32 %v239, %v251
      %v276 = vadd.f32 %v240, %v251
      %v277 = vadd.f32 %v241, %v251
      %v278 = vadd.f32 %v242, %v251
      %v279 = vadd.f32 %v243, %v251
      %v280 = vadd.f32 %v244, %v251
      %v281 = vadd.f32 %v245, %v251
      %v282 = vadd.f32 %v246, %v251
      %v283 = vadd.f32 %v247, %v251
      %v284 = vmax.f32 %v252, 0.0
      %v285 = vmax.f32 %v253, 0.0
      %v286 = vmax.f32 %v254, 0.0
      %v287 = vmax.f32 %v255, 0.0
      %v288 = vmax.f32 %v256, 0.0
      %v289 = vmax.f32 %v257, 0.0
      %v290 = vmax.f32 %v258, 0.0
      %v291 = vmax.f32 %v259, 0.0
      %v292 = vmax.f32 %v260, 0.0
      %v293 = vmax.f32 %v261, 0.0
      %v294 = vmax.f32 %v262, 0.0
      %v295 = vmax.f32 %v263, 0.0
      %v296 = vmax.f32 %v264, 0.0
      %v297 = vmax.f32 %v265, 0.0
      %v298 = vmax.f32 %v266, 0.0
      %v299 = vmax.f32 %v267, 0.0
      %v300 = vmax.f32 %v268, 0.0
      %v301 = vmax.f32 %v269, 0.0
      %v302 = vmax.f32 %v270, 0.0
      %v303 = vmax.f32 %v271, 0.0
      %v304 = vmax.f32 %v272, 0.0
      %v305 = vmax.f32 %v273, 0.0
      %v306 = vmax.f32 %v274, 0.0
      %v307 = vmax.f32 %v275, 0.0
      %v308 = vmax.f32 %v276, 0.0
      %v309 = vmax.f32 %v277, 0.0
      %v310 = vmax.f32 %v278, 0.0
      %v311 = vmax.f32 %v279, 0.0
      %v312 = vmax.f32 %v280, 0.0
      %v313 = vmax.f32 %v281, 0.0
      %v314 = vmax.f32 %v282, 0.0
      %v315 = vmax.f32 %v283, 0.0
      %v316 = vpack.c.bf16 %v285, %v284
      %v317 = vpack.c.bf16 %v287, %v286
      %v318 = vpack.c.bf16 %v289, %v288
      %v319 = vpack.c.bf16 %v291, %v290
      %v320 = vpack.c.bf16 %v293, %v292
      %v321 = vpack.c.bf16 %v295, %v294
      %v322 = vpack.c.bf16 %v297, %v296
      %v323 = vpack.c.bf16 %v299, %v298
      %v324 = vpack.c.bf16 %v301, %v300
      %v325 = vpack.c.bf16 %v303, %v302
      %v326 = vpack.c.bf16 %v305, %v304
      %v327 = vpack.c.bf16 %v307, %v306
      %v328 = vpack.c.bf16 %v309, %v308
      %v329 = vpack.c.bf16 %v311, %v310
      %v330 = vpack.c.bf16 %v313, %v312
      %v331 = vpack.c.bf16 %v315, %v314
      %v348 = vunpack.c.l.b16 %v316
      %v349 = vunpack.c.h.b16 %v316
      %v350 = vunpack.c.l.b16 %v317
      %v351 = vunpack.c.h.b16 %v317
      %v352 = vunpack.c.l.b16 %v318
      %v353 = vunpack.c.h.b16 %v318
      %v354 = vunpack.c.l.b16 %v319
      %v355 = vunpack.c.h.b16 %v319
      %v356 = vunpack.c.l.b16 %v320
      %v357 = vunpack.c.h.b16 %v320
      %v358 = vunpack.c.l.b16 %v321
      %v359 = vunpack.c.h.b16 %v321
      %v360 = vunpack.c.l.b16 %v322
      %v361 = vunpack.c.h.b16 %v322
      %v362 = vunpack.c.l.b16 %v323
      %v363 = vunpack.c.h.b16 %v323
      %v364 = vunpack.c.l.b16 %v324
      %v365 = vunpack.c.h.b16 %v324
      %v366 = vunpack.c.l.b16 %v325
      %v367 = vunpack.c.h.b16 %v325
      %v368 = vunpack.c.l.b16 %v326
      %v369 = vunpack.c.h.b16 %v326
      %v370 = vunpack.c.l.b16 %v327
      %v371 = vunpack.c.h.b16 %v327
      %v372 = vunpack.c.l.b16 %v328
      %v373 = vunpack.c.h.b16 %v328
      %v374 = vunpack.c.l.b16 %v329
      %v375 = vunpack.c.h.b16 %v329
      %v376 = vunpack.c.l.b16 %v330
      %v377 = vunpack.c.h.b16 %v330
      %v378 = vunpack.c.l.b16 %v331
      %v379 = vunpack.c.h.b16 %v331
      %v380 = vpack.c.b16 %v348, %v348
      %v381 = vpack.c.b16 %v349, %v349
      %v382 = vpack.c.b16 %v350, %v350
      %v383 = vpack.c.b16 %v351, %v351
      %v384 = vpack.c.b16 %v352, %v352
      %v385 = vpack.c.b16 %v353, %v353
      %v386 = vpack.c.b16 %v354, %v354
      %v387 = vpack.c.b16 %v355, %v355
      %v388 = vpack.c.b16 %v356, %v356
      %v389 = vpack.c.b16 %v357, %v357
      %v390 = vpack.c.b16 %v358, %v358
      %v391 = vpack.c.b16 %v359, %v359
      %v392 = vpack.c.b16 %v360, %v360
      %v393 = vpack.c.b16 %v361, %v361
      %v394 = vpack.c.b16 %v362, %v362
      %v395 = vpack.c.b16 %v363, %v363
      %v396 = vpack.c.b16 %v364, %v364
      %v397 = vpack.c.b16 %v365, %v365
      %v398 = vpack.c.b16 %v366, %v366
      %v399 = vpack.c.b16 %v367, %v367
      %v400 = vpack.c.b16 %v368, %v368
      %v401 = vpack.c.b16 %v369, %v369
      %v402 = vpack.c.b16 %v370, %v370
      %v403 = vpack.c.b16 %v371, %v371
      %v404 = vpack.c.b16 %v372, %v372
      %v405 = vpack.c.b16 %v373, %v373
      %v406 = vpack.c.b16 %v374, %v374
      %v407 = vpack.c.b16 %v375, %v375
      %v408 = vpack.c.b16 %v376, %v376
      %v409 = vpack.c.b16 %v377, %v377
      %v410 = vpack.c.b16 %v378, %v378
      %v411 = vpack.c.b16 %v379, %v379
      %444 = vst [vmem:[%s145] sm:$0xf] %v380
      %445 = vst [vmem:[%s145 + $0x4] sm:$0xf] %v381
      %446 = vst [vmem:[%s145 + $0x8] sm:$0xf] %v382
      %447 = vst [vmem:[%s145 + $0xc] sm:$0xf] %v383
      %448 = vst [vmem:[%s145 + $0x10] sm:$0xf] %v384
      %449 = vst [vmem:[%s145 + $0x14] sm:$0xf] %v385
      %450 = vst [vmem:[%s145 + $0x18] sm:$0xf] %v386
      %451 = vst [vmem:[%s145 + $0x1c] sm:$0xf] %v387
      %452 = vst [vmem:[%s145 + $0x20] sm:$0xf] %v388
      %453 = vst [vmem:[%s145 + $0x24] sm:$0xf] %v389
      %454 = vst [vmem:[%s145 + $0x28] sm:$0xf] %v390
      %455 = vst [vmem:[%s145 + $0x2c] sm:$0xf] %v391
      %456 = vst [vmem:[%s145 + $0x30] sm:$0xf] %v392
      %457 = vst [vmem:[%s145 + $0x34] sm:$0xf] %v393
      %458 = vst [vmem:[%s145 + $0x38] sm:$0xf] %v394
      %459 = vst [vmem:[%s145 + $0x3c] sm:$0xf] %v395
      %460 = vst [vmem:[%s145 + $0x40] sm:$0xf] %v396
      %461 = vst [vmem:[%s145 + $0x44] sm:$0xf] %v397
      %462 = vst [vmem:[%s145 + $0x48] sm:$0xf] %v398
      %463 = vst [vmem:[%s145 + $0x4c] sm:$0xf] %v399
      %464 = vst [vmem:[%s145 + $0x50] sm:$0xf] %v400
      %465 = vst [vmem:[%s145 + $0x54] sm:$0xf] %v401
      %466 = vst [vmem:[%s145 + $0x58] sm:$0xf] %v402
      %467 = vst [vmem:[%s145 + $0x5c] sm:$0xf] %v403
      %468 = vst [vmem:[%s145 + $0x60] sm:$0xf] %v404
      %469 = vst [vmem:[%s145 + $0x64] sm:$0xf] %v405
      %470 = vst [vmem:[%s145 + $0x68] sm:$0xf] %v406
      %471 = vst [vmem:[%s145 + $0x6c] sm:$0xf] %v407
      %472 = vst [vmem:[%s145 + $0x70] sm:$0xf] %v408
      %473 = vst [vmem:[%s145 + $0x74] sm:$0xf] %v409
      %474 = vst [vmem:[%s145 + $0x78] sm:$0xf] %v410
      %475 = vst [vmem:[%s145 + $0x7c] sm:$0xf] %v411
      %s476 = smul.u32 32, %s13
      %p477 = scmp.lt.s32.totalorder %s476, 63
      %s478 = scalar_select %p477, %s476, 63
      %s479 = smul.addr %s478, 4
      %s480 = scalar_lea.vmem %s2, %s479
      // Predicated region
      $region29: #{bottleneck_forward.6} parent=27 // pred_check
        %p481 = pneg %p78
      $region30: #{bottleneck_forward.6} parent=27 // pred_check_branch
        %483 = sbr.rel (%p481) target = $region32
      $region31: #{bottleneck_forward.6} parent=27 // pred_region
        %s484 = smul.u32 32, %s13
      $region32: #{bottleneck_forward.6} parent=27 // pred_fallthru
        _
    $region28: #{bottleneck_forward.6} parent=5 // pred_fallthru
      _
    %p485 = scmp.le.s32.totalorder 2, %s8
    // Predicated region
    $region33: #{bottleneck_forward.6} parent=5 // pred_check
      %p486 = pneg %p485
    $region34: #{bottleneck_forward.6} parent=5 // pred_check_branch
      %488 = sbr.rel (%p486) target = $region36
    $region35: #{bottleneck_forward.6} parent=5 // pred_region
      %s489 = ssub.s32 %s8, 2
      // Predicated region
      $region37: #{bottleneck_forward.6} parent=35 // pred_check
        %p490 = pneg %p84
      $region38: #{bottleneck_forward.6} parent=35 // pred_check_branch
        %492 = sbr.rel (%p490) target = $region40
      $region39: #{bottleneck_forward.6} parent=35 // pred_region
        %s493 = smul.u32 32, %s14
        %p494 = scmp.lt.s32.totalorder %s493, 63
        %s495 = scalar_select %p494, %s493, 63
        %s496 = smul.addr %s495, 4
        %s497 = scalar_lea.vmem %s2, %s496
      $region40: #{bottleneck_forward.6} parent=35 // pred_fallthru
        _
    $region36: #{bottleneck_forward.6} parent=5 // pred_fallthru
      _
  $region6: #{bottleneck_forward.6} parent=0 // loop_footer
    %s12 = sadd.s32 1, %s8
  $region7: #{bottleneck_forward.6} parent=0 // loop_footer_branch
    %7 = sbr.rel target = $region3
  $region8: #{bottleneck_forward.6} parent=0 // loop_exit
    _

// kernel: bottleneck_forward.8
$region0: #{bottleneck_forward.8}
  #allocation0 [shape = 'u32[]', space=smem, size = 0x4, offset = 0x4, fixed_abs, tag = 'smem constant byte address 0x4 - core index']
  #allocation1 [shape = 'u32[144,128]{1,0:T(1,128)}', space=vmem, size = 0x12000, scoped, tag = 'internal scratch']
  %s0 = inlined_call_operand.vmem [shape: bf16[128,128], index: 0, kind: input, shape index: {}]
  %s1 = inlined_call_operand.vmem [shape: f32[8,128], index: 1, kind: input, shape index: {}]
  %s2 = inlined_call_operand.vmem [shape: bf16[128,128], index: 2, kind: input, shape index: {}]
  %s3 = inlined_call_operand.vmem [shape: bf16[128,128], index: 3, kind: input, shape index: {}]
  %s4 = inlined_call_operand.vmem [shape: bf16[128,128], index: 4, kind: input, shape index: {}]
  %s5 = inlined_call_operand.vmem [shape: bf16[128,128], index: 5, kind: output, shape index: {0}]
  %s6 = inlined_call_operand.vmem [shape: f32[16,128], index: 6, kind: output, shape index: {1}]
  %s7 = inlined_call_operand.vmem [shape: bf16[128,128], index: 7, kind: output, shape index: {2}]
  %s8 = inlined_call_operand.vmem [shape: f32[16,128], index: 8, kind: output, shape index: {3}]
  %9 = xla_tuple %s5, %s6, %s7, %s8
  %s10 = sld [smem:[#allocation0]]
  $region77: #{bottleneck_forward.8} parent=0
    _
  %s12 = ssub.s32 1, %s10
  %s13 = scalar_select 0, %s12, %s10
  loop: start=0, step=1, limit=4
  $region2: #{bottleneck_forward.8} parent=0 // loop_pre_header
    _
  $region3: #{bottleneck_forward.8} parent=0 // loop_header
    %s15 = sphi 0, %s19
    %p16 = scmp.ge.s32.totalorder %s15, 4
    %s25 = sphi 0, %s27
    %s28 = sphi 0, %s25
    %s29 = sphi 0, %s28
    %s45 = sphi 0, %s29
    %s49 = sphi 0, %s49
    %s51 = sphi 0, %s49
    %s52 = sphi 0, %s51
    %s66 = sphi 0, %s52
    %s70 = sphi 0, %s70
    %s72 = sphi 0, %s70
    %s73 = sphi 0, %s72
    %s87 = sphi 0, %s73
    %s93 = sphi 0, %s95
    %s96 = sphi 0, %s93
    %s97 = sphi 0, %s96
    %s113 = sphi 0, %s97
    %s117 = sphi 0, %s117
    %s119 = sphi 0, %s117
    %s120 = sphi 0, %s119
    %s134 = sphi 0, %s120
    %s140 = sphi 0, %s142
    %s143 = sphi 0, %s140
    %s144 = sphi 0, %s143
    %s160 = sphi 0, %s144
    %s166 = sphi 0, %s168
    %s169 = sphi 0, %s166
    %s170 = sphi 0, %s169
    %s186 = sphi 0, %s170
    %s192 = sphi 0, %s194
    %s195 = sphi 0, %s192
    %s196 = sphi 0, %s195
    %s212 = sphi 0, %s196
    %s218 = sphi 0, %s220
    %s221 = sphi 0, %s218
    %s222 = sphi 0, %s221
    %s238 = sphi 0, %s222
  $region4: #{bottleneck_forward.8} parent=0 // loop_header_branch
    %18 = sbr.rel (%p16) target = $region8
  $region5: #{bottleneck_forward.8} parent=0 // loop_body
    %s20 = ssub.s32 %s15, 1
    %s21 = ssub.s32 %s15, 2
    %s22 = sadd.s32 %s15, 1
    %s23 = ssub.s32 %s15, %s22
    %p24 = scmp.eq.s32.totalorder %s23, 0
    %s26 = sadd.s32 %s25, 1
    %s27 = scalar_select %p24, %s25, %s26
    %p30 = pneg %p24
    %p31 = scmp.eq.s32.totalorder %s15, 1
    %p32 = por %p30, %p31
    %p33 = scmp.ne.s32.totalorder %s25, %s28
    %p34 = scmp.eq.s32.totalorder %s15, 0
    %p35 = por %p33, %p34
    %p36 = scmp.ne.s32.totalorder %s25, %s28
    %p37 = scmp.eq.s32.totalorder %s20, 1
    %p38 = por %p36, %p37
    %p39 = scmp.ne.s32.totalorder %s28, %s29
    %p40 = scmp.eq.s32.totalorder %s20, 0
    %p41 = por %p39, %p40
    %p42 = scmp.ne.s32.totalorder %s28, %s29
    %p43 = scmp.eq.s32.totalorder %s21, 1
    %p44 = por %p42, %p43
    %p46 = scmp.ne.s32.totalorder %s29, %s45
    %p47 = scmp.eq.s32.totalorder %s21, 0
    %p48 = por %p46, %p47
    %s50 = sadd.s32 %s49, 1
    %p53 = scmp.eq.s32.totalorder %s15, 1
    %p54 = scmp.ne.s32.totalorder %s49, %s51
    %p55 = scmp.eq.s32.totalorder %s15, 0
    %p56 = por %p54, %p55
    %p57 = scmp.ne.s32.totalorder %s49, %s51
    %p58 = scmp.eq.s32.totalorder %s20, 1
    %p59 = por %p57, %p58
    %p60 = scmp.ne.s32.totalorder %s51, %s52
    %p61 = scmp.eq.s32.totalorder %s20, 0
    %p62 = por %p60, %p61
    %p63 = scmp.ne.s32.totalorder %s51, %s52
    %p64 = scmp.eq.s32.totalorder %s21, 1
    %p65 = por %p63, %p64
    %p67 = scmp.ne.s32.totalorder %s52, %s66
    %p68 = scmp.eq.s32.totalorder %s21, 0
    %p69 = por %p67, %p68
    %s71 = sadd.s32 %s70, 1
    %p74 = scmp.eq.s32.totalorder %s15, 1
    %p75 = scmp.ne.s32.totalorder %s70, %s72
    %p76 = scmp.eq.s32.totalorder %s15, 0
    %p77 = por %p75, %p76
    %p78 = scmp.ne.s32.totalorder %s70, %s72
    %p79 = scmp.eq.s32.totalorder %s20, 1
    %p80 = por %p78, %p79
    %p81 = scmp.ne.s32.totalorder %s72, %s73
    %p82 = scmp.eq.s32.totalorder %s20, 0
    %p83 = por %p81, %p82
    %p84 = scmp.ne.s32.totalorder %s72, %s73
    %p85 = scmp.eq.s32.totalorder %s21, 1
    %p86 = por %p84, %p85
    %p88 = scmp.ne.s32.totalorder %s73, %s87
    %p89 = scmp.eq.s32.totalorder %s21, 0
    %p90 = por %p88, %p89
    %s91 = ssub.s32 %s15, %s22
    %p92 = scmp.eq.s32.totalorder %s91, 0
    %s94 = sadd.s32 %s93, 1
    %s95 = scalar_select %p92, %s93, %s94
    %p98 = pneg %p92
    %p99 = scmp.eq.s32.totalorder %s15, 1
    %p100 = por %p98, %p99
    %p101 = scmp.ne.s32.totalorder %s93, %s96
    %p102 = scmp.eq.s32.totalorder %s15, 0
    %p103 = por %p101, %p102
    %p104 = scmp.ne.s32.totalorder %s93, %s96
    %p105 = scmp.eq.s32.totalorder %s20, 1
    %p106 = por %p104, %p105
    %p107 = scmp.ne.s32.totalorder %s96, %s97
    %p108 = scmp.eq.s32.totalorder %s20, 0
    %p109 = por %p107, %p108
    %p110 = scmp.ne.s32.totalorder %s96, %s97
    %p111 = scmp.eq.s32.totalorder %s21, 1
    %p112 = por %p110, %p111
    %p114 = scmp.ne.s32.totalorder %s97, %s113
    %p115 = scmp.eq.s32.totalorder %s21, 0
    %p116 = por %p114, %p115
    %s118 = sadd.s32 %s117, 1
    %p121 = scmp.eq.s32.totalorder %s15, 1
    %p122 = scmp.ne.s32.totalorder %s117, %s119
    %p123 = scmp.eq.s32.totalorder %s15, 0
    %p124 = por %p122, %p123
    %p125 = scmp.ne.s32.totalorder %s117, %s119
    %p126 = scmp.eq.s32.totalorder %s20, 1
    %p127 = por %p125, %p126
    %p128 = scmp.ne.s32.totalorder %s119, %s120
    %p129 = scmp.eq.s32.totalorder %s20, 0
    %p130 = por %p128, %p129
    %p131 = scmp.ne.s32.totalorder %s119, %s120
    %p132 = scmp.eq.s32.totalorder %s21, 1
    %p133 = por %p131, %p132
    %p135 = scmp.ne.s32.totalorder %s120, %s134
    %p136 = scmp.eq.s32.totalorder %s21, 0
    %p137 = por %p135, %p136
    %s138 = ssub.s32 %s15, %s22
    %p139 = scmp.eq.s32.totalorder %s138, 0
    %s141 = sadd.s32 %s140, 1
    %s142 = scalar_select %p139, %s140, %s141
    %p145 = pneg %p139
    %p146 = scmp.eq.s32.totalorder %s15, 1
    %p147 = por %p145, %p146
    %p148 = scmp.ne.s32.totalorder %s140, %s143
    %p149 = scmp.eq.s32.totalorder %s15, 0
    %p150 = por %p148, %p149
    %p151 = scmp.ne.s32.totalorder %s140, %s143
    %p152 = scmp.eq.s32.totalorder %s20, 1
    %p153 = por %p151, %p152
    %p154 = scmp.ne.s32.totalorder %s143, %s144
    %p155 = scmp.eq.s32.totalorder %s20, 0
    %p156 = por %p154, %p155
    %p157 = scmp.ne.s32.totalorder %s143, %s144
    %p158 = scmp.eq.s32.totalorder %s21, 1
    %p159 = por %p157, %p158
    %p161 = scmp.ne.s32.totalorder %s144, %s160
    %p162 = scmp.eq.s32.totalorder %s21, 0
    %p163 = por %p161, %p162
    %s164 = ssub.s32 %s15, %s22
    %p165 = scmp.eq.s32.totalorder %s164, 0
    %s167 = sadd.s32 %s166, 1
    %s168 = scalar_select %p165, %s166, %s167
    %p171 = pneg %p165
    %p172 = scmp.eq.s32.totalorder %s15, 1
    %p173 = por %p171, %p172
    %p174 = scmp.ne.s32.totalorder %s166, %s169
    %p175 = scmp.eq.s32.totalorder %s15, 0
    %p176 = por %p174, %p175
    %p177 = scmp.ne.s32.totalorder %s166, %s169
    %p178 = scmp.eq.s32.totalorder %s20, 1
    %p179 = por %p177, %p178
    %p180 = scmp.ne.s32.totalorder %s169, %s170
    %p181 = scmp.eq.s32.totalorder %s20, 0
    %p182 = por %p180, %p181
    %p183 = scmp.ne.s32.totalorder %s169, %s170
    %p184 = scmp.eq.s32.totalorder %s21, 1
    %p185 = por %p183, %p184
    %p187 = scmp.ne.s32.totalorder %s170, %s186
    %p188 = scmp.eq.s32.totalorder %s21, 0
    %p189 = por %p187, %p188
    %s190 = ssub.s32 %s15, %s22
    %p191 = scmp.eq.s32.totalorder %s190, 0
    %s193 = sadd.s32 %s192, 1
    %s194 = scalar_select %p191, %s192, %s193
    %p197 = pneg %p191
    %p198 = scmp.eq.s32.totalorder %s15, 1
    %p199 = por %p197, %p198
    %p200 = scmp.ne.s32.totalorder %s192, %s195
    %p201 = scmp.eq.s32.totalorder %s15, 0
    %p202 = por %p200, %p201
    %p203 = scmp.ne.s32.totalorder %s192, %s195
    %p204 = scmp.eq.s32.totalorder %s20, 1
    %p205 = por %p203, %p204
    %p206 = scmp.ne.s32.totalorder %s195, %s196
    %p207 = scmp.eq.s32.totalorder %s20, 0
    %p208 = por %p206, %p207
    %p209 = scmp.ne.s32.totalorder %s195, %s196
    %p210 = scmp.eq.s32.totalorder %s21, 1
    %p211 = por %p209, %p210
    %p213 = scmp.ne.s32.totalorder %s196, %s212
    %p214 = scmp.eq.s32.totalorder %s21, 0
    %p215 = por %p213, %p214
    %s216 = ssub.s32 %s15, %s22
    %p217 = scmp.eq.s32.totalorder %s216, 0
    %s219 = sadd.s32 %s218, 1
    %s220 = scalar_select %p217, %s218, %s219
    %p223 = pneg %p217
    %p224 = scmp.eq.s32.totalorder %s15, 1
    %p225 = por %p223, %p224
    %p226 = scmp.ne.s32.totalorder %s218, %s221
    %p227 = scmp.eq.s32.totalorder %s15, 0
    %p228 = por %p226, %p227
    %p229 = scmp.ne.s32.totalorder %s218, %s221
    %p230 = scmp.eq.s32.totalorder %s20, 1
    %p231 = por %p229, %p230
    %p232 = scmp.ne.s32.totalorder %s221, %s222
    %p233 = scmp.eq.s32.totalorder %s20, 0
    %p234 = por %p232, %p233
    %p235 = scmp.ne.s32.totalorder %s221, %s222
    %p236 = scmp.eq.s32.totalorder %s21, 1
    %p237 = por %p235, %p236
    %p239 = scmp.ne.s32.totalorder %s222, %s238
    %p240 = scmp.eq.s32.totalorder %s21, 0
    %p241 = por %p239, %p240
    %p242 = scmp.le.s32.totalorder 1, %s15
    %p243 = scmp.lt.s32.totalorder %s15, 3
    %p244 = pnand %p242, %p243
    %p245 = pneg %p244
    // Predicated region
    $region9: #{bottleneck_forward.8} parent=5 // pred_check
      _
    $region10: #{bottleneck_forward.8} parent=5 // pred_check_branch
      %247 = sbr.rel (%p244) target = $region12
    $region11: #{bottleneck_forward.8} parent=5 // pred_region
      %s248 = ssub.s32 %s15, 1
      // Predicated region
      $region13: #{bottleneck_forward.8} parent=11 // pred_check
        %p249 = pneg %p62
      $region14: #{bottleneck_forward.8} parent=11 // pred_check_branch
        %251 = sbr.rel (%p249) target = $region16
      $region15: #{bottleneck_forward.8} parent=11 // pred_region
        _
      $region16: #{bottleneck_forward.8} parent=11 // pred_fallthru
        _
      // Predicated region
      $region17: #{bottleneck_forward.8} parent=11 // pred_check
        %p252 = pneg %p83
      $region18: #{bottleneck_forward.8} parent=11 // pred_check_branch
        %254 = sbr.rel (%p252) target = $region20
      $region19: #{bottleneck_forward.8} parent=11 // pred_region
        _
      $region20: #{bottleneck_forward.8} parent=11 // pred_fallthru
        _
      // Predicated region
      $region21: #{bottleneck_forward.8} parent=11 // pred_check
        %p255 = pneg %p130
      $region22: #{bottleneck_forward.8} parent=11 // pred_check_branch
        %257 = sbr.rel (%p255) target = $region24
      $region23: #{bottleneck_forward.8} parent=11 // pred_region
        _
      $region24: #{bottleneck_forward.8} parent=11 // pred_fallthru
        _
    $region12: #{bottleneck_forward.8} parent=5 // pred_fallthru
      _
    %p258 = scmp.lt.s32.totalorder %s15, 2
    // Predicated region
    $region25: #{bottleneck_forward.8} parent=5 // pred_check
      %p259 = pneg %p258
    $region26: #{bottleneck_forward.8} parent=5 // pred_check_branch
      %261 = sbr.rel (%p259) target = $region28
    $region27: #{bottleneck_forward.8} parent=5 // pred_region
      // Predicated region
      $region29: #{bottleneck_forward.8} parent=27 // pred_check
        %p262 = pneg %p35
      $region30: #{bottleneck_forward.8} parent=27 // pred_check_branch
        %264 = sbr.rel (%p262) target = $region32
      $region31: #{bottleneck_forward.8} parent=27 // pred_region
        %s265 = smul.u32 8, %s15
        %p266 = scmp.lt.s32.totalorder %s265, 15
        %s267 = scalar_select %p266, %s265, 15
        %s268 = smul.addr %s267, 4
        %s269 = scalar_lea.vmem %s0, %s268
        %s270 = smul.u32 8, %s15
      $region32: #{bottleneck_forward.8} parent=27 // pred_fallthru
        _
      // Predicated region
      $region33: #{bottleneck_forward.8} parent=27 // pred_check
        %p271 = pneg %p103
      $region34: #{bottleneck_forward.8} parent=27 // pred_check_branch
        %273 = sbr.rel (%p271) target = $region36
      $region35: #{bottleneck_forward.8} parent=27 // pred_region
        %s274 = smul.u32 8, %s15
        %p275 = scmp.lt.s32.totalorder %s274, 15
        %s276 = scalar_select %p275, %s274, 15
        %s277 = smul.addr %s276, 4
        %s278 = scalar_lea.vmem %s3, %s277
        %s279 = smul.u32 8, %s15
      $region36: #{bottleneck_forward.8} parent=27 // pred_fallthru
        _
    $region28: #{bottleneck_forward.8} parent=5 // pred_fallthru
      _
    %p280 = scmp.le.s32.totalorder 1, %s15
    %p281 = scmp.lt.s32.totalorder %s15, 3
    %p282 = pnand %p280, %p281
    %p283 = pneg %p282
    // Predicated region
    $region37: #{bottleneck_forward.8} parent=5 // pred_check
      _
    $region38: #{bottleneck_forward.8} parent=5 // pred_check_branch
      %285 = sbr.rel (%p282) target = $region40
    $region39: #{bottleneck_forward.8} parent=5 // pred_region
      %s286 = ssub.s32 %s15, 1
      %s287 = smul.u32 8, %s20
      %p288 = scmp.lt.s32.totalorder %s287, 15
      %s289 = scalar_select %p288, %s287, 15
      %s290 = smul.addr %s289, 4
      %s291 = scalar_lea.vmem %s0, %s290
      %p292 = pneg %p41
      %p293 = pneg %p38
      %p294 = pneg %p62
      %p295 = pneg %p59
      %p296 = pneg %p83
      %p297 = pneg %p80
      %s298 = smul.u32 8, %s20
      %p299 = scmp.lt.s32.totalorder %s298, 15
      %s300 = scalar_select %p299, %s298, 15
      %s301 = smul.addr %s300, 4
      %s302 = scalar_lea.vmem %s3, %s301
      %p303 = pneg %p109
      %p304 = pneg %p106
      %p305 = pneg %p130
      %p306 = pneg %p127
      %p307 = pneg %p156
      %p308 = pneg %p153
      %s309 = smul.u32 8, %s20
      %p310 = scmp.lt.s32.totalorder %s309, 15
      %s311 = scalar_select %p310, %s309, 15
      %s312 = smul.addr %s311, 4
      %s313 = scalar_lea.vmem %s5, %s312
      %p314 = pneg %p182
      %p315 = pneg %p179
      %p316 = scmp.lt.s32.totalorder %s20, 1
      %s317 = scalar_select %p316, %s20, 1
      %s318 = smul.addr %s317, 8
      %s319 = scalar_lea.vmem %s6, %s318
      %p320 = pneg %p208
      %p321 = pneg %p205
      %s322 = smul.u32 8, %s20
      %p323 = scmp.lt.s32.totalorder %s322, 15
      %s324 = scalar_select %p323, %s322, 15
      %s325 = smul.addr %s324, 4
      %s326 = scalar_lea.vmem %s7, %s325
      %p327 = pneg %p234
      %p328 = pneg %p231
      %p329 = scmp.lt.s32.totalorder %s20, 1
      %s330 = scalar_select %p329, %s20, 1
      %s331 = smul.addr %s330, 8
      %s332 = scalar_lea.vmem %s8, %s331
      %s333 = smul.u32 8, %s20
      %p334 = scmp.lt.s32.totalorder %s333, 15
      %s335 = scalar_select %p334, %s333, 15
      %s336 = smul.addr %s335, 4
      %s337 = scalar_lea.vmem %s0, %s336
      %s338 = smul.u32 8, %s20
      %s339 = smul.u32 8, %s20
      %p340 = scmp.lt.s32.totalorder %s339, 15
      %s341 = scalar_select %p340, %s339, 15
      %s342 = smul.addr %s341, 4
      %s343 = scalar_lea.vmem %s3, %s342
      %s344 = smul.u32 8, %s20
      %s345 = smul.u32 8, %s20
      %p346 = scmp.lt.s32.totalorder %s345, 15
      %s347 = scalar_select %p346, %s345, 15
      %s348 = smul.addr %s347, 4
      %s349 = scalar_lea.vmem %s5, %s348
      %s350 = smul.u32 8, %s20
      %p351 = scmp.lt.s32.totalorder %s20, 1
      %s352 = scalar_select %p351, %s20, 1
      %s353 = smul.addr %s352, 8
      %s354 = scalar_lea.vmem %s6, %s353
      %s355 = smul.u32 8, %s20
      %p356 = scmp.lt.s32.totalorder %s355, 15
      %s357 = scalar_select %p356, %s355, 15
      %s358 = smul.addr %s357, 4
      %s359 = scalar_lea.vmem %s7, %s358
      %s360 = smul.u32 8, %s20
      %p361 = scmp.lt.s32.totalorder %s20, 1
      %s362 = scalar_select %p361, %s20, 1
      %s363 = smul.addr %s362, 8
      %s364 = scalar_lea.vmem %s8, %s363
      %v366 = vld [vmem:[%s1] sm:$0xff]
      %v367 = vld [vmem:[%s337] sm:$0xf]
      %v368 = vld [vmem:[%s337 + $0x4] sm:$0xf]
      %v369 = vld [vmem:[%s337 + $0x8] sm:$0xf]
      %v370 = vld [vmem:[%s337 + $0xc] sm:$0xf]
      %v371 = vld [vmem:[%s337 + $0x10] sm:$0xf]
      %v372 = vld [vmem:[%s337 + $0x14] sm:$0xf]
      %v373 = vld [vmem:[%s337 + $0x18] sm:$0xf]
      %v374 = vld [vmem:[%s337 + $0x1c] sm:$0xf]
      %v375 = vunpack.c.l.bf16 %v367
      %v376 = vunpack.c.l.bf16 %v368
      %v377 = vunpack.c.l.bf16 %v369
      %v378 = vunpack.c.l.bf16 %v370
      %v379 = vunpack.c.l.bf16 %v371
      %v380 = vunpack.c.l.bf16 %v372
      %v381 = vunpack.c.l.bf16 %v373
      %v382 = vunpack.c.l.bf16 %v374
      %v383 = vlaneseq
      %v384 = vshrl.u32 %v383, 7
      %v385 = vsub.s32 0, %v384
      %v386 = vrot.slane %v366, %v385
      %v387 = vmul.f32 %v375, %v386
      %v388 = vmul.f32 %v376, %v386
      %v389 = vmul.f32 %v377, %v386
      %v390 = vmul.f32 %v378, %v386
      %v391 = vmul.f32 %v379, %v386
      %v392 = vmul.f32 %v380, %v386
      %v393 = vmul.f32 %v381, %v386
      %v394 = vmul.f32 %v382, %v386
      %v395 = vlaneseq
      %v396 = vshrl.u32 %v395, 7
      %v397 = vsub.s32 1, %v396
      %v398 = vrot.slane %v366, %v397
      %v399 = vadd.f32 %v387, %v398
      %v400 = vadd.f32 %v388, %v398
      %v401 = vadd.f32 %v389, %v398
      %v402 = vadd.f32 %v390, %v398
      %v403 = vadd.f32 %v391, %v398
      %v404 = vadd.f32 %v392, %v398
      %v405 = vadd.f32 %v393, %v398
      %v406 = vadd.f32 %v394, %v398
      %v407 = vmax.f32 %v399, 0.0
      %v408 = vmax.f32 %v400, 0.0
      %v409 = vmax.f32 %v401, 0.0
      %v410 = vmax.f32 %v402, 0.0
      %v411 = vmax.f32 %v403, 0.0
      %v412 = vmax.f32 %v404, 0.0
      %v413 = vmax.f32 %v405, 0.0
      %v414 = vmax.f32 %v406, 0.0
      %v415 = vpack.c.bf16 %v408, %v407
      %v416 = vpack.c.bf16 %v410, %v409
      %v417 = vpack.c.bf16 %v412, %v411
      %v418 = vpack.c.bf16 %v414, %v413
      %v419 = vld [vmem:[%s2] sm:$0xf]
      %v420 = vld [vmem:[%s2 + $0x4] sm:$0xf]
      %v421 = vld [vmem:[%s2 + $0x8] sm:$0xf]
      %v422 = vld [vmem:[%s2 + $0xc] sm:$0xf]
      %v423 = vld [vmem:[%s2 + $0x10] sm:$0xf]
      %v424 = vld [vmem:[%s2 + $0x14] sm:$0xf]
      %v425 = vld [vmem:[%s2 + $0x18] sm:$0xf]
      %v426 = vld [vmem:[%s2 + $0x1c] sm:$0xf]
      %v427 = vld [vmem:[%s2 + $0x20] sm:$0xf]
      %v428 = vld [vmem:[%s2 + $0x24] sm:$0xf]
      %v429 = vld [vmem:[%s2 + $0x28] sm:$0xf]
      %v430 = vld [vmem:[%s2 + $0x2c] sm:$0xf]
      %v431 = vld [vmem:[%s2 + $0x30] sm:$0xf]
      %v432 = vld [vmem:[%s2 + $0x34] sm:$0xf]
      %v433 = vld [vmem:[%s2 + $0x38] sm:$0xf]
      %v434 = vld [vmem:[%s2 + $0x3c] sm:$0xf]
      %v451 = vunpack.c.l.b16 %v419
      %v452 = vunpack.c.l.b16 %v420
      %v453 = vunpack.c.l.b16 %v421
      %v454 = vunpack.c.l.b16 %v422
      %v455 = vunpack.c.l.b16 %v423
      %v456 = vunpack.c.l.b16 %v424
      %v457 = vunpack.c.l.b16 %v425
      %v458 = vunpack.c.l.b16 %v426
      %v459 = vunpack.c.l.b16 %v427
      %v460 = vunpack.c.l.b16 %v428
      %v461 = vunpack.c.l.b16 %v429
      %v462 = vunpack.c.l.b16 %v430
      %v463 = vunpack.c.l.b16 %v431
      %v464 = vunpack.c.l.b16 %v432
      %v465 = vunpack.c.l.b16 %v433
      %v466 = vunpack.c.l.b16 %v434
      %v467 = vpack.c.b16 %v452, %v451
      %v468 = vpack.c.b16 %v454, %v453
      %v469 = vpack.c.b16 %v456, %v455
      %v470 = vpack.c.b16 %v458, %v457
      %v471 = vpack.c.b16 %v460, %v459
      %v472 = vpack.c.b16 %v462, %v461
      %v473 = vpack.c.b16 %v464, %v463
      %v474 = vpack.c.b16 %v466, %v465
      %483 = vmatprep.subr.bf16.mxu0 0
      %484 = vmatpush1.bf16.msra.mxu0 %v467
      %485 = vmatprep.subr.bf16.mxu0 0
      %486 = vmatpush1.bf16.msra.mxu0 %v468
      %487 = vmatprep.subr.bf16.mxu0 0
      %488 = vmatpush1.bf16.msra.mxu0 %v469
      %489 = vmatprep.subr.bf16.mxu0 0
      %490 = vmatpush1.bf16.msra.mxu0 %v470
      %491 = vmatprep.subr.bf16.mxu0 0
      %492 = vmatpush1.bf16.msra.mxu0 %v471
      %493 = vmatprep.subr.bf16.mxu0 0
      %494 = vmatpush1.bf16.msra.mxu0 %v472
      %495 = vmatprep.subr.bf16.mxu0 0
      %496 = vmatpush1.bf16.msra.mxu0 %v473
      %497 = vmatprep.subr.bf16.mxu0 0
      %498 = vmatpush1.bf16.msra.mxu0 %v474
      %499 = vmatprep.subr.bf16.mxu0 0
      %500 = vmatpush1.bf16.msra.mxu0 0
      %501 = vmatprep.subr.bf16.mxu0 0
      %502 = vmatpush1.bf16.msra.mxu0 0
      %503 = vmatprep.subr.bf16.mxu0 0
      %504 = vmatpush1.bf16.msra.mxu0 0
      %505 = vmatprep.subr.bf16.mxu0 0
      %506 = vmatpush1.bf16.msra.mxu0 0
      %507 = vmatprep.subr.bf16.mxu0 0
      %508 = vmatpush1.bf16.msra.mxu0 0
      %509 = vmatprep.subr.bf16.mxu0 0
      %510 = vmatpush1.bf16.msra.mxu0 0
      %511 = vmatprep.subr.bf16.mxu0 0
      %512 = vmatpush1.bf16.msra.mxu0 0
      %513 = vmatprep.subr.bf16.mxu0 0
      %514 = vmatpush1.bf16.msra.mxu0 0
      %515 = vmatprep.mubr.bf16.mxu0 0
      %516 = vmatmul.mubr.bf16.gmra.mrb[0].mxu0 %v415
      %v517 = vpop.f32.mrb[0].mxu0
      %v518 = vadd.f32 0.0, %v517
      %v519 = vpop.f32.mrb[0].mxu0
      %v520 = vpop.f32.mrb[0].mxu0
      %v521 = vadd.f32 0.0, %v520
      %v522 = vpop.f32.mrb[0].mxu0
      %523 = vmatprep.mubr.bf16.mxu0 0
      %524 = vmatmul.mubr.bf16.gmra.mrb[0].mxu0 %v416
      %v525 = vpop.f32.mrb[0].mxu0
      %v526 = vadd.f32 0.0, %v525
      %v527 = vpop.f32.mrb[0].mxu0
      %v528 = vpop.f32.mrb[0].mxu0
      %v529 = vadd.f32 0.0, %v528
      %v530 = vpop.f32.mrb[0].mxu0
      %531 = vmatprep.mubr.bf16.mxu0 0
      %532 = vmatmul.mubr.bf16.gmra.mrb[0].mxu0 %v417
      %v533 = vpop.f32.mrb[0].mxu0
      %v534 = vadd.f32 0.0, %v533
      %v535 = vpop.f32.mrb[0].mxu0
      %v536 = vpop.f32.mrb[0].mxu0
      %v537 = vadd.f32 0.0, %v536
      %v538 = vpop.f32.mrb[0].mxu0
      %539 = vmatprep.mubr.bf16.mxu0 0
      %540 = vmatmul.mubr.bf16.gmra.mrb[0].mxu0 %v418
      %v541 = vpop.f32.mrb[0].mxu0
      %v542 = vadd.f32 0.0, %v541
      %v543 = vpop.f32.mrb[0].mxu0
      %v544 = vpop.f32.mrb[0].mxu0
      %v545 = vadd.f32 0.0, %v544
      %v546 = vpop.f32.mrb[0].mxu0
      %547 = vdwg.mxu0
      %v548 = vpack.c.bf16 %v521, %v518
      %v549 = vpack.c.bf16 %v529, %v526
      %v550 = vpack.c.bf16 %v537, %v534
      %v551 = vpack.c.bf16 %v545, %v542
      %v556 = vunpack.c.l.b16 %v548
      %v557 = vunpack.c.h.b16 %v548
      %v558 = vunpack.c.l.b16 %v549
      %v559 = vunpack.c.h.b16 %v549
      %v560 = vunpack.c.l.b16 %v550
      %v561 = vunpack.c.h.b16 %v550
      %v562 = vunpack.c.l.b16 %v551
      %v563 = vunpack.c.h.b16 %v551
      %v564 = vpack.c.b16 %v556, %v556
      %v565 = vpack.c.b16 %v557, %v557
      %v566 = vpack.c.b16 %v558, %v558
      %v567 = vpack.c.b16 %v559, %v559
      %v568 = vpack.c.b16 %v560, %v560
      %v569 = vpack.c.b16 %v561, %v561
      %v570 = vpack.c.b16 %v562, %v562
      %v571 = vpack.c.b16 %v563, %v563
      %580 = vst [vmem:[%s349] sm:$0xf] %v564
      %581 = vst [vmem:[%s349 + $0x4] sm:$0xf] %v565
      %582 = vst [vmem:[%s349 + $0x8] sm:$0xf] %v566
      %583 = vst [vmem:[%s349 + $0xc] sm:$0xf] %v567
      %584 = vst [vmem:[%s349 + $0x10] sm:$0xf] %v568
      %585 = vst [vmem:[%s349 + $0x14] sm:$0xf] %v569
      %586 = vst [vmem:[%s349 + $0x18] sm:$0xf] %v570
      %587 = vst [vmem:[%s349 + $0x1c] sm:$0xf] %v571
      %v588 = vadd.f32 %v518, %v521
      %v589 = vadd.f32 %v588, %v526
      %v590 = vadd.f32 %v589, %v529
      %v591 = vadd.f32 %v590, %v534
      %v592 = vadd.f32 %v591, %v537
      %v593 = vadd.f32 %v592, %v542
      %v594 = vadd.f32 %v593, %v545
      %v595 = vrot.slane %v594, 4
      %v596 = vadd.f32 %v594, %v595
      %v597 = vrot.slane %v596, 2
      %v598 = vadd.f32 %v596, %v597
      %v599 = vrot.slane %v598, 1
      %v600 = vadd.f32 %v598, %v599
      %v601 = vmul.f32 %v518, %v518
      %v602 = vmul.f32 %v521, %v521
      %v603 = vmul.f32 %v526, %v526
      %v604 = vmul.f32 %v529, %v529
      %v605 = vmul.f32 %v534, %v534
      %v606 = vmul.f32 %v537, %v537
      %v607 = vmul.f32 %v542, %v542
      %v608 = vmul.f32 %v545, %v545
      %v609 = vadd.f32 %v601, %v602
      %v610 = vadd.f32 %v609, %v603
      %v611 = vadd.f32 %v610, %v604
      %v612 = vadd.f32 %v611, %v605
      %v613 = vadd.f32 %v612, %v606
      %v614 = vadd.f32 %v613, %v607
      %v615 = vadd.f32 %v614, %v608
      %v616 = vrot.slane %v615, 4
      %v617 = vadd.f32 %v615, %v616
      %v618 = vrot.slane %v617, 2
      %v619 = vadd.f32 %v617, %v618
      %v620 = vrot.slane %v619, 1
      %v621 = vadd.f32 %v619, %v620
      %v622 = vlaneseq
      %v623 = vshrl.u32 %v622, 7
      %vm624 = vcmp.eq.s32.totalorder %v623, 0
      %v625 = vsel %vm624, %v600, 0.0
      %vm626 = vcmp.eq.s32.totalorder %v623, 1
      %v627 = vsel %vm626, %v621, 0.0
      %v628 = vadd.f32 %v625, %v627
      %629 = vst [vmem:[%s354] sm:$0xff] %v628
      %v630 = vld [vmem:[%s343] sm:$0xf]
      %v631 = vld [vmem:[%s343 + $0x4] sm:$0xf]
      %v632 = vld [vmem:[%s343 + $0x8] sm:$0xf]
      %v633 = vld [vmem:[%s343 + $0xc] sm:$0xf]
      %v634 = vld [vmem:[%s343 + $0x10] sm:$0xf]
      %v635 = vld [vmem:[%s343 + $0x14] sm:$0xf]
      %v636 = vld [vmem:[%s343 + $0x18] sm:$0xf]
      %v637 = vld [vmem:[%s343 + $0x1c] sm:$0xf]
      %v638 = vld [vmem:[%s4] sm:$0xf]
      %v639 = vld [vmem:[%s4 + $0x4] sm:$0xf]
      %v640 = vld [vmem:[%s4 + $0x8] sm:$0xf]
      %v641 = vld [vmem:[%s4 + $0xc] sm:$0xf]
      %v642 = vld [vmem:[%s4 + $0x10] sm:$0xf]
      %v643 = vld [vmem:[%s4 + $0x14] sm:$0xf]
      %v644 = vld [vmem:[%s4 + $0x18] sm:$0xf]
      %v645 = vld [vmem:[%s4 + $0x1c] sm:$0xf]
      %v646 = vld [vmem:[%s4 + $0x20] sm:$0xf]
      %v647 = vld [vmem:[%s4 + $0x24] sm:$0xf]
      %v648 = vld [vmem:[%s4 + $0x28] sm:$0xf]
      %v649 = vld [vmem:[%s4 + $0x2c] sm:$0xf]
      %v650 = vld [vmem:[%s4 + $0x30] sm:$0xf]
      %v651 = vld [vmem:[%s4 + $0x34] sm:$0xf]
      %v652 = vld [vmem:[%s4 + $0x38] sm:$0xf]
      %v653 = vld [vmem:[%s4 + $0x3c] sm:$0xf]
      %v662 = vunpack.c.l.b16 %v630
      %v663 = vunpack.c.l.b16 %v631
      %v664 = vunpack.c.l.b16 %v632
      %v665 = vunpack.c.l.b16 %v633
      %v666 = vunpack.c.l.b16 %v634
      %v667 = vunpack.c.l.b16 %v635
      %v668 = vunpack.c.l.b16 %v636
      %v669 = vunpack.c.l.b16 %v637
      %v670 = vpack.c.b16 %v663, %v662
      %v671 = vpack.c.b16 %v665, %v664
      %v672 = vpack.c.b16 %v667, %v666
      %v673 = vpack.c.b16 %v669, %v668
      %v694 = vunpack.c.l.b16 %v638
      %v695 = vunpack.c.l.b16 %v639
      %v696 = vunpack.c.l.b16 %v640
      %v697 = vunpack.c.l.b16 %v641
      %v698 = vunpack.c.l.b16 %v642
      %v699 = vunpack.c.l.b16 %v643
      %v700 = vunpack.c.l.b16 %v644
      %v701 = vunpack.c.l.b16 %v645
      %v702 = vunpack.c.l.b16 %v646
      %v703 = vunpack.c.l.b16 %v647
      %v704 = vunpack.c.l.b16 %v648
      %v705 = vunpack.c.l.b16 %v649
      %v706 = vunpack.c.l.b16 %v650
      %v707 = vunpack.c.l.b16 %v651
      %v708 = vunpack.c.l.b16 %v652
      %v709 = vunpack.c.l.b16 %v653
      %v710 = vpack.c.b16 %v695, %v694
      %v711 = vpack.c.b16 %v697, %v696
      %v712 = vpack.c.b16 %v699, %v698
      %v713 = vpack.c.b16 %v701, %v700
      %v714 = vpack.c.b16 %v703, %v702
      %v715 = vpack.c.b16 %v705, %v704
      %v716 = vpack.c.b16 %v707, %v706
      %v717 = vpack.c.b16 %v709, %v708
      %726 = vmatprep.subr.bf16.mxu0 0
      %727 = vmatpush1.bf16.msra.mxu0 %v710
      %728 = vmatprep.subr.bf16.mxu0 0
      %729 = vmatpush1.bf16.msra.mxu0 %v711
      %730 = vmatprep.subr.bf16.mxu0 0
      %731 = vmatpush1.bf16.msra.mxu0 %v712
      %732 = vmatprep.subr.bf16.mxu0 0
      %733 = vmatpush1.bf16.msra.mxu0 %v713
      %734 = vmatprep.subr.bf16.mxu0 0
      %735 = vmatpush1.bf16.msra.mxu0 %v714
      %736 = vmatprep.subr.bf16.mxu0 0
      %737 = vmatpush1.bf16.msra.mxu0 %v715
      %738 = vmatprep.subr.bf16.mxu0 0
      %739 = vmatpush1.bf16.msra.mxu0 %v716
      %740 = vmatprep.subr.bf16.mxu0 0
      %741 = vmatpush1.bf16.msra.mxu0 %v717
      %742 = vmatprep.subr.bf16.mxu0 0
      %743 = vmatpush1.bf16.msra.mxu0 0
      %744 = vmatprep.subr.bf16.mxu0 0
      %745 = vmatpush1.bf16.msra.mxu0 0
      %746 = vmatprep.subr.bf16.mxu0 0
      %747 = vmatpush1.bf16.msra.mxu0 0
      %748 = vmatprep.subr.bf16.mxu0 0
      %749 = vmatpush1.bf16.msra.mxu0 0
      %750 = vmatprep.subr.bf16.mxu0 0
      %751 = vmatpush1.bf16.msra.mxu0 0
      %752 = vmatprep.subr.bf16.mxu0 0
      %753 = vmatpush1.bf16.msra.mxu0 0
      %754 = vmatprep.subr.bf16.mxu0 0
      %755 = vmatpush1.bf16.msra.mxu0 0
      %756 = vmatprep.subr.bf16.mxu0 0
      %757 = vmatpush1.bf16.msra.mxu0 0
      %758 = vmatprep.mubr.bf16.mxu0 0
      %759 = vmatmul.mubr.bf16.gmra.mrb[0].mxu0 %v670
      %v760 = vpop.f32.mrb[0].mxu0
      %v761 = vadd.f32 0.0, %v760
      %v762 = vpop.f32.mrb[0].mxu0
      %v763 = vpop.f32.mrb[0].mxu0
      %v764 = vadd.f32 0.0, %v763
      %v765 = vpop.f32.mrb[0].mxu0
      %766 = vmatprep.mubr.bf16.mxu0 0
      %767 = vmatmul.mubr.bf16.gmra.mrb[0].mxu0 %v671
      %v768 = vpop.f32.mrb[0].mxu0
      %v769 = vadd.f32 0.0, %v768
      %v770 = vpop.f32.mrb[0].mxu0
      %v771 = vpop.f32.mrb[0].mxu0
      %v772 = vadd.f32 0.0, %v771
      %v773 = vpop.f32.mrb[0].mxu0
      %774 = vmatprep.mubr.bf16.mxu0 0
      %775 = vmatmul.mubr.bf16.gmra.mrb[0].mxu0 %v672
      %v776 = vpop.f32.mrb[0].mxu0
      %v777 = vadd.f32 0.0, %v776
      %v778 = vpop.f32.mrb[0].mxu0
      %v779 = vpop.f32.mrb[0].mxu0
      %v780 = vadd.f32 0.0, %v779
      %v781 = vpop.f32.mrb[0].mxu0
      %782 = vmatprep.mubr.bf16.mxu0 0
      %783 = vmatmul.mubr.bf16.gmra.mrb[0].mxu0 %v673
      %v784 = vpop.f32.mrb[0].mxu0
      %v785 = vadd.f32 0.0, %v784
      %v786 = vpop.f32.mrb[0].mxu0
      %v787 = vpop.f32.mrb[0].mxu0
      %v788 = vadd.f32 0.0, %v787
      %v789 = vpop.f32.mrb[0].mxu0
      %790 = vdwg.mxu0
      %v791 = vpack.c.bf16 %v764, %v761
      %v792 = vpack.c.bf16 %v772, %v769
      %v793 = vpack.c.bf16 %v780, %v777
      %v794 = vpack.c.bf16 %v788, %v785
      %v799 = vunpack.c.l.b16 %v791
      %v800 = vunpack.c.h.b16 %v791
      %v801 = vunpack.c.l.b16 %v792
      %v802 = vunpack.c.h.b16 %v792
      %v803 = vunpack.c.l.b16 %v793
      %v804 = vunpack.c.h.b16 %v793
      %v805 = vunpack.c.l.b16 %v794
      %v806 = vunpack.c.h.b16 %v794
      %v807 = vpack.c.b16 %v799, %v799
      %v808 = vpack.c.b16 %v800, %v800
      %v809 = vpack.c.b16 %v801, %v801
      %v810 = vpack.c.b16 %v802, %v802
      %v811 = vpack.c.b16 %v803, %v803
      %v812 = vpack.c.b16 %v804, %v804
      %v813 = vpack.c.b16 %v805, %v805
      %v814 = vpack.c.b16 %v806, %v806
      %823 = vst [vmem:[%s359] sm:$0xf] %v807
      %824 = vst [vmem:[%s359 + $0x4] sm:$0xf] %v808
      %825 = vst [vmem:[%s359 + $0x8] sm:$0xf] %v809
      %826 = vst [vmem:[%s359 + $0xc] sm:$0xf] %v810
      %827 = vst [vmem:[%s359 + $0x10] sm:$0xf] %v811
      %828 = vst [vmem:[%s359 + $0x14] sm:$0xf] %v812
      %829 = vst [vmem:[%s359 + $0x18] sm:$0xf] %v813
      %830 = vst [vmem:[%s359 + $0x1c] sm:$0xf] %v814
      %v831 = vadd.f32 %v761, %v764
      %v832 = vadd.f32 %v831, %v769
      %v833 = vadd.f32 %v832, %v772
      %v834 = vadd.f32 %v833, %v777
      %v835 = vadd.f32 %v834, %v780
      %v836 = vadd.f32 %v835, %v785
      %v837 = vadd.f32 %v836, %v788
      %v838 = vrot.slane %v837, 4
      %v839 = vadd.f32 %v837, %v838
      %v840 = vrot.slane %v839, 2
      %v841 = vadd.f32 %v839, %v840
      %v842 = vrot.slane %v841, 1
      %v843 = vadd.f32 %v841, %v842
      %v844 = vmul.f32 %v761, %v761
      %v845 = vmul.f32 %v764, %v764
      %v846 = vmul.f32 %v769, %v769
      %v847 = vmul.f32 %v772, %v772
      %v848 = vmul.f32 %v777, %v777
      %v849 = vmul.f32 %v780, %v780
      %v850 = vmul.f32 %v785, %v785
      %v851 = vmul.f32 %v788, %v788
      %v852 = vadd.f32 %v844, %v845
      %v853 = vadd.f32 %v852, %v846
      %v854 = vadd.f32 %v853, %v847
      %v855 = vadd.f32 %v854, %v848
      %v856 = vadd.f32 %v855, %v849
      %v857 = vadd.f32 %v856, %v850
      %v858 = vadd.f32 %v857, %v851
      %v859 = vrot.slane %v858, 4
      %v860 = vadd.f32 %v858, %v859
      %v861 = vrot.slane %v860, 2
      %v862 = vadd.f32 %v860, %v861
      %v863 = vrot.slane %v862, 1
      %v864 = vadd.f32 %v862, %v863
      %v865 = vsel %vm624, %v843, 0.0
      %v866 = vsel %vm626, %v864, 0.0
      %v867 = vadd.f32 %v865, %v866
      %868 = vst [vmem:[%s364] sm:$0xff] %v867
      %s869 = smul.u32 8, %s20
      %p870 = scmp.lt.s32.totalorder %s869, 15
      %s871 = scalar_select %p870, %s869, 15
      %s872 = smul.addr %s871, 4
      %s873 = scalar_lea.vmem %s5, %s872
      %p874 = scmp.lt.s32.totalorder %s20, 1
      %s875 = scalar_select %p874, %s20, 1
      %s876 = smul.addr %s875, 8
      %s877 = scalar_lea.vmem %s6, %s876
      %s878 = smul.u32 8, %s20
      %p879 = scmp.lt.s32.totalorder %s878, 15
      %s880 = scalar_select %p879, %s878, 15
      %s881 = smul.addr %s880, 4
      %s882 = scalar_lea.vmem %s7, %s881
      %p883 = scmp.lt.s32.totalorder %s20, 1
      %s884 = scalar_select %p883, %s20, 1
      %s885 = smul.addr %s884, 8
      %s886 = scalar_lea.vmem %s8, %s885
      // Predicated region
      $region41: #{bottleneck_forward.8} parent=39 // pred_check
        %p887 = pneg %p153
      $region42: #{bottleneck_forward.8} parent=39 // pred_check_branch
        %889 = sbr.rel (%p887) target = $region44
      $region43: #{bottleneck_forward.8} parent=39 // pred_region
        %s890 = smul.u32 8, %s20
      $region44: #{bottleneck_forward.8} parent=39 // pred_fallthru
        _
      // Predicated region
      $region45: #{bottleneck_forward.8} parent=39 // pred_check
        %p891 = pneg %p179
      $region46: #{bottleneck_forward.8} parent=39 // pred_check_branch
        %893 = sbr.rel (%p891) target = $region48
      $region47: #{bottleneck_forward.8} parent=39 // pred_region
        _
      $region48: #{bottleneck_forward.8} parent=39 // pred_fallthru
        _
      // Predicated region
      $region49: #{bottleneck_forward.8} parent=39 // pred_check
        %p894 = pneg %p205
      $region50: #{bottleneck_forward.8} parent=39 // pred_check_branch
        %896 = sbr.rel (%p894) target = $region52
      $region51: #{bottleneck_forward.8} parent=39 // pred_region
        %s897 = smul.u32 8, %s20
      $region52: #{bottleneck_forward.8} parent=39 // pred_fallthru
        _
      // Predicated region
      $region53: #{bottleneck_forward.8} parent=39 // pred_check
        %p898 = pneg %p231
      $region54: #{bottleneck_forward.8} parent=39 // pred_check_branch
        %900 = sbr.rel (%p898) target = $region56
      $region55: #{bottleneck_forward.8} parent=39 // pred_region
        _
      $region56: #{bottleneck_forward.8} parent=39 // pred_fallthru
        _
    $region40: #{bottleneck_forward.8} parent=5 // pred_fallthru
      _
    %p901 = scmp.le.s32.totalorder 2, %s15
    // Predicated region
    $region57: #{bottleneck_forward.8} parent=5 // pred_check
      %p902 = pneg %p901
    $region58: #{bottleneck_forward.8} parent=5 // pred_check_branch
      %904 = sbr.rel (%p902) target = $region60
    $region59: #{bottleneck_forward.8} parent=5 // pred_region
      %s905 = ssub.s32 %s15, 2
      // Predicated region
      $region61: #{bottleneck_forward.8} parent=59 // pred_check
        %p906 = pneg %p159
      $region62: #{bottleneck_forward.8} parent=59 // pred_check_branch
        %908 = sbr.rel (%p906) target = $region64
      $region63: #{bottleneck_forward.8} parent=59 // pred_region
        %s909 = smul.u32 8, %s21
        %p910 = scmp.lt.s32.totalorder %s909, 15
        %s911 = scalar_select %p910, %s909, 15
        %s912 = smul.addr %s911, 4
        %s913 = scalar_lea.vmem %s5, %s912
      $region64: #{bottleneck_forward.8} parent=59 // pred_fallthru
        _
      // Predicated region
      $region65: #{bottleneck_forward.8} parent=59 // pred_check
        %p914 = pneg %p185
      $region66: #{bottleneck_forward.8} parent=59 // pred_check_branch
        %916 = sbr.rel (%p914) target = $region68
      $region67: #{bottleneck_forward.8} parent=59 // pred_region
        %p917 = scmp.lt.s32.totalorder %s21, 1
        %s918 = scalar_select %p917, %s21, 1
        %s919 = smul.addr %s918, 8
        %s920 = scalar_lea.vmem %s6, %s919
      $region68: #{bottleneck_forward.8} parent=59 // pred_fallthru
        _
      // Predicated region
      $region69: #{bottleneck_forward.8} parent=59 // pred_check
        %p921 = pneg %p211
      $region70: #{bottleneck_forward.8} parent=59 // pred_check_branch
        %923 = sbr.rel (%p921) target = $region72
      $region71: #{bottleneck_forward.8} parent=59 // pred_region
        %s924 = smul.u32 8, %s21
        %p925 = scmp.lt.s32.totalorder %s924, 15
        %s926 = scalar_select %p925, %s924, 15
        %s927 = smul.addr %s926, 4
        %s928 = scalar_lea.vmem %s7, %s927
      $region72: #{bottleneck_forward.8} parent=59 // pred_fallthru
        _
      // Predicated region
      $region73: #{bottleneck_forward.8} parent=59 // pred_check
        %p929 = pneg %p237
      $region74: #{bottleneck_forward.8} parent=59 // pred_check_branch
        %931 = sbr.rel (%p929) target = $region76
      $region75: #{bottleneck_forward.8} parent=59 // pred_region
        %p932 = scmp.lt.s32.totalorder %s21, 1
        %s933 = scalar_select %p932, %s21, 1
        %s934 = smul.addr %s933, 8
        %s935 = scalar_lea.vmem %s8, %s934
      $region76: #{bottleneck_forward.8} parent=59 // pred_fallthru
        _
    $region60: #{bottleneck_forward.8} parent=5 // pred_fallthru
      _
  $region6: #{bottleneck_forward.8} parent=0 // loop_footer
    %s19 = sadd.s32 1, %s15
  $region7: #{bottleneck_forward.8} parent=0 // loop_footer_branch
    %14 = sbr.rel target = $region3
  $region8: #{bottleneck_forward.8} parent=0 // loop_exit
    _

// kernel: bottleneck_forward.9
$region0: #{bottleneck_forward.9}
  #allocation0 [shape = 'u32[]', space=smem, size = 0x4, offset = 0x4, fixed_abs, tag = 'smem constant byte address 0x4 - core index']
  #allocation1 [shape = 'u32[144,128]{1,0:T(1,128)}', space=vmem, size = 0x12000, scoped, tag = 'internal scratch']
  %s0 = inlined_call_operand.vmem [shape: bf16[128,128], index: 0, kind: input, shape index: {}]
  %s1 = inlined_call_operand.vmem [shape: f32[8,128], index: 1, kind: input, shape index: {}]
  %s2 = inlined_call_operand.vmem [shape: bf16[128,128], index: 2, kind: input, shape index: {}]
  %s3 = inlined_call_operand.vmem [shape: f32[8,128], index: 3, kind: input, shape index: {}]
  %s4 = inlined_call_operand.hbm [shape: f32[128,128], index: 4, kind: output, shape index: {}]
  %s5 = sld [smem:[#allocation0]]
  $region49: #{bottleneck_forward.9} parent=0
    _
  %s7 = ssub.s32 1, %s5
  %s8 = scalar_select 0, %s7, %s5
  $region1: #{bottleneck_forward.9} parent=0
    #allocation2 [shape = 'u8[65536]{0}', space=vmem, size = 0x10000, scoped, tag = 'output window, operand 0']
    #allocation3 [shape = 's32[2]{0}', space=sflag, size = 0x8, scoped, tag = 'scoped memory for bottleneck_forward.9']
    %9 = vsyncpa [#allocation3], 0
    %s10 = scalar_lea.sflag [#allocation3], 1
    %11 = vsyncpa %s10, 0
    loop: start=0, step=1, limit=4
    $region2: #{bottleneck_forward.9} parent=1 // loop_pre_header
      _
    $region3: #{bottleneck_forward.9} parent=1 // loop_header
      %s13 = sphi 0, %s17
      %p14 = scmp.ge.s32.totalorder %s13, 4
      %s23 = sphi 0, %s25
      %s26 = sphi 0, %s23
      %s27 = sphi 0, %s26
      %s43 = sphi 0, %s27
      %s47 = sphi 0, %s47
      %s49 = sphi 0, %s47
      %s50 = sphi 0, %s49
      %s64 = sphi 0, %s50
      %s70 = sphi 0, %s72
      %s73 = sphi 0, %s70
      %s74 = sphi 0, %s73
      %s90 = sphi 0, %s74
      %s94 = sphi 0, %s94
      %s96 = sphi 0, %s94
      %s97 = sphi 0, %s96
      %s111 = sphi 0, %s97
      %s117 = sphi 0, %s119
      %s120 = sphi 0, %s117
      %s121 = sphi 0, %s120
      %s137 = sphi 0, %s121
    $region4: #{bottleneck_forward.9} parent=1 // loop_header_branch
      %16 = sbr.rel (%p14) target = $region8
    $region5: #{bottleneck_forward.9} parent=1 // loop_body
      %s18 = ssub.s32 %s13, 1
      %s19 = ssub.s32 %s13, 2
      %s20 = sadd.s32 %s13, 1
      %s21 = ssub.s32 %s13, %s20
      %p22 = scmp.eq.s32.totalorder %s21, 0
      %s24 = sadd.s32 %s23, 1
      %s25 = scalar_select %p22, %s23, %s24
      %p28 = pneg %p22
      %p29 = scmp.eq.s32.totalorder %s13, 1
      %p30 = por %p28, %p29
      %p31 = scmp.ne.s32.totalorder %s23, %s26
      %p32 = scmp.eq.s32.totalorder %s13, 0
      %p33 = por %p31, %p32
      %p34 = scmp.ne.s32.totalorder %s23, %s26
      %p35 = scmp.eq.s32.totalorder %s18, 1
      %p36 = por %p34, %p35
      %p37 = scmp.ne.s32.totalorder %s26, %s27
      %p38 = scmp.eq.s32.totalorder %s18, 0
      %p39 = por %p37, %p38
      %p40 = scmp.ne.s32.totalorder %s26, %s27
      %p41 = scmp.eq.s32.totalorder %s19, 1
      %p42 = por %p40, %p41
      %p44 = scmp.ne.s32.totalorder %s27, %s43
      %p45 = scmp.eq.s32.totalorder %s19, 0
      %p46 = por %p44, %p45
      %s48 = sadd.s32 %s47, 1
      %p51 = scmp.eq.s32.totalorder %s13, 1
      %p52 = scmp.ne.s32.totalorder %s47, %s49
      %p53 = scmp.eq.s32.totalorder %s13, 0
      %p54 = por %p52, %p53
      %p55 = scmp.ne.s32.totalorder %s47, %s49
      %p56 = scmp.eq.s32.totalorder %s18, 1
      %p57 = por %p55, %p56
      %p58 = scmp.ne.s32.totalorder %s49, %s50
      %p59 = scmp.eq.s32.totalorder %s18, 0
      %p60 = por %p58, %p59
      %p61 = scmp.ne.s32.totalorder %s49, %s50
      %p62 = scmp.eq.s32.totalorder %s19, 1
      %p63 = por %p61, %p62
      %p65 = scmp.ne.s32.totalorder %s50, %s64
      %p66 = scmp.eq.s32.totalorder %s19, 0
      %p67 = por %p65, %p66
      %s68 = ssub.s32 %s13, %s20
      %p69 = scmp.eq.s32.totalorder %s68, 0
      %s71 = sadd.s32 %s70, 1
      %s72 = scalar_select %p69, %s70, %s71
      %p75 = pneg %p69
      %p76 = scmp.eq.s32.totalorder %s13, 1
      %p77 = por %p75, %p76
      %p78 = scmp.ne.s32.totalorder %s70, %s73
      %p79 = scmp.eq.s32.totalorder %s13, 0
      %p80 = por %p78, %p79
      %p81 = scmp.ne.s32.totalorder %s70, %s73
      %p82 = scmp.eq.s32.totalorder %s18, 1
      %p83 = por %p81, %p82
      %p84 = scmp.ne.s32.totalorder %s73, %s74
      %p85 = scmp.eq.s32.totalorder %s18, 0
      %p86 = por %p84, %p85
      %p87 = scmp.ne.s32.totalorder %s73, %s74
      %p88 = scmp.eq.s32.totalorder %s19, 1
      %p89 = por %p87, %p88
      %p91 = scmp.ne.s32.totalorder %s74, %s90
      %p92 = scmp.eq.s32.totalorder %s19, 0
      %p93 = por %p91, %p92
      %s95 = sadd.s32 %s94, 1
      %p98 = scmp.eq.s32.totalorder %s13, 1
      %p99 = scmp.ne.s32.totalorder %s94, %s96
      %p100 = scmp.eq.s32.totalorder %s13, 0
      %p101 = por %p99, %p100
      %p102 = scmp.ne.s32.totalorder %s94, %s96
      %p103 = scmp.eq.s32.totalorder %s18, 1
      %p104 = por %p102, %p103
      %p105 = scmp.ne.s32.totalorder %s96, %s97
      %p106 = scmp.eq.s32.totalorder %s18, 0
      %p107 = por %p105, %p106
      %p108 = scmp.ne.s32.totalorder %s96, %s97
      %p109 = scmp.eq.s32.totalorder %s19, 1
      %p110 = por %p108, %p109
      %p112 = scmp.ne.s32.totalorder %s97, %s111
      %p113 = scmp.eq.s32.totalorder %s19, 0
      %p114 = por %p112, %p113
      %s115 = ssub.s32 %s13, %s20
      %p116 = scmp.eq.s32.totalorder %s115, 0
      %s118 = sadd.s32 %s117, 1
      %s119 = scalar_select %p116, %s117, %s118
      %p122 = pneg %p116
      %p123 = scmp.eq.s32.totalorder %s13, 1
      %p124 = por %p122, %p123
      %p125 = scmp.ne.s32.totalorder %s117, %s120
      %p126 = scmp.eq.s32.totalorder %s13, 0
      %p127 = por %p125, %p126
      %p128 = scmp.ne.s32.totalorder %s117, %s120
      %p129 = scmp.eq.s32.totalorder %s18, 1
      %p130 = por %p128, %p129
      %p131 = scmp.ne.s32.totalorder %s120, %s121
      %p132 = scmp.eq.s32.totalorder %s18, 0
      %p133 = por %p131, %p132
      %p134 = scmp.ne.s32.totalorder %s120, %s121
      %p135 = scmp.eq.s32.totalorder %s19, 1
      %p136 = por %p134, %p135
      %p138 = scmp.ne.s32.totalorder %s121, %s137
      %p139 = scmp.eq.s32.totalorder %s19, 0
      %p140 = por %p138, %p139
      %p141 = scmp.le.s32.totalorder 1, %s13
      %p142 = scmp.lt.s32.totalorder %s13, 3
      %p143 = pnand %p141, %p142
      %p144 = pneg %p143
      // Predicated region
      $region9: #{bottleneck_forward.9} parent=5 // pred_check
        _
      $region10: #{bottleneck_forward.9} parent=5 // pred_check_branch
        %146 = sbr.rel (%p143) target = $region12
      $region11: #{bottleneck_forward.9} parent=5 // pred_region
        %s147 = ssub.s32 %s13, 1
        // Predicated region
        $region13: #{bottleneck_forward.9} parent=11 // pred_check
          %p148 = pneg %p60
        $region14: #{bottleneck_forward.9} parent=11 // pred_check_branch
          %150 = sbr.rel (%p148) target = $region16
        $region15: #{bottleneck_forward.9} parent=11 // pred_region
          _
        $region16: #{bottleneck_forward.9} parent=11 // pred_fallthru
          _
        // Predicated region
        $region17: #{bottleneck_forward.9} parent=11 // pred_check
          %p151 = pneg %p107
        $region18: #{bottleneck_forward.9} parent=11 // pred_check_branch
          %153 = sbr.rel (%p151) target = $region20
        $region19: #{bottleneck_forward.9} parent=11 // pred_region
          _
        $region20: #{bottleneck_forward.9} parent=11 // pred_fallthru
          _
      $region12: #{bottleneck_forward.9} parent=5 // pred_fallthru
        _
      %p154 = scmp.lt.s32.totalorder %s13, 2
      // Predicated region
      $region21: #{bottleneck_forward.9} parent=5 // pred_check
        %p155 = pneg %p154
      $region22: #{bottleneck_forward.9} parent=5 // pred_check_branch
        %157 = sbr.rel (%p155) target = $region24
      $region23: #{bottleneck_forward.9} parent=5 // pred_region
        // Predicated region
        $region25: #{bottleneck_forward.9} parent=23 // pred_check
          %p158 = pneg %p33
        $region26: #{bottleneck_forward.9} parent=23 // pred_check_branch
          %160 = sbr.rel (%p158) target = $region28
        $region27: #{bottleneck_forward.9} parent=23 // pred_region
          %s161 = smul.u32 8, %s13
          %p162 = scmp.lt.s32.totalorder %s161, 15
          %s163 = scalar_select %p162, %s161, 15
          %s164 = smul.addr %s163, 4
          %s165 = scalar_lea.vmem %s0, %s164
          %s166 = smul.u32 8, %s13
        $region28: #{bottleneck_forward.9} parent=23 // pred_fallthru
          _
        // Predicated region
        $region29: #{bottleneck_forward.9} parent=23 // pred_check
          %p167 = pneg %p80
        $region30: #{bottleneck_forward.9} parent=23 // pred_check_branch
          %169 = sbr.rel (%p167) target = $region32
        $region31: #{bottleneck_forward.9} parent=23 // pred_region
          %s170 = smul.u32 8, %s13
          %p171 = scmp.lt.s32.totalorder %s170, 15
          %s172 = scalar_select %p171, %s170, 15
          %s173 = smul.addr %s172, 4
          %s174 = scalar_lea.vmem %s2, %s173
          %s175 = smul.u32 8, %s13
        $region32: #{bottleneck_forward.9} parent=23 // pred_fallthru
          _
      $region24: #{bottleneck_forward.9} parent=5 // pred_fallthru
        _
      %p176 = scmp.le.s32.totalorder 1, %s13
      %p177 = scmp.lt.s32.totalorder %s13, 3
      %p178 = pnand %p176, %p177
      %p179 = pneg %p178
      // Predicated region
      $region33: #{bottleneck_forward.9} parent=5 // pred_check
        _
      $region34: #{bottleneck_forward.9} parent=5 // pred_check_branch
        %181 = sbr.rel (%p178) target = $region36
      $region35: #{bottleneck_forward.9} parent=5 // pred_region
        %s182 = ssub.s32 %s13, 1
        %s183 = smul.u32 8, %s18
        %p184 = scmp.lt.s32.totalorder %s183, 15
        %s185 = scalar_select %p184, %s183, 15
        %s186 = smul.addr %s185, 4
        %s187 = scalar_lea.vmem %s0, %s186
        %p188 = pneg %p39
        %p189 = pneg %p36
        %p190 = pneg %p60
        %p191 = pneg %p57
        %s192 = smul.u32 8, %s18
        %p193 = scmp.lt.s32.totalorder %s192, 15
        %s194 = scalar_select %p193, %s192, 15
        %s195 = smul.addr %s194, 4
        %s196 = scalar_lea.vmem %s2, %s195
        %p197 = pneg %p86
        %p198 = pneg %p83
        %p199 = pneg %p107
        %p200 = pneg %p104
        %p201 = pneg %p133
        %p202 = pneg %p130
        %s203 = sand.u32 %s120, 1
        %s204 = scalar_lea.sflag [#allocation3], %s203
        %s205 = sand.u32 %s120, 1
        %s206 = smul.addr %s205, 64
        %s207 = scalar_lea.vmem [#allocation2], %s206
        %s208 = smul.u32 8, %s18
        %p209 = scmp.lt.s32.totalorder %s208, 15
        %s210 = scalar_select %p209, %s208, 15
        %s211 = smul.addr %s210, 4
        %s212 = scalar_lea.vmem %s0, %s211
        %s213 = smul.u32 8, %s18
        %s214 = smul.u32 8, %s18
        %p215 = scmp.lt.s32.totalorder %s214, 15
        %s216 = scalar_select %p215, %s214, 15
        %s217 = smul.addr %s216, 4
        %s218 = scalar_lea.vmem %s2, %s217
        %s219 = smul.u32 8, %s18
        %s220 = smul.u32 8, %s18
        %v221 = vld [vmem:[%s1] sm:$0xff]
        %v222 = vld [vmem:[%s212] sm:$0xf]
        %v223 = vld [vmem:[%s212 + $0x4] sm:$0xf]
        %v224 = vld [vmem:[%s212 + $0x8] sm:$0xf]
        %v225 = vld [vmem:[%s212 + $0xc] sm:$0xf]
        %v226 = vld [vmem:[%s212 + $0x10] sm:$0xf]
        %v227 = vld [vmem:[%s212 + $0x14] sm:$0xf]
        %v228 = vld [vmem:[%s212 + $0x18] sm:$0xf]
        %v229 = vld [vmem:[%s212 + $0x1c] sm:$0xf]
        %v230 = vunpack.c.l.bf16 %v222
        %v231 = vunpack.c.l.bf16 %v223
        %v232 = vunpack.c.l.bf16 %v224
        %v233 = vunpack.c.l.bf16 %v225
        %v234 = vunpack.c.l.bf16 %v226
        %v235 = vunpack.c.l.bf16 %v227
        %v236 = vunpack.c.l.bf16 %v228
        %v237 = vunpack.c.l.bf16 %v229
        %v238 = vlaneseq
        %v239 = vshrl.u32 %v238, 7
        %v240 = vsub.s32 0, %v239
        %v241 = vrot.slane %v221, %v240
        %v242 = vmul.f32 %v230, %v241
        %v243 = vmul.f32 %v231, %v241
        %v244 = vmul.f32 %v232, %v241
        %v245 = vmul.f32 %v233, %v241
        %v246 = vmul.f32 %v234, %v241
        %v247 = vmul.f32 %v235, %v241
        %v248 = vmul.f32 %v236, %v241
        %v249 = vmul.f32 %v237, %v241
        %v250 = vlaneseq
        %v251 = vshrl.u32 %v250, 7
        %v252 = vsub.s32 1, %v251
        %v253 = vrot.slane %v221, %v252
        %v254 = vadd.f32 %v242, %v253
        %v255 = vadd.f32 %v243, %v253
        %v256 = vadd.f32 %v244, %v253
        %v257 = vadd.f32 %v245, %v253
        %v258 = vadd.f32 %v246, %v253
        %v259 = vadd.f32 %v247, %v253
        %v260 = vadd.f32 %v248, %v253
        %v261 = vadd.f32 %v249, %v253
        %v262 = vld [vmem:[%s3] sm:$0xff]
        %v263 = vld [vmem:[%s218] sm:$0xf]
        %v264 = vld [vmem:[%s218 + $0x4] sm:$0xf]
        %v265 = vld [vmem:[%s218 + $0x8] sm:$0xf]
        %v266 = vld [vmem:[%s218 + $0xc] sm:$0xf]
        %v267 = vld [vmem:[%s218 + $0x10] sm:$0xf]
        %v268 = vld [vmem:[%s218 + $0x14] sm:$0xf]
        %v269 = vld [vmem:[%s218 + $0x18] sm:$0xf]
        %v270 = vld [vmem:[%s218 + $0x1c] sm:$0xf]
        %v271 = vunpack.c.l.bf16 %v263
        %v272 = vunpack.c.l.bf16 %v264
        %v273 = vunpack.c.l.bf16 %v265
        %v274 = vunpack.c.l.bf16 %v266
        %v275 = vunpack.c.l.bf16 %v267
        %v276 = vunpack.c.l.bf16 %v268
        %v277 = vunpack.c.l.bf16 %v269
        %v278 = vunpack.c.l.bf16 %v270
        %v279 = vlaneseq
        %v280 = vshrl.u32 %v279, 7
        %v281 = vsub.s32 0, %v280
        %v282 = vrot.slane %v262, %v281
        %v283 = vmul.f32 %v271, %v282
        %v284 = vmul.f32 %v272, %v282
        %v285 = vmul.f32 %v273, %v282
        %v286 = vmul.f32 %v274, %v282
        %v287 = vmul.f32 %v275, %v282
        %v288 = vmul.f32 %v276, %v282
        %v289 = vmul.f32 %v277, %v282
        %v290 = vmul.f32 %v278, %v282
        %v291 = vlaneseq
        %v292 = vshrl.u32 %v291, 7
        %v293 = vsub.s32 1, %v292
        %v294 = vrot.slane %v262, %v293
        %v295 = vadd.f32 %v283, %v294
        %v296 = vadd.f32 %v284, %v294
        %v297 = vadd.f32 %v285, %v294
        %v298 = vadd.f32 %v286, %v294
        %v299 = vadd.f32 %v287, %v294
        %v300 = vadd.f32 %v288, %v294
        %v301 = vadd.f32 %v289, %v294
        %v302 = vadd.f32 %v290, %v294
        %v303 = vadd.f32 %v254, %v295
        %v304 = vadd.f32 %v255, %v296
        %v305 = vadd.f32 %v256, %v297
        %v306 = vadd.f32 %v257, %v298
        %v307 = vadd.f32 %v258, %v299
        %v308 = vadd.f32 %v259, %v300
        %v309 = vadd.f32 %v260, %v301
        %v310 = vadd.f32 %v261, %v302
        %v311 = vmax.f32 %v303, 0.0
        %v312 = vmax.f32 %v304, 0.0
        %v313 = vmax.f32 %v305, 0.0
        %v314 = vmax.f32 %v306, 0.0
        %v315 = vmax.f32 %v307, 0.0
        %v316 = vmax.f32 %v308, 0.0
        %v317 = vmax.f32 %v309, 0.0
        %v318 = vmax.f32 %v310, 0.0
        %319 = vst [vmem:[%s207] sm:$0xff] %v311
        %320 = vst [vmem:[%s207 + $0x8] sm:$0xff] %v312
        %321 = vst [vmem:[%s207 + $0x10] sm:$0xff] %v313
        %322 = vst [vmem:[%s207 + $0x18] sm:$0xff] %v314
        %323 = vst [vmem:[%s207 + $0x20] sm:$0xff] %v315
        %324 = vst [vmem:[%s207 + $0x28] sm:$0xff] %v316
        %325 = vst [vmem:[%s207 + $0x30] sm:$0xff] %v317
        %326 = vst [vmem:[%s207 + $0x38] sm:$0xff] %v318
        %s327 = sand.u32 %s120, 1
        %s328 = scalar_lea.sflag [#allocation3], %s327
        %s329 = sand.u32 %s120, 1
        %s330 = smul.addr %s329, 64
        %s331 = scalar_lea.vmem [#allocation2], %s330
        // Predicated region
        $region37: #{bottleneck_forward.9} parent=35 // pred_check
          %p332 = pneg %p130
        $region38: #{bottleneck_forward.9} parent=35 // pred_check_branch
          %334 = sbr.rel (%p332) target = $region40
        $region39: #{bottleneck_forward.9} parent=35 // pred_region
          %s335 = smul.u32 8, %s18
          %s337 = ssub.s32 1024, 1024
          %338 = vsyncadd %s328, %s337
          %s339 = smul.addr %s335, 128
          %s340 = scalar_lea.hbm %s4, %s339
          %s341 = sshll.u32 %s331, 4
          %s342 = int_to_ptr.vmem [resolvable:$true] %s341
          %347 = dma.vmem_to_hbm [thread:$0]  %s342, 1024, %s340, %s328, 128, 128, 8
        $region40: #{bottleneck_forward.9} parent=35 // pred_fallthru
          _
      $region36: #{bottleneck_forward.9} parent=5 // pred_fallthru
        _
      %p348 = scmp.le.s32.totalorder 2, %s13
      // Predicated region
      $region41: #{bottleneck_forward.9} parent=5 // pred_check
        %p349 = pneg %p348
      $region42: #{bottleneck_forward.9} parent=5 // pred_check_branch
        %351 = sbr.rel (%p349) target = $region44
      $region43: #{bottleneck_forward.9} parent=5 // pred_region
        %s352 = ssub.s32 %s13, 2
        // Predicated region
        $region45: #{bottleneck_forward.9} parent=43 // pred_check
          %p353 = pneg %p136
        $region46: #{bottleneck_forward.9} parent=43 // pred_check_branch
          %355 = sbr.rel (%p353) target = $region48
        $region47: #{bottleneck_forward.9} parent=43 // pred_region
          %s356 = sand.u32 %s121, 1
          %s357 = scalar_lea.sflag [#allocation3], %s356
          %s358 = sand.u32 %s121, 1
          %s359 = smul.addr %s358, 64
          %s360 = scalar_lea.vmem [#allocation2], %s359
          %361 = dma.done %s357, 1024
        $region48: #{bottleneck_forward.9} parent=43 // pred_fallthru
          _
      $region44: #{bottleneck_forward.9} parent=5 // pred_fallthru
        _
    $region6: #{bottleneck_forward.9} parent=1 // loop_footer
      %s17 = sadd.s32 1, %s13
    $region7: #{bottleneck_forward.9} parent=1 // loop_footer_branch
      %12 = sbr.rel target = $region3
    $region8: #{bottleneck_forward.9} parent=1 // loop_exit
      _
    %362 = vsyncpa [#allocation3], 1
    %s363 = scalar_lea.sflag [#allocation3], 1
    %364 = vsyncpa %s363, 1

// kernel: bottleneck_forward.7
$region0: #{bottleneck_forward.7}
  #allocation0 [shape = 'u32[]', space=smem, size = 0x4, offset = 0x4, fixed_abs, tag = 'smem constant byte address 0x4 - core index']
  #allocation1 [shape = 'u32[144,128]{1,0:T(1,128)}', space=vmem, size = 0x12000, scoped, tag = 'internal scratch']
  %s0 = inlined_call_operand.vmem [shape: bf16[128,1152], index: 0, kind: input, shape index: {}]
  %s1 = inlined_call_operand.vmem [shape: bf16[1152,128], index: 1, kind: input, shape index: {}]
  %s2 = inlined_call_operand.vmem [shape: bf16[128,128], index: 2, kind: output, shape index: {0}]
  %s3 = inlined_call_operand.vmem [shape: f32[16,128], index: 3, kind: output, shape index: {1}]
  %4 = xla_tuple %s2, %s3
  %s5 = sld [smem:[#allocation0]]
  $region49: #{bottleneck_forward.7} parent=0
    _
  %s7 = ssub.s32 1, %s5
  %s8 = scalar_select 0, %s7, %s5
  loop: start=0, step=1, limit=4
  $region2: #{bottleneck_forward.7} parent=0 // loop_pre_header
    _
  $region3: #{bottleneck_forward.7} parent=0 // loop_header
    %s10 = sphi 0, %s14
    %p11 = scmp.ge.s32.totalorder %s10, 4
    %s20 = sphi 0, %s22
    %s23 = sphi 0, %s20
    %s24 = sphi 0, %s23
    %s40 = sphi 0, %s24
    %s44 = sphi 0, %s44
    %s46 = sphi 0, %s44
    %s47 = sphi 0, %s46
    %s61 = sphi 0, %s47
    %s67 = sphi 0, %s69
    %s70 = sphi 0, %s67
    %s71 = sphi 0, %s70
    %s87 = sphi 0, %s71
    %s93 = sphi 0, %s95
    %s96 = sphi 0, %s93
    %s97 = sphi 0, %s96
    %s113 = sphi 0, %s97
  $region4: #{bottleneck_forward.7} parent=0 // loop_header_branch
    %13 = sbr.rel (%p11) target = $region8
  $region5: #{bottleneck_forward.7} parent=0 // loop_body
    %s15 = ssub.s32 %s10, 1
    %s16 = ssub.s32 %s10, 2
    %s17 = sadd.s32 %s10, 1
    %s18 = ssub.s32 %s10, %s17
    %p19 = scmp.eq.s32.totalorder %s18, 0
    %s21 = sadd.s32 %s20, 1
    %s22 = scalar_select %p19, %s20, %s21
    %p25 = pneg %p19
    %p26 = scmp.eq.s32.totalorder %s10, 1
    %p27 = por %p25, %p26
    %p28 = scmp.ne.s32.totalorder %s20, %s23
    %p29 = scmp.eq.s32.totalorder %s10, 0
    %p30 = por %p28, %p29
    %p31 = scmp.ne.s32.totalorder %s20, %s23
    %p32 = scmp.eq.s32.totalorder %s15, 1
    %p33 = por %p31, %p32
    %p34 = scmp.ne.s32.totalorder %s23, %s24
    %p35 = scmp.eq.s32.totalorder %s15, 0
    %p36 = por %p34, %p35
    %p37 = scmp.ne.s32.totalorder %s23, %s24
    %p38 = scmp.eq.s32.totalorder %s16, 1
    %p39 = por %p37, %p38
    %p41 = scmp.ne.s32.totalorder %s24, %s40
    %p42 = scmp.eq.s32.totalorder %s16, 0
    %p43 = por %p41, %p42
    %s45 = sadd.s32 %s44, 1
    %p48 = scmp.eq.s32.totalorder %s10, 1
    %p49 = scmp.ne.s32.totalorder %s44, %s46
    %p50 = scmp.eq.s32.totalorder %s10, 0
    %p51 = por %p49, %p50
    %p52 = scmp.ne.s32.totalorder %s44, %s46
    %p53 = scmp.eq.s32.totalorder %s15, 1
    %p54 = por %p52, %p53
    %p55 = scmp.ne.s32.totalorder %s46, %s47
    %p56 = scmp.eq.s32.totalorder %s15, 0
    %p57 = por %p55, %p56
    %p58 = scmp.ne.s32.totalorder %s46, %s47
    %p59 = scmp.eq.s32.totalorder %s16, 1
    %p60 = por %p58, %p59
    %p62 = scmp.ne.s32.totalorder %s47, %s61
    %p63 = scmp.eq.s32.totalorder %s16, 0
    %p64 = por %p62, %p63
    %s65 = ssub.s32 %s10, %s17
    %p66 = scmp.eq.s32.totalorder %s65, 0
    %s68 = sadd.s32 %s67, 1
    %s69 = scalar_select %p66, %s67, %s68
    %p72 = pneg %p66
    %p73 = scmp.eq.s32.totalorder %s10, 1
    %p74 = por %p72, %p73
    %p75 = scmp.ne.s32.totalorder %s67, %s70
    %p76 = scmp.eq.s32.totalorder %s10, 0
    %p77 = por %p75, %p76
    %p78 = scmp.ne.s32.totalorder %s67, %s70
    %p79 = scmp.eq.s32.totalorder %s15, 1
    %p80 = por %p78, %p79
    %p81 = scmp.ne.s32.totalorder %s70, %s71
    %p82 = scmp.eq.s32.totalorder %s15, 0
    %p83 = por %p81, %p82
    %p84 = scmp.ne.s32.totalorder %s70, %s71
    %p85 = scmp.eq.s32.totalorder %s16, 1
    %p86 = por %p84, %p85
    %p88 = scmp.ne.s32.totalorder %s71, %s87
    %p89 = scmp.eq.s32.totalorder %s16, 0
    %p90 = por %p88, %p89
    %s91 = ssub.s32 %s10, %s17
    %p92 = scmp.eq.s32.totalorder %s91, 0
    %s94 = sadd.s32 %s93, 1
    %s95 = scalar_select %p92, %s93, %s94
    %p98 = pneg %p92
    %p99 = scmp.eq.s32.totalorder %s10, 1
    %p100 = por %p98, %p99
    %p101 = scmp.ne.s32.totalorder %s93, %s96
    %p102 = scmp.eq.s32.totalorder %s10, 0
    %p103 = por %p101, %p102
    %p104 = scmp.ne.s32.totalorder %s93, %s96
    %p105 = scmp.eq.s32.totalorder %s15, 1
    %p106 = por %p104, %p105
    %p107 = scmp.ne.s32.totalorder %s96, %s97
    %p108 = scmp.eq.s32.totalorder %s15, 0
    %p109 = por %p107, %p108
    %p110 = scmp.ne.s32.totalorder %s96, %s97
    %p111 = scmp.eq.s32.totalorder %s16, 1
    %p112 = por %p110, %p111
    %p114 = scmp.ne.s32.totalorder %s97, %s113
    %p115 = scmp.eq.s32.totalorder %s16, 0
    %p116 = por %p114, %p115
    %p117 = scmp.le.s32.totalorder 1, %s10
    %p118 = scmp.lt.s32.totalorder %s10, 3
    %p119 = pnand %p117, %p118
    %p120 = pneg %p119
    // Predicated region
    $region9: #{bottleneck_forward.7} parent=5 // pred_check
      _
    $region10: #{bottleneck_forward.7} parent=5 // pred_check_branch
      %122 = sbr.rel (%p119) target = $region12
    $region11: #{bottleneck_forward.7} parent=5 // pred_region
      %s123 = ssub.s32 %s10, 1
      // Predicated region
      $region13: #{bottleneck_forward.7} parent=11 // pred_check
        %p124 = pneg %p57
      $region14: #{bottleneck_forward.7} parent=11 // pred_check_branch
        %126 = sbr.rel (%p124) target = $region16
      $region15: #{bottleneck_forward.7} parent=11 // pred_region
        _
      $region16: #{bottleneck_forward.7} parent=11 // pred_fallthru
        _
    $region12: #{bottleneck_forward.7} parent=5 // pred_fallthru
      _
    %p127 = scmp.lt.s32.totalorder %s10, 2
    // Predicated region
    $region17: #{bottleneck_forward.7} parent=5 // pred_check
      %p128 = pneg %p127
    $region18: #{bottleneck_forward.7} parent=5 // pred_check_branch
      %130 = sbr.rel (%p128) target = $region20
    $region19: #{bottleneck_forward.7} parent=5 // pred_region
      // Predicated region
      $region21: #{bottleneck_forward.7} parent=19 // pred_check
        %p131 = pneg %p30
      $region22: #{bottleneck_forward.7} parent=19 // pred_check_branch
        %133 = sbr.rel (%p131) target = $region24
      $region23: #{bottleneck_forward.7} parent=19 // pred_region
        %s134 = smul.u32 8, %s10
        %p135 = scmp.lt.s32.totalorder %s134, 15
        %s136 = scalar_select %p135, %s134, 15
        %s137 = smul.addr %s136, 9
        %s138 = smul.addr %s137, 4
        %s139 = scalar_lea.vmem %s0, %s138
        %s140 = smul.u32 8, %s10
      $region24: #{bottleneck_forward.7} parent=19 // pred_fallthru
        _
    $region20: #{bottleneck_forward.7} parent=5 // pred_fallthru
      _
    %p141 = scmp.le.s32.totalorder 1, %s10
    %p142 = scmp.lt.s32.totalorder %s10, 3
    %p143 = pnand %p141, %p142
    %p144 = pneg %p143
    // Predicated region
    $region25: #{bottleneck_forward.7} parent=5 // pred_check
      _
    $region26: #{bottleneck_forward.7} parent=5 // pred_check_branch
      %146 = sbr.rel (%p143) target = $region28
    $region27: #{bottleneck_forward.7} parent=5 // pred_region
      %s147 = ssub.s32 %s10, 1
      %s148 = smul.u32 8, %s15
      %p149 = scmp.lt.s32.totalorder %s148, 15
      %s150 = scalar_select %p149, %s148, 15
      %s151 = smul.addr %s150, 9
      %s152 = smul.addr %s151, 4
      %s153 = scalar_lea.vmem %s0, %s152
      %p154 = pneg %p36
      %p155 = pneg %p33
      %p156 = pneg %p57
      %p157 = pneg %p54
      %p158 = pneg %p83
      %p159 = pneg %p80
      %s160 = smul.u32 8, %s15
      %p161 = scmp.lt.s32.totalorder %s160, 15
      %s162 = scalar_select %p161, %s160, 15
      %s163 = smul.addr %s162, 4
      %s164 = scalar_lea.vmem %s2, %s163
      %p165 = pneg %p109
      %p166 = pneg %p106
      %p167 = scmp.lt.s32.totalorder %s15, 1
      %s168 = scalar_select %p167, %s15, 1
      %s169 = smul.addr %s168, 8
      %s170 = scalar_lea.vmem %s3, %s169
      %s171 = smul.u32 8, %s15
      %p172 = scmp.lt.s32.totalorder %s171, 15
      %s173 = scalar_select %p172, %s171, 15
      %s174 = smul.addr %s173, 9
      %s175 = smul.addr %s174, 4
      %s176 = scalar_lea.vmem %s0, %s175
      %s177 = smul.u32 8, %s15
      %s178 = smul.u32 8, %s15
      %p179 = scmp.lt.s32.totalorder %s178, 15
      %s180 = scalar_select %p179, %s178, 15
      %s181 = smul.addr %s180, 4
      %s182 = scalar_lea.vmem %s2, %s181
      %s183 = smul.u32 8, %s15
      %p184 = scmp.lt.s32.totalorder %s15, 1
      %s185 = scalar_select %p184, %s15, 1
      %s186 = smul.addr %s185, 8
      %s187 = scalar_lea.vmem %s3, %s186
      %v189 = vld [vmem:[%s176] sm:$0xff]
      %v190 = vld [vmem:[%s176 + $0x8] sm:$0xff]
      %v191 = vld [vmem:[%s176 + $0x10] sm:$0xff]
      %v192 = vld [vmem:[%s176 + $0x18] sm:$0xff]
      %v193 = vld [vmem:[%s176 + $0x20] sm:$0xf]
      %v194 = vld [vmem:[%s176 + $0x24] sm:$0xff]
      %v195 = vld [vmem:[%s176 + $0x2c] sm:$0xff]
      %v196 = vld [vmem:[%s176 + $0x34] sm:$0xff]
      %v197 = vld [vmem:[%s176 + $0x3c] sm:$0xff]
      %v198 = vld [vmem:[%s176 + $0x44] sm:$0xf]
      %v199 = vld [vmem:[%s176 + $0x48] sm:$0xff]
      %v200 = vld [vmem:[%s176 + $0x50] sm:$0xff]
      %v201 = vld [vmem:[%s176 + $0x58] sm:$0xff]
      %v202 = vld [vmem:[%s176 + $0x60] sm:$0xff]
      %v203 = vld [vmem:[%s176 + $0x68] sm:$0xf]
      %v204 = vld [vmem:[%s176 + $0x6c] sm:$0xff]
      %v205 = vld [vmem:[%s176 + $0x74] sm:$0xff]
      %v206 = vld [vmem:[%s176 + $0x7c] sm:$0xff]
      %v207 = vld [vmem:[%s176 + $0x84] sm:$0xff]
      %v208 = vld [vmem:[%s176 + $0x8c] sm:$0xf]
      %v209 = vld [vmem:[%s176 + $0x90] sm:$0xff]
      %v210 = vld [vmem:[%s176 + $0x98] sm:$0xff]
      %v211 = vld [vmem:[%s176 + $0xa0] sm:$0xff]
      %v212 = vld [vmem:[%s176 + $0xa8] sm:$0xff]
      %v213 = vld [vmem:[%s176 + $0xb0] sm:$0xf]
      %v214 = vld [vmem:[%s176 + $0xb4] sm:$0xff]
      %v215 = vld [vmem:[%s176 + $0xbc] sm:$0xff]
      %v216 = vld [vmem:[%s176 + $0xc4] sm:$0xff]
      %v217 = vld [vmem:[%s176 + $0xcc] sm:$0xff]
      %v218 = vld [vmem:[%s176 + $0xd4] sm:$0xf]
      %v219 = vld [vmem:[%s176 + $0xd8] sm:$0xff]
      %v220 = vld [vmem:[%s176 + $0xe0] sm:$0xff]
      %v221 = vld [vmem:[%s176 + $0xe8] sm:$0xff]
      %v222 = vld [vmem:[%s176 + $0xf0] sm:$0xff]
      %v223 = vld [vmem:[%s176 + $0xf8] sm:$0xf]
      %v224 = vld [vmem:[%s176 + $0xfc] sm:$0xff]
      %v225 = vld [vmem:[%s176 + $0x104] sm:$0xff]
      %v226 = vld [vmem:[%s176 + $0x10c] sm:$0xff]
      %v227 = vld [vmem:[%s176 + $0x114] sm:$0xff]
      %v228 = vld [vmem:[%s176 + $0x11c] sm:$0xf]
      %v229 = vld [vmem:[%s1] sm:$0xf]
      %v230 = vld [vmem:[%s1 + $0x4] sm:$0xf]
      %v231 = vld [vmem:[%s1 + $0x8] sm:$0xf]
      %v232 = vld [vmem:[%s1 + $0xc] sm:$0xf]
      %v233 = vld [vmem:[%s1 + $0x10] sm:$0xf]
      %v234 = vld [vmem:[%s1 + $0x14] sm:$0xf]
      %v235 = vld [vmem:[%s1 + $0x18] sm:$0xf]
      %v236 = vld [vmem:[%s1 + $0x1c] sm:$0xf]
      %v237 = vld [vmem:[%s1 + $0x20] sm:$0xf]
      %v238 = vld [vmem:[%s1 + $0x24] sm:$0xf]
      %v239 = vld [vmem:[%s1 + $0x28] sm:$0xf]
      %v240 = vld [vmem:[%s1 + $0x2c] sm:$0xf]
      %v241 = vld [vmem:[%s1 + $0x30] sm:$0xf]
      %v242 = vld [vmem:[%s1 + $0x34] sm:$0xf]
      %v243 = vld [vmem:[%s1 + $0x38] sm:$0xf]
      %v244 = vld [vmem:[%s1 + $0x3c] sm:$0xf]
      %v245 = vld [vmem:[%s1 + $0x40] sm:$0xf]
      %v246 = vld [vmem:[%s1 + $0x44] sm:$0xf]
      %v247 = vld [vmem:[%s1 + $0x48] sm:$0xf]
      %v248 = vld [vmem:[%s1 + $0x4c] sm:$0xf]
      %v249 = vld [vmem:[%s1 + $0x50] sm:$0xf]
      %v250 = vld [vmem:[%s1 + $0x54] sm:$0xf]
      %v251 = vld [vmem:[%s1 + $0x58] sm:$0xf]
      %v252 = vld [vmem:[%s1 + $0x5c] sm:$0xf]
      %v253 = vld [vmem:[%s1 + $0x60] sm:$0xf]
      %v254 = vld [vmem:[%s1 + $0x64] sm:$0xf]
      %v255 = vld [vmem:[%s1 + $0x68] sm:$0xf]
      %v256 = vld [vmem:[%s1 + $0x6c] sm:$0xf]
      %v257 = vld [vmem:[%s1 + $0x70] sm:$0xf]
      %v258 = vld [vmem:[%s1 + $0x74] sm:$0xf]
      %v259 = vld [vmem:[%s1 + $0x78] sm:$0xf]
      %v260 = vld [vmem:[%s1 + $0x7c] sm:$0xf]
      %v261 = vld [vmem:[%s1 + $0x80] sm:$0xf]
      %v262 = vld [vmem:[%s1 + $0x84] sm:$0xf]
      %v263 = vld [vmem:[%s1 + $0x88] sm:$0xf]
      %v264 = vld [vmem:[%s1 + $0x8c] sm:$0xf]
      %v265 = vld [vmem:[%s1 + $0x90] sm:$0xf]
      %v266 = vld [vmem:[%s1 + $0x94] sm:$0xf]
      %v267 = vld [vmem:[%s1 + $0x98] sm:$0xf]
      %v268 = vld [vmem:[%s1 + $0x9c] sm:$0xf]
      %v269 = vld [vmem:[%s1 + $0xa0] sm:$0xf]
      %v270 = vld [vmem:[%s1 + $0xa4] sm:$0xf]
      %v271 = vld [vmem:[%s1 + $0xa8] sm:$0xf]
      %v272 = vld [vmem:[%s1 + $0xac] sm:$0xf]
      %v273 = vld [vmem:[%s1 + $0xb0] sm:$0xf]
      %v274 = vld [vmem:[%s1 + $0xb4] sm:$0xf]
      %v275 = vld [vmem:[%s1 + $0xb8] sm:$0xf]
      %v276 = vld [vmem:[%s1 + $0xbc] sm:$0xf]
      %v277 = vld [vmem:[%s1 + $0xc0] sm:$0xf]
      %v278 = vld [vmem:[%s1 + $0xc4] sm:$0xf]
      %v279 = vld [vmem:[%s1 + $0xc8] sm:$0xf]
      %v280 = vld [vmem:[%s1 + $0xcc] sm:$0xf]
      %v281 = vld [vmem:[%s1 + $0xd0] sm:$0xf]
      %v282 = vld [vmem:[%s1 + $0xd4] sm:$0xf]
      %v283 = vld [vmem:[%s1 + $0xd8] sm:$0xf]
      %v284 = vld [vmem:[%s1 + $0xdc] sm:$0xf]
      %v285 = vld [vmem:[%s1 + $0xe0] sm:$0xf]
      %v286 = vld [vmem:[%s1 + $0xe4] sm:$0xf]
      %v287 = vld [vmem:[%s1 + $0xe8] sm:$0xf]
      %v288 = vld [vmem:[%s1 + $0xec] sm:$0xf]
      %v289 = vld [vmem:[%s1 + $0xf0] sm:$0xf]
      %v290 = vld [vmem:[%s1 + $0xf4] sm:$0xf]
      %v291 = vld [vmem:[%s1 + $0xf8] sm:$0xf]
      %v292 = vld [vmem:[%s1 + $0xfc] sm:$0xf]
      %v293 = vld [vmem:[%s1 + $0x100] sm:$0xf]
      %v294 = vld [vmem:[%s1 + $0x104] sm:$0xf]
      %v295 = vld [vmem:[%s1 + $0x108] sm:$0xf]
      %v296 = vld [vmem:[%s1 + $0x10c] sm:$0xf]
      %v297 = vld [vmem:[%s1 + $0x110] sm:$0xf]
      %v298 = vld [vmem:[%s1 + $0x114] sm:$0xf]
      %v299 = vld [vmem:[%s1 + $0x118] sm:$0xf]
      %v300 = vld [vmem:[%s1 + $0x11c] sm:$0xf]
      %v301 = vld [vmem:[%s1 + $0x120] sm:$0xf]
      %v302 = vld [vmem:[%s1 + $0x124] sm:$0xf]
      %v303 = vld [vmem:[%s1 + $0x128] sm:$0xf]
      %v304 = vld [vmem:[%s1 + $0x12c] sm:$0xf]
      %v305 = vld [vmem:[%s1 + $0x130] sm:$0xf]
      %v306 = vld [vmem:[%s1 + $0x134] sm:$0xf]
      %v307 = vld [vmem:[%s1 + $0x138] sm:$0xf]
      %v308 = vld [vmem:[%s1 + $0x13c] sm:$0xf]
      %v309 = vld [vmem:[%s1 + $0x140] sm:$0xf]
      %v310 = vld [vmem:[%s1 + $0x144] sm:$0xf]
      %v311 = vld [vmem:[%s1 + $0x148] sm:$0xf]
      %v312 = vld [vmem:[%s1 + $0x14c] sm:$0xf]
      %v313 = vld [vmem:[%s1 + $0x150] sm:$0xf]
      %v314 = vld [vmem:[%s1 + $0x154] sm:$0xf]
      %v315 = vld [vmem:[%s1 + $0x158] sm:$0xf]
      %v316 = vld [vmem:[%s1 + $0x15c] sm:$0xf]
      %v317 = vld [vmem:[%s1 + $0x160] sm:$0xf]
      %v318 = vld [vmem:[%s1 + $0x164] sm:$0xf]
      %v319 = vld [vmem:[%s1 + $0x168] sm:$0xf]
      %v320 = vld [vmem:[%s1 + $0x16c] sm:$0xf]
      %v321 = vld [vmem:[%s1 + $0x170] sm:$0xf]
      %v322 = vld [vmem:[%s1 + $0x174] sm:$0xf]
      %v323 = vld [vmem:[%s1 + $0x178] sm:$0xf]
      %v324 = vld [vmem:[%s1 + $0x17c] sm:$0xf]
      %v325 = vld [vmem:[%s1 + $0x180] sm:$0xf]
      %v326 = vld [vmem:[%s1 + $0x184] sm:$0xf]
      %v327 = vld [vmem:[%s1 + $0x188] sm:$0xf]
      %v328 = vld [vmem:[%s1 + $0x18c] sm:$0xf]
      %v329 = vld [vmem:[%s1 + $0x190] sm:$0xf]
      %v330 = vld [vmem:[%s1 + $0x194] sm:$0xf]
      %v331 = vld [vmem:[%s1 + $0x198] sm:$0xf]
      %v332 = vld [vmem:[%s1 + $0x19c] sm:$0xf]
      %v333 = vld [vmem:[%s1 + $0x1a0] sm:$0xf]
      %v334 = vld [vmem:[%s1 + $0x1a4] sm:$0xf]
      %v335 = vld [vmem:[%s1 + $0x1a8] sm:$0xf]
      %v336 = vld [vmem:[%s1 + $0x1ac] sm:$0xf]
      %v337 = vld [vmem:[%s1 + $0x1b0] sm:$0xf]
      %v338 = vld [vmem:[%s1 + $0x1b4] sm:$0xf]
      %v339 = vld [vmem:[%s1 + $0x1b8] sm:$0xf]
      %v340 = vld [vmem:[%s1 + $0x1bc] sm:$0xf]
      %v341 = vld [vmem:[%s1 + $0x1c0] sm:$0xf]
      %v342 = vld [vmem:[%s1 + $0x1c4] sm:$0xf]
      %v343 = vld [vmem:[%s1 + $0x1c8] sm:$0xf]
      %v344 = vld [vmem:[%s1 + $0x1cc] sm:$0xf]
      %v345 = vld [vmem:[%s1 + $0x1d0] sm:$0xf]
      %v346 = vld [vmem:[%s1 + $0x1d4] sm:$0xf]
      %v347 = vld [vmem:[%s1 + $0x1d8] sm:$0xf]
      %v348 = vld [vmem:[%s1 + $0x1dc] sm:$0xf]
      %v349 = vld [vmem:[%s1 + $0x1e0] sm:$0xf]
      %v350 = vld [vmem:[%s1 + $0x1e4] sm:$0xf]
      %v351 = vld [vmem:[%s1 + $0x1e8] sm:$0xf]
      %v352 = vld [vmem:[%s1 + $0x1ec] sm:$0xf]
      %v353 = vld [vmem:[%s1 + $0x1f0] sm:$0xf]
      %v354 = vld [vmem:[%s1 + $0x1f4] sm:$0xf]
      %v355 = vld [vmem:[%s1 + $0x1f8] sm:$0xf]
      %v356 = vld [vmem:[%s1 + $0x1fc] sm:$0xf]
      %v357 = vld [vmem:[%s1 + $0x200] sm:$0xf]
      %v358 = vld [vmem:[%s1 + $0x204] sm:$0xf]
      %v359 = vld [vmem:[%s1 + $0x208] sm:$0xf]
      %v360 = vld [vmem:[%s1 + $0x20c] sm:$0xf]
      %v361 = vld [vmem:[%s1 + $0x210] sm:$0xf]
      %v362 = vld [vmem:[%s1 + $0x214] sm:$0xf]
      %v363 = vld [vmem:[%s1 + $0x218] sm:$0xf]
      %v364 = vld [vmem:[%s1 + $0x21c] sm:$0xf]
      %v365 = vld [vmem:[%s1 + $0x220] sm:$0xf]
      %v366 = vld [vmem:[%s1 + $0x224] sm:$0xf]
      %v367 = vld [vmem:[%s1 + $0x228] sm:$0xf]
      %v368 = vld [vmem:[%s1 + $0x22c] sm:$0xf]
      %v369 = vld [vmem:[%s1 + $0x230] sm:$0xf]
      %v370 = vld [vmem:[%s1 + $0x234] sm:$0xf]
      %v371 = vld [vmem:[%s1 + $0x238] sm:$0xf]
      %v372 = vld [vmem:[%s1 + $0x23c] sm:$0xf]
      %v413 = vunpack.c.l.b16 %v189
      %v414 = vunpack.c.h.b16 %v189
      %v415 = vunpack.c.l.b16 %v190
      %v416 = vunpack.c.h.b16 %v190
      %v417 = vunpack.c.l.b16 %v191
      %v418 = vunpack.c.h.b16 %v191
      %v419 = vunpack.c.l.b16 %v192
      %v420 = vunpack.c.h.b16 %v192
      %v421 = vunpack.c.l.b16 %v193
      %v422 = vunpack.c.l.b16 %v194
      %v423 = vunpack.c.h.b16 %v194
      %v424 = vunpack.c.l.b16 %v195
      %v425 = vunpack.c.h.b16 %v195
      %v426 = vunpack.c.l.b16 %v196
      %v427 = vunpack.c.h.b16 %v196
      %v428 = vunpack.c.l.b16 %v197
      %v429 = vunpack.c.h.b16 %v197
      %v430 = vunpack.c.l.b16 %v198
      %v431 = vunpack.c.l.b16 %v199
      %v432 = vunpack.c.h.b16 %v199
      %v433 = vunpack.c.l.b16 %v200
      %v434 = vunpack.c.h.b16 %v200
      %v435 = vunpack.c.l.b16 %v201
      %v436 = vunpack.c.h.b16 %v201
      %v437 = vunpack.c.l.b16 %v202
      %v438 = vunpack.c.h.b16 %v202
      %v439 = vunpack.c.l.b16 %v203
      %v440 = vunpack.c.l.b16 %v204
      %v441 = vunpack.c.h.b16 %v204
      %v442 = vunpack.c.l.b16 %v205
      %v443 = vunpack.c.h.b16 %v205
      %v444 = vunpack.c.l.b16 %v206
      %v445 = vunpack.c.h.b16 %v206
      %v446 = vunpack.c.l.b16 %v207
      %v447 = vunpack.c.h.b16 %v207
      %v448 = vunpack.c.l.b16 %v208
      %v449 = vunpack.c.l.b16 %v209
      %v450 = vunpack.c.h.b16 %v209
      %v451 = vunpack.c.l.b16 %v210
      %v452 = vunpack.c.h.b16 %v210
      %v453 = vunpack.c.l.b16 %v211
      %v454 = vunpack.c.h.b16 %v211
      %v455 = vunpack.c.l.b16 %v212
      %v456 = vunpack.c.h.b16 %v212
      %v457 = vunpack.c.l.b16 %v213
      %v458 = vunpack.c.l.b16 %v214
      %v459 = vunpack.c.h.b16 %v214
      %v460 = vunpack.c.l.b16 %v215
      %v461 = vunpack.c.h.b16 %v215
      %v462 = vunpack.c.l.b16 %v216
      %v463 = vunpack.c.h.b16 %v216
      %v464 = vunpack.c.l.b16 %v217
      %v465 = vunpack.c.h.b16 %v217
      %v466 = vunpack.c.l.b16 %v218
      %v467 = vunpack.c.l.b16 %v219
      %v468 = vunpack.c.h.b16 %v219
      %v469 = vunpack.c.l.b16 %v220
      %v470 = vunpack.c.h.b16 %v220
      %v471 = vunpack.c.l.b16 %v221
      %v472 = vunpack.c.h.b16 %v221
      %v473 = vunpack.c.l.b16 %v222
      %v474 = vunpack.c.h.b16 %v222
      %v475 = vunpack.c.l.b16 %v223
      %v476 = vunpack.c.l.b16 %v224
      %v477 = vunpack.c.h.b16 %v224
      %v478 = vunpack.c.l.b16 %v225
      %v479 = vunpack.c.h.b16 %v225
      %v480 = vunpack.c.l.b16 %v226
      %v481 = vunpack.c.h.b16 %v226
      %v482 = vunpack.c.l.b16 %v227
      %v483 = vunpack.c.h.b16 %v227
      %v484 = vunpack.c.l.b16 %v228
      %v485 = vpack.c.b16 %v422, %v413
      %v486 = vpack.c.b16 %v423, %v414
      %v487 = vpack.c.b16 %v424, %v415
      %v488 = vpack.c.b16 %v425, %v416
      %v489 = vpack.c.b16 %v426, %v417
      %v490 = vpack.c.b16 %v427, %v418
      %v491 = vpack.c.b16 %v428, %v419
      %v492 = vpack.c.b16 %v429, %v420
      %v493 = vpack.c.b16 %v430, %v421
      %v494 = vpack.c.b16 %v440, %v431
      %v495 = vpack.c.b16 %v441, %v432
      %v496 = vpack.c.b16 %v442, %v433
      %v497 = vpack.c.b16 %v443, %v434
      %v498 = vpack.c.b16 %v444, %v435
      %v499 = vpack.c.b16 %v445, %v436
      %v500 = vpack.c.b16 %v446, %v437
      %v501 = vpack.c.b16 %v447, %v438
      %v502 = vpack.c.b16 %v448, %v439
      %v503 = vpack.c.b16 %v458, %v449
      %v504 = vpack.c.b16 %v459, %v450
      %v505 = vpack.c.b16 %v460, %v451
      %v506 = vpack.c.b16 %v461, %v452
      %v507 = vpack.c.b16 %v462, %v453
      %v508 = vpack.c.b16 %v463, %v454
      %v509 = vpack.c.b16 %v464, %v455
      %v510 = vpack.c.b16 %v465, %v456
      %v511 = vpack.c.b16 %v466, %v457
      %v512 = vpack.c.b16 %v476, %v467
      %v513 = vpack.c.b16 %v477, %v468
      %v514 = vpack.c.b16 %v478, %v469
      %v515 = vpack.c.b16 %v479, %v470
      %v516 = vpack.c.b16 %v480, %v471
      %v517 = vpack.c.b16 %v481, %v472
      %v518 = vpack.c.b16 %v482, %v473
      %v519 = vpack.c.b16 %v483, %v474
      %v520 = vpack.c.b16 %v484, %v475
      %v701 = vunpack.c.l.b16 %v229
      %v702 = vunpack.c.l.b16 %v230
      %v703 = vunpack.c.l.b16 %v231
      %v704 = vunpack.c.l.b16 %v232
      %v705 = vunpack.c.l.b16 %v233
      %v706 = vunpack.c.l.b16 %v234
      %v707 = vunpack.c.l.b16 %v235
      %v708 = vunpack.c.l.b16 %v236
      %v709 = vunpack.c.l.b16 %v237
      %v710 = vunpack.c.l.b16 %v238
      %v711 = vunpack.c.l.b16 %v239
      %v712 = vunpack.c.l.b16 %v240
      %v713 = vunpack.c.l.b16 %v241
      %v714 = vunpack.c.l.b16 %v242
      %v715 = vunpack.c.l.b16 %v243
      %v716 = vunpack.c.l.b16 %v244
      %v717 = vunpack.c.l.b16 %v245
      %v718 = vunpack.c.l.b16 %v246
      %v719 = vunpack.c.l.b16 %v247
      %v720 = vunpack.c.l.b16 %v248
      %v721 = vunpack.c.l.b16 %v249
      %v722 = vunpack.c.l.b16 %v250
      %v723 = vunpack.c.l.b16 %v251
      %v724 = vunpack.c.l.b16 %v252
      %v725 = vunpack.c.l.b16 %v253
      %v726 = vunpack.c.l.b16 %v254
      %v727 = vunpack.c.l.b16 %v255
      %v728 = vunpack.c.l.b16 %v256
      %v729 = vunpack.c.l.b16 %v257
      %v730 = vunpack.c.l.b16 %v258
      %v731 = vunpack.c.l.b16 %v259
      %v732 = vunpack.c.l.b16 %v260
      %v733 = vunpack.c.l.b16 %v261
      %v734 = vunpack.c.l.b16 %v262
      %v735 = vunpack.c.l.b16 %v263
      %v736 = vunpack.c.l.b16 %v264
      %v737 = vunpack.c.l.b16 %v265
      %v738 = vunpack.c.l.b16 %v266
      %v739 = vunpack.c.l.b16 %v267
      %v740 = vunpack.c.l.b16 %v268
      %v741 = vunpack.c.l.b16 %v269
      %v742 = vunpack.c.l.b16 %v270
      %v743 = vunpack.c.l.b16 %v271
      %v744 = vunpack.c.l.b16 %v272
      %v745 = vunpack.c.l.b16 %v273
      %v746 = vunpack.c.l.b16 %v274
      %v747 = vunpack.c.l.b16 %v275
      %v748 = vunpack.c.l.b16 %v276
      %v749 = vunpack.c.l.b16 %v277
      %v750 = vunpack.c.l.b16 %v278
      %v751 = vunpack.c.l.b16 %v279
      %v752 = vunpack.c.l.b16 %v280
      %v753 = vunpack.c.l.b16 %v281
      %v754 = vunpack.c.l.b16 %v282
      %v755 = vunpack.c.l.b16 %v283
      %v756 = vunpack.c.l.b16 %v284
      %v757 = vunpack.c.l.b16 %v285
      %v758 = vunpack.c.l.b16 %v286
      %v759 = vunpack.c.l.b16 %v287
      %v760 = vunpack.c.l.b16 %v288
      %v761 = vunpack.c.l.b16 %v289
      %v762 = vunpack.c.l.b16 %v290
      %v763 = vunpack.c.l.b16 %v291
      %v764 = vunpack.c.l.b16 %v292
      %v765 = vunpack.c.l.b16 %v293
      %v766 = vunpack.c.l.b16 %v294
      %v767 = vunpack.c.l.b16 %v295
      %v768 = vunpack.c.l.b16 %v296
      %v769 = vunpack.c.l.b16 %v297
      %v770 = vunpack.c.l.b16 %v298
      %v771 = vunpack.c.l.b16 %v299
      %v772 = vunpack.c.l.b16 %v300
      %v773 = vunpack.c.l.b16 %v301
      %v774 = vunpack.c.l.b16 %v302
      %v775 = vunpack.c.l.b16 %v303
      %v776 = vunpack.c.l.b16 %v304
      %v777 = vunpack.c.l.b16 %v305
      %v778 = vunpack.c.l.b16 %v306
      %v779 = vunpack.c.l.b16 %v307
      %v780 = vunpack.c.l.b16 %v308
      %v781 = vunpack.c.l.b16 %v309
      %v782 = vunpack.c.l.b16 %v310
      %v783 = vunpack.c.l.b16 %v311
      %v784 = vunpack.c.l.b16 %v312
      %v785 = vunpack.c.l.b16 %v313
      %v786 = vunpack.c.l.b16 %v314
      %v787 = vunpack.c.l.b16 %v315
      %v788 = vunpack.c.l.b16 %v316
      %v789 = vunpack.c.l.b16 %v317
      %v790 = vunpack.c.l.b16 %v318
      %v791 = vunpack.c.l.b16 %v319
      %v792 = vunpack.c.l.b16 %v320
      %v793 = vunpack.c.l.b16 %v321
      %v794 = vunpack.c.l.b16 %v322
      %v795 = vunpack.c.l.b16 %v323
      %v796 = vunpack.c.l.b16 %v324
      %v797 = vunpack.c.l.b16 %v325
      %v798 = vunpack.c.l.b16 %v326
      %v799 = vunpack.c.l.b16 %v327
      %v800 = vunpack.c.l.b16 %v328
      %v801 = vunpack.c.l.b16 %v329
      %v802 = vunpack.c.l.b16 %v330
      %v803 = vunpack.c.l.b16 %v331
      %v804 = vunpack.c.l.b16 %v332
      %v805 = vunpack.c.l.b16 %v333
      %v806 = vunpack.c.l.b16 %v334
      %v807 = vunpack.c.l.b16 %v335
      %v808 = vunpack.c.l.b16 %v336
      %v809 = vunpack.c.l.b16 %v337
      %v810 = vunpack.c.l.b16 %v338
      %v811 = vunpack.c.l.b16 %v339
      %v812 = vunpack.c.l.b16 %v340
      %v813 = vunpack.c.l.b16 %v341
      %v814 = vunpack.c.l.b16 %v342
      %v815 = vunpack.c.l.b16 %v343
      %v816 = vunpack.c.l.b16 %v344
      %v817 = vunpack.c.l.b16 %v345
      %v818 = vunpack.c.l.b16 %v346
      %v819 = vunpack.c.l.b16 %v347
      %v820 = vunpack.c.l.b16 %v348
      %v821 = vunpack.c.l.b16 %v349
      %v822 = vunpack.c.l.b16 %v350
      %v823 = vunpack.c.l.b16 %v351
      %v824 = vunpack.c.l.b16 %v352
      %v825 = vunpack.c.l.b16 %v353
      %v826 = vunpack.c.l.b16 %v354
      %v827 = vunpack.c.l.b16 %v355
      %v828 = vunpack.c.l.b16 %v356
      %v829 = vunpack.c.l.b16 %v357
      %v830 = vunpack.c.l.b16 %v358
      %v831 = vunpack.c.l.b16 %v359
      %v832 = vunpack.c.l.b16 %v360
      %v833 = vunpack.c.l.b16 %v361
      %v834 = vunpack.c.l.b16 %v362
      %v835 = vunpack.c.l.b16 %v363
      %v836 = vunpack.c.l.b16 %v364
      %v837 = vunpack.c.l.b16 %v365
      %v838 = vunpack.c.l.b16 %v366
      %v839 = vunpack.c.l.b16 %v367
      %v840 = vunpack.c.l.b16 %v368
      %v841 = vunpack.c.l.b16 %v369
      %v842 = vunpack.c.l.b16 %v370
      %v843 = vunpack.c.l.b16 %v371
      %v844 = vunpack.c.l.b16 %v372
      %v845 = vpack.c.b16 %v702, %v701
      %v846 = vpack.c.b16 %v704, %v703
      %v847 = vpack.c.b16 %v706, %v705
      %v848 = vpack.c.b16 %v708, %v707
      %v849 = vpack.c.b16 %v710, %v709
      %v850 = vpack.c.b16 %v712, %v711
      %v851 = vpack.c.b16 %v714, %v713
      %v852 = vpack.c.b16 %v716, %v715
      %v853 = vpack.c.b16 %v718, %v717
      %v854 = vpack.c.b16 %v720, %v719
      %v855 = vpack.c.b16 %v722, %v721
      %v856 = vpack.c.b16 %v724, %v723
      %v857 = vpack.c.b16 %v726, %v725
      %v858 = vpack.c.b16 %v728, %v727
      %v859 = vpack.c.b16 %v730, %v729
      %v860 = vpack.c.b16 %v732, %v731
      %v861 = vpack.c.b16 %v734, %v733
      %v862 = vpack.c.b16 %v736, %v735
      %v863 = vpack.c.b16 %v738, %v737
      %v864 = vpack.c.b16 %v740, %v739
      %v865 = vpack.c.b16 %v742, %v741
      %v866 = vpack.c.b16 %v744, %v743
      %v867 = vpack.c.b16 %v746, %v745
      %v868 = vpack.c.b16 %v748, %v747
      %v869 = vpack.c.b16 %v750, %v749
      %v870 = vpack.c.b16 %v752, %v751
      %v871 = vpack.c.b16 %v754, %v753
      %v872 = vpack.c.b16 %v756, %v755
      %v873 = vpack.c.b16 %v758, %v757
      %v874 = vpack.c.b16 %v760, %v759
      %v875 = vpack.c.b16 %v762, %v761
      %v876 = vpack.c.b16 %v764, %v763
      %v877 = vpack.c.b16 %v766, %v765
      %v878 = vpack.c.b16 %v768, %v767
      %v879 = vpack.c.b16 %v770, %v769
      %v880 = vpack.c.b16 %v772, %v771
      %v881 = vpack.c.b16 %v774, %v773
      %v882 = vpack.c.b16 %v776, %v775
      %v883 = vpack.c.b16 %v778, %v777
      %v884 = vpack.c.b16 %v780, %v779
      %v885 = vpack.c.b16 %v782, %v781
      %v886 = vpack.c.b16 %v784, %v783
      %v887 = vpack.c.b16 %v786, %v785
      %v888 = vpack.c.b16 %v788, %v787
      %v889 = vpack.c.b16 %v790, %v789
      %v890 = vpack.c.b16 %v792, %v791
      %v891 = vpack.c.b16 %v794, %v793
      %v892 = vpack.c.b16 %v796, %v795
      %v893 = vpack.c.b16 %v798, %v797
      %v894 = vpack.c.b16 %v800, %v799
      %v895 = vpack.c.b16 %v802, %v801
      %v896 = vpack.c.b16 %v804, %v803
      %v897 = vpack.c.b16 %v806, %v805
      %v898 = vpack.c.b16 %v808, %v807
      %v899 = vpack.c.b16 %v810, %v809
      %v900 = vpack.c.b16 %v812, %v811
      %v901 = vpack.c.b16 %v814, %v813
      %v902 = vpack.c.b16 %v816, %v815
      %v903 = vpack.c.b16 %v818, %v817
      %v904 = vpack.c.b16 %v820, %v819
      %v905 = vpack.c.b16 %v822, %v821
      %v906 = vpack.c.b16 %v824, %v823
      %v907 = vpack.c.b16 %v826, %v825
      %v908 = vpack.c.b16 %v828, %v827
      %v909 = vpack.c.b16 %v830, %v829
      %v910 = vpack.c.b16 %v832, %v831
      %v911 = vpack.c.b16 %v834, %v833
      %v912 = vpack.c.b16 %v836, %v835
      %v913 = vpack.c.b16 %v838, %v837
      %v914 = vpack.c.b16 %v840, %v839
      %v915 = vpack.c.b16 %v842, %v841
      %v916 = vpack.c.b16 %v844, %v843
      %989 = vmatprep.subr.bf16.mxu0 0
      %990 = vmatpush1.bf16.msra.mxu0 %v845
      %991 = vmatprep.subr.bf16.mxu0 0
      %992 = vmatpush1.bf16.msra.mxu0 %v846
      %993 = vmatprep.subr.bf16.mxu0 0
      %994 = vmatpush1.bf16.msra.mxu0 %v847
      %995 = vmatprep.subr.bf16.mxu0 0
      %996 = vmatpush1.bf16.msra.mxu0 %v848
      %997 = vmatprep.subr.bf16.mxu0 0
      %998 = vmatpush1.bf16.msra.mxu0 %v849
      %999 = vmatprep.subr.bf16.mxu0 0
      %1000 = vmatpush1.bf16.msra.mxu0 %v850
      %1001 = vmatprep.subr.bf16.mxu0 0
      %1002 = vmatpush1.bf16.msra.mxu0 %v851
      %1003 = vmatprep.subr.bf16.mxu0 0
      %1004 = vmatpush1.bf16.msra.mxu0 %v852
      %1005 = vmatprep.subr.bf16.mxu0 0
      %1006 = vmatpush1.bf16.msra.mxu0 %v853
      %1007 = vmatprep.subr.bf16.mxu0 0
      %1008 = vmatpush1.bf16.msra.mxu0 %v854
      %1009 = vmatprep.subr.bf16.mxu0 0
      %1010 = vmatpush1.bf16.msra.mxu0 %v855
      %1011 = vmatprep.subr.bf16.mxu0 0
      %1012 = vmatpush1.bf16.msra.mxu0 %v856
      %1013 = vmatprep.subr.bf16.mxu0 0
      %1014 = vmatpush1.bf16.msra.mxu0 %v857
      %1015 = vmatprep.subr.bf16.mxu0 0
      %1016 = vmatpush1.bf16.msra.mxu0 %v858
      %1017 = vmatprep.subr.bf16.mxu0 0
      %1018 = vmatpush1.bf16.msra.mxu0 %v859
      %1019 = vmatprep.subr.bf16.mxu0 0
      %1020 = vmatpush1.bf16.msra.mxu0 %v860
      %1021 = vmatprep.mubr.bf16.mxu0 %v486
      %1022 = vmatmul.mubr.bf16.gmra.mrb[0].mxu0 %v485
      %v1023 = vpop.f32.mrb[0].mxu0
      %v1024 = vadd.f32 0.0, %v1023
      %v1025 = vpop.f32.mrb[0].mxu0
      %v1026 = vpop.f32.mrb[0].mxu0
      %v1027 = vadd.f32 0.0, %v1026
      %v1028 = vpop.f32.mrb[0].mxu0
      %1029 = vmatprep.mubr.bf16.mxu0 %v495
      %1030 = vmatmul.mubr.bf16.gmra.mrb[0].mxu0 %v494
      %v1031 = vpop.f32.mrb[0].mxu0
      %v1032 = vadd.f32 0.0, %v1031
      %v1033 = vpop.f32.mrb[0].mxu0
      %v1034 = vpop.f32.mrb[0].mxu0
      %v1035 = vadd.f32 0.0, %v1034
      %v1036 = vpop.f32.mrb[0].mxu0
      %1037 = vmatprep.mubr.bf16.mxu0 %v504
      %1038 = vmatmul.mubr.bf16.gmra.mrb[0].mxu0 %v503
      %v1039 = vpop.f32.mrb[0].mxu0
      %v1040 = vadd.f32 0.0, %v1039
      %v1041 = vpop.f32.mrb[0].mxu0
      %v1042 = vpop.f32.mrb[0].mxu0
      %v1043 = vadd.f32 0.0, %v1042
      %v1044 = vpop.f32.mrb[0].mxu0
      %1045 = vmatprep.mubr.bf16.mxu0 %v513
      %1046 = vmatmul.mubr.bf16.gmra.mrb[0].mxu0 %v512
      %v1047 = vpop.f32.mrb[0].mxu0
      %v1048 = vadd.f32 0.0, %v1047
      %v1049 = vpop.f32.mrb[0].mxu0
      %v1050 = vpop.f32.mrb[0].mxu0
      %v1051 = vadd.f32 0.0, %v1050
      %v1052 = vpop.f32.mrb[0].mxu0
      %1053 = vdwg.mxu0
      %1054 = vmatprep.subr.bf16.mxu0 0
      %1055 = vmatpush1.bf16.msra.mxu0 %v861
      %1056 = vmatprep.subr.bf16.mxu0 0
      %1057 = vmatpush1.bf16.msra.mxu0 %v862
      %1058 = vmatprep.subr.bf16.mxu0 0
      %1059 = vmatpush1.bf16.msra.mxu0 %v863
      %1060 = vmatprep.subr.bf16.mxu0 0
      %1061 = vmatpush1.bf16.msra.mxu0 %v864
      %1062 = vmatprep.subr.bf16.mxu0 0
      %1063 = vmatpush1.bf16.msra.mxu0 %v865
      %1064 = vmatprep.subr.bf16.mxu0 0
      %1065 = vmatpush1.bf16.msra.mxu0 %v866
      %1066 = vmatprep.subr.bf16.mxu0 0
      %1067 = vmatpush1.bf16.msra.mxu0 %v867
      %1068 = vmatprep.subr.bf16.mxu0 0
      %1069 = vmatpush1.bf16.msra.mxu0 %v868
      %1070 = vmatprep.subr.bf16.mxu0 0
      %1071 = vmatpush1.bf16.msra.mxu0 %v869
      %1072 = vmatprep.subr.bf16.mxu0 0
      %1073 = vmatpush1.bf16.msra.mxu0 %v870
      %1074 = vmatprep.subr.bf16.mxu0 0
      %1075 = vmatpush1.bf16.msra.mxu0 %v871
      %1076 = vmatprep.subr.bf16.mxu0 0
      %1077 = vmatpush1.bf16.msra.mxu0 %v872
      %1078 = vmatprep.subr.bf16.mxu0 0
      %1079 = vmatpush1.bf16.msra.mxu0 %v873
      %1080 = vmatprep.subr.bf16.mxu0 0
      %1081 = vmatpush1.bf16.msra.mxu0 %v874
      %1082 = vmatprep.subr.bf16.mxu0 0
      %1083 = vmatpush1.bf16.msra.mxu0 %v875
      %1084 = vmatprep.subr.bf16.mxu0 0
      %1085 = vmatpush1.bf16.msra.mxu0 %v876
      %1086 = vmatprep.mubr.bf16.mxu0 %v488
      %1087 = vmatmul.mubr.bf16.gmra.mrb[0].mxu0 %v487
      %v1088 = vpop.f32.mrb[0].mxu0
      %v1089 = vadd.f32 %v1024, %v1088
      %v1090 = vpop.f32.mrb[0].mxu0
      %v1091 = vpop.f32.mrb[0].mxu0
      %v1092 = vadd.f32 %v1027, %v1091
      %v1093 = vpop.f32.mrb[0].mxu0
      %1094 = vmatprep.mubr.bf16.mxu0 %v497
      %1095 = vmatmul.mubr.bf16.gmra.mrb[0].mxu0 %v496
      %v1096 = vpop.f32.mrb[0].mxu0
      %v1097 = vadd.f32 %v1032, %v1096
      %v1098 = vpop.f32.mrb[0].mxu0
      %v1099 = vpop.f32.mrb[0].mxu0
      %v1100 = vadd.f32 %v1035, %v1099
      %v1101 = vpop.f32.mrb[0].mxu0
      %1102 = vmatprep.mubr.bf16.mxu0 %v506
      %1103 = vmatmul.mubr.bf16.gmra.mrb[0].mxu0 %v505
      %v1104 = vpop.f32.mrb[0].mxu0
      %v1105 = vadd.f32 %v1040, %v1104
      %v1106 = vpop.f32.mrb[0].mxu0
      %v1107 = vpop.f32.mrb[0].mxu0
      %v1108 = vadd.f32 %v1043, %v1107
      %v1109 = vpop.f32.mrb[0].mxu0
      %1110 = vmatprep.mubr.bf16.mxu0 %v515
      %1111 = vmatmul.mubr.bf16.gmra.mrb[0].mxu0 %v514
      %v1112 = vpop.f32.mrb[0].mxu0
      %v1113 = vadd.f32 %v1048, %v1112
      %v1114 = vpop.f32.mrb[0].mxu0
      %v1115 = vpop.f32.mrb[0].mxu0
      %v1116 = vadd.f32 %v1051, %v1115
      %v1117 = vpop.f32.mrb[0].mxu0
      %1118 = vdwg.mxu0
      %1119 = vmatprep.subr.bf16.mxu0 0
      %1120 = vmatpush1.bf16.msra.mxu0 %v877
      %1121 = vmatprep.subr.bf16.mxu0 0
      %1122 = vmatpush1.bf16.msra.mxu0 %v878
      %1123 = vmatprep.subr.bf16.mxu0 0
      %1124 = vmatpush1.bf16.msra.mxu0 %v879
      %1125 = vmatprep.subr.bf16.mxu0 0
      %1126 = vmatpush1.bf16.msra.mxu0 %v880
      %1127 = vmatprep.subr.bf16.mxu0 0
      %1128 = vmatpush1.bf16.msra.mxu0 %v881
      %1129 = vmatprep.subr.bf16.mxu0 0
      %1130 = vmatpush1.bf16.msra.mxu0 %v882
      %1131 = vmatprep.subr.bf16.mxu0 0
      %1132 = vmatpush1.bf16.msra.mxu0 %v883
      %1133 = vmatprep.subr.bf16.mxu0 0
      %1134 = vmatpush1.bf16.msra.mxu0 %v884
      %1135 = vmatprep.subr.bf16.mxu0 0
      %1136 = vmatpush1.bf16.msra.mxu0 %v885
      %1137 = vmatprep.subr.bf16.mxu0 0
      %1138 = vmatpush1.bf16.msra.mxu0 %v886
      %1139 = vmatprep.subr.bf16.mxu0 0
      %1140 = vmatpush1.bf16.msra.mxu0 %v887
      %1141 = vmatprep.subr.bf16.mxu0 0
      %1142 = vmatpush1.bf16.msra.mxu0 %v888
      %1143 = vmatprep.subr.bf16.mxu0 0
      %1144 = vmatpush1.bf16.msra.mxu0 %v889
      %1145 = vmatprep.subr.bf16.mxu0 0
      %1146 = vmatpush1.bf16.msra.mxu0 %v890
      %1147 = vmatprep.subr.bf16.mxu0 0
      %1148 = vmatpush1.bf16.msra.mxu0 %v891
      %1149 = vmatprep.subr.bf16.mxu0 0
      %1150 = vmatpush1.bf16.msra.mxu0 %v892
      %1151 = vmatprep.mubr.bf16.mxu0 %v490
      %1152 = vmatmul.mubr.bf16.gmra.mrb[0].mxu0 %v489
      %v1153 = vpop.f32.mrb[0].mxu0
      %v1154 = vadd.f32 %v1089, %v1153
      %v1155 = vpop.f32.mrb[0].mxu0
      %v1156 = vpop.f32.mrb[0].mxu0
      %v1157 = vadd.f32 %v1092, %v1156
      %v1158 = vpop.f32.mrb[0].mxu0
      %1159 = vmatprep.mubr.bf16.mxu0 %v499
      %1160 = vmatmul.mubr.bf16.gmra.mrb[0].mxu0 %v498
      %v1161 = vpop.f32.mrb[0].mxu0
      %v1162 = vadd.f32 %v1097, %v1161
      %v1163 = vpop.f32.mrb[0].mxu0
      %v1164 = vpop.f32.mrb[0].mxu0
      %v1165 = vadd.f32 %v1100, %v1164
      %v1166 = vpop.f32.mrb[0].mxu0
      %1167 = vmatprep.mubr.bf16.mxu0 %v508
      %1168 = vmatmul.mubr.bf16.gmra.mrb[0].mxu0 %v507
      %v1169 = vpop.f32.mrb[0].mxu0
      %v1170 = vadd.f32 %v1105, %v1169
      %v1171 = vpop.f32.mrb[0].mxu0
      %v1172 = vpop.f32.mrb[0].mxu0
      %v1173 = vadd.f32 %v1108, %v1172
      %v1174 = vpop.f32.mrb[0].mxu0
      %1175 = vmatprep.mubr.bf16.mxu0 %v517
      %1176 = vmatmul.mubr.bf16.gmra.mrb[0].mxu0 %v516
      %v1177 = vpop.f32.mrb[0].mxu0
      %v1178 = vadd.f32 %v1113, %v1177
      %v1179 = vpop.f32.mrb[0].mxu0
      %v1180 = vpop.f32.mrb[0].mxu0
      %v1181 = vadd.f32 %v1116, %v1180
      %v1182 = vpop.f32.mrb[0].mxu0
      %1183 = vdwg.mxu0
      %1184 = vmatprep.subr.bf16.mxu0 0
      %1185 = vmatpush1.bf16.msra.mxu0 %v893
      %1186 = vmatprep.subr.bf16.mxu0 0
      %1187 = vmatpush1.bf16.msra.mxu0 %v894
      %1188 = vmatprep.subr.bf16.mxu0 0
      %1189 = vmatpush1.bf16.msra.mxu0 %v895
      %1190 = vmatprep.subr.bf16.mxu0 0
      %1191 = vmatpush1.bf16.msra.mxu0 %v896
      %1192 = vmatprep.subr.bf16.mxu0 0
      %1193 = vmatpush1.bf16.msra.mxu0 %v897
      %1194 = vmatprep.subr.bf16.mxu0 0
      %1195 = vmatpush1.bf16.msra.mxu0 %v898
      %1196 = vmatprep.subr.bf16.mxu0 0
      %1197 = vmatpush1.bf16.msra.mxu0 %v899
      %1198 = vmatprep.subr.bf16.mxu0 0
      %1199 = vmatpush1.bf16.msra.mxu0 %v900
      %1200 = vmatprep.subr.bf16.mxu0 0
      %1201 = vmatpush1.bf16.msra.mxu0 %v901
      %1202 = vmatprep.subr.bf16.mxu0 0
      %1203 = vmatpush1.bf16.msra.mxu0 %v902
      %1204 = vmatprep.subr.bf16.mxu0 0
      %1205 = vmatpush1.bf16.msra.mxu0 %v903
      %1206 = vmatprep.subr.bf16.mxu0 0
      %1207 = vmatpush1.bf16.msra.mxu0 %v904
      %1208 = vmatprep.subr.bf16.mxu0 0
      %1209 = vmatpush1.bf16.msra.mxu0 %v905
      %1210 = vmatprep.subr.bf16.mxu0 0
      %1211 = vmatpush1.bf16.msra.mxu0 %v906
      %1212 = vmatprep.subr.bf16.mxu0 0
      %1213 = vmatpush1.bf16.msra.mxu0 %v907
      %1214 = vmatprep.subr.bf16.mxu0 0
      %1215 = vmatpush1.bf16.msra.mxu0 %v908
      %1216 = vmatprep.mubr.bf16.mxu0 %v492
      %1217 = vmatmul.mubr.bf16.gmra.mrb[0].mxu0 %v491
      %v1218 = vpop.f32.mrb[0].mxu0
      %v1219 = vadd.f32 %v1154, %v1218
      %v1220 = vpop.f32.mrb[0].mxu0
      %v1221 = vpop.f32.mrb[0].mxu0
      %v1222 = vadd.f32 %v1157, %v1221
      %v1223 = vpop.f32.mrb[0].mxu0
      %1224 = vmatprep.mubr.bf16.mxu0 %v501
      %1225 = vmatmul.mubr.bf16.gmra.mrb[0].mxu0 %v500
      %v1226 = vpop.f32.mrb[0].mxu0
      %v1227 = vadd.f32 %v1162, %v1226
      %v1228 = vpop.f32.mrb[0].mxu0
      %v1229 = vpop.f32.mrb[0].mxu0
      %v1230 = vadd.f32 %v1165, %v1229
      %v1231 = vpop.f32.mrb[0].mxu0
      %1232 = vmatprep.mubr.bf16.mxu0 %v510
      %1233 = vmatmul.mubr.bf16.gmra.mrb[0].mxu0 %v509
      %v1234 = vpop.f32.mrb[0].mxu0
      %v1235 = vadd.f32 %v1170, %v1234
      %v1236 = vpop.f32.mrb[0].mxu0
      %v1237 = vpop.f32.mrb[0].mxu0
      %v1238 = vadd.f32 %v1173, %v1237
      %v1239 = vpop.f32.mrb[0].mxu0
      %1240 = vmatprep.mubr.bf16.mxu0 %v519
      %1241 = vmatmul.mubr.bf16.gmra.mrb[0].mxu0 %v518
      %v1242 = vpop.f32.mrb[0].mxu0
      %v1243 = vadd.f32 %v1178, %v1242
      %v1244 = vpop.f32.mrb[0].mxu0
      %v1245 = vpop.f32.mrb[0].mxu0
      %v1246 = vadd.f32 %v1181, %v1245
      %v1247 = vpop.f32.mrb[0].mxu0
      %1248 = vdwg.mxu0
      %1249 = vmatprep.subr.bf16.mxu0 0
      %1250 = vmatpush1.bf16.msra.mxu0 %v909
      %1251 = vmatprep.subr.bf16.mxu0 0
      %1252 = vmatpush1.bf16.msra.mxu0 %v910
      %1253 = vmatprep.subr.bf16.mxu0 0
      %1254 = vmatpush1.bf16.msra.mxu0 %v911
      %1255 = vmatprep.subr.bf16.mxu0 0
      %1256 = vmatpush1.bf16.msra.mxu0 %v912
      %1257 = vmatprep.subr.bf16.mxu0 0
      %1258 = vmatpush1.bf16.msra.mxu0 %v913
      %1259 = vmatprep.subr.bf16.mxu0 0
      %1260 = vmatpush1.bf16.msra.mxu0 %v914
      %1261 = vmatprep.subr.bf16.mxu0 0
      %1262 = vmatpush1.bf16.msra.mxu0 %v915
      %1263 = vmatprep.subr.bf16.mxu0 0
      %1264 = vmatpush1.bf16.msra.mxu0 %v916
      %1265 = vmatprep.subr.bf16.mxu0 0
      %1266 = vmatpush1.bf16.msra.mxu0 0
      %1267 = vmatprep.subr.bf16.mxu0 0
      %1268 = vmatpush1.bf16.msra.mxu0 0
      %1269 = vmatprep.subr.bf16.mxu0 0
      %1270 = vmatpush1.bf16.msra.mxu0 0
      %1271 = vmatprep.subr.bf16.mxu0 0
      %1272 = vmatpush1.bf16.msra.mxu0 0
      %1273 = vmatprep.subr.bf16.mxu0 0
      %1274 = vmatpush1.bf16.msra.mxu0 0
      %1275 = vmatprep.subr.bf16.mxu0 0
      %1276 = vmatpush1.bf16.msra.mxu0 0
      %1277 = vmatprep.subr.bf16.mxu0 0
      %1278 = vmatpush1.bf16.msra.mxu0 0
      %1279 = vmatprep.subr.bf16.mxu0 0
      %1280 = vmatpush1.bf16.msra.mxu0 0
      %1281 = vmatprep.mubr.bf16.mxu0 0
      %1282 = vmatmul.mubr.bf16.gmra.mrb[0].mxu0 %v493
      %v1283 = vpop.f32.mrb[0].mxu0
      %v1284 = vadd.f32 %v1219, %v1283
      %v1285 = vpop.f32.mrb[0].mxu0
      %v1286 = vpop.f32.mrb[0].mxu0
      %v1287 = vadd.f32 %v1222, %v1286
      %v1288 = vpop.f32.mrb[0].mxu0
      %1289 = vmatprep.mubr.bf16.mxu0 0
      %1290 = vmatmul.mubr.bf16.gmra.mrb[0].mxu0 %v502
      %v1291 = vpop.f32.mrb[0].mxu0
      %v1292 = vadd.f32 %v1227, %v1291
      %v1293 = vpop.f32.mrb[0].mxu0
      %v1294 = vpop.f32.mrb[0].mxu0
      %v1295 = vadd.f32 %v1230, %v1294
      %v1296 = vpop.f32.mrb[0].mxu0
      %1297 = vmatprep.mubr.bf16.mxu0 0
      %1298 = vmatmul.mubr.bf16.gmra.mrb[0].mxu0 %v511
      %v1299 = vpop.f32.mrb[0].mxu0
      %v1300 = vadd.f32 %v1235, %v1299
      %v1301 = vpop.f32.mrb[0].mxu0
      %v1302 = vpop.f32.mrb[0].mxu0
      %v1303 = vadd.f32 %v1238, %v1302
      %v1304 = vpop.f32.mrb[0].mxu0
      %1305 = vmatprep.mubr.bf16.mxu0 0
      %1306 = vmatmul.mubr.bf16.gmra.mrb[0].mxu0 %v520
      %v1307 = vpop.f32.mrb[0].mxu0
      %v1308 = vadd.f32 %v1243, %v1307
      %v1309 = vpop.f32.mrb[0].mxu0
      %v1310 = vpop.f32.mrb[0].mxu0
      %v1311 = vadd.f32 %v1246, %v1310
      %v1312 = vpop.f32.mrb[0].mxu0
      %1313 = vdwg.mxu0
      %v1314 = vpack.c.bf16 %v1287, %v1284
      %v1315 = vpack.c.bf16 %v1295, %v1292
      %v1316 = vpack.c.bf16 %v1303, %v1300
      %v1317 = vpack.c.bf16 %v1311, %v1308
      %v1322 = vunpack.c.l.b16 %v1314
      %v1323 = vunpack.c.h.b16 %v1314
      %v1324 = vunpack.c.l.b16 %v1315
      %v1325 = vunpack.c.h.b16 %v1315
      %v1326 = vunpack.c.l.b16 %v1316
      %v1327 = vunpack.c.h.b16 %v1316
      %v1328 = vunpack.c.l.b16 %v1317
      %v1329 = vunpack.c.h.b16 %v1317
      %v1330 = vpack.c.b16 %v1322, %v1322
      %v1331 = vpack.c.b16 %v1323, %v1323
      %v1332 = vpack.c.b16 %v1324, %v1324
      %v1333 = vpack.c.b16 %v1325, %v1325
      %v1334 = vpack.c.b16 %v1326, %v1326
      %v1335 = vpack.c.b16 %v1327, %v1327
      %v1336 = vpack.c.b16 %v1328, %v1328
      %v1337 = vpack.c.b16 %v1329, %v1329
      %1346 = vst [vmem:[%s182] sm:$0xf] %v1330
      %1347 = vst [vmem:[%s182 + $0x4] sm:$0xf] %v1331
      %1348 = vst [vmem:[%s182 + $0x8] sm:$0xf] %v1332
      %1349 = vst [vmem:[%s182 + $0xc] sm:$0xf] %v1333
      %1350 = vst [vmem:[%s182 + $0x10] sm:$0xf] %v1334
      %1351 = vst [vmem:[%s182 + $0x14] sm:$0xf] %v1335
      %1352 = vst [vmem:[%s182 + $0x18] sm:$0xf] %v1336
      %1353 = vst [vmem:[%s182 + $0x1c] sm:$0xf] %v1337
      %v1354 = vadd.f32 %v1284, %v1287
      %v1355 = vadd.f32 %v1354, %v1292
      %v1356 = vadd.f32 %v1355, %v1295
      %v1357 = vadd.f32 %v1356, %v1300
      %v1358 = vadd.f32 %v1357, %v1303
      %v1359 = vadd.f32 %v1358, %v1308
      %v1360 = vadd.f32 %v1359, %v1311
      %v1361 = vrot.slane %v1360, 4
      %v1362 = vadd.f32 %v1360, %v1361
      %v1363 = vrot.slane %v1362, 2
      %v1364 = vadd.f32 %v1362, %v1363
      %v1365 = vrot.slane %v1364, 1
      %v1366 = vadd.f32 %v1364, %v1365
      %v1367 = vmul.f32 %v1284, %v1284
      %v1368 = vmul.f32 %v1287, %v1287
      %v1369 = vmul.f32 %v1292, %v1292
      %v1370 = vmul.f32 %v1295, %v1295
      %v1371 = vmul.f32 %v1300, %v1300
      %v1372 = vmul.f32 %v1303, %v1303
      %v1373 = vmul.f32 %v1308, %v1308
      %v1374 = vmul.f32 %v1311, %v1311
      %v1375 = vadd.f32 %v1367, %v1368
      %v1376 = vadd.f32 %v1375, %v1369
      %v1377 = vadd.f32 %v1376, %v1370
      %v1378 = vadd.f32 %v1377, %v1371
      %v1379 = vadd.f32 %v1378, %v1372
      %v1380 = vadd.f32 %v1379, %v1373
      %v1381 = vadd.f32 %v1380, %v1374
      %v1382 = vrot.slane %v1381, 4
      %v1383 = vadd.f32 %v1381, %v1382
      %v1384 = vrot.slane %v1383, 2
      %v1385 = vadd.f32 %v1383, %v1384
      %v1386 = vrot.slane %v1385, 1
      %v1387 = vadd.f32 %v1385, %v1386
      %v1388 = vlaneseq
      %v1389 = vshrl.u32 %v1388, 7
      %vm1390 = vcmp.eq.s32.totalorder %v1389, 0
      %v1391 = vsel %vm1390, %v1366, 0.0
      %vm1392 = vcmp.eq.s32.totalorder %v1389, 1
      %v1393 = vsel %vm1392, %v1387, 0.0
      %v1394 = vadd.f32 %v1391, %v1393
      %1395 = vst [vmem:[%s187] sm:$0xff] %v1394
      %s1396 = smul.u32 8, %s15
      %p1397 = scmp.lt.s32.totalorder %s1396, 15
      %s1398 = scalar_select %p1397, %s1396, 15
      %s1399 = smul.addr %s1398, 4
      %s1400 = scalar_lea.vmem %s2, %s1399
      %p1401 = scmp.lt.s32.totalorder %s15, 1
      %s1402 = scalar_select %p1401, %s15, 1
      %s1403 = smul.addr %s1402, 8
      %s1404 = scalar_lea.vmem %s3, %s1403
      // Predicated region
      $region29: #{bottleneck_forward.7} parent=27 // pred_check
        %p1405 = pneg %p80
      $region30: #{bottleneck_forward.7} parent=27 // pred_check_branch
        %1407 = sbr.rel (%p1405) target = $region32
      $region31: #{bottleneck_forward.7} parent=27 // pred_region
        %s1408 = smul.u32 8, %s15
      $region32: #{bottleneck_forward.7} parent=27 // pred_fallthru
        _
      // Predicated region
      $region33: #{bottleneck_forward.7} parent=27 // pred_check
        %p1409 = pneg %p106
      $region34: #{bottleneck_forward.7} parent=27 // pred_check_branch
        %1411 = sbr.rel (%p1409) target = $region36
      $region35: #{bottleneck_forward.7} parent=27 // pred_region
        _
      $region36: #{bottleneck_forward.7} parent=27 // pred_fallthru
        _
    $region28: #{bottleneck_forward.7} parent=5 // pred_fallthru
      _
    %p1412 = scmp.le.s32.totalorder 2, %s10
    // Predicated region
    $region37: #{bottleneck_forward.7} parent=5 // pred_check
      %p1413 = pneg %p1412
    $region38: #{bottleneck_forward.7} parent=5 // pred_check_branch
      %1415 = sbr.rel (%p1413) target = $region40
    $region39: #{bottleneck_forward.7} parent=5 // pred_region
      %s1416 = ssub.s32 %s10, 2
      // Predicated region
      $region41: #{bottleneck_forward.7} parent=39 // pred_check
        %p1417 = pneg %p86
      $region42: #{bottleneck_forward.7} parent=39 // pred_check_branch
        %1419 = sbr.rel (%p1417) target = $region44
      $region43: #{bottleneck_forward.7} parent=39 // pred_region
        %s1420 = smul.u32 8, %s16
        %p1421 = scmp.lt.s32.totalorder %s1420, 15
        %s1422 = scalar_select %p1421, %s1420, 15
        %s1423 = smul.addr %s1422, 4
        %s1424 = scalar_lea.vmem %s2, %s1423
      $region44: #{bottleneck_forward.7} parent=39 // pred_fallthru
        _
      // Predicated region
      $region45: #{bottleneck_forward.7} parent=39 // pred_check
        %p1425 = pneg %p112
      $region46: #{bottleneck_forward.7} parent=39 // pred_check_branch
        %1427 = sbr.rel (%p1425) target = $region48
      $region47: #{bottleneck_forward.7} parent=39 // pred_region
        %p1428 = scmp.lt.s32.totalorder %s16, 1
        %s1429 = scalar_select %p1428, %s16, 1
        %s1430 = smul.addr %s1429, 8
        %s1431 = scalar_lea.vmem %s3, %s1430
      $region48: #{bottleneck_forward.7} parent=39 // pred_fallthru
        _
    $region40: #{bottleneck_forward.7} parent=5 // pred_fallthru
      _
  $region6: #{bottleneck_forward.7} parent=0 // loop_footer
    %s14 = sadd.s32 1, %s10
  $region7: #{bottleneck_forward.7} parent=0 // loop_footer_branch
    %9 = sbr.rel target = $region3
  $region8: #{bottleneck_forward.7} parent=0 // loop_exit
    _

</llo_original>
